<compile_context>
chip_gen: v6e
topology: v6e:2x2x1
jax: 0.10.0
libtpu: 0.0.40
codegen_flags: <defaults>
</compile_context>

<pallas_src>
import functools
import math

import numpy as np
import jax
import jax.numpy as jnp
from jax import lax
from jax.experimental import pallas as pl
from jax.experimental.pallas import tpu as pltpu


# ---------------------------------------------------------------------------
# Parameter / padding setup (pure numpy, mirrors the PyTorch helpers)
# ---------------------------------------------------------------------------
def _normalize_int_tuple(x, rank):
    if isinstance(x, int):
        return (x,) * rank
    x = tuple(int(v) for v in x)
    if len(x) == 1:
        return (x[0],) * rank
    if len(x) != rank:
        raise ValueError(f"expected int or length-{rank} tuple, got {x}")
    return x


def _setup_kernel_2d_np(kernel, normalize_kernel=True, flip_kernel=False):
    """Always returns the effective 2-D FIR kernel.

    The torch module keeps a 1-D kernel when `separable`; applying it per axis
    is mathematically identical to the outer-product 2-D kernel built here
    (normalization, flip and gain all factor across axes).
    """
    k = np.asarray(1 if kernel is None else kernel, dtype=np.float32)
    if k.size == 0:
        raise ValueError("Kernel must have at least one element.")
    if k.ndim == 0:
        k = k[None]
    if k.ndim == 1:
        k = np.outer(k, k)
    if k.ndim != 2:
        raise ValueError("rank-2 module expects a 1-D or 2-D kernel")
    if normalize_kernel:
        k = k / np.abs(k).sum()
    if flip_kernel:
        k = k[::-1, ::-1]
    return np.ascontiguousarray(k, dtype=np.float32)


def _parse_padding(rank, padding):
    if isinstance(padding, int):
        return (padding,) * rank * 2
    padding = tuple(int(p) for p in padding)
    if len(padding) == 1:
        return (padding[0],) * rank * 2
    if len(padding) == rank:
        out = []
        for p in reversed(padding):          # torch _reverse_repeat_tuple(padding, 2)
            out.extend([p, p])
        return tuple(out)
    if len(padding) == rank * 2:
        return padding
    raise ValueError("bad padding")


def _calc_padding(rank, kernel_size, up, down):
    if isinstance(kernel_size, int):
        kernel_size = (kernel_size,) * rank
    elif len(kernel_size) == 1:
        kernel_size = (kernel_size[0],) * rank
    up = _normalize_int_tuple(up, rank)
    down = _normalize_int_tuple(down, rank)
    padding = []
    for k, u, d in zip(kernel_size, up, down):
        if u == d == 1:
            div, mod = divmod(k - 1, 2)
            padding.extend([div + mod, div])
            continue
        p0, p1 = 0, 0
        if u > 1:
            p0 += (k + u - 1) // 2
            p1 += (k - u) // 2
        if d > 1:
            p0 += (k - d + 1) // 2
            p1 += (k - d) // 2
        padding.extend([p0, p1])
    return tuple(padding)


# ---------------------------------------------------------------------------
# Band-matrix construction (per axis): up + pad + FIR + down as one matrix
# ---------------------------------------------------------------------------
def _axis_out_len(L, u, d, p0, p1, K):
    Lf = L * u + p0 + p1 - K + 1
    if Lf <= 0:
        raise ValueError("upfirdn output size is non-positive")
    return -(-Lf // d)


def _axis_window(L, u, d, p0, K, m_lo, m_hi):
    """In-range input index window [lo, hi) needed by outputs [m_lo, m_hi)."""
    if m_hi <= m_lo:
        return 0, 1
    m = np.arange(m_lo, m_hi)[:, None]
    s = np.arange(K)[None, :]
    num = m * d + s - p0
    valid = (num % u == 0)
    j = num // u
    valid &= (j >= 0) & (j < L)
    if not valid.any():
        return 0, 1
    jv = j[valid]
    return int(jv.min()), int(jv.max()) + 1


def _axis_band_block(kvec, L, u, d, p0, m_lo, m_hi, rows_out, win_start, win_len):
    """Band matrix mapping input window [win_start, win_start+win_len) to
    final (down-sampled) outputs [m_lo, m_hi); extra rows are zero.
    Out-of-range input samples (i.e. zero padding) simply get no coefficient."""
    M = np.zeros((rows_out, win_len), np.float64)
    if m_hi > m_lo and kvec.shape[0] > 0:
        m = np.arange(m_lo, m_hi)[:, None]
        s = np.arange(kvec.shape[0])[None, :]
        num = m * d + s - p0
        valid = (num % u == 0)
        j = num // u
        valid &= (j >= 0) & (j < L)
        jj = j - win_start
        valid &= (jj >= 0) & (jj < win_len)
        rr = np.broadcast_to(m - m_lo, valid.shape)
        ss = np.broadcast_to(s, valid.shape)
        np.add.at(M, (rr[valid], jj[valid]), kvec[ss[valid]])
    return M


_DEFAULT_VMEM = 64 * 1024 * 1024


def _vmem_capacity_bytes():
    try:
        info = pltpu.get_tpu_info()
        cap = int(getattr(info, "vmem_capacity_bytes", 0) or 0)
        if cap > 0:
            return cap
    except Exception:
        pass
    return _DEFAULT_VMEM          # conservative (v7x-sized) default


# ---------------------------------------------------------------------------
# Pallas kernel: OUT_block = sum_p (A_p @ X_window) @ B_p   (per W tile)
# ---------------------------------------------------------------------------
def _upfirdn_matmul_kernel(rs_ref, a_ref, b_ref, x_ref, o_ref, *, col_in, col_w):
    h = pl.program_id(1)
    tnc = x_ref.shape[0]
    rank, n_wt, wwin, two = b_ref.shape
    tro, hwin = a_ref.shape[2], a_ref.shape[3]

    rs = rs_ref[h]                                           # input row-window start
    xw = x_ref[:, pl.ds(rs, hwin), :].astype(jnp.float32)    # (TNC, Hwin, Win)

    # H pass: one MXU matmul per SVD component (band handles up/down/pad/phase)
    zs = []
    for p in range(rank):
        a = a_ref[0, p, :, :]                                # (TRo, Hwin)
        ab = jnp.broadcast_to(a[None, :, :], (tnc, tro, hwin))
        z = lax.dot_general(
            ab, xw, (((2,), (1,)), ((0,), (0,))),
            preferred_element_type=jnp.float32,
            precision=lax.Precision.HIGHEST)                 # (TNC, TRo, Win)
        zs.append(z)

    # W pass: tiled band matmuls, stores go straight to the final layout
    for wt in range(n_wt):
        c_in = col_in[wt]
        acc = None
        for p in range(rank):
            zc = zs[p][:, :, c_in:c_in + wwin]               # (TNC, TRo, Wwin)
            b = b_ref[p, wt, :, :]                           # (Wwin, TWo)
            bb = jnp.broadcast_to(b[None, :, :], (tnc, wwin, two))
            t = lax.dot_general(
                zc, bb, (((2,), (1,)), ((0,), (0,))),
                preferred_element_type=jnp.float32,
                precision=lax.Precision.HIGHEST)             # (TNC, TRo, TWo)
            acc = t if acc is None else acc + t
        c0 = wt * two
        w_out = col_w[wt]
        o_ref[:, :, c0:c0 + w_out] = acc[:, :, :w_out].astype(o_ref.dtype)


def upfirdn2d_pallas(x, k_eff, up, down, padding):
    """x: (N, C, H, W); k_eff: (KH, KW) effective cross-correlation taps.
    up/down index 0 <-> W, index 1 <-> H; padding = (w0, w1, h0, h1)."""
    N, C, H, W = (int(v) for v in x.shape)
    u_w, u_h = int(up[0]), int(up[1])
    d_w, d_h = int(down[0]), int(down[1])
    p_w0, p_w1, p_h0, p_h1 = (int(p) for p in padding)
    KH, KW = k_eff.shape
    Ho = _axis_out_len(H, u_h, d_h, p_h0, p_h1, KH)
    Wo = _axis_out_len(W, u_w, d_w, p_w0, p_w1, KW)
    NC = N * C
    itemsize = int(np.dtype(x.dtype).itemsize)

    # ---- SVD split of the 2-D kernel into separable components --------------
    k64 = np.asarray(k_eff, np.float64)
    U, S, Vt = np.linalg.svd(k64)
    R = max(1, int(np.sum(S > S[0] * 1e-9))) if S[0] > 0 else 1
    kh = [U[:, p] * np.sqrt(S[p]) for p in range(R)]
    kw = [Vt[p, :] * np.sqrt(S[p]) for p in range(R)]

    # ---- output tiling -------------------------------------------------------
    vmem_cap = _vmem_capacity_bytes()
    tr_target = int(np.clip((128 * u_h) // max(1, d_h), 32, 256))
    tr_target -= tr_target % 8
    if Ho <= tr_target:
        TRo = Ho
    else:
        TRo = 0
        for cand in range(tr_target, max(8, tr_target // 2) - 1, -8):
            if Ho % cand == 0:
                TRo = cand
                break
        if TRo == 0:
            TRo = tr_target      # tail row-block is masked by Pallas on store
    n_h = -(-Ho // TRo)

    tw_target = int(np.clip((256 * u_w) // max(1, d_w), 128, 512))
    tw_target -= tw_target % 128
    TWo = min(Wo, tw_target)
    n_wt = -(-Wo // TWo)

    # ---- H band matrices (one per output-row block, per component) ----------
    row_lo = [h * TRo for h in range(n_h)]
    row_hi = [min((h + 1) * TRo, Ho) for h in range(n_h)]
    wins = [_axis_window(H, u_h, d_h, p_h0, KH, lo, hi)
            for lo, hi in zip(row_lo, row_hi)]
    Hwin = min(H, max(1, max(hi - lo for lo, hi in wins)))
    rs_list = [max(0, min(lo, H - Hwin)) for lo, _ in wins]
    A = np.zeros((n_h, R, TRo, Hwin), np.float32)
    for h in range(n_h):
        for p in range(R):
            A[h, p] = _axis_band_block(kh[p], H, u_h, d_h, p_h0,
                                       row_lo[h], row_hi[h], TRo,
                                       rs_list[h], Hwin).astype(np.float32)

    # ---- W band matrices (one per output-column tile, per component) --------
    col_lo = [wt * TWo for wt in range(n_wt)]
    col_hi = [min((wt + 1) * TWo, Wo) for wt in range(n_wt)]
    wwins = [_axis_window(W, u_w, d_w, p_w0, KW, lo, hi)
             for lo, hi in zip(col_lo, col_hi)]
    Wwin = min(W, max(1, max(hi - lo for lo, hi in wwins)))
    cs_list = [max(0, min(lo, W - Wwin)) for lo, _ in wwins]
    B = np.zeros((R, n_wt, Wwin, TWo), np.float32)
    for p in range(R):
        for wt in range(n_wt):
            B[p, wt] = _axis_band_block(kw[p], W, u_w, d_w, p_w0,
                                        col_lo[wt], col_hi[wt], TWo,
                                        cs_list[wt], Wwin).astype(np.float32).T
    col_w = tuple(hi - lo for lo, hi in zip(col_lo, col_hi))
    col_in = tuple(int(c) for c in cs_list)

    # ---- channel tiling under a per-generation VMEM budget -------------------
    budget = max(16 << 20, min(int(vmem_cap * 0.35), 48 << 20))
    fixed = 2 * 4 * (A.size + B.size)                   # A, B (double-buffered)
    per_nc = (2 * H * W * itemsize                      # input plane (2 bufs)
              + 2 * TRo * Wo * itemsize                 # output block (2 bufs)
              + 4 * (Hwin * W                           # f32 window copy
                     + R * TRo * W                      # z temporaries
                     + 2 * TRo * TWo))                  # matmul result + cast
    cap_nc = max(1, int((budget - fixed) // max(1, per_nc)))
    TNC = 1
    for t in range(min(NC, cap_nc), 0, -1):
        if NC % t == 0:
            TNC = t
            break
    n_nc = NC // TNC
    need = fixed + TNC * per_nc
    vmem_limit = int(min(vmem_cap * 0.9, max(need * 1.4 + (8 << 20), 32 << 20)))

    # Megacore: shard nc when possible (avoids duplicate input DMA on v7x),
    # otherwise let both cores split the row axis.
    sem = ("parallel", "arbitrary") if n_nc >= 2 else ("arbitrary", "parallel")

    kernel_fn = functools.partial(_upfirdn_matmul_kernel,
                                  col_in=col_in, col_w=col_w)

    grid_spec = pltpu.PrefetchScalarGridSpec(
        num_scalar_prefetch=1,                     # per-row-block window starts
        grid=(n_nc, n_h),
        in_specs=[
            pl.BlockSpec((1, R, TRo, Hwin), lambda nc, h, rs: (h, 0, 0, 0)),
            pl.BlockSpec((R, n_wt, Wwin, TWo), lambda nc, h, rs: (0, 0, 0, 0)),
            pl.BlockSpec((TNC, H, W), lambda nc, h, rs: (nc, 0, 0)),
        ],
        out_specs=pl.BlockSpec((TNC, TRo, Wo), lambda nc, h, rs: (nc, h, 0)),
    )

    x_nc = x.reshape(NC, H, W)                     # free: no layout transpose
    rs_arr = jnp.asarray(np.asarray(rs_list, np.int32))
    y = pl.pallas_call(
        kernel_fn,
        out_shape=jax.ShapeDtypeStruct((NC, Ho, Wo), x.dtype),
        grid_spec=grid_spec,
        compiler_params=pltpu.CompilerParams(
            dimension_semantics=sem,
            vmem_limit_bytes=vmem_limit),
    )(rs_arr, jnp.asarray(A), jnp.asarray(B), x_nc)
    return y.reshape(N, C, Ho, Wo)                 # free reshape, no trim pass


# ---------------------------------------------------------------------------
# Module-equivalent wrapper (rank = 2)
# ---------------------------------------------------------------------------
class UpFirDn2d:
    """JAX/Pallas equivalent of firewood _UpFirDnNd(rank=2) forward."""

    def __init__(self, kernel=None, up=1, down=1, padding=0, gain=1.0,
                 normalize_kernel=True, flip_kernel=False,
                 upsample_mode="zeros", ignore_same_padding=False):
        rank = 2
        self.rank = rank
        if not upsample_mode.startswith("zero"):
            # TODO(synk): upsample_mode 'nearest'/'linear' not implemented.
            raise NotImplementedError("only upsample_mode='zeros' is supported")
        self.up = _normalize_int_tuple(up, rank)        # index 0 <-> W
        self.down = _normalize_int_tuple(down, rank)
        self.gain = float(gain)
        self.flip_kernel = bool(flip_kernel)
        self.upsample_mode = upsample_mode
        self.kernel = _setup_kernel_2d_np(kernel, normalize_kernel=normalize_kernel,
                                          flip_kernel=flip_kernel)
        pad = _parse_padding(rank, padding)
        if not ignore_same_padding:
            same = _calc_padding(rank, self.kernel.shape, self.up, self.down)
            pad = tuple(p + s for p, s in zip(pad, same))
        self.padding = pad                              # (w0, w1, h0, h1), F.pad order

        # Effective cross-correlation taps used by firNd: flip when
        # flip_kernel=False (true convolution) and fold in gain * prod(up).
        g = self.gain
        if upsample_mode.startswith("zero"):
            g = g * math.prod(self.up)
        k = self.kernel if self.flip_kernel else self.kernel[::-1, ::-1]
        self.k_eff = np.ascontiguousarray(k * g, dtype=np.float32)

    def __call__(self, x):
        return upfirdn2d_pallas(x, self.k_eff, self.up, self.down, self.padding)

    # Independent pure-JAX transcription of upfirdnNd/firNd (no Pallas),
    # used only for correctness checking.
    def reference(self, x):
        u_w, u_h = self.up
        d_w, d_h = self.down
        N, C, H, W = x.shape
        if u_h > 1 or u_w > 1:
            z = jnp.zeros((N, C, H, u_h, W, u_w), x.dtype)
            z = z.at[:, :, :, 0, :, 0].set(x)
            x = z.reshape(N, C, H * u_h, W * u_w)
        gain = self.gain
        if self.upsample_mode.startswith("zero"):
            gain = gain * math.prod(self.up)
        w0, w1, h0, h1 = self.padding
        x = lax.pad(x, jnp.array(0, x.dtype),
                    ((0, 0, 0), (0, 0, 0), (h0, h1, 0), (w0, w1, 0)))
        k = self.kernel if self.flip_kernel else self.kernel[::-1, ::-1]
        k = k * (gain ** (k.ndim / self.rank))
        kj = jnp.asarray(np.ascontiguousarray(k, dtype=np.float32))
        Cc = x.shape[1]
        wgt = jnp.broadcast_to(kj[None, None], (Cc, 1) + kj.shape)
        y = lax.conv_general_dilated(
            x.astype(jnp.float32), wgt, (1, 1), "VALID",
            dimension_numbers=("NCHW", "OIHW", "NCHW"),
            feature_group_count=Cc, precision=lax.Precision.HIGHEST)
        y = y.astype(x.dtype)
        if d_h > 1 or d_w > 1:
            y = y[:, :, ::d_h, ::d_w]
        return y


if __name__ == "__main__":
    key = jax.random.PRNGKey(0)
    checks = []

    # 1) StyleGAN-style 2x zero-insertion upsample FIR.
    x1 = jax.random.normal(key, (2, 4, 16, 16), dtype=jnp.float32)   # NCHW
    mod1 = UpFirDn2d(kernel=[1, 3, 3, 1], up=2, down=1, padding=0, gain=1.0)
    y1 = jax.block_until_ready(mod1(x1))
    assert y1.shape == (2, 4, 32, 32), y1.shape
    checks.append((y1, mod1.reference(x1)))

    # 2) 2x FIR downsample (down-stride folded into the band matrices).
    mod2 = UpFirDn2d(kernel=[1, 3, 3, 1], up=1, down=2, padding=0, gain=1.0)
    y2 = jax.block_until_ready(mod2(x1))
    assert y2.shape == (2, 4, 8, 8), y2.shape
    checks.append((y2, mod2.reference(x1)))

    # 3) plain "same" smoothing FIR, odd spatial sizes / odd channel count.
    x3 = jax.random.normal(jax.random.PRNGKey(0), (1, 3, 9, 12), dtype=jnp.float32)
    mod3 = UpFirDn2d(kernel=[1, 2, 1], up=1, down=1, padding=0, gain=1.0)
    y3 = jax.block_until_ready(mod3(x3))
    assert y3.shape == (1, 3, 9, 12), y3.shape
    checks.append((y3, mod3.reference(x3)))

    # 4) asymmetric non-separable 2-D kernel (SVD rank 2), flip_kernel=True,
    #    extra gain and padding, up=2.
    mod4 = UpFirDn2d(kernel=np.array([[1.0, 2.0], [3.0, 4.0]]), up=2, down=1,
                     padding=1, gain=2.0, flip_kernel=True)
    y4 = jax.block_until_ready(mod4(x3))
    checks.append((y4, mod4.reference(x3)))

    # 5) combined up=2 / down=2 (phase selection with unit stride).
    mod5 = UpFirDn2d(kernel=[1, 3, 3, 1], up=2, down=2, padding=0, gain=1.0)
    y5 = jax.block_until_ready(mod5(x1))
    assert y5.shape == (2, 4, 17, 17), y5.shape
    checks.append((y5, mod5.reference(x1)))

    for out, ref in checks:
        ref = jax.block_until_ready(ref)
        np.testing.assert_allclose(np.asarray(out), np.asarray(ref),
                                   rtol=1e-5, atol=1e-5)

    print("KERNEL_OK")
</pallas_src>

<mosaic_0001>
module attributes {stable_mosaic.version = 11 : i64} {
  func.func @_upfirdn_matmul_kernel(%arg0: i32, %arg1: i32, %arg2: memref<1xi32, #tpu.memory_space<smem>>, %arg3: memref<1x1x32x16xf32, #tpu.memory_space<vmem>>, %arg4: memref<1x1x16x32xf32, #tpu.memory_space<vmem>>, %arg5: memref<8x16x16xf32, #tpu.memory_space<vmem>>, %arg6: memref<8x32x32xf32, #tpu.memory_space<vmem>>) attributes {dimension_semantics = [#tpu.dimension_semantics<arbitrary>, #tpu.dimension_semantics<parallel>], iteration_bounds = array<i64: 1, 1>, scalar_prefetch = 1 : i64, scratch_operands = 0 : i64, tpu.core_type = #tpu.core_type<tc>, window_params = [{transform_indices = @transform_0, window_bounds = array<i64: 1, 1, 32, 16>}, {pipeline_mode = #tpu.pipeline_mode<synchronous>, transform_indices = @transform_1, window_bounds = array<i64: 1, 1, 16, 32>}, {transform_indices = @transform_2, window_bounds = array<i64: 8, 16, 16>}, {transform_indices = @transform_3, window_bounds = array<i64: 8, 32, 32>}]} {
    %0 = arith.index_cast %arg1 : i32 to index
    %1 = memref.load %arg2[%0] : memref<1xi32, #tpu.memory_space<smem>>
    %c0 = arith.constant 0 : index
    %2 = arith.index_cast %1 : i32 to index
    %c0_0 = arith.constant 0 : index
    %3 = vector.load %arg5[%c0, %2, %c0_0] : memref<8x16x16xf32, #tpu.memory_space<vmem>>, vector<8x16x16xf32>
    %c0_1 = arith.constant 0 : index
    %c0_2 = arith.constant 0 : index
    %c0_3 = arith.constant 0 : index
    %c0_4 = arith.constant 0 : index
    %4 = vector.load %arg3[%c0_1, %c0_2, %c0_3, %c0_4] : memref<1x1x32x16xf32, #tpu.memory_space<vmem>>, vector<1x1x32x16xf32>
    %5 = vector.shape_cast %4 : vector<1x1x32x16xf32> to vector<32x16xf32>
    %6 = vector.shape_cast %5 : vector<32x16xf32> to vector<1x32x16xf32>
    %7 = vector.shape_cast %6 : vector<1x32x16xf32> to vector<1x32x16xf32>
    %8 = vector.broadcast %7 : vector<1x32x16xf32> to vector<8x32x16xf32>
    %cst = arith.constant dense<0.000000e+00> : vector<8x32x16xf32>
    %9 = tpu.matmul %8, %3, %cst {dimension_numbers = #tpu.dot_dimension_numbers<[2], [1], [1], [2], [0, 0, 0, 1, 1, 2], [0], [0]>, precision = #tpu.contract_precision<fp32>} : vector<8x32x16xf32>, vector<8x16x16xf32>, vector<8x32x16xf32> -> vector<8x32x16xf32>
    %c0_5 = arith.constant 0 : index
    %c0_6 = arith.constant 0 : index
    %c0_7 = arith.constant 0 : index
    %c0_8 = arith.constant 0 : index
    %10 = vector.load %arg4[%c0_5, %c0_6, %c0_7, %c0_8] : memref<1x1x16x32xf32, #tpu.memory_space<vmem>>, vector<1x1x16x32xf32>
    %11 = vector.shape_cast %10 : vector<1x1x16x32xf32> to vector<16x32xf32>
    %12 = vector.shape_cast %11 : vector<16x32xf32> to vector<1x16x32xf32>
    %13 = vector.shape_cast %12 : vector<1x16x32xf32> to vector<1x16x32xf32>
    %14 = vector.broadcast %13 : vector<1x16x32xf32> to vector<8x16x32xf32>
    %cst_9 = arith.constant dense<0.000000e+00> : vector<8x32x32xf32>
    %15 = tpu.matmul %9, %14, %cst_9 {dimension_numbers = #tpu.dot_dimension_numbers<[2], [1], [1], [2], [0, 0, 0, 1, 1, 2], [0], [0]>, precision = #tpu.contract_precision<fp32>} : vector<8x32x16xf32>, vector<8x16x32xf32>, vector<8x32x32xf32> -> vector<8x32x32xf32>
    %c0_10 = arith.constant 0 : index
    %c0_11 = arith.constant 0 : index
    %c0_12 = arith.constant 0 : index
    %16 = vector.load %arg6[%c0_10, %c0_11, %c0_12] : memref<8x32x32xf32, #tpu.memory_space<vmem>>, vector<8x32x32xf32>
    tpu.vector_store %arg6[%c0_10, %c0_11, %c0_12], %15 {strides = array<i32>} : memref<8x32x32xf32, #tpu.memory_space<vmem>>, vector<8x32x32xf32>,
    return
  }
  func.func @transform_0(%arg0: i32, %arg1: i32, %arg2: memref<1xi32, #tpu.memory_space<smem>>) -> (i32, i32, i32, i32) {
    %c0_i32 = arith.constant 0 : i32
    %c0_i32_0 = arith.constant 0 : i32
    %c0_i32_1 = arith.constant 0 : i32
    %c0_i32_2 = arith.constant 0 : i32
    return %arg1, %c0_i32, %c0_i32_0, %c0_i32_1 : i32, i32, i32, i32
  }
  func.func @transform_1(%arg0: i32, %arg1: i32, %arg2: memref<1xi32, #tpu.memory_space<smem>>) -> (i32, i32, i32, i32) {
    %c0_i32 = arith.constant 0 : i32
    %c0_i32_0 = arith.constant 0 : i32
    %c0_i32_1 = arith.constant 0 : i32
    %c0_i32_2 = arith.constant 0 : i32
    %c0_i32_3 = arith.constant 0 : i32
    return %c0_i32, %c0_i32_0, %c0_i32_1, %c0_i32_2 : i32, i32, i32, i32
  }
  func.func @transform_2(%arg0: i32, %arg1: i32, %arg2: memref<1xi32, #tpu.memory_space<smem>>) -> (i32, i32, i32) {
    %c0_i32 = arith.constant 0 : i32
    %c0_i32_0 = arith.constant 0 : i32
    %c0_i32_1 = arith.constant 0 : i32
    return %arg0, %c0_i32, %c0_i32_0 : i32, i32, i32
  }
  func.func @transform_3(%arg0: i32, %arg1: i32, %arg2: memref<1xi32, #tpu.memory_space<smem>>) -> (i32, i32, i32) {
    %c0_i32 = arith.constant 0 : i32
    %c0_i32_0 = arith.constant 0 : i32
    return %arg0, %arg1, %c0_i32 : i32, i32, i32
  }
}

</mosaic_0001>

<llo_original>
// kernel: tpu_custom_call.1
$region0: #{tpu_custom_call.1}
  #allocation0 [shape = 'u32[]', space=smem, size = 0x4, offset = 0x4, fixed_abs, tag = 'smem constant byte address 0x4 - core index']
  #allocation1 [shape = 'u32[144,128]{1,0:T(1,128)}', space=vmem, size = 0x12000, scoped, tag = 'internal scratch']
  #allocation2 [shape = 's32[1]{0}', space=sflag, size = 0x4, scoped, tag = 'scoped memory for tpu_custom_call.1']
  #allocation3 [shape = 's32[1]{0:T(128)S(6)}', space=smem, size = 0x200, scoped, tag = 'prefetched SMEM operand 0']
  %s0 = inlined_call_operand.<no memory space> [shape: s32[1], index: 0, kind: input, shape index: {}]
  %s1 = inlined_call_operand.vmem [shape: f32[1,1,32,16], index: 1, kind: input, shape index: {}]
  %s2 = inlined_call_operand.vmem [shape: f32[1,1,16,32], index: 2, kind: input, shape index: {}]
  %s3 = inlined_call_operand.hbm [shape: f32[8,16,16], index: 3, kind: input, shape index: {}]
  %s4 = inlined_call_operand.hbm [shape: f32[8,32,32], index: 4, kind: output, shape index: {}]
  %s5 = sld [smem:[#allocation0]]
  $region26: #{tpu_custom_call.1} parent=0
    _
  %s7 = ssub.s32 1, %s5
  %s8 = scalar_select 0, %s7, %s5
  %9 = sst [smem:[#allocation3]] %s0
  $region1: #{tpu_custom_call.1} parent=0
    #allocation4 [shape = 'u8[65536]{0}', space=vmem, size = 0x10000, scoped, tag = 'input window, operand 3, single buffered']
    #allocation5 [shape = 's32[1]{0}', space=sflag, size = 0x4, scoped, tag = 'scoped memory for tpu_custom_call.1']
    #allocation6 [shape = 's32[1]{0}', space=sflag, size = 0x4, scoped, tag = 'scoped memory for tpu_custom_call.1']
    #allocation7 [shape = 'u8[131072]{0}', space=vmem, size = 0x20000, scoped, tag = 'output window, operand 0, single buffered']
    %10 = vsyncpa [#allocation5], 0
    %11 = vsyncpa [#allocation6], 0
    // Predicated region
    $region2: #{tpu_custom_call.1} parent=1 // pred_check
      _
    $region3: #{tpu_custom_call.1} parent=1 // pred_check_branch
      %13 = sbr.rel (0) target = $region5
    $region4: #{tpu_custom_call.1} parent=1 // pred_region
      _
    $region5: #{tpu_custom_call.1} parent=1 // pred_fallthru
      _
    // Predicated region
    $region6: #{tpu_custom_call.1} parent=1 // pred_check
      _
    $region7: #{tpu_custom_call.1} parent=1 // pred_check_branch
      %15 = sbr.rel (0) target = $region9
    $region8: #{tpu_custom_call.1} parent=1 // pred_region
      _
    $region9: #{tpu_custom_call.1} parent=1 // pred_fallthru
      _
    // Predicated region
    $region10: #{tpu_custom_call.1} parent=1 // pred_check
      _
    $region11: #{tpu_custom_call.1} parent=1 // pred_check_branch
      %17 = sbr.rel (0) target = $region13
    $region12: #{tpu_custom_call.1} parent=1 // pred_region
      %s19 = ssub.s32 2048, 2048
      %20 = vsyncadd [#allocation5], %s19
      %s21 = sshll.u32 [#allocation4], 4
      %s22 = int_to_ptr.vmem [resolvable:$true] %s21
      %27 = dma.hbm_to_vmem [thread:$0]  %s3, 2048, %s22, [#allocation5], 128, 128, 8
    $region13: #{tpu_custom_call.1} parent=1 // pred_fallthru
      _
    // Predicated region
    $region14: #{tpu_custom_call.1} parent=1 // pred_check
      _
    $region15: #{tpu_custom_call.1} parent=1 // pred_check_branch
      %29 = sbr.rel (0) target = $region17
    $region16: #{tpu_custom_call.1} parent=1 // pred_region
      %30 = dma.done [#allocation5], 2048
    $region17: #{tpu_custom_call.1} parent=1 // pred_fallthru
      _
    %s31 = sld [smem:[#allocation3]]
    %s32 = scalar_lea.vmem [#allocation4], %s31
    %v33 = vld [vmem:[%s32] sm:$0xff]
    %v34 = vld [vmem:[%s32 + $0x8] sm:$0xff]
    %v35 = vld [vmem:[%s32 + $0x10] sm:$0xff]
    %v36 = vld [vmem:[%s32 + $0x18] sm:$0xff]
    %v37 = vld [vmem:[%s32 + $0x20] sm:$0xff]
    %v38 = vld [vmem:[%s32 + $0x28] sm:$0xff]
    %v39 = vld [vmem:[%s32 + $0x30] sm:$0xff]
    %v40 = vld [vmem:[%s32 + $0x38] sm:$0xff]
    %v41 = vld [vmem:[%s32 + $0x40] sm:$0xff]
    %v42 = vld [vmem:[%s32 + $0x48] sm:$0xff]
    %v43 = vld [vmem:[%s32 + $0x50] sm:$0xff]
    %v44 = vld [vmem:[%s32 + $0x58] sm:$0xff]
    %v45 = vld [vmem:[%s32 + $0x60] sm:$0xff]
    %v46 = vld [vmem:[%s32 + $0x68] sm:$0xff]
    %v47 = vld [vmem:[%s32 + $0x70] sm:$0xff]
    %v48 = vld [vmem:[%s32 + $0x78] sm:$0xff]
    %v49 = vld [vmem:[%s1] sm:$0xff]
    %v50 = vld [vmem:[%s1 + $0x8] sm:$0xff]
    %v51 = vld [vmem:[%s1 + $0x10] sm:$0xff]
    %v52 = vld [vmem:[%s1 + $0x18] sm:$0xff]
    %vm53 = vcmask 130048
    %v55 = vsel %vm53, %v49, 0
    %v58 = vsel %vm53, %v50, 0
    %v61 = vsel %vm53, %v51, 0
    %v64 = vsel %vm53, %v52, 0
    %66 = vmatprep.subr.mxu0 0.0
    %67 = vmatpush1.msra.mxu0 0.0
    %68 = vmatprep.subr.mxu0 0.0
    %69 = vmatpush1.msra.mxu0 0.0
    %70 = vmatprep.subr.mxu0 0.0
    %71 = vmatpush1.msra.mxu0 0.0
    %72 = vmatprep.subr.mxu0 0.0
    %73 = vmatpush1.msra.mxu0 0.0
    %74 = vmatprep.subr.mxu0 0.0
    %75 = vmatpush1.msra.mxu0 0.0
    %76 = vmatprep.subr.mxu0 0.0
    %77 = vmatpush1.msra.mxu0 0.0
    %78 = vmatprep.subr.mxu0 0.0
    %79 = vmatpush1.msra.mxu0 0.0
    %80 = vmatprep.subr.mxu0 0.0
    %81 = vmatpush1.msra.mxu0 0.0
    %82 = vmatprep.subr.mxu0 0.0
    %83 = vmatpush1.msra.mxu0 0.0
    %84 = vmatprep.subr.mxu0 0.0
    %85 = vmatpush1.msra.mxu0 0.0
    %86 = vmatprep.subr.mxu0 0.0
    %87 = vmatpush1.msra.mxu0 0.0
    %88 = vmatprep.subr.mxu0 0.0
    %89 = vmatpush1.msra.mxu0 0.0
    %90 = vmatprep.subr.mxu0 0.0
    %91 = vmatpush1.msra.mxu0 0.0
    %92 = vmatprep.subr.mxu0 0.0
    %93 = vmatpush1.msra.mxu0 0.0
    %94 = vmatprep.subr.mxu0 0.0
    %v95 = vand.u32 %v34, 4294901760
    %96 = vmatpush1.msra.mxu0 %v95
    %97 = vmatprep.subr.mxu0 0.0
    %v98 = vand.u32 %v33, 4294901760
    %99 = vmatpush1.msra.mxu0 %v98
    %100 = vmatprep.subr.mxu0 0.0
    %101 = vmatpush2.msra.mxu0 0.0
    %102 = vmatprep.subr.mxu0 0.0
    %103 = vmatpush2.msra.mxu0 0.0
    %104 = vmatprep.subr.mxu0 0.0
    %105 = vmatpush2.msra.mxu0 0.0
    %106 = vmatprep.subr.mxu0 0.0
    %107 = vmatpush2.msra.mxu0 0.0
    %108 = vmatprep.subr.mxu0 0.0
    %109 = vmatpush2.msra.mxu0 0.0
    %110 = vmatprep.subr.mxu0 0.0
    %111 = vmatpush2.msra.mxu0 0.0
    %112 = vmatprep.subr.mxu0 0.0
    %113 = vmatpush2.msra.mxu0 0.0
    %114 = vmatprep.subr.mxu0 0.0
    %115 = vmatpush2.msra.mxu0 0.0
    %116 = vmatprep.subr.mxu0 0.0
    %117 = vmatpush2.msra.mxu0 0.0
    %118 = vmatprep.subr.mxu0 0.0
    %119 = vmatpush2.msra.mxu0 0.0
    %120 = vmatprep.subr.mxu0 0.0
    %121 = vmatpush2.msra.mxu0 0.0
    %122 = vmatprep.subr.mxu0 0.0
    %123 = vmatpush2.msra.mxu0 0.0
    %124 = vmatprep.subr.mxu0 0.0
    %125 = vmatpush2.msra.mxu0 0.0
    %126 = vmatprep.subr.mxu0 0.0
    %127 = vmatpush2.msra.mxu0 0.0
    %128 = vmatprep.subr.mxu0 0.0
    %129 = vmatpush2.msra.mxu0 0.0
    %130 = vmatprep.subr.mxu0 0.0
    %131 = vmatpush2.msra.mxu0 0.0
    %132 = vmatprep.mubr.f32.mxu0 0.0
    %v133 = vand.u32 %v55, 4294901760
    %v134 = vsub.f32 %v55, %v133
    %v135 = vand.u32 %v134, 4294901760
    %v136 = vsub.f32 %v134, %v135
    %v137 = vand.u32 %v136, 4294901760
    %138 = vmatmul.mubr.f32.gmra.mxu0 %v137
    %v139 = vpop.f32.mrf.mxu0
    %v140 = vadd.f32 0.0, %v139
    %v141 = vpop.f32.mrf.mxu0
    %142 = vmatprep.mubr.f32.mxu0 0.0
    %v143 = vand.u32 %v58, 4294901760
    %v144 = vsub.f32 %v58, %v143
    %v145 = vand.u32 %v144, 4294901760
    %v146 = vsub.f32 %v144, %v145
    %v147 = vand.u32 %v146, 4294901760
    %148 = vmatmul.mubr.f32.gmra.mxu0 %v147
    %v149 = vpop.f32.mrf.mxu0
    %v150 = vadd.f32 0.0, %v149
    %v151 = vpop.f32.mrf.mxu0
    %152 = vmatprep.mubr.f32.mxu0 0.0
    %v153 = vand.u32 %v61, 4294901760
    %v154 = vsub.f32 %v61, %v153
    %v155 = vand.u32 %v154, 4294901760
    %v156 = vsub.f32 %v154, %v155
    %v157 = vand.u32 %v156, 4294901760
    %158 = vmatmul.mubr.f32.gmra.mxu0 %v157
    %v159 = vpop.f32.mrf.mxu0
    %v160 = vadd.f32 0.0, %v159
    %v161 = vpop.f32.mrf.mxu0
    %162 = vmatprep.mubr.f32.mxu0 0.0
    %v163 = vand.u32 %v64, 4294901760
    %v164 = vsub.f32 %v64, %v163
    %v165 = vand.u32 %v164, 4294901760
    %v166 = vsub.f32 %v164, %v165
    %v167 = vand.u32 %v166, 4294901760
    %168 = vmatmul.mubr.f32.gmra.mxu0 %v167
    %v169 = vpop.f32.mrf.mxu0
    %v170 = vadd.f32 0.0, %v169
    %v171 = vpop.f32.mrf.mxu0
    %172 = vdwg.mxu0
    %173 = vmatprep.subr.mxu0 0.0
    %174 = vmatpush1.msra.mxu0 0.0
    %175 = vmatprep.subr.mxu0 0.0
    %176 = vmatpush1.msra.mxu0 0.0
    %177 = vmatprep.subr.mxu0 0.0
    %178 = vmatpush1.msra.mxu0 0.0
    %179 = vmatprep.subr.mxu0 0.0
    %180 = vmatpush1.msra.mxu0 0.0
    %181 = vmatprep.subr.mxu0 0.0
    %182 = vmatpush1.msra.mxu0 0.0
    %183 = vmatprep.subr.mxu0 0.0
    %184 = vmatpush1.msra.mxu0 0.0
    %185 = vmatprep.subr.mxu0 0.0
    %186 = vmatpush1.msra.mxu0 0.0
    %187 = vmatprep.subr.mxu0 0.0
    %188 = vmatpush1.msra.mxu0 0.0
    %189 = vmatprep.subr.mxu0 0.0
    %190 = vmatpush1.msra.mxu0 0.0
    %191 = vmatprep.subr.mxu0 0.0
    %192 = vmatpush1.msra.mxu0 0.0
    %193 = vmatprep.subr.mxu0 0.0
    %194 = vmatpush1.msra.mxu0 0.0
    %195 = vmatprep.subr.mxu0 0.0
    %196 = vmatpush1.msra.mxu0 0.0
    %197 = vmatprep.subr.mxu0 0.0
    %198 = vmatpush1.msra.mxu0 0.0
    %199 = vmatprep.subr.mxu0 0.0
    %200 = vmatpush1.msra.mxu0 0.0
    %201 = vmatprep.subr.mxu0 0.0
    %v202 = vand.u32 %v34, 4294901760
    %v203 = vsub.f32 %v34, %v202
    %v204 = vand.u32 %v203, 4294901760
    %v205 = vsub.f32 %v203, %v204
    %v206 = vand.u32 %v205, 4294901760
    %207 = vmatpush1.msra.mxu0 %v206
    %208 = vmatprep.subr.mxu0 0.0
    %v209 = vand.u32 %v33, 4294901760
    %v210 = vsub.f32 %v33, %v209
    %v211 = vand.u32 %v210, 4294901760
    %v212 = vsub.f32 %v210, %v211
    %v213 = vand.u32 %v212, 4294901760
    %214 = vmatpush1.msra.mxu0 %v213
    %215 = vmatprep.subr.mxu0 0.0
    %216 = vmatpush2.msra.mxu0 0.0
    %217 = vmatprep.subr.mxu0 0.0
    %218 = vmatpush2.msra.mxu0 0.0
    %219 = vmatprep.subr.mxu0 0.0
    %220 = vmatpush2.msra.mxu0 0.0
    %221 = vmatprep.subr.mxu0 0.0
    %222 = vmatpush2.msra.mxu0 0.0
    %223 = vmatprep.subr.mxu0 0.0
    %224 = vmatpush2.msra.mxu0 0.0
    %225 = vmatprep.subr.mxu0 0.0
    %226 = vmatpush2.msra.mxu0 0.0
    %227 = vmatprep.subr.mxu0 0.0
    %228 = vmatpush2.msra.mxu0 0.0
    %229 = vmatprep.subr.mxu0 0.0
    %230 = vmatpush2.msra.mxu0 0.0
    %231 = vmatprep.subr.mxu0 0.0
    %232 = vmatpush2.msra.mxu0 0.0
    %233 = vmatprep.subr.mxu0 0.0
    %234 = vmatpush2.msra.mxu0 0.0
    %235 = vmatprep.subr.mxu0 0.0
    %236 = vmatpush2.msra.mxu0 0.0
    %237 = vmatprep.subr.mxu0 0.0
    %238 = vmatpush2.msra.mxu0 0.0
    %239 = vmatprep.subr.mxu0 0.0
    %240 = vmatpush2.msra.mxu0 0.0
    %241 = vmatprep.subr.mxu0 0.0
    %242 = vmatpush2.msra.mxu0 0.0
    %243 = vmatprep.subr.mxu0 0.0
    %244 = vmatpush2.msra.mxu0 0.0
    %245 = vmatprep.subr.mxu0 0.0
    %246 = vmatpush2.msra.mxu0 0.0
    %247 = vmatprep.mubr.f32.mxu0 0.0
    %v248 = vand.u32 %v55, 4294901760
    %249 = vmatmul.mubr.f32.gmra.mxu0 %v248
    %v250 = vpop.f32.mrf.mxu0
    %v251 = vadd.f32 %v140, %v250
    %v252 = vpop.f32.mrf.mxu0
    %253 = vmatprep.mubr.f32.mxu0 0.0
    %v254 = vand.u32 %v58, 4294901760
    %255 = vmatmul.mubr.f32.gmra.mxu0 %v254
    %v256 = vpop.f32.mrf.mxu0
    %v257 = vadd.f32 %v150, %v256
    %v258 = vpop.f32.mrf.mxu0
    %259 = vmatprep.mubr.f32.mxu0 0.0
    %v260 = vand.u32 %v61, 4294901760
    %261 = vmatmul.mubr.f32.gmra.mxu0 %v260
    %v262 = vpop.f32.mrf.mxu0
    %v263 = vadd.f32 %v160, %v262
    %v264 = vpop.f32.mrf.mxu0
    %265 = vmatprep.mubr.f32.mxu0 0.0
    %v266 = vand.u32 %v64, 4294901760
    %267 = vmatmul.mubr.f32.gmra.mxu0 %v266
    %v268 = vpop.f32.mrf.mxu0
    %v269 = vadd.f32 %v170, %v268
    %v270 = vpop.f32.mrf.mxu0
    %271 = vdwg.mxu0
    %272 = vmatprep.subr.mxu0 0.0
    %273 = vmatpush1.msra.mxu0 0.0
    %274 = vmatprep.subr.mxu0 0.0
    %275 = vmatpush1.msra.mxu0 0.0
    %276 = vmatprep.subr.mxu0 0.0
    %277 = vmatpush1.msra.mxu0 0.0
    %278 = vmatprep.subr.mxu0 0.0
    %279 = vmatpush1.msra.mxu0 0.0
    %280 = vmatprep.subr.mxu0 0.0
    %281 = vmatpush1.msra.mxu0 0.0
    %282 = vmatprep.subr.mxu0 0.0
    %283 = vmatpush1.msra.mxu0 0.0
    %284 = vmatprep.subr.mxu0 0.0
    %285 = vmatpush1.msra.mxu0 0.0
    %286 = vmatprep.subr.mxu0 0.0
    %287 = vmatpush1.msra.mxu0 0.0
    %288 = vmatprep.subr.mxu0 0.0
    %289 = vmatpush1.msra.mxu0 0.0
    %290 = vmatprep.subr.mxu0 0.0
    %291 = vmatpush1.msra.mxu0 0.0
    %292 = vmatprep.subr.mxu0 0.0
    %293 = vmatpush1.msra.mxu0 0.0
    %294 = vmatprep.subr.mxu0 0.0
    %295 = vmatpush1.msra.mxu0 0.0
    %296 = vmatprep.subr.mxu0 0.0
    %297 = vmatpush1.msra.mxu0 0.0
    %298 = vmatprep.subr.mxu0 0.0
    %299 = vmatpush1.msra.mxu0 0.0
    %300 = vmatprep.subr.mxu0 0.0
    %v301 = vand.u32 %v34, 4294901760
    %v302 = vsub.f32 %v34, %v301
    %303 = vmatpush1.msra.mxu0 %v302
    %304 = vmatprep.subr.mxu0 0.0
    %v305 = vand.u32 %v33, 4294901760
    %v306 = vsub.f32 %v33, %v305
    %307 = vmatpush1.msra.mxu0 %v306
    %308 = vmatprep.subr.mxu0 0.0
    %309 = vmatpush2.msra.mxu0 0.0
    %310 = vmatprep.subr.mxu0 0.0
    %311 = vmatpush2.msra.mxu0 0.0
    %312 = vmatprep.subr.mxu0 0.0
    %313 = vmatpush2.msra.mxu0 0.0
    %314 = vmatprep.subr.mxu0 0.0
    %315 = vmatpush2.msra.mxu0 0.0
    %316 = vmatprep.subr.mxu0 0.0
    %317 = vmatpush2.msra.mxu0 0.0
    %318 = vmatprep.subr.mxu0 0.0
    %319 = vmatpush2.msra.mxu0 0.0
    %320 = vmatprep.subr.mxu0 0.0
    %321 = vmatpush2.msra.mxu0 0.0
    %322 = vmatprep.subr.mxu0 0.0
    %323 = vmatpush2.msra.mxu0 0.0
    %324 = vmatprep.subr.mxu0 0.0
    %325 = vmatpush2.msra.mxu0 0.0
    %326 = vmatprep.subr.mxu0 0.0
    %327 = vmatpush2.msra.mxu0 0.0
    %328 = vmatprep.subr.mxu0 0.0
    %329 = vmatpush2.msra.mxu0 0.0
    %330 = vmatprep.subr.mxu0 0.0
    %331 = vmatpush2.msra.mxu0 0.0
    %332 = vmatprep.subr.mxu0 0.0
    %333 = vmatpush2.msra.mxu0 0.0
    %334 = vmatprep.subr.mxu0 0.0
    %335 = vmatpush2.msra.mxu0 0.0
    %336 = vmatprep.subr.mxu0 0.0
    %337 = vmatpush2.msra.mxu0 0.0
    %338 = vmatprep.subr.mxu0 0.0
    %339 = vmatpush2.msra.mxu0 0.0
    %340 = vmatprep.mubr.f32.mxu0 0.0
    %v341 = vand.u32 %v55, 4294901760
    %v342 = vsub.f32 %v55, %v341
    %343 = vmatmul.mubr.f32.gmra.mxu0 %v342
    %v344 = vpop.f32.mrf.mxu0
    %v345 = vadd.f32 %v251, %v344
    %v346 = vpop.f32.mrf.mxu0
    %347 = vmatprep.mubr.f32.mxu0 0.0
    %v348 = vand.u32 %v58, 4294901760
    %v349 = vsub.f32 %v58, %v348
    %350 = vmatmul.mubr.f32.gmra.mxu0 %v349
    %v351 = vpop.f32.mrf.mxu0
    %v352 = vadd.f32 %v257, %v351
    %v353 = vpop.f32.mrf.mxu0
    %354 = vmatprep.mubr.f32.mxu0 0.0
    %v355 = vand.u32 %v61, 4294901760
    %v356 = vsub.f32 %v61, %v355
    %357 = vmatmul.mubr.f32.gmra.mxu0 %v356
    %v358 = vpop.f32.mrf.mxu0
    %v359 = vadd.f32 %v263, %v358
    %v360 = vpop.f32.mrf.mxu0
    %361 = vmatprep.mubr.f32.mxu0 0.0
    %v362 = vand.u32 %v64, 4294901760
    %v363 = vsub.f32 %v64, %v362
    %364 = vmatmul.mubr.f32.gmra.mxu0 %v363
    %v365 = vpop.f32.mrf.mxu0
    %v366 = vadd.f32 %v269, %v365
    %v367 = vpop.f32.mrf.mxu0
    %368 = vdwg.mxu0
    %369 = vmatprep.subr.mxu0 0.0
    %370 = vmatpush1.msra.mxu0 0.0
    %371 = vmatprep.subr.mxu0 0.0
    %372 = vmatpush1.msra.mxu0 0.0
    %373 = vmatprep.subr.mxu0 0.0
    %374 = vmatpush1.msra.mxu0 0.0
    %375 = vmatprep.subr.mxu0 0.0
    %376 = vmatpush1.msra.mxu0 0.0
    %377 = vmatprep.subr.mxu0 0.0
    %378 = vmatpush1.msra.mxu0 0.0
    %379 = vmatprep.subr.mxu0 0.0
    %380 = vmatpush1.msra.mxu0 0.0
    %381 = vmatprep.subr.mxu0 0.0
    %382 = vmatpush1.msra.mxu0 0.0
    %383 = vmatprep.subr.mxu0 0.0
    %384 = vmatpush1.msra.mxu0 0.0
    %385 = vmatprep.subr.mxu0 0.0
    %386 = vmatpush1.msra.mxu0 0.0
    %387 = vmatprep.subr.mxu0 0.0
    %388 = vmatpush1.msra.mxu0 0.0
    %389 = vmatprep.subr.mxu0 0.0
    %390 = vmatpush1.msra.mxu0 0.0
    %391 = vmatprep.subr.mxu0 0.0
    %392 = vmatpush1.msra.mxu0 0.0
    %393 = vmatprep.subr.mxu0 0.0
    %394 = vmatpush1.msra.mxu0 0.0
    %395 = vmatprep.subr.mxu0 0.0
    %396 = vmatpush1.msra.mxu0 0.0
    %397 = vmatprep.subr.mxu0 0.0
    %v398 = vand.u32 %v34, 4294901760
    %399 = vmatpush1.msra.mxu0 %v398
    %400 = vmatprep.subr.mxu0 0.0
    %v401 = vand.u32 %v33, 4294901760
    %402 = vmatpush1.msra.mxu0 %v401
    %403 = vmatprep.subr.mxu0 0.0
    %404 = vmatpush2.msra.mxu0 0.0
    %405 = vmatprep.subr.mxu0 0.0
    %406 = vmatpush2.msra.mxu0 0.0
    %407 = vmatprep.subr.mxu0 0.0
    %408 = vmatpush2.msra.mxu0 0.0
    %409 = vmatprep.subr.mxu0 0.0
    %410 = vmatpush2.msra.mxu0 0.0
    %411 = vmatprep.subr.mxu0 0.0
    %412 = vmatpush2.msra.mxu0 0.0
    %413 = vmatprep.subr.mxu0 0.0
    %414 = vmatpush2.msra.mxu0 0.0
    %415 = vmatprep.subr.mxu0 0.0
    %416 = vmatpush2.msra.mxu0 0.0
    %417 = vmatprep.subr.mxu0 0.0
    %418 = vmatpush2.msra.mxu0 0.0
    %419 = vmatprep.subr.mxu0 0.0
    %420 = vmatpush2.msra.mxu0 0.0
    %421 = vmatprep.subr.mxu0 0.0
    %422 = vmatpush2.msra.mxu0 0.0
    %423 = vmatprep.subr.mxu0 0.0
    %424 = vmatpush2.msra.mxu0 0.0
    %425 = vmatprep.subr.mxu0 0.0
    %426 = vmatpush2.msra.mxu0 0.0
    %427 = vmatprep.subr.mxu0 0.0
    %428 = vmatpush2.msra.mxu0 0.0
    %429 = vmatprep.subr.mxu0 0.0
    %430 = vmatpush2.msra.mxu0 0.0
    %431 = vmatprep.subr.mxu0 0.0
    %432 = vmatpush2.msra.mxu0 0.0
    %433 = vmatprep.subr.mxu0 0.0
    %434 = vmatpush2.msra.mxu0 0.0
    %435 = vmatprep.mubr.f32.mxu0 0.0
    %v436 = vand.u32 %v55, 4294901760
    %v437 = vsub.f32 %v55, %v436
    %v438 = vand.u32 %v437, 4294901760
    %439 = vmatmul.mubr.f32.gmra.mxu0 %v438
    %v440 = vpop.f32.mrf.mxu0
    %v441 = vadd.f32 %v345, %v440
    %v442 = vpop.f32.mrf.mxu0
    %443 = vmatprep.mubr.f32.mxu0 0.0
    %v444 = vand.u32 %v58, 4294901760
    %v445 = vsub.f32 %v58, %v444
    %v446 = vand.u32 %v445, 4294901760
    %447 = vmatmul.mubr.f32.gmra.mxu0 %v446
    %v448 = vpop.f32.mrf.mxu0
    %v449 = vadd.f32 %v352, %v448
    %v450 = vpop.f32.mrf.mxu0
    %451 = vmatprep.mubr.f32.mxu0 0.0
    %v452 = vand.u32 %v61, 4294901760
    %v453 = vsub.f32 %v61, %v452
    %v454 = vand.u32 %v453, 4294901760
    %455 = vmatmul.mubr.f32.gmra.mxu0 %v454
    %v456 = vpop.f32.mrf.mxu0
    %v457 = vadd.f32 %v359, %v456
    %v458 = vpop.f32.mrf.mxu0
    %459 = vmatprep.mubr.f32.mxu0 0.0
    %v460 = vand.u32 %v64, 4294901760
    %v461 = vsub.f32 %v64, %v460
    %v462 = vand.u32 %v461, 4294901760
    %463 = vmatmul.mubr.f32.gmra.mxu0 %v462
    %v464 = vpop.f32.mrf.mxu0
    %v465 = vadd.f32 %v366, %v464
    %v466 = vpop.f32.mrf.mxu0
    %467 = vdwg.mxu0
    %468 = vmatprep.subr.mxu0 0.0
    %469 = vmatpush1.msra.mxu0 0.0
    %470 = vmatprep.subr.mxu0 0.0
    %471 = vmatpush1.msra.mxu0 0.0
    %472 = vmatprep.subr.mxu0 0.0
    %473 = vmatpush1.msra.mxu0 0.0
    %474 = vmatprep.subr.mxu0 0.0
    %475 = vmatpush1.msra.mxu0 0.0
    %476 = vmatprep.subr.mxu0 0.0
    %477 = vmatpush1.msra.mxu0 0.0
    %478 = vmatprep.subr.mxu0 0.0
    %479 = vmatpush1.msra.mxu0 0.0
    %480 = vmatprep.subr.mxu0 0.0
    %481 = vmatpush1.msra.mxu0 0.0
    %482 = vmatprep.subr.mxu0 0.0
    %483 = vmatpush1.msra.mxu0 0.0
    %484 = vmatprep.subr.mxu0 0.0
    %485 = vmatpush1.msra.mxu0 0.0
    %486 = vmatprep.subr.mxu0 0.0
    %487 = vmatpush1.msra.mxu0 0.0
    %488 = vmatprep.subr.mxu0 0.0
    %489 = vmatpush1.msra.mxu0 0.0
    %490 = vmatprep.subr.mxu0 0.0
    %491 = vmatpush1.msra.mxu0 0.0
    %492 = vmatprep.subr.mxu0 0.0
    %493 = vmatpush1.msra.mxu0 0.0
    %494 = vmatprep.subr.mxu0 0.0
    %495 = vmatpush1.msra.mxu0 0.0
    %496 = vmatprep.subr.mxu0 0.0
    %v497 = vand.u32 %v34, 4294901760
    %v498 = vsub.f32 %v34, %v497
    %v499 = vand.u32 %v498, 4294901760
    %500 = vmatpush1.msra.mxu0 %v499
    %501 = vmatprep.subr.mxu0 0.0
    %v502 = vand.u32 %v33, 4294901760
    %v503 = vsub.f32 %v33, %v502
    %v504 = vand.u32 %v503, 4294901760
    %505 = vmatpush1.msra.mxu0 %v504
    %506 = vmatprep.subr.mxu0 0.0
    %507 = vmatpush2.msra.mxu0 0.0
    %508 = vmatprep.subr.mxu0 0.0
    %509 = vmatpush2.msra.mxu0 0.0
    %510 = vmatprep.subr.mxu0 0.0
    %511 = vmatpush2.msra.mxu0 0.0
    %512 = vmatprep.subr.mxu0 0.0
    %513 = vmatpush2.msra.mxu0 0.0
    %514 = vmatprep.subr.mxu0 0.0
    %515 = vmatpush2.msra.mxu0 0.0
    %516 = vmatprep.subr.mxu0 0.0
    %517 = vmatpush2.msra.mxu0 0.0
    %518 = vmatprep.subr.mxu0 0.0
    %519 = vmatpush2.msra.mxu0 0.0
    %520 = vmatprep.subr.mxu0 0.0
    %521 = vmatpush2.msra.mxu0 0.0
    %522 = vmatprep.subr.mxu0 0.0
    %523 = vmatpush2.msra.mxu0 0.0
    %524 = vmatprep.subr.mxu0 0.0
    %525 = vmatpush2.msra.mxu0 0.0
    %526 = vmatprep.subr.mxu0 0.0
    %527 = vmatpush2.msra.mxu0 0.0
    %528 = vmatprep.subr.mxu0 0.0
    %529 = vmatpush2.msra.mxu0 0.0
    %530 = vmatprep.subr.mxu0 0.0
    %531 = vmatpush2.msra.mxu0 0.0
    %532 = vmatprep.subr.mxu0 0.0
    %533 = vmatpush2.msra.mxu0 0.0
    %534 = vmatprep.subr.mxu0 0.0
    %535 = vmatpush2.msra.mxu0 0.0
    %536 = vmatprep.subr.mxu0 0.0
    %537 = vmatpush2.msra.mxu0 0.0
    %538 = vmatprep.mubr.f32.mxu0 0.0
    %v539 = vand.u32 %v55, 4294901760
    %540 = vmatmul.mubr.f32.gmra.mxu0 %v539
    %v541 = vpop.f32.mrf.mxu0
    %v542 = vadd.f32 %v441, %v541
    %v543 = vpop.f32.mrf.mxu0
    %544 = vmatprep.mubr.f32.mxu0 0.0
    %v545 = vand.u32 %v58, 4294901760
    %546 = vmatmul.mubr.f32.gmra.mxu0 %v545
    %v547 = vpop.f32.mrf.mxu0
    %v548 = vadd.f32 %v449, %v547
    %v549 = vpop.f32.mrf.mxu0
    %550 = vmatprep.mubr.f32.mxu0 0.0
    %v551 = vand.u32 %v61, 4294901760
    %552 = vmatmul.mubr.f32.gmra.mxu0 %v551
    %v553 = vpop.f32.mrf.mxu0
    %v554 = vadd.f32 %v457, %v553
    %v555 = vpop.f32.mrf.mxu0
    %556 = vmatprep.mubr.f32.mxu0 0.0
    %v557 = vand.u32 %v64, 4294901760
    %558 = vmatmul.mubr.f32.gmra.mxu0 %v557
    %v559 = vpop.f32.mrf.mxu0
    %v560 = vadd.f32 %v465, %v559
    %v561 = vpop.f32.mrf.mxu0
    %562 = vdwg.mxu0
    %563 = vmatprep.subr.mxu0 0.0
    %564 = vmatpush1.msra.mxu0 0.0
    %565 = vmatprep.subr.mxu0 0.0
    %566 = vmatpush1.msra.mxu0 0.0
    %567 = vmatprep.subr.mxu0 0.0
    %568 = vmatpush1.msra.mxu0 0.0
    %569 = vmatprep.subr.mxu0 0.0
    %570 = vmatpush1.msra.mxu0 0.0
    %571 = vmatprep.subr.mxu0 0.0
    %572 = vmatpush1.msra.mxu0 0.0
    %573 = vmatprep.subr.mxu0 0.0
    %574 = vmatpush1.msra.mxu0 0.0
    %575 = vmatprep.subr.mxu0 0.0
    %576 = vmatpush1.msra.mxu0 0.0
    %577 = vmatprep.subr.mxu0 0.0
    %578 = vmatpush1.msra.mxu0 0.0
    %579 = vmatprep.subr.mxu0 0.0
    %580 = vmatpush1.msra.mxu0 0.0
    %581 = vmatprep.subr.mxu0 0.0
    %582 = vmatpush1.msra.mxu0 0.0
    %583 = vmatprep.subr.mxu0 0.0
    %584 = vmatpush1.msra.mxu0 0.0
    %585 = vmatprep.subr.mxu0 0.0
    %586 = vmatpush1.msra.mxu0 0.0
    %587 = vmatprep.subr.mxu0 0.0
    %588 = vmatpush1.msra.mxu0 0.0
    %589 = vmatprep.subr.mxu0 0.0
    %590 = vmatpush1.msra.mxu0 0.0
    %591 = vmatprep.subr.mxu0 0.0
    %v592 = vand.u32 %v34, 4294901760
    %593 = vmatpush1.msra.mxu0 %v592
    %594 = vmatprep.subr.mxu0 0.0
    %v595 = vand.u32 %v33, 4294901760
    %596 = vmatpush1.msra.mxu0 %v595
    %597 = vmatprep.subr.mxu0 0.0
    %598 = vmatpush2.msra.mxu0 0.0
    %599 = vmatprep.subr.mxu0 0.0
    %600 = vmatpush2.msra.mxu0 0.0
    %601 = vmatprep.subr.mxu0 0.0
    %602 = vmatpush2.msra.mxu0 0.0
    %603 = vmatprep.subr.mxu0 0.0
    %604 = vmatpush2.msra.mxu0 0.0
    %605 = vmatprep.subr.mxu0 0.0
    %606 = vmatpush2.msra.mxu0 0.0
    %607 = vmatprep.subr.mxu0 0.0
    %608 = vmatpush2.msra.mxu0 0.0
    %609 = vmatprep.subr.mxu0 0.0
    %610 = vmatpush2.msra.mxu0 0.0
    %611 = vmatprep.subr.mxu0 0.0
    %612 = vmatpush2.msra.mxu0 0.0
    %613 = vmatprep.subr.mxu0 0.0
    %614 = vmatpush2.msra.mxu0 0.0
    %615 = vmatprep.subr.mxu0 0.0
    %616 = vmatpush2.msra.mxu0 0.0
    %617 = vmatprep.subr.mxu0 0.0
    %618 = vmatpush2.msra.mxu0 0.0
    %619 = vmatprep.subr.mxu0 0.0
    %620 = vmatpush2.msra.mxu0 0.0
    %621 = vmatprep.subr.mxu0 0.0
    %622 = vmatpush2.msra.mxu0 0.0
    %623 = vmatprep.subr.mxu0 0.0
    %624 = vmatpush2.msra.mxu0 0.0
    %625 = vmatprep.subr.mxu0 0.0
    %626 = vmatpush2.msra.mxu0 0.0
    %627 = vmatprep.subr.mxu0 0.0
    %628 = vmatpush2.msra.mxu0 0.0
    %629 = vmatprep.mubr.f32.mxu0 0.0
    %v630 = vand.u32 %v55, 4294901760
    %631 = vmatmul.mubr.f32.gmra.mxu0 %v630
    %v632 = vpop.f32.mrf.mxu0
    %v633 = vadd.f32 %v542, %v632
    %v634 = vpop.f32.mrf.mxu0
    %635 = vmatprep.mubr.f32.mxu0 0.0
    %v636 = vand.u32 %v58, 4294901760
    %637 = vmatmul.mubr.f32.gmra.mxu0 %v636
    %v638 = vpop.f32.mrf.mxu0
    %v639 = vadd.f32 %v548, %v638
    %v640 = vpop.f32.mrf.mxu0
    %641 = vmatprep.mubr.f32.mxu0 0.0
    %v642 = vand.u32 %v61, 4294901760
    %643 = vmatmul.mubr.f32.gmra.mxu0 %v642
    %v644 = vpop.f32.mrf.mxu0
    %v645 = vadd.f32 %v554, %v644
    %v646 = vpop.f32.mrf.mxu0
    %647 = vmatprep.mubr.f32.mxu0 0.0
    %v648 = vand.u32 %v64, 4294901760
    %649 = vmatmul.mubr.f32.gmra.mxu0 %v648
    %v650 = vpop.f32.mrf.mxu0
    %v651 = vadd.f32 %v560, %v650
    %v652 = vpop.f32.mrf.mxu0
    %653 = vdwg.mxu0
    %654 = vmatprep.subr.mxu0 0.0
    %655 = vmatpush1.msra.mxu0 0.0
    %656 = vmatprep.subr.mxu0 0.0
    %657 = vmatpush1.msra.mxu0 0.0
    %658 = vmatprep.subr.mxu0 0.0
    %659 = vmatpush1.msra.mxu0 0.0
    %660 = vmatprep.subr.mxu0 0.0
    %661 = vmatpush1.msra.mxu0 0.0
    %662 = vmatprep.subr.mxu0 0.0
    %663 = vmatpush1.msra.mxu0 0.0
    %664 = vmatprep.subr.mxu0 0.0
    %665 = vmatpush1.msra.mxu0 0.0
    %666 = vmatprep.subr.mxu0 0.0
    %667 = vmatpush1.msra.mxu0 0.0
    %668 = vmatprep.subr.mxu0 0.0
    %669 = vmatpush1.msra.mxu0 0.0
    %670 = vmatprep.subr.mxu0 0.0
    %671 = vmatpush1.msra.mxu0 0.0
    %672 = vmatprep.subr.mxu0 0.0
    %673 = vmatpush1.msra.mxu0 0.0
    %674 = vmatprep.subr.mxu0 0.0
    %675 = vmatpush1.msra.mxu0 0.0
    %676 = vmatprep.subr.mxu0 0.0
    %677 = vmatpush1.msra.mxu0 0.0
    %678 = vmatprep.subr.mxu0 0.0
    %679 = vmatpush1.msra.mxu0 0.0
    %680 = vmatprep.subr.mxu0 0.0
    %681 = vmatpush1.msra.mxu0 0.0
    %682 = vmatprep.subr.mxu0 0.0
    %v683 = vand.u32 %v36, 4294901760
    %684 = vmatpush1.msra.mxu0 %v683
    %685 = vmatprep.subr.mxu0 0.0
    %v686 = vand.u32 %v35, 4294901760
    %687 = vmatpush1.msra.mxu0 %v686
    %688 = vmatprep.subr.mxu0 0.0
    %689 = vmatpush2.msra.mxu0 0.0
    %690 = vmatprep.subr.mxu0 0.0
    %691 = vmatpush2.msra.mxu0 0.0
    %692 = vmatprep.subr.mxu0 0.0
    %693 = vmatpush2.msra.mxu0 0.0
    %694 = vmatprep.subr.mxu0 0.0
    %695 = vmatpush2.msra.mxu0 0.0
    %696 = vmatprep.subr.mxu0 0.0
    %697 = vmatpush2.msra.mxu0 0.0
    %698 = vmatprep.subr.mxu0 0.0
    %699 = vmatpush2.msra.mxu0 0.0
    %700 = vmatprep.subr.mxu0 0.0
    %701 = vmatpush2.msra.mxu0 0.0
    %702 = vmatprep.subr.mxu0 0.0
    %703 = vmatpush2.msra.mxu0 0.0
    %704 = vmatprep.subr.mxu0 0.0
    %705 = vmatpush2.msra.mxu0 0.0
    %706 = vmatprep.subr.mxu0 0.0
    %707 = vmatpush2.msra.mxu0 0.0
    %708 = vmatprep.subr.mxu0 0.0
    %709 = vmatpush2.msra.mxu0 0.0
    %710 = vmatprep.subr.mxu0 0.0
    %711 = vmatpush2.msra.mxu0 0.0
    %712 = vmatprep.subr.mxu0 0.0
    %713 = vmatpush2.msra.mxu0 0.0
    %714 = vmatprep.subr.mxu0 0.0
    %715 = vmatpush2.msra.mxu0 0.0
    %716 = vmatprep.subr.mxu0 0.0
    %717 = vmatpush2.msra.mxu0 0.0
    %718 = vmatprep.subr.mxu0 0.0
    %719 = vmatpush2.msra.mxu0 0.0
    %720 = vmatprep.mubr.f32.mxu0 0.0
    %v721 = vand.u32 %v55, 4294901760
    %v722 = vsub.f32 %v55, %v721
    %v723 = vand.u32 %v722, 4294901760
    %v724 = vsub.f32 %v722, %v723
    %v725 = vand.u32 %v724, 4294901760
    %726 = vmatmul.mubr.f32.gmra.mxu0 %v725
    %v727 = vpop.f32.mrf.mxu0
    %v728 = vadd.f32 0.0, %v727
    %v729 = vpop.f32.mrf.mxu0
    %730 = vmatprep.mubr.f32.mxu0 0.0
    %v731 = vand.u32 %v58, 4294901760
    %v732 = vsub.f32 %v58, %v731
    %v733 = vand.u32 %v732, 4294901760
    %v734 = vsub.f32 %v732, %v733
    %v735 = vand.u32 %v734, 4294901760
    %736 = vmatmul.mubr.f32.gmra.mxu0 %v735
    %v737 = vpop.f32.mrf.mxu0
    %v738 = vadd.f32 0.0, %v737
    %v739 = vpop.f32.mrf.mxu0
    %740 = vmatprep.mubr.f32.mxu0 0.0
    %v741 = vand.u32 %v61, 4294901760
    %v742 = vsub.f32 %v61, %v741
    %v743 = vand.u32 %v742, 4294901760
    %v744 = vsub.f32 %v742, %v743
    %v745 = vand.u32 %v744, 4294901760
    %746 = vmatmul.mubr.f32.gmra.mxu0 %v745
    %v747 = vpop.f32.mrf.mxu0
    %v748 = vadd.f32 0.0, %v747
    %v749 = vpop.f32.mrf.mxu0
    %750 = vmatprep.mubr.f32.mxu0 0.0
    %v751 = vand.u32 %v64, 4294901760
    %v752 = vsub.f32 %v64, %v751
    %v753 = vand.u32 %v752, 4294901760
    %v754 = vsub.f32 %v752, %v753
    %v755 = vand.u32 %v754, 4294901760
    %756 = vmatmul.mubr.f32.gmra.mxu0 %v755
    %v757 = vpop.f32.mrf.mxu0
    %v758 = vadd.f32 0.0, %v757
    %v759 = vpop.f32.mrf.mxu0
    %760 = vdwg.mxu0
    %761 = vmatprep.subr.mxu0 0.0
    %762 = vmatpush1.msra.mxu0 0.0
    %763 = vmatprep.subr.mxu0 0.0
    %764 = vmatpush1.msra.mxu0 0.0
    %765 = vmatprep.subr.mxu0 0.0
    %766 = vmatpush1.msra.mxu0 0.0
    %767 = vmatprep.subr.mxu0 0.0
    %768 = vmatpush1.msra.mxu0 0.0
    %769 = vmatprep.subr.mxu0 0.0
    %770 = vmatpush1.msra.mxu0 0.0
    %771 = vmatprep.subr.mxu0 0.0
    %772 = vmatpush1.msra.mxu0 0.0
    %773 = vmatprep.subr.mxu0 0.0
    %774 = vmatpush1.msra.mxu0 0.0
    %775 = vmatprep.subr.mxu0 0.0
    %776 = vmatpush1.msra.mxu0 0.0
    %777 = vmatprep.subr.mxu0 0.0
    %778 = vmatpush1.msra.mxu0 0.0
    %779 = vmatprep.subr.mxu0 0.0
    %780 = vmatpush1.msra.mxu0 0.0
    %781 = vmatprep.subr.mxu0 0.0
    %782 = vmatpush1.msra.mxu0 0.0
    %783 = vmatprep.subr.mxu0 0.0
    %784 = vmatpush1.msra.mxu0 0.0
    %785 = vmatprep.subr.mxu0 0.0
    %786 = vmatpush1.msra.mxu0 0.0
    %787 = vmatprep.subr.mxu0 0.0
    %788 = vmatpush1.msra.mxu0 0.0
    %789 = vmatprep.subr.mxu0 0.0
    %v790 = vand.u32 %v36, 4294901760
    %v791 = vsub.f32 %v36, %v790
    %v792 = vand.u32 %v791, 4294901760
    %v793 = vsub.f32 %v791, %v792
    %v794 = vand.u32 %v793, 4294901760
    %795 = vmatpush1.msra.mxu0 %v794
    %796 = vmatprep.subr.mxu0 0.0
    %v797 = vand.u32 %v35, 4294901760
    %v798 = vsub.f32 %v35, %v797
    %v799 = vand.u32 %v798, 4294901760
    %v800 = vsub.f32 %v798, %v799
    %v801 = vand.u32 %v800, 4294901760
    %802 = vmatpush1.msra.mxu0 %v801
    %803 = vmatprep.subr.mxu0 0.0
    %804 = vmatpush2.msra.mxu0 0.0
    %805 = vmatprep.subr.mxu0 0.0
    %806 = vmatpush2.msra.mxu0 0.0
    %807 = vmatprep.subr.mxu0 0.0
    %808 = vmatpush2.msra.mxu0 0.0
    %809 = vmatprep.subr.mxu0 0.0
    %810 = vmatpush2.msra.mxu0 0.0
    %811 = vmatprep.subr.mxu0 0.0
    %812 = vmatpush2.msra.mxu0 0.0
    %813 = vmatprep.subr.mxu0 0.0
    %814 = vmatpush2.msra.mxu0 0.0
    %815 = vmatprep.subr.mxu0 0.0
    %816 = vmatpush2.msra.mxu0 0.0
    %817 = vmatprep.subr.mxu0 0.0
    %818 = vmatpush2.msra.mxu0 0.0
    %819 = vmatprep.subr.mxu0 0.0
    %820 = vmatpush2.msra.mxu0 0.0
    %821 = vmatprep.subr.mxu0 0.0
    %822 = vmatpush2.msra.mxu0 0.0
    %823 = vmatprep.subr.mxu0 0.0
    %824 = vmatpush2.msra.mxu0 0.0
    %825 = vmatprep.subr.mxu0 0.0
    %826 = vmatpush2.msra.mxu0 0.0
    %827 = vmatprep.subr.mxu0 0.0
    %828 = vmatpush2.msra.mxu0 0.0
    %829 = vmatprep.subr.mxu0 0.0
    %830 = vmatpush2.msra.mxu0 0.0
    %831 = vmatprep.subr.mxu0 0.0
    %832 = vmatpush2.msra.mxu0 0.0
    %833 = vmatprep.subr.mxu0 0.0
    %834 = vmatpush2.msra.mxu0 0.0
    %835 = vmatprep.mubr.f32.mxu0 0.0
    %v836 = vand.u32 %v55, 4294901760
    %837 = vmatmul.mubr.f32.gmra.mxu0 %v836
    %v838 = vpop.f32.mrf.mxu0
    %v839 = vadd.f32 %v728, %v838
    %v840 = vpop.f32.mrf.mxu0
    %841 = vmatprep.mubr.f32.mxu0 0.0
    %v842 = vand.u32 %v58, 4294901760
    %843 = vmatmul.mubr.f32.gmra.mxu0 %v842
    %v844 = vpop.f32.mrf.mxu0
    %v845 = vadd.f32 %v738, %v844
    %v846 = vpop.f32.mrf.mxu0
    %847 = vmatprep.mubr.f32.mxu0 0.0
    %v848 = vand.u32 %v61, 4294901760
    %849 = vmatmul.mubr.f32.gmra.mxu0 %v848
    %v850 = vpop.f32.mrf.mxu0
    %v851 = vadd.f32 %v748, %v850
    %v852 = vpop.f32.mrf.mxu0
    %853 = vmatprep.mubr.f32.mxu0 0.0
    %v854 = vand.u32 %v64, 4294901760
    %855 = vmatmul.mubr.f32.gmra.mxu0 %v854
    %v856 = vpop.f32.mrf.mxu0
    %v857 = vadd.f32 %v758, %v856
    %v858 = vpop.f32.mrf.mxu0
    %859 = vdwg.mxu0
    %860 = vmatprep.subr.mxu0 0.0
    %861 = vmatpush1.msra.mxu0 0.0
    %862 = vmatprep.subr.mxu0 0.0
    %863 = vmatpush1.msra.mxu0 0.0
    %864 = vmatprep.subr.mxu0 0.0
    %865 = vmatpush1.msra.mxu0 0.0
    %866 = vmatprep.subr.mxu0 0.0
    %867 = vmatpush1.msra.mxu0 0.0
    %868 = vmatprep.subr.mxu0 0.0
    %869 = vmatpush1.msra.mxu0 0.0
    %870 = vmatprep.subr.mxu0 0.0
    %871 = vmatpush1.msra.mxu0 0.0
    %872 = vmatprep.subr.mxu0 0.0
    %873 = vmatpush1.msra.mxu0 0.0
    %874 = vmatprep.subr.mxu0 0.0
    %875 = vmatpush1.msra.mxu0 0.0
    %876 = vmatprep.subr.mxu0 0.0
    %877 = vmatpush1.msra.mxu0 0.0
    %878 = vmatprep.subr.mxu0 0.0
    %879 = vmatpush1.msra.mxu0 0.0
    %880 = vmatprep.subr.mxu0 0.0
    %881 = vmatpush1.msra.mxu0 0.0
    %882 = vmatprep.subr.mxu0 0.0
    %883 = vmatpush1.msra.mxu0 0.0
    %884 = vmatprep.subr.mxu0 0.0
    %885 = vmatpush1.msra.mxu0 0.0
    %886 = vmatprep.subr.mxu0 0.0
    %887 = vmatpush1.msra.mxu0 0.0
    %888 = vmatprep.subr.mxu0 0.0
    %v889 = vand.u32 %v36, 4294901760
    %v890 = vsub.f32 %v36, %v889
    %891 = vmatpush1.msra.mxu0 %v890
    %892 = vmatprep.subr.mxu0 0.0
    %v893 = vand.u32 %v35, 4294901760
    %v894 = vsub.f32 %v35, %v893
    %895 = vmatpush1.msra.mxu0 %v894
    %896 = vmatprep.subr.mxu0 0.0
    %897 = vmatpush2.msra.mxu0 0.0
    %898 = vmatprep.subr.mxu0 0.0
    %899 = vmatpush2.msra.mxu0 0.0
    %900 = vmatprep.subr.mxu0 0.0
    %901 = vmatpush2.msra.mxu0 0.0
    %902 = vmatprep.subr.mxu0 0.0
    %903 = vmatpush2.msra.mxu0 0.0
    %904 = vmatprep.subr.mxu0 0.0
    %905 = vmatpush2.msra.mxu0 0.0
    %906 = vmatprep.subr.mxu0 0.0
    %907 = vmatpush2.msra.mxu0 0.0
    %908 = vmatprep.subr.mxu0 0.0
    %909 = vmatpush2.msra.mxu0 0.0
    %910 = vmatprep.subr.mxu0 0.0
    %911 = vmatpush2.msra.mxu0 0.0
    %912 = vmatprep.subr.mxu0 0.0
    %913 = vmatpush2.msra.mxu0 0.0
    %914 = vmatprep.subr.mxu0 0.0
    %915 = vmatpush2.msra.mxu0 0.0
    %916 = vmatprep.subr.mxu0 0.0
    %917 = vmatpush2.msra.mxu0 0.0
    %918 = vmatprep.subr.mxu0 0.0
    %919 = vmatpush2.msra.mxu0 0.0
    %920 = vmatprep.subr.mxu0 0.0
    %921 = vmatpush2.msra.mxu0 0.0
    %922 = vmatprep.subr.mxu0 0.0
    %923 = vmatpush2.msra.mxu0 0.0
    %924 = vmatprep.subr.mxu0 0.0
    %925 = vmatpush2.msra.mxu0 0.0
    %926 = vmatprep.subr.mxu0 0.0
    %927 = vmatpush2.msra.mxu0 0.0
    %928 = vmatprep.mubr.f32.mxu0 0.0
    %v929 = vand.u32 %v55, 4294901760
    %v930 = vsub.f32 %v55, %v929
    %931 = vmatmul.mubr.f32.gmra.mxu0 %v930
    %v932 = vpop.f32.mrf.mxu0
    %v933 = vadd.f32 %v839, %v932
    %v934 = vpop.f32.mrf.mxu0
    %935 = vmatprep.mubr.f32.mxu0 0.0
    %v936 = vand.u32 %v58, 4294901760
    %v937 = vsub.f32 %v58, %v936
    %938 = vmatmul.mubr.f32.gmra.mxu0 %v937
    %v939 = vpop.f32.mrf.mxu0
    %v940 = vadd.f32 %v845, %v939
    %v941 = vpop.f32.mrf.mxu0
    %942 = vmatprep.mubr.f32.mxu0 0.0
    %v943 = vand.u32 %v61, 4294901760
    %v944 = vsub.f32 %v61, %v943
    %945 = vmatmul.mubr.f32.gmra.mxu0 %v944
    %v946 = vpop.f32.mrf.mxu0
    %v947 = vadd.f32 %v851, %v946
    %v948 = vpop.f32.mrf.mxu0
    %949 = vmatprep.mubr.f32.mxu0 0.0
    %v950 = vand.u32 %v64, 4294901760
    %v951 = vsub.f32 %v64, %v950
    %952 = vmatmul.mubr.f32.gmra.mxu0 %v951
    %v953 = vpop.f32.mrf.mxu0
    %v954 = vadd.f32 %v857, %v953
    %v955 = vpop.f32.mrf.mxu0
    %956 = vdwg.mxu0
    %957 = vmatprep.subr.mxu0 0.0
    %958 = vmatpush1.msra.mxu0 0.0
    %959 = vmatprep.subr.mxu0 0.0
    %960 = vmatpush1.msra.mxu0 0.0
    %961 = vmatprep.subr.mxu0 0.0
    %962 = vmatpush1.msra.mxu0 0.0
    %963 = vmatprep.subr.mxu0 0.0
    %964 = vmatpush1.msra.mxu0 0.0
    %965 = vmatprep.subr.mxu0 0.0
    %966 = vmatpush1.msra.mxu0 0.0
    %967 = vmatprep.subr.mxu0 0.0
    %968 = vmatpush1.msra.mxu0 0.0
    %969 = vmatprep.subr.mxu0 0.0
    %970 = vmatpush1.msra.mxu0 0.0
    %971 = vmatprep.subr.mxu0 0.0
    %972 = vmatpush1.msra.mxu0 0.0
    %973 = vmatprep.subr.mxu0 0.0
    %974 = vmatpush1.msra.mxu0 0.0
    %975 = vmatprep.subr.mxu0 0.0
    %976 = vmatpush1.msra.mxu0 0.0
    %977 = vmatprep.subr.mxu0 0.0
    %978 = vmatpush1.msra.mxu0 0.0
    %979 = vmatprep.subr.mxu0 0.0
    %980 = vmatpush1.msra.mxu0 0.0
    %981 = vmatprep.subr.mxu0 0.0
    %982 = vmatpush1.msra.mxu0 0.0
    %983 = vmatprep.subr.mxu0 0.0
    %984 = vmatpush1.msra.mxu0 0.0
    %985 = vmatprep.subr.mxu0 0.0
    %v986 = vand.u32 %v36, 4294901760
    %987 = vmatpush1.msra.mxu0 %v986
    %988 = vmatprep.subr.mxu0 0.0
    %v989 = vand.u32 %v35, 4294901760
    %990 = vmatpush1.msra.mxu0 %v989
    %991 = vmatprep.subr.mxu0 0.0
    %992 = vmatpush2.msra.mxu0 0.0
    %993 = vmatprep.subr.mxu0 0.0
    %994 = vmatpush2.msra.mxu0 0.0
    %995 = vmatprep.subr.mxu0 0.0
    %996 = vmatpush2.msra.mxu0 0.0
    %997 = vmatprep.subr.mxu0 0.0
    %998 = vmatpush2.msra.mxu0 0.0
    %999 = vmatprep.subr.mxu0 0.0
    %1000 = vmatpush2.msra.mxu0 0.0
    %1001 = vmatprep.subr.mxu0 0.0
    %1002 = vmatpush2.msra.mxu0 0.0
    %1003 = vmatprep.subr.mxu0 0.0
    %1004 = vmatpush2.msra.mxu0 0.0
    %1005 = vmatprep.subr.mxu0 0.0
    %1006 = vmatpush2.msra.mxu0 0.0
    %1007 = vmatprep.subr.mxu0 0.0
    %1008 = vmatpush2.msra.mxu0 0.0
    %1009 = vmatprep.subr.mxu0 0.0
    %1010 = vmatpush2.msra.mxu0 0.0
    %1011 = vmatprep.subr.mxu0 0.0
    %1012 = vmatpush2.msra.mxu0 0.0
    %1013 = vmatprep.subr.mxu0 0.0
    %1014 = vmatpush2.msra.mxu0 0.0
    %1015 = vmatprep.subr.mxu0 0.0
    %1016 = vmatpush2.msra.mxu0 0.0
    %1017 = vmatprep.subr.mxu0 0.0
    %1018 = vmatpush2.msra.mxu0 0.0
    %1019 = vmatprep.subr.mxu0 0.0
    %1020 = vmatpush2.msra.mxu0 0.0
    %1021 = vmatprep.subr.mxu0 0.0
    %1022 = vmatpush2.msra.mxu0 0.0
    %1023 = vmatprep.mubr.f32.mxu0 0.0
    %v1024 = vand.u32 %v55, 4294901760
    %v1025 = vsub.f32 %v55, %v1024
    %v1026 = vand.u32 %v1025, 4294901760
    %1027 = vmatmul.mubr.f32.gmra.mxu0 %v1026
    %v1028 = vpop.f32.mrf.mxu0
    %v1029 = vadd.f32 %v933, %v1028
    %v1030 = vpop.f32.mrf.mxu0
    %1031 = vmatprep.mubr.f32.mxu0 0.0
    %v1032 = vand.u32 %v58, 4294901760
    %v1033 = vsub.f32 %v58, %v1032
    %v1034 = vand.u32 %v1033, 4294901760
    %1035 = vmatmul.mubr.f32.gmra.mxu0 %v1034
    %v1036 = vpop.f32.mrf.mxu0
    %v1037 = vadd.f32 %v940, %v1036
    %v1038 = vpop.f32.mrf.mxu0
    %1039 = vmatprep.mubr.f32.mxu0 0.0
    %v1040 = vand.u32 %v61, 4294901760
    %v1041 = vsub.f32 %v61, %v1040
    %v1042 = vand.u32 %v1041, 4294901760
    %1043 = vmatmul.mubr.f32.gmra.mxu0 %v1042
    %v1044 = vpop.f32.mrf.mxu0
    %v1045 = vadd.f32 %v947, %v1044
    %v1046 = vpop.f32.mrf.mxu0
    %1047 = vmatprep.mubr.f32.mxu0 0.0
    %v1048 = vand.u32 %v64, 4294901760
    %v1049 = vsub.f32 %v64, %v1048
    %v1050 = vand.u32 %v1049, 4294901760
    %1051 = vmatmul.mubr.f32.gmra.mxu0 %v1050
    %v1052 = vpop.f32.mrf.mxu0
    %v1053 = vadd.f32 %v954, %v1052
    %v1054 = vpop.f32.mrf.mxu0
    %1055 = vdwg.mxu0
    %1056 = vmatprep.subr.mxu0 0.0
    %1057 = vmatpush1.msra.mxu0 0.0
    %1058 = vmatprep.subr.mxu0 0.0
    %1059 = vmatpush1.msra.mxu0 0.0
    %1060 = vmatprep.subr.mxu0 0.0
    %1061 = vmatpush1.msra.mxu0 0.0
    %1062 = vmatprep.subr.mxu0 0.0
    %1063 = vmatpush1.msra.mxu0 0.0
    %1064 = vmatprep.subr.mxu0 0.0
    %1065 = vmatpush1.msra.mxu0 0.0
    %1066 = vmatprep.subr.mxu0 0.0
    %1067 = vmatpush1.msra.mxu0 0.0
    %1068 = vmatprep.subr.mxu0 0.0
    %1069 = vmatpush1.msra.mxu0 0.0
    %1070 = vmatprep.subr.mxu0 0.0
    %1071 = vmatpush1.msra.mxu0 0.0
    %1072 = vmatprep.subr.mxu0 0.0
    %1073 = vmatpush1.msra.mxu0 0.0
    %1074 = vmatprep.subr.mxu0 0.0
    %1075 = vmatpush1.msra.mxu0 0.0
    %1076 = vmatprep.subr.mxu0 0.0
    %1077 = vmatpush1.msra.mxu0 0.0
    %1078 = vmatprep.subr.mxu0 0.0
    %1079 = vmatpush1.msra.mxu0 0.0
    %1080 = vmatprep.subr.mxu0 0.0
    %1081 = vmatpush1.msra.mxu0 0.0
    %1082 = vmatprep.subr.mxu0 0.0
    %1083 = vmatpush1.msra.mxu0 0.0
    %1084 = vmatprep.subr.mxu0 0.0
    %v1085 = vand.u32 %v36, 4294901760
    %v1086 = vsub.f32 %v36, %v1085
    %v1087 = vand.u32 %v1086, 4294901760
    %1088 = vmatpush1.msra.mxu0 %v1087
    %1089 = vmatprep.subr.mxu0 0.0
    %v1090 = vand.u32 %v35, 4294901760
    %v1091 = vsub.f32 %v35, %v1090
    %v1092 = vand.u32 %v1091, 4294901760
    %1093 = vmatpush1.msra.mxu0 %v1092
    %1094 = vmatprep.subr.mxu0 0.0
    %1095 = vmatpush2.msra.mxu0 0.0
    %1096 = vmatprep.subr.mxu0 0.0
    %1097 = vmatpush2.msra.mxu0 0.0
    %1098 = vmatprep.subr.mxu0 0.0
    %1099 = vmatpush2.msra.mxu0 0.0
    %1100 = vmatprep.subr.mxu0 0.0
    %1101 = vmatpush2.msra.mxu0 0.0
    %1102 = vmatprep.subr.mxu0 0.0
    %1103 = vmatpush2.msra.mxu0 0.0
    %1104 = vmatprep.subr.mxu0 0.0
    %1105 = vmatpush2.msra.mxu0 0.0
    %1106 = vmatprep.subr.mxu0 0.0
    %1107 = vmatpush2.msra.mxu0 0.0
    %1108 = vmatprep.subr.mxu0 0.0
    %1109 = vmatpush2.msra.mxu0 0.0
    %1110 = vmatprep.subr.mxu0 0.0
    %1111 = vmatpush2.msra.mxu0 0.0
    %1112 = vmatprep.subr.mxu0 0.0
    %1113 = vmatpush2.msra.mxu0 0.0
    %1114 = vmatprep.subr.mxu0 0.0
    %1115 = vmatpush2.msra.mxu0 0.0
    %1116 = vmatprep.subr.mxu0 0.0
    %1117 = vmatpush2.msra.mxu0 0.0
    %1118 = vmatprep.subr.mxu0 0.0
    %1119 = vmatpush2.msra.mxu0 0.0
    %1120 = vmatprep.subr.mxu0 0.0
    %1121 = vmatpush2.msra.mxu0 0.0
    %1122 = vmatprep.subr.mxu0 0.0
    %1123 = vmatpush2.msra.mxu0 0.0
    %1124 = vmatprep.subr.mxu0 0.0
    %1125 = vmatpush2.msra.mxu0 0.0
    %1126 = vmatprep.mubr.f32.mxu0 0.0
    %v1127 = vand.u32 %v55, 4294901760
    %1128 = vmatmul.mubr.f32.gmra.mxu0 %v1127
    %v1129 = vpop.f32.mrf.mxu0
    %v1130 = vadd.f32 %v1029, %v1129
    %v1131 = vpop.f32.mrf.mxu0
    %1132 = vmatprep.mubr.f32.mxu0 0.0
    %v1133 = vand.u32 %v58, 4294901760
    %1134 = vmatmul.mubr.f32.gmra.mxu0 %v1133
    %v1135 = vpop.f32.mrf.mxu0
    %v1136 = vadd.f32 %v1037, %v1135
    %v1137 = vpop.f32.mrf.mxu0
    %1138 = vmatprep.mubr.f32.mxu0 0.0
    %v1139 = vand.u32 %v61, 4294901760
    %1140 = vmatmul.mubr.f32.gmra.mxu0 %v1139
    %v1141 = vpop.f32.mrf.mxu0
    %v1142 = vadd.f32 %v1045, %v1141
    %v1143 = vpop.f32.mrf.mxu0
    %1144 = vmatprep.mubr.f32.mxu0 0.0
    %v1145 = vand.u32 %v64, 4294901760
    %1146 = vmatmul.mubr.f32.gmra.mxu0 %v1145
    %v1147 = vpop.f32.mrf.mxu0
    %v1148 = vadd.f32 %v1053, %v1147
    %v1149 = vpop.f32.mrf.mxu0
    %1150 = vdwg.mxu0
    %1151 = vmatprep.subr.mxu0 0.0
    %1152 = vmatpush1.msra.mxu0 0.0
    %1153 = vmatprep.subr.mxu0 0.0
    %1154 = vmatpush1.msra.mxu0 0.0
    %1155 = vmatprep.subr.mxu0 0.0
    %1156 = vmatpush1.msra.mxu0 0.0
    %1157 = vmatprep.subr.mxu0 0.0
    %1158 = vmatpush1.msra.mxu0 0.0
    %1159 = vmatprep.subr.mxu0 0.0
    %1160 = vmatpush1.msra.mxu0 0.0
    %1161 = vmatprep.subr.mxu0 0.0
    %1162 = vmatpush1.msra.mxu0 0.0
    %1163 = vmatprep.subr.mxu0 0.0
    %1164 = vmatpush1.msra.mxu0 0.0
    %1165 = vmatprep.subr.mxu0 0.0
    %1166 = vmatpush1.msra.mxu0 0.0
    %1167 = vmatprep.subr.mxu0 0.0
    %1168 = vmatpush1.msra.mxu0 0.0
    %1169 = vmatprep.subr.mxu0 0.0
    %1170 = vmatpush1.msra.mxu0 0.0
    %1171 = vmatprep.subr.mxu0 0.0
    %1172 = vmatpush1.msra.mxu0 0.0
    %1173 = vmatprep.subr.mxu0 0.0
    %1174 = vmatpush1.msra.mxu0 0.0
    %1175 = vmatprep.subr.mxu0 0.0
    %1176 = vmatpush1.msra.mxu0 0.0
    %1177 = vmatprep.subr.mxu0 0.0
    %1178 = vmatpush1.msra.mxu0 0.0
    %1179 = vmatprep.subr.mxu0 0.0
    %v1180 = vand.u32 %v36, 4294901760
    %1181 = vmatpush1.msra.mxu0 %v1180
    %1182 = vmatprep.subr.mxu0 0.0
    %v1183 = vand.u32 %v35, 4294901760
    %1184 = vmatpush1.msra.mxu0 %v1183
    %1185 = vmatprep.subr.mxu0 0.0
    %1186 = vmatpush2.msra.mxu0 0.0
    %1187 = vmatprep.subr.mxu0 0.0
    %1188 = vmatpush2.msra.mxu0 0.0
    %1189 = vmatprep.subr.mxu0 0.0
    %1190 = vmatpush2.msra.mxu0 0.0
    %1191 = vmatprep.subr.mxu0 0.0
    %1192 = vmatpush2.msra.mxu0 0.0
    %1193 = vmatprep.subr.mxu0 0.0
    %1194 = vmatpush2.msra.mxu0 0.0
    %1195 = vmatprep.subr.mxu0 0.0
    %1196 = vmatpush2.msra.mxu0 0.0
    %1197 = vmatprep.subr.mxu0 0.0
    %1198 = vmatpush2.msra.mxu0 0.0
    %1199 = vmatprep.subr.mxu0 0.0
    %1200 = vmatpush2.msra.mxu0 0.0
    %1201 = vmatprep.subr.mxu0 0.0
    %1202 = vmatpush2.msra.mxu0 0.0
    %1203 = vmatprep.subr.mxu0 0.0
    %1204 = vmatpush2.msra.mxu0 0.0
    %1205 = vmatprep.subr.mxu0 0.0
    %1206 = vmatpush2.msra.mxu0 0.0
    %1207 = vmatprep.subr.mxu0 0.0
    %1208 = vmatpush2.msra.mxu0 0.0
    %1209 = vmatprep.subr.mxu0 0.0
    %1210 = vmatpush2.msra.mxu0 0.0
    %1211 = vmatprep.subr.mxu0 0.0
    %1212 = vmatpush2.msra.mxu0 0.0
    %1213 = vmatprep.subr.mxu0 0.0
    %1214 = vmatpush2.msra.mxu0 0.0
    %1215 = vmatprep.subr.mxu0 0.0
    %1216 = vmatpush2.msra.mxu0 0.0
    %1217 = vmatprep.mubr.f32.mxu0 0.0
    %v1218 = vand.u32 %v55, 4294901760
    %1219 = vmatmul.mubr.f32.gmra.mxu0 %v1218
    %v1220 = vpop.f32.mrf.mxu0
    %v1221 = vadd.f32 %v1130, %v1220
    %v1222 = vpop.f32.mrf.mxu0
    %1223 = vmatprep.mubr.f32.mxu0 0.0
    %v1224 = vand.u32 %v58, 4294901760
    %1225 = vmatmul.mubr.f32.gmra.mxu0 %v1224
    %v1226 = vpop.f32.mrf.mxu0
    %v1227 = vadd.f32 %v1136, %v1226
    %v1228 = vpop.f32.mrf.mxu0
    %1229 = vmatprep.mubr.f32.mxu0 0.0
    %v1230 = vand.u32 %v61, 4294901760
    %1231 = vmatmul.mubr.f32.gmra.mxu0 %v1230
    %v1232 = vpop.f32.mrf.mxu0
    %v1233 = vadd.f32 %v1142, %v1232
    %v1234 = vpop.f32.mrf.mxu0
    %1235 = vmatprep.mubr.f32.mxu0 0.0
    %v1236 = vand.u32 %v64, 4294901760
    %1237 = vmatmul.mubr.f32.gmra.mxu0 %v1236
    %v1238 = vpop.f32.mrf.mxu0
    %v1239 = vadd.f32 %v1148, %v1238
    %v1240 = vpop.f32.mrf.mxu0
    %1241 = vdwg.mxu0
    %1242 = vmatprep.subr.mxu0 0.0
    %1243 = vmatpush1.msra.mxu0 0.0
    %1244 = vmatprep.subr.mxu0 0.0
    %1245 = vmatpush1.msra.mxu0 0.0
    %1246 = vmatprep.subr.mxu0 0.0
    %1247 = vmatpush1.msra.mxu0 0.0
    %1248 = vmatprep.subr.mxu0 0.0
    %1249 = vmatpush1.msra.mxu0 0.0
    %1250 = vmatprep.subr.mxu0 0.0
    %1251 = vmatpush1.msra.mxu0 0.0
    %1252 = vmatprep.subr.mxu0 0.0
    %1253 = vmatpush1.msra.mxu0 0.0
    %1254 = vmatprep.subr.mxu0 0.0
    %1255 = vmatpush1.msra.mxu0 0.0
    %1256 = vmatprep.subr.mxu0 0.0
    %1257 = vmatpush1.msra.mxu0 0.0
    %1258 = vmatprep.subr.mxu0 0.0
    %1259 = vmatpush1.msra.mxu0 0.0
    %1260 = vmatprep.subr.mxu0 0.0
    %1261 = vmatpush1.msra.mxu0 0.0
    %1262 = vmatprep.subr.mxu0 0.0
    %1263 = vmatpush1.msra.mxu0 0.0
    %1264 = vmatprep.subr.mxu0 0.0
    %1265 = vmatpush1.msra.mxu0 0.0
    %1266 = vmatprep.subr.mxu0 0.0
    %1267 = vmatpush1.msra.mxu0 0.0
    %1268 = vmatprep.subr.mxu0 0.0
    %1269 = vmatpush1.msra.mxu0 0.0
    %1270 = vmatprep.subr.mxu0 0.0
    %v1271 = vand.u32 %v38, 4294901760
    %1272 = vmatpush1.msra.mxu0 %v1271
    %1273 = vmatprep.subr.mxu0 0.0
    %v1274 = vand.u32 %v37, 4294901760
    %1275 = vmatpush1.msra.mxu0 %v1274
    %1276 = vmatprep.subr.mxu0 0.0
    %1277 = vmatpush2.msra.mxu0 0.0
    %1278 = vmatprep.subr.mxu0 0.0
    %1279 = vmatpush2.msra.mxu0 0.0
    %1280 = vmatprep.subr.mxu0 0.0
    %1281 = vmatpush2.msra.mxu0 0.0
    %1282 = vmatprep.subr.mxu0 0.0
    %1283 = vmatpush2.msra.mxu0 0.0
    %1284 = vmatprep.subr.mxu0 0.0
    %1285 = vmatpush2.msra.mxu0 0.0
    %1286 = vmatprep.subr.mxu0 0.0
    %1287 = vmatpush2.msra.mxu0 0.0
    %1288 = vmatprep.subr.mxu0 0.0
    %1289 = vmatpush2.msra.mxu0 0.0
    %1290 = vmatprep.subr.mxu0 0.0
    %1291 = vmatpush2.msra.mxu0 0.0
    %1292 = vmatprep.subr.mxu0 0.0
    %1293 = vmatpush2.msra.mxu0 0.0
    %1294 = vmatprep.subr.mxu0 0.0
    %1295 = vmatpush2.msra.mxu0 0.0
    %1296 = vmatprep.subr.mxu0 0.0
    %1297 = vmatpush2.msra.mxu0 0.0
    %1298 = vmatprep.subr.mxu0 0.0
    %1299 = vmatpush2.msra.mxu0 0.0
    %1300 = vmatprep.subr.mxu0 0.0
    %1301 = vmatpush2.msra.mxu0 0.0
    %1302 = vmatprep.subr.mxu0 0.0
    %1303 = vmatpush2.msra.mxu0 0.0
    %1304 = vmatprep.subr.mxu0 0.0
    %1305 = vmatpush2.msra.mxu0 0.0
    %1306 = vmatprep.subr.mxu0 0.0
    %1307 = vmatpush2.msra.mxu0 0.0
    %1308 = vmatprep.mubr.f32.mxu0 0.0
    %v1309 = vand.u32 %v55, 4294901760
    %v1310 = vsub.f32 %v55, %v1309
    %v1311 = vand.u32 %v1310, 4294901760
    %v1312 = vsub.f32 %v1310, %v1311
    %v1313 = vand.u32 %v1312, 4294901760
    %1314 = vmatmul.mubr.f32.gmra.mxu0 %v1313
    %v1315 = vpop.f32.mrf.mxu0
    %v1316 = vadd.f32 0.0, %v1315
    %v1317 = vpop.f32.mrf.mxu0
    %1318 = vmatprep.mubr.f32.mxu0 0.0
    %v1319 = vand.u32 %v58, 4294901760
    %v1320 = vsub.f32 %v58, %v1319
    %v1321 = vand.u32 %v1320, 4294901760
    %v1322 = vsub.f32 %v1320, %v1321
    %v1323 = vand.u32 %v1322, 4294901760
    %1324 = vmatmul.mubr.f32.gmra.mxu0 %v1323
    %v1325 = vpop.f32.mrf.mxu0
    %v1326 = vadd.f32 0.0, %v1325
    %v1327 = vpop.f32.mrf.mxu0
    %1328 = vmatprep.mubr.f32.mxu0 0.0
    %v1329 = vand.u32 %v61, 4294901760
    %v1330 = vsub.f32 %v61, %v1329
    %v1331 = vand.u32 %v1330, 4294901760
    %v1332 = vsub.f32 %v1330, %v1331
    %v1333 = vand.u32 %v1332, 4294901760
    %1334 = vmatmul.mubr.f32.gmra.mxu0 %v1333
    %v1335 = vpop.f32.mrf.mxu0
    %v1336 = vadd.f32 0.0, %v1335
    %v1337 = vpop.f32.mrf.mxu0
    %1338 = vmatprep.mubr.f32.mxu0 0.0
    %v1339 = vand.u32 %v64, 4294901760
    %v1340 = vsub.f32 %v64, %v1339
    %v1341 = vand.u32 %v1340, 4294901760
    %v1342 = vsub.f32 %v1340, %v1341
    %v1343 = vand.u32 %v1342, 4294901760
    %1344 = vmatmul.mubr.f32.gmra.mxu0 %v1343
    %v1345 = vpop.f32.mrf.mxu0
    %v1346 = vadd.f32 0.0, %v1345
    %v1347 = vpop.f32.mrf.mxu0
    %1348 = vdwg.mxu0
    %1349 = vmatprep.subr.mxu0 0.0
    %1350 = vmatpush1.msra.mxu0 0.0
    %1351 = vmatprep.subr.mxu0 0.0
    %1352 = vmatpush1.msra.mxu0 0.0
    %1353 = vmatprep.subr.mxu0 0.0
    %1354 = vmatpush1.msra.mxu0 0.0
    %1355 = vmatprep.subr.mxu0 0.0
    %1356 = vmatpush1.msra.mxu0 0.0
    %1357 = vmatprep.subr.mxu0 0.0
    %1358 = vmatpush1.msra.mxu0 0.0
    %1359 = vmatprep.subr.mxu0 0.0
    %1360 = vmatpush1.msra.mxu0 0.0
    %1361 = vmatprep.subr.mxu0 0.0
    %1362 = vmatpush1.msra.mxu0 0.0
    %1363 = vmatprep.subr.mxu0 0.0
    %1364 = vmatpush1.msra.mxu0 0.0
    %1365 = vmatprep.subr.mxu0 0.0
    %1366 = vmatpush1.msra.mxu0 0.0
    %1367 = vmatprep.subr.mxu0 0.0
    %1368 = vmatpush1.msra.mxu0 0.0
    %1369 = vmatprep.subr.mxu0 0.0
    %1370 = vmatpush1.msra.mxu0 0.0
    %1371 = vmatprep.subr.mxu0 0.0
    %1372 = vmatpush1.msra.mxu0 0.0
    %1373 = vmatprep.subr.mxu0 0.0
    %1374 = vmatpush1.msra.mxu0 0.0
    %1375 = vmatprep.subr.mxu0 0.0
    %1376 = vmatpush1.msra.mxu0 0.0
    %1377 = vmatprep.subr.mxu0 0.0
    %v1378 = vand.u32 %v38, 4294901760
    %v1379 = vsub.f32 %v38, %v1378
    %v1380 = vand.u32 %v1379, 4294901760
    %v1381 = vsub.f32 %v1379, %v1380
    %v1382 = vand.u32 %v1381, 4294901760
    %1383 = vmatpush1.msra.mxu0 %v1382
    %1384 = vmatprep.subr.mxu0 0.0
    %v1385 = vand.u32 %v37, 4294901760
    %v1386 = vsub.f32 %v37, %v1385
    %v1387 = vand.u32 %v1386, 4294901760
    %v1388 = vsub.f32 %v1386, %v1387
    %v1389 = vand.u32 %v1388, 4294901760
    %1390 = vmatpush1.msra.mxu0 %v1389
    %1391 = vmatprep.subr.mxu0 0.0
    %1392 = vmatpush2.msra.mxu0 0.0
    %1393 = vmatprep.subr.mxu0 0.0
    %1394 = vmatpush2.msra.mxu0 0.0
    %1395 = vmatprep.subr.mxu0 0.0
    %1396 = vmatpush2.msra.mxu0 0.0
    %1397 = vmatprep.subr.mxu0 0.0
    %1398 = vmatpush2.msra.mxu0 0.0
    %1399 = vmatprep.subr.mxu0 0.0
    %1400 = vmatpush2.msra.mxu0 0.0
    %1401 = vmatprep.subr.mxu0 0.0
    %1402 = vmatpush2.msra.mxu0 0.0
    %1403 = vmatprep.subr.mxu0 0.0
    %1404 = vmatpush2.msra.mxu0 0.0
    %1405 = vmatprep.subr.mxu0 0.0
    %1406 = vmatpush2.msra.mxu0 0.0
    %1407 = vmatprep.subr.mxu0 0.0
    %1408 = vmatpush2.msra.mxu0 0.0
    %1409 = vmatprep.subr.mxu0 0.0
    %1410 = vmatpush2.msra.mxu0 0.0
    %1411 = vmatprep.subr.mxu0 0.0
    %1412 = vmatpush2.msra.mxu0 0.0
    %1413 = vmatprep.subr.mxu0 0.0
    %1414 = vmatpush2.msra.mxu0 0.0
    %1415 = vmatprep.subr.mxu0 0.0
    %1416 = vmatpush2.msra.mxu0 0.0
    %1417 = vmatprep.subr.mxu0 0.0
    %1418 = vmatpush2.msra.mxu0 0.0
    %1419 = vmatprep.subr.mxu0 0.0
    %1420 = vmatpush2.msra.mxu0 0.0
    %1421 = vmatprep.subr.mxu0 0.0
    %1422 = vmatpush2.msra.mxu0 0.0
    %1423 = vmatprep.mubr.f32.mxu0 0.0
    %v1424 = vand.u32 %v55, 4294901760
    %1425 = vmatmul.mubr.f32.gmra.mxu0 %v1424
    %v1426 = vpop.f32.mrf.mxu0
    %v1427 = vadd.f32 %v1316, %v1426
    %v1428 = vpop.f32.mrf.mxu0
    %1429 = vmatprep.mubr.f32.mxu0 0.0
    %v1430 = vand.u32 %v58, 4294901760
    %1431 = vmatmul.mubr.f32.gmra.mxu0 %v1430
    %v1432 = vpop.f32.mrf.mxu0
    %v1433 = vadd.f32 %v1326, %v1432
    %v1434 = vpop.f32.mrf.mxu0
    %1435 = vmatprep.mubr.f32.mxu0 0.0
    %v1436 = vand.u32 %v61, 4294901760
    %1437 = vmatmul.mubr.f32.gmra.mxu0 %v1436
    %v1438 = vpop.f32.mrf.mxu0
    %v1439 = vadd.f32 %v1336, %v1438
    %v1440 = vpop.f32.mrf.mxu0
    %1441 = vmatprep.mubr.f32.mxu0 0.0
    %v1442 = vand.u32 %v64, 4294901760
    %1443 = vmatmul.mubr.f32.gmra.mxu0 %v1442
    %v1444 = vpop.f32.mrf.mxu0
    %v1445 = vadd.f32 %v1346, %v1444
    %v1446 = vpop.f32.mrf.mxu0
    %1447 = vdwg.mxu0
    %1448 = vmatprep.subr.mxu0 0.0
    %1449 = vmatpush1.msra.mxu0 0.0
    %1450 = vmatprep.subr.mxu0 0.0
    %1451 = vmatpush1.msra.mxu0 0.0
    %1452 = vmatprep.subr.mxu0 0.0
    %1453 = vmatpush1.msra.mxu0 0.0
    %1454 = vmatprep.subr.mxu0 0.0
    %1455 = vmatpush1.msra.mxu0 0.0
    %1456 = vmatprep.subr.mxu0 0.0
    %1457 = vmatpush1.msra.mxu0 0.0
    %1458 = vmatprep.subr.mxu0 0.0
    %1459 = vmatpush1.msra.mxu0 0.0
    %1460 = vmatprep.subr.mxu0 0.0
    %1461 = vmatpush1.msra.mxu0 0.0
    %1462 = vmatprep.subr.mxu0 0.0
    %1463 = vmatpush1.msra.mxu0 0.0
    %1464 = vmatprep.subr.mxu0 0.0
    %1465 = vmatpush1.msra.mxu0 0.0
    %1466 = vmatprep.subr.mxu0 0.0
    %1467 = vmatpush1.msra.mxu0 0.0
    %1468 = vmatprep.subr.mxu0 0.0
    %1469 = vmatpush1.msra.mxu0 0.0
    %1470 = vmatprep.subr.mxu0 0.0
    %1471 = vmatpush1.msra.mxu0 0.0
    %1472 = vmatprep.subr.mxu0 0.0
    %1473 = vmatpush1.msra.mxu0 0.0
    %1474 = vmatprep.subr.mxu0 0.0
    %1475 = vmatpush1.msra.mxu0 0.0
    %1476 = vmatprep.subr.mxu0 0.0
    %v1477 = vand.u32 %v38, 4294901760
    %v1478 = vsub.f32 %v38, %v1477
    %1479 = vmatpush1.msra.mxu0 %v1478
    %1480 = vmatprep.subr.mxu0 0.0
    %v1481 = vand.u32 %v37, 4294901760
    %v1482 = vsub.f32 %v37, %v1481
    %1483 = vmatpush1.msra.mxu0 %v1482
    %1484 = vmatprep.subr.mxu0 0.0
    %1485 = vmatpush2.msra.mxu0 0.0
    %1486 = vmatprep.subr.mxu0 0.0
    %1487 = vmatpush2.msra.mxu0 0.0
    %1488 = vmatprep.subr.mxu0 0.0
    %1489 = vmatpush2.msra.mxu0 0.0
    %1490 = vmatprep.subr.mxu0 0.0
    %1491 = vmatpush2.msra.mxu0 0.0
    %1492 = vmatprep.subr.mxu0 0.0
    %1493 = vmatpush2.msra.mxu0 0.0
    %1494 = vmatprep.subr.mxu0 0.0
    %1495 = vmatpush2.msra.mxu0 0.0
    %1496 = vmatprep.subr.mxu0 0.0
    %1497 = vmatpush2.msra.mxu0 0.0
    %1498 = vmatprep.subr.mxu0 0.0
    %1499 = vmatpush2.msra.mxu0 0.0
    %1500 = vmatprep.subr.mxu0 0.0
    %1501 = vmatpush2.msra.mxu0 0.0
    %1502 = vmatprep.subr.mxu0 0.0
    %1503 = vmatpush2.msra.mxu0 0.0
    %1504 = vmatprep.subr.mxu0 0.0
    %1505 = vmatpush2.msra.mxu0 0.0
    %1506 = vmatprep.subr.mxu0 0.0
    %1507 = vmatpush2.msra.mxu0 0.0
    %1508 = vmatprep.subr.mxu0 0.0
    %1509 = vmatpush2.msra.mxu0 0.0
    %1510 = vmatprep.subr.mxu0 0.0
    %1511 = vmatpush2.msra.mxu0 0.0
    %1512 = vmatprep.subr.mxu0 0.0
    %1513 = vmatpush2.msra.mxu0 0.0
    %1514 = vmatprep.subr.mxu0 0.0
    %1515 = vmatpush2.msra.mxu0 0.0
    %1516 = vmatprep.mubr.f32.mxu0 0.0
    %v1517 = vand.u32 %v55, 4294901760
    %v1518 = vsub.f32 %v55, %v1517
    %1519 = vmatmul.mubr.f32.gmra.mxu0 %v1518
    %v1520 = vpop.f32.mrf.mxu0
    %v1521 = vadd.f32 %v1427, %v1520
    %v1522 = vpop.f32.mrf.mxu0
    %1523 = vmatprep.mubr.f32.mxu0 0.0
    %v1524 = vand.u32 %v58, 4294901760
    %v1525 = vsub.f32 %v58, %v1524
    %1526 = vmatmul.mubr.f32.gmra.mxu0 %v1525
    %v1527 = vpop.f32.mrf.mxu0
    %v1528 = vadd.f32 %v1433, %v1527
    %v1529 = vpop.f32.mrf.mxu0
    %1530 = vmatprep.mubr.f32.mxu0 0.0
    %v1531 = vand.u32 %v61, 4294901760
    %v1532 = vsub.f32 %v61, %v1531
    %1533 = vmatmul.mubr.f32.gmra.mxu0 %v1532
    %v1534 = vpop.f32.mrf.mxu0
    %v1535 = vadd.f32 %v1439, %v1534
    %v1536 = vpop.f32.mrf.mxu0
    %1537 = vmatprep.mubr.f32.mxu0 0.0
    %v1538 = vand.u32 %v64, 4294901760
    %v1539 = vsub.f32 %v64, %v1538
    %1540 = vmatmul.mubr.f32.gmra.mxu0 %v1539
    %v1541 = vpop.f32.mrf.mxu0
    %v1542 = vadd.f32 %v1445, %v1541
    %v1543 = vpop.f32.mrf.mxu0
    %1544 = vdwg.mxu0
    %1545 = vmatprep.subr.mxu0 0.0
    %1546 = vmatpush1.msra.mxu0 0.0
    %1547 = vmatprep.subr.mxu0 0.0
    %1548 = vmatpush1.msra.mxu0 0.0
    %1549 = vmatprep.subr.mxu0 0.0
    %1550 = vmatpush1.msra.mxu0 0.0
    %1551 = vmatprep.subr.mxu0 0.0
    %1552 = vmatpush1.msra.mxu0 0.0
    %1553 = vmatprep.subr.mxu0 0.0
    %1554 = vmatpush1.msra.mxu0 0.0
    %1555 = vmatprep.subr.mxu0 0.0
    %1556 = vmatpush1.msra.mxu0 0.0
    %1557 = vmatprep.subr.mxu0 0.0
    %1558 = vmatpush1.msra.mxu0 0.0
    %1559 = vmatprep.subr.mxu0 0.0
    %1560 = vmatpush1.msra.mxu0 0.0
    %1561 = vmatprep.subr.mxu0 0.0
    %1562 = vmatpush1.msra.mxu0 0.0
    %1563 = vmatprep.subr.mxu0 0.0
    %1564 = vmatpush1.msra.mxu0 0.0
    %1565 = vmatprep.subr.mxu0 0.0
    %1566 = vmatpush1.msra.mxu0 0.0
    %1567 = vmatprep.subr.mxu0 0.0
    %1568 = vmatpush1.msra.mxu0 0.0
    %1569 = vmatprep.subr.mxu0 0.0
    %1570 = vmatpush1.msra.mxu0 0.0
    %1571 = vmatprep.subr.mxu0 0.0
    %1572 = vmatpush1.msra.mxu0 0.0
    %1573 = vmatprep.subr.mxu0 0.0
    %v1574 = vand.u32 %v38, 4294901760
    %1575 = vmatpush1.msra.mxu0 %v1574
    %1576 = vmatprep.subr.mxu0 0.0
    %v1577 = vand.u32 %v37, 4294901760
    %1578 = vmatpush1.msra.mxu0 %v1577
    %1579 = vmatprep.subr.mxu0 0.0
    %1580 = vmatpush2.msra.mxu0 0.0
    %1581 = vmatprep.subr.mxu0 0.0
    %1582 = vmatpush2.msra.mxu0 0.0
    %1583 = vmatprep.subr.mxu0 0.0
    %1584 = vmatpush2.msra.mxu0 0.0
    %1585 = vmatprep.subr.mxu0 0.0
    %1586 = vmatpush2.msra.mxu0 0.0
    %1587 = vmatprep.subr.mxu0 0.0
    %1588 = vmatpush2.msra.mxu0 0.0
    %1589 = vmatprep.subr.mxu0 0.0
    %1590 = vmatpush2.msra.mxu0 0.0
    %1591 = vmatprep.subr.mxu0 0.0
    %1592 = vmatpush2.msra.mxu0 0.0
    %1593 = vmatprep.subr.mxu0 0.0
    %1594 = vmatpush2.msra.mxu0 0.0
    %1595 = vmatprep.subr.mxu0 0.0
    %1596 = vmatpush2.msra.mxu0 0.0
    %1597 = vmatprep.subr.mxu0 0.0
    %1598 = vmatpush2.msra.mxu0 0.0
    %1599 = vmatprep.subr.mxu0 0.0
    %1600 = vmatpush2.msra.mxu0 0.0
    %1601 = vmatprep.subr.mxu0 0.0
    %1602 = vmatpush2.msra.mxu0 0.0
    %1603 = vmatprep.subr.mxu0 0.0
    %1604 = vmatpush2.msra.mxu0 0.0
    %1605 = vmatprep.subr.mxu0 0.0
    %1606 = vmatpush2.msra.mxu0 0.0
    %1607 = vmatprep.subr.mxu0 0.0
    %1608 = vmatpush2.msra.mxu0 0.0
    %1609 = vmatprep.subr.mxu0 0.0
    %1610 = vmatpush2.msra.mxu0 0.0
    %1611 = vmatprep.mubr.f32.mxu0 0.0
    %v1612 = vand.u32 %v55, 4294901760
    %v1613 = vsub.f32 %v55, %v1612
    %v1614 = vand.u32 %v1613, 4294901760
    %1615 = vmatmul.mubr.f32.gmra.mxu0 %v1614
    %v1616 = vpop.f32.mrf.mxu0
    %v1617 = vadd.f32 %v1521, %v1616
    %v1618 = vpop.f32.mrf.mxu0
    %1619 = vmatprep.mubr.f32.mxu0 0.0
    %v1620 = vand.u32 %v58, 4294901760
    %v1621 = vsub.f32 %v58, %v1620
    %v1622 = vand.u32 %v1621, 4294901760
    %1623 = vmatmul.mubr.f32.gmra.mxu0 %v1622
    %v1624 = vpop.f32.mrf.mxu0
    %v1625 = vadd.f32 %v1528, %v1624
    %v1626 = vpop.f32.mrf.mxu0
    %1627 = vmatprep.mubr.f32.mxu0 0.0
    %v1628 = vand.u32 %v61, 4294901760
    %v1629 = vsub.f32 %v61, %v1628
    %v1630 = vand.u32 %v1629, 4294901760
    %1631 = vmatmul.mubr.f32.gmra.mxu0 %v1630
    %v1632 = vpop.f32.mrf.mxu0
    %v1633 = vadd.f32 %v1535, %v1632
    %v1634 = vpop.f32.mrf.mxu0
    %1635 = vmatprep.mubr.f32.mxu0 0.0
    %v1636 = vand.u32 %v64, 4294901760
    %v1637 = vsub.f32 %v64, %v1636
    %v1638 = vand.u32 %v1637, 4294901760
    %1639 = vmatmul.mubr.f32.gmra.mxu0 %v1638
    %v1640 = vpop.f32.mrf.mxu0
    %v1641 = vadd.f32 %v1542, %v1640
    %v1642 = vpop.f32.mrf.mxu0
    %1643 = vdwg.mxu0
    %1644 = vmatprep.subr.mxu0 0.0
    %1645 = vmatpush1.msra.mxu0 0.0
    %1646 = vmatprep.subr.mxu0 0.0
    %1647 = vmatpush1.msra.mxu0 0.0
    %1648 = vmatprep.subr.mxu0 0.0
    %1649 = vmatpush1.msra.mxu0 0.0
    %1650 = vmatprep.subr.mxu0 0.0
    %1651 = vmatpush1.msra.mxu0 0.0
    %1652 = vmatprep.subr.mxu0 0.0
    %1653 = vmatpush1.msra.mxu0 0.0
    %1654 = vmatprep.subr.mxu0 0.0
    %1655 = vmatpush1.msra.mxu0 0.0
    %1656 = vmatprep.subr.mxu0 0.0
    %1657 = vmatpush1.msra.mxu0 0.0
    %1658 = vmatprep.subr.mxu0 0.0
    %1659 = vmatpush1.msra.mxu0 0.0
    %1660 = vmatprep.subr.mxu0 0.0
    %1661 = vmatpush1.msra.mxu0 0.0
    %1662 = vmatprep.subr.mxu0 0.0
    %1663 = vmatpush1.msra.mxu0 0.0
    %1664 = vmatprep.subr.mxu0 0.0
    %1665 = vmatpush1.msra.mxu0 0.0
    %1666 = vmatprep.subr.mxu0 0.0
    %1667 = vmatpush1.msra.mxu0 0.0
    %1668 = vmatprep.subr.mxu0 0.0
    %1669 = vmatpush1.msra.mxu0 0.0
    %1670 = vmatprep.subr.mxu0 0.0
    %1671 = vmatpush1.msra.mxu0 0.0
    %1672 = vmatprep.subr.mxu0 0.0
    %v1673 = vand.u32 %v38, 4294901760
    %v1674 = vsub.f32 %v38, %v1673
    %v1675 = vand.u32 %v1674, 4294901760
    %1676 = vmatpush1.msra.mxu0 %v1675
    %1677 = vmatprep.subr.mxu0 0.0
    %v1678 = vand.u32 %v37, 4294901760
    %v1679 = vsub.f32 %v37, %v1678
    %v1680 = vand.u32 %v1679, 4294901760
    %1681 = vmatpush1.msra.mxu0 %v1680
    %1682 = vmatprep.subr.mxu0 0.0
    %1683 = vmatpush2.msra.mxu0 0.0
    %1684 = vmatprep.subr.mxu0 0.0
    %1685 = vmatpush2.msra.mxu0 0.0
    %1686 = vmatprep.subr.mxu0 0.0
    %1687 = vmatpush2.msra.mxu0 0.0
    %1688 = vmatprep.subr.mxu0 0.0
    %1689 = vmatpush2.msra.mxu0 0.0
    %1690 = vmatprep.subr.mxu0 0.0
    %1691 = vmatpush2.msra.mxu0 0.0
    %1692 = vmatprep.subr.mxu0 0.0
    %1693 = vmatpush2.msra.mxu0 0.0
    %1694 = vmatprep.subr.mxu0 0.0
    %1695 = vmatpush2.msra.mxu0 0.0
    %1696 = vmatprep.subr.mxu0 0.0
    %1697 = vmatpush2.msra.mxu0 0.0
    %1698 = vmatprep.subr.mxu0 0.0
    %1699 = vmatpush2.msra.mxu0 0.0
    %1700 = vmatprep.subr.mxu0 0.0
    %1701 = vmatpush2.msra.mxu0 0.0
    %1702 = vmatprep.subr.mxu0 0.0
    %1703 = vmatpush2.msra.mxu0 0.0
    %1704 = vmatprep.subr.mxu0 0.0
    %1705 = vmatpush2.msra.mxu0 0.0
    %1706 = vmatprep.subr.mxu0 0.0
    %1707 = vmatpush2.msra.mxu0 0.0
    %1708 = vmatprep.subr.mxu0 0.0
    %1709 = vmatpush2.msra.mxu0 0.0
    %1710 = vmatprep.subr.mxu0 0.0
    %1711 = vmatpush2.msra.mxu0 0.0
    %1712 = vmatprep.subr.mxu0 0.0
    %1713 = vmatpush2.msra.mxu0 0.0
    %1714 = vmatprep.mubr.f32.mxu0 0.0
    %v1715 = vand.u32 %v55, 4294901760
    %1716 = vmatmul.mubr.f32.gmra.mxu0 %v1715
    %v1717 = vpop.f32.mrf.mxu0
    %v1718 = vadd.f32 %v1617, %v1717
    %v1719 = vpop.f32.mrf.mxu0
    %1720 = vmatprep.mubr.f32.mxu0 0.0
    %v1721 = vand.u32 %v58, 4294901760
    %1722 = vmatmul.mubr.f32.gmra.mxu0 %v1721
    %v1723 = vpop.f32.mrf.mxu0
    %v1724 = vadd.f32 %v1625, %v1723
    %v1725 = vpop.f32.mrf.mxu0
    %1726 = vmatprep.mubr.f32.mxu0 0.0
    %v1727 = vand.u32 %v61, 4294901760
    %1728 = vmatmul.mubr.f32.gmra.mxu0 %v1727
    %v1729 = vpop.f32.mrf.mxu0
    %v1730 = vadd.f32 %v1633, %v1729
    %v1731 = vpop.f32.mrf.mxu0
    %1732 = vmatprep.mubr.f32.mxu0 0.0
    %v1733 = vand.u32 %v64, 4294901760
    %1734 = vmatmul.mubr.f32.gmra.mxu0 %v1733
    %v1735 = vpop.f32.mrf.mxu0
    %v1736 = vadd.f32 %v1641, %v1735
    %v1737 = vpop.f32.mrf.mxu0
    %1738 = vdwg.mxu0
    %1739 = vmatprep.subr.mxu0 0.0
    %1740 = vmatpush1.msra.mxu0 0.0
    %1741 = vmatprep.subr.mxu0 0.0
    %1742 = vmatpush1.msra.mxu0 0.0
    %1743 = vmatprep.subr.mxu0 0.0
    %1744 = vmatpush1.msra.mxu0 0.0
    %1745 = vmatprep.subr.mxu0 0.0
    %1746 = vmatpush1.msra.mxu0 0.0
    %1747 = vmatprep.subr.mxu0 0.0
    %1748 = vmatpush1.msra.mxu0 0.0
    %1749 = vmatprep.subr.mxu0 0.0
    %1750 = vmatpush1.msra.mxu0 0.0
    %1751 = vmatprep.subr.mxu0 0.0
    %1752 = vmatpush1.msra.mxu0 0.0
    %1753 = vmatprep.subr.mxu0 0.0
    %1754 = vmatpush1.msra.mxu0 0.0
    %1755 = vmatprep.subr.mxu0 0.0
    %1756 = vmatpush1.msra.mxu0 0.0
    %1757 = vmatprep.subr.mxu0 0.0
    %1758 = vmatpush1.msra.mxu0 0.0
    %1759 = vmatprep.subr.mxu0 0.0
    %1760 = vmatpush1.msra.mxu0 0.0
    %1761 = vmatprep.subr.mxu0 0.0
    %1762 = vmatpush1.msra.mxu0 0.0
    %1763 = vmatprep.subr.mxu0 0.0
    %1764 = vmatpush1.msra.mxu0 0.0
    %1765 = vmatprep.subr.mxu0 0.0
    %1766 = vmatpush1.msra.mxu0 0.0
    %1767 = vmatprep.subr.mxu0 0.0
    %v1768 = vand.u32 %v38, 4294901760
    %1769 = vmatpush1.msra.mxu0 %v1768
    %1770 = vmatprep.subr.mxu0 0.0
    %v1771 = vand.u32 %v37, 4294901760
    %1772 = vmatpush1.msra.mxu0 %v1771
    %1773 = vmatprep.subr.mxu0 0.0
    %1774 = vmatpush2.msra.mxu0 0.0
    %1775 = vmatprep.subr.mxu0 0.0
    %1776 = vmatpush2.msra.mxu0 0.0
    %1777 = vmatprep.subr.mxu0 0.0
    %1778 = vmatpush2.msra.mxu0 0.0
    %1779 = vmatprep.subr.mxu0 0.0
    %1780 = vmatpush2.msra.mxu0 0.0
    %1781 = vmatprep.subr.mxu0 0.0
    %1782 = vmatpush2.msra.mxu0 0.0
    %1783 = vmatprep.subr.mxu0 0.0
    %1784 = vmatpush2.msra.mxu0 0.0
    %1785 = vmatprep.subr.mxu0 0.0
    %1786 = vmatpush2.msra.mxu0 0.0
    %1787 = vmatprep.subr.mxu0 0.0
    %1788 = vmatpush2.msra.mxu0 0.0
    %1789 = vmatprep.subr.mxu0 0.0
    %1790 = vmatpush2.msra.mxu0 0.0
    %1791 = vmatprep.subr.mxu0 0.0
    %1792 = vmatpush2.msra.mxu0 0.0
    %1793 = vmatprep.subr.mxu0 0.0
    %1794 = vmatpush2.msra.mxu0 0.0
    %1795 = vmatprep.subr.mxu0 0.0
    %1796 = vmatpush2.msra.mxu0 0.0
    %1797 = vmatprep.subr.mxu0 0.0
    %1798 = vmatpush2.msra.mxu0 0.0
    %1799 = vmatprep.subr.mxu0 0.0
    %1800 = vmatpush2.msra.mxu0 0.0
    %1801 = vmatprep.subr.mxu0 0.0
    %1802 = vmatpush2.msra.mxu0 0.0
    %1803 = vmatprep.subr.mxu0 0.0
    %1804 = vmatpush2.msra.mxu0 0.0
    %1805 = vmatprep.mubr.f32.mxu0 0.0
    %v1806 = vand.u32 %v55, 4294901760
    %1807 = vmatmul.mubr.f32.gmra.mxu0 %v1806
    %v1808 = vpop.f32.mrf.mxu0
    %v1809 = vadd.f32 %v1718, %v1808
    %v1810 = vpop.f32.mrf.mxu0
    %1811 = vmatprep.mubr.f32.mxu0 0.0
    %v1812 = vand.u32 %v58, 4294901760
    %1813 = vmatmul.mubr.f32.gmra.mxu0 %v1812
    %v1814 = vpop.f32.mrf.mxu0
    %v1815 = vadd.f32 %v1724, %v1814
    %v1816 = vpop.f32.mrf.mxu0
    %1817 = vmatprep.mubr.f32.mxu0 0.0
    %v1818 = vand.u32 %v61, 4294901760
    %1819 = vmatmul.mubr.f32.gmra.mxu0 %v1818
    %v1820 = vpop.f32.mrf.mxu0
    %v1821 = vadd.f32 %v1730, %v1820
    %v1822 = vpop.f32.mrf.mxu0
    %1823 = vmatprep.mubr.f32.mxu0 0.0
    %v1824 = vand.u32 %v64, 4294901760
    %1825 = vmatmul.mubr.f32.gmra.mxu0 %v1824
    %v1826 = vpop.f32.mrf.mxu0
    %v1827 = vadd.f32 %v1736, %v1826
    %v1828 = vpop.f32.mrf.mxu0
    %1829 = vdwg.mxu0
    %1830 = vmatprep.subr.mxu0 0.0
    %1831 = vmatpush1.msra.mxu0 0.0
    %1832 = vmatprep.subr.mxu0 0.0
    %1833 = vmatpush1.msra.mxu0 0.0
    %1834 = vmatprep.subr.mxu0 0.0
    %1835 = vmatpush1.msra.mxu0 0.0
    %1836 = vmatprep.subr.mxu0 0.0
    %1837 = vmatpush1.msra.mxu0 0.0
    %1838 = vmatprep.subr.mxu0 0.0
    %1839 = vmatpush1.msra.mxu0 0.0
    %1840 = vmatprep.subr.mxu0 0.0
    %1841 = vmatpush1.msra.mxu0 0.0
    %1842 = vmatprep.subr.mxu0 0.0
    %1843 = vmatpush1.msra.mxu0 0.0
    %1844 = vmatprep.subr.mxu0 0.0
    %1845 = vmatpush1.msra.mxu0 0.0
    %1846 = vmatprep.subr.mxu0 0.0
    %1847 = vmatpush1.msra.mxu0 0.0
    %1848 = vmatprep.subr.mxu0 0.0
    %1849 = vmatpush1.msra.mxu0 0.0
    %1850 = vmatprep.subr.mxu0 0.0
    %1851 = vmatpush1.msra.mxu0 0.0
    %1852 = vmatprep.subr.mxu0 0.0
    %1853 = vmatpush1.msra.mxu0 0.0
    %1854 = vmatprep.subr.mxu0 0.0
    %1855 = vmatpush1.msra.mxu0 0.0
    %1856 = vmatprep.subr.mxu0 0.0
    %1857 = vmatpush1.msra.mxu0 0.0
    %1858 = vmatprep.subr.mxu0 0.0
    %v1859 = vand.u32 %v40, 4294901760
    %1860 = vmatpush1.msra.mxu0 %v1859
    %1861 = vmatprep.subr.mxu0 0.0
    %v1862 = vand.u32 %v39, 4294901760
    %1863 = vmatpush1.msra.mxu0 %v1862
    %1864 = vmatprep.subr.mxu0 0.0
    %1865 = vmatpush2.msra.mxu0 0.0
    %1866 = vmatprep.subr.mxu0 0.0
    %1867 = vmatpush2.msra.mxu0 0.0
    %1868 = vmatprep.subr.mxu0 0.0
    %1869 = vmatpush2.msra.mxu0 0.0
    %1870 = vmatprep.subr.mxu0 0.0
    %1871 = vmatpush2.msra.mxu0 0.0
    %1872 = vmatprep.subr.mxu0 0.0
    %1873 = vmatpush2.msra.mxu0 0.0
    %1874 = vmatprep.subr.mxu0 0.0
    %1875 = vmatpush2.msra.mxu0 0.0
    %1876 = vmatprep.subr.mxu0 0.0
    %1877 = vmatpush2.msra.mxu0 0.0
    %1878 = vmatprep.subr.mxu0 0.0
    %1879 = vmatpush2.msra.mxu0 0.0
    %1880 = vmatprep.subr.mxu0 0.0
    %1881 = vmatpush2.msra.mxu0 0.0
    %1882 = vmatprep.subr.mxu0 0.0
    %1883 = vmatpush2.msra.mxu0 0.0
    %1884 = vmatprep.subr.mxu0 0.0
    %1885 = vmatpush2.msra.mxu0 0.0
    %1886 = vmatprep.subr.mxu0 0.0
    %1887 = vmatpush2.msra.mxu0 0.0
    %1888 = vmatprep.subr.mxu0 0.0
    %1889 = vmatpush2.msra.mxu0 0.0
    %1890 = vmatprep.subr.mxu0 0.0
    %1891 = vmatpush2.msra.mxu0 0.0
    %1892 = vmatprep.subr.mxu0 0.0
    %1893 = vmatpush2.msra.mxu0 0.0
    %1894 = vmatprep.subr.mxu0 0.0
    %1895 = vmatpush2.msra.mxu0 0.0
    %1896 = vmatprep.mubr.f32.mxu0 0.0
    %v1897 = vand.u32 %v55, 4294901760
    %v1898 = vsub.f32 %v55, %v1897
    %v1899 = vand.u32 %v1898, 4294901760
    %v1900 = vsub.f32 %v1898, %v1899
    %v1901 = vand.u32 %v1900, 4294901760
    %1902 = vmatmul.mubr.f32.gmra.mxu0 %v1901
    %v1903 = vpop.f32.mrf.mxu0
    %v1904 = vadd.f32 0.0, %v1903
    %v1905 = vpop.f32.mrf.mxu0
    %1906 = vmatprep.mubr.f32.mxu0 0.0
    %v1907 = vand.u32 %v58, 4294901760
    %v1908 = vsub.f32 %v58, %v1907
    %v1909 = vand.u32 %v1908, 4294901760
    %v1910 = vsub.f32 %v1908, %v1909
    %v1911 = vand.u32 %v1910, 4294901760
    %1912 = vmatmul.mubr.f32.gmra.mxu0 %v1911
    %v1913 = vpop.f32.mrf.mxu0
    %v1914 = vadd.f32 0.0, %v1913
    %v1915 = vpop.f32.mrf.mxu0
    %1916 = vmatprep.mubr.f32.mxu0 0.0
    %v1917 = vand.u32 %v61, 4294901760
    %v1918 = vsub.f32 %v61, %v1917
    %v1919 = vand.u32 %v1918, 4294901760
    %v1920 = vsub.f32 %v1918, %v1919
    %v1921 = vand.u32 %v1920, 4294901760
    %1922 = vmatmul.mubr.f32.gmra.mxu0 %v1921
    %v1923 = vpop.f32.mrf.mxu0
    %v1924 = vadd.f32 0.0, %v1923
    %v1925 = vpop.f32.mrf.mxu0
    %1926 = vmatprep.mubr.f32.mxu0 0.0
    %v1927 = vand.u32 %v64, 4294901760
    %v1928 = vsub.f32 %v64, %v1927
    %v1929 = vand.u32 %v1928, 4294901760
    %v1930 = vsub.f32 %v1928, %v1929
    %v1931 = vand.u32 %v1930, 4294901760
    %1932 = vmatmul.mubr.f32.gmra.mxu0 %v1931
    %v1933 = vpop.f32.mrf.mxu0
    %v1934 = vadd.f32 0.0, %v1933
    %v1935 = vpop.f32.mrf.mxu0
    %1936 = vdwg.mxu0
    %1937 = vmatprep.subr.mxu0 0.0
    %1938 = vmatpush1.msra.mxu0 0.0
    %1939 = vmatprep.subr.mxu0 0.0
    %1940 = vmatpush1.msra.mxu0 0.0
    %1941 = vmatprep.subr.mxu0 0.0
    %1942 = vmatpush1.msra.mxu0 0.0
    %1943 = vmatprep.subr.mxu0 0.0
    %1944 = vmatpush1.msra.mxu0 0.0
    %1945 = vmatprep.subr.mxu0 0.0
    %1946 = vmatpush1.msra.mxu0 0.0
    %1947 = vmatprep.subr.mxu0 0.0
    %1948 = vmatpush1.msra.mxu0 0.0
    %1949 = vmatprep.subr.mxu0 0.0
    %1950 = vmatpush1.msra.mxu0 0.0
    %1951 = vmatprep.subr.mxu0 0.0
    %1952 = vmatpush1.msra.mxu0 0.0
    %1953 = vmatprep.subr.mxu0 0.0
    %1954 = vmatpush1.msra.mxu0 0.0
    %1955 = vmatprep.subr.mxu0 0.0
    %1956 = vmatpush1.msra.mxu0 0.0
    %1957 = vmatprep.subr.mxu0 0.0
    %1958 = vmatpush1.msra.mxu0 0.0
    %1959 = vmatprep.subr.mxu0 0.0
    %1960 = vmatpush1.msra.mxu0 0.0
    %1961 = vmatprep.subr.mxu0 0.0
    %1962 = vmatpush1.msra.mxu0 0.0
    %1963 = vmatprep.subr.mxu0 0.0
    %1964 = vmatpush1.msra.mxu0 0.0
    %1965 = vmatprep.subr.mxu0 0.0
    %v1966 = vand.u32 %v40, 4294901760
    %v1967 = vsub.f32 %v40, %v1966
    %v1968 = vand.u32 %v1967, 4294901760
    %v1969 = vsub.f32 %v1967, %v1968
    %v1970 = vand.u32 %v1969, 4294901760
    %1971 = vmatpush1.msra.mxu0 %v1970
    %1972 = vmatprep.subr.mxu0 0.0
    %v1973 = vand.u32 %v39, 4294901760
    %v1974 = vsub.f32 %v39, %v1973
    %v1975 = vand.u32 %v1974, 4294901760
    %v1976 = vsub.f32 %v1974, %v1975
    %v1977 = vand.u32 %v1976, 4294901760
    %1978 = vmatpush1.msra.mxu0 %v1977
    %1979 = vmatprep.subr.mxu0 0.0
    %1980 = vmatpush2.msra.mxu0 0.0
    %1981 = vmatprep.subr.mxu0 0.0
    %1982 = vmatpush2.msra.mxu0 0.0
    %1983 = vmatprep.subr.mxu0 0.0
    %1984 = vmatpush2.msra.mxu0 0.0
    %1985 = vmatprep.subr.mxu0 0.0
    %1986 = vmatpush2.msra.mxu0 0.0
    %1987 = vmatprep.subr.mxu0 0.0
    %1988 = vmatpush2.msra.mxu0 0.0
    %1989 = vmatprep.subr.mxu0 0.0
    %1990 = vmatpush2.msra.mxu0 0.0
    %1991 = vmatprep.subr.mxu0 0.0
    %1992 = vmatpush2.msra.mxu0 0.0
    %1993 = vmatprep.subr.mxu0 0.0
    %1994 = vmatpush2.msra.mxu0 0.0
    %1995 = vmatprep.subr.mxu0 0.0
    %1996 = vmatpush2.msra.mxu0 0.0
    %1997 = vmatprep.subr.mxu0 0.0
    %1998 = vmatpush2.msra.mxu0 0.0
    %1999 = vmatprep.subr.mxu0 0.0
    %2000 = vmatpush2.msra.mxu0 0.0
    %2001 = vmatprep.subr.mxu0 0.0
    %2002 = vmatpush2.msra.mxu0 0.0
    %2003 = vmatprep.subr.mxu0 0.0
    %2004 = vmatpush2.msra.mxu0 0.0
    %2005 = vmatprep.subr.mxu0 0.0
    %2006 = vmatpush2.msra.mxu0 0.0
    %2007 = vmatprep.subr.mxu0 0.0
    %2008 = vmatpush2.msra.mxu0 0.0
    %2009 = vmatprep.subr.mxu0 0.0
    %2010 = vmatpush2.msra.mxu0 0.0
    %2011 = vmatprep.mubr.f32.mxu0 0.0
    %v2012 = vand.u32 %v55, 4294901760
    %2013 = vmatmul.mubr.f32.gmra.mxu0 %v2012
    %v2014 = vpop.f32.mrf.mxu0
    %v2015 = vadd.f32 %v1904, %v2014
    %v2016 = vpop.f32.mrf.mxu0
    %2017 = vmatprep.mubr.f32.mxu0 0.0
    %v2018 = vand.u32 %v58, 4294901760
    %2019 = vmatmul.mubr.f32.gmra.mxu0 %v2018
    %v2020 = vpop.f32.mrf.mxu0
    %v2021 = vadd.f32 %v1914, %v2020
    %v2022 = vpop.f32.mrf.mxu0
    %2023 = vmatprep.mubr.f32.mxu0 0.0
    %v2024 = vand.u32 %v61, 4294901760
    %2025 = vmatmul.mubr.f32.gmra.mxu0 %v2024
    %v2026 = vpop.f32.mrf.mxu0
    %v2027 = vadd.f32 %v1924, %v2026
    %v2028 = vpop.f32.mrf.mxu0
    %2029 = vmatprep.mubr.f32.mxu0 0.0
    %v2030 = vand.u32 %v64, 4294901760
    %2031 = vmatmul.mubr.f32.gmra.mxu0 %v2030
    %v2032 = vpop.f32.mrf.mxu0
    %v2033 = vadd.f32 %v1934, %v2032
    %v2034 = vpop.f32.mrf.mxu0
    %2035 = vdwg.mxu0
    %2036 = vmatprep.subr.mxu0 0.0
    %2037 = vmatpush1.msra.mxu0 0.0
    %2038 = vmatprep.subr.mxu0 0.0
    %2039 = vmatpush1.msra.mxu0 0.0
    %2040 = vmatprep.subr.mxu0 0.0
    %2041 = vmatpush1.msra.mxu0 0.0
    %2042 = vmatprep.subr.mxu0 0.0
    %2043 = vmatpush1.msra.mxu0 0.0
    %2044 = vmatprep.subr.mxu0 0.0
    %2045 = vmatpush1.msra.mxu0 0.0
    %2046 = vmatprep.subr.mxu0 0.0
    %2047 = vmatpush1.msra.mxu0 0.0
    %2048 = vmatprep.subr.mxu0 0.0
    %2049 = vmatpush1.msra.mxu0 0.0
    %2050 = vmatprep.subr.mxu0 0.0
    %2051 = vmatpush1.msra.mxu0 0.0
    %2052 = vmatprep.subr.mxu0 0.0
    %2053 = vmatpush1.msra.mxu0 0.0
    %2054 = vmatprep.subr.mxu0 0.0
    %2055 = vmatpush1.msra.mxu0 0.0
    %2056 = vmatprep.subr.mxu0 0.0
    %2057 = vmatpush1.msra.mxu0 0.0
    %2058 = vmatprep.subr.mxu0 0.0
    %2059 = vmatpush1.msra.mxu0 0.0
    %2060 = vmatprep.subr.mxu0 0.0
    %2061 = vmatpush1.msra.mxu0 0.0
    %2062 = vmatprep.subr.mxu0 0.0
    %2063 = vmatpush1.msra.mxu0 0.0
    %2064 = vmatprep.subr.mxu0 0.0
    %v2065 = vand.u32 %v40, 4294901760
    %v2066 = vsub.f32 %v40, %v2065
    %2067 = vmatpush1.msra.mxu0 %v2066
    %2068 = vmatprep.subr.mxu0 0.0
    %v2069 = vand.u32 %v39, 4294901760
    %v2070 = vsub.f32 %v39, %v2069
    %2071 = vmatpush1.msra.mxu0 %v2070
    %2072 = vmatprep.subr.mxu0 0.0
    %2073 = vmatpush2.msra.mxu0 0.0
    %2074 = vmatprep.subr.mxu0 0.0
    %2075 = vmatpush2.msra.mxu0 0.0
    %2076 = vmatprep.subr.mxu0 0.0
    %2077 = vmatpush2.msra.mxu0 0.0
    %2078 = vmatprep.subr.mxu0 0.0
    %2079 = vmatpush2.msra.mxu0 0.0
    %2080 = vmatprep.subr.mxu0 0.0
    %2081 = vmatpush2.msra.mxu0 0.0
    %2082 = vmatprep.subr.mxu0 0.0
    %2083 = vmatpush2.msra.mxu0 0.0
    %2084 = vmatprep.subr.mxu0 0.0
    %2085 = vmatpush2.msra.mxu0 0.0
    %2086 = vmatprep.subr.mxu0 0.0
    %2087 = vmatpush2.msra.mxu0 0.0
    %2088 = vmatprep.subr.mxu0 0.0
    %2089 = vmatpush2.msra.mxu0 0.0
    %2090 = vmatprep.subr.mxu0 0.0
    %2091 = vmatpush2.msra.mxu0 0.0
    %2092 = vmatprep.subr.mxu0 0.0
    %2093 = vmatpush2.msra.mxu0 0.0
    %2094 = vmatprep.subr.mxu0 0.0
    %2095 = vmatpush2.msra.mxu0 0.0
    %2096 = vmatprep.subr.mxu0 0.0
    %2097 = vmatpush2.msra.mxu0 0.0
    %2098 = vmatprep.subr.mxu0 0.0
    %2099 = vmatpush2.msra.mxu0 0.0
    %2100 = vmatprep.subr.mxu0 0.0
    %2101 = vmatpush2.msra.mxu0 0.0
    %2102 = vmatprep.subr.mxu0 0.0
    %2103 = vmatpush2.msra.mxu0 0.0
    %2104 = vmatprep.mubr.f32.mxu0 0.0
    %v2105 = vand.u32 %v55, 4294901760
    %v2106 = vsub.f32 %v55, %v2105
    %2107 = vmatmul.mubr.f32.gmra.mxu0 %v2106
    %v2108 = vpop.f32.mrf.mxu0
    %v2109 = vadd.f32 %v2015, %v2108
    %v2110 = vpop.f32.mrf.mxu0
    %2111 = vmatprep.mubr.f32.mxu0 0.0
    %v2112 = vand.u32 %v58, 4294901760
    %v2113 = vsub.f32 %v58, %v2112
    %2114 = vmatmul.mubr.f32.gmra.mxu0 %v2113
    %v2115 = vpop.f32.mrf.mxu0
    %v2116 = vadd.f32 %v2021, %v2115
    %v2117 = vpop.f32.mrf.mxu0
    %2118 = vmatprep.mubr.f32.mxu0 0.0
    %v2119 = vand.u32 %v61, 4294901760
    %v2120 = vsub.f32 %v61, %v2119
    %2121 = vmatmul.mubr.f32.gmra.mxu0 %v2120
    %v2122 = vpop.f32.mrf.mxu0
    %v2123 = vadd.f32 %v2027, %v2122
    %v2124 = vpop.f32.mrf.mxu0
    %2125 = vmatprep.mubr.f32.mxu0 0.0
    %v2126 = vand.u32 %v64, 4294901760
    %v2127 = vsub.f32 %v64, %v2126
    %2128 = vmatmul.mubr.f32.gmra.mxu0 %v2127
    %v2129 = vpop.f32.mrf.mxu0
    %v2130 = vadd.f32 %v2033, %v2129
    %v2131 = vpop.f32.mrf.mxu0
    %2132 = vdwg.mxu0
    %2133 = vmatprep.subr.mxu0 0.0
    %2134 = vmatpush1.msra.mxu0 0.0
    %2135 = vmatprep.subr.mxu0 0.0
    %2136 = vmatpush1.msra.mxu0 0.0
    %2137 = vmatprep.subr.mxu0 0.0
    %2138 = vmatpush1.msra.mxu0 0.0
    %2139 = vmatprep.subr.mxu0 0.0
    %2140 = vmatpush1.msra.mxu0 0.0
    %2141 = vmatprep.subr.mxu0 0.0
    %2142 = vmatpush1.msra.mxu0 0.0
    %2143 = vmatprep.subr.mxu0 0.0
    %2144 = vmatpush1.msra.mxu0 0.0
    %2145 = vmatprep.subr.mxu0 0.0
    %2146 = vmatpush1.msra.mxu0 0.0
    %2147 = vmatprep.subr.mxu0 0.0
    %2148 = vmatpush1.msra.mxu0 0.0
    %2149 = vmatprep.subr.mxu0 0.0
    %2150 = vmatpush1.msra.mxu0 0.0
    %2151 = vmatprep.subr.mxu0 0.0
    %2152 = vmatpush1.msra.mxu0 0.0
    %2153 = vmatprep.subr.mxu0 0.0
    %2154 = vmatpush1.msra.mxu0 0.0
    %2155 = vmatprep.subr.mxu0 0.0
    %2156 = vmatpush1.msra.mxu0 0.0
    %2157 = vmatprep.subr.mxu0 0.0
    %2158 = vmatpush1.msra.mxu0 0.0
    %2159 = vmatprep.subr.mxu0 0.0
    %2160 = vmatpush1.msra.mxu0 0.0
    %2161 = vmatprep.subr.mxu0 0.0
    %v2162 = vand.u32 %v40, 4294901760
    %2163 = vmatpush1.msra.mxu0 %v2162
    %2164 = vmatprep.subr.mxu0 0.0
    %v2165 = vand.u32 %v39, 4294901760
    %2166 = vmatpush1.msra.mxu0 %v2165
    %2167 = vmatprep.subr.mxu0 0.0
    %2168 = vmatpush2.msra.mxu0 0.0
    %2169 = vmatprep.subr.mxu0 0.0
    %2170 = vmatpush2.msra.mxu0 0.0
    %2171 = vmatprep.subr.mxu0 0.0
    %2172 = vmatpush2.msra.mxu0 0.0
    %2173 = vmatprep.subr.mxu0 0.0
    %2174 = vmatpush2.msra.mxu0 0.0
    %2175 = vmatprep.subr.mxu0 0.0
    %2176 = vmatpush2.msra.mxu0 0.0
    %2177 = vmatprep.subr.mxu0 0.0
    %2178 = vmatpush2.msra.mxu0 0.0
    %2179 = vmatprep.subr.mxu0 0.0
    %2180 = vmatpush2.msra.mxu0 0.0
    %2181 = vmatprep.subr.mxu0 0.0
    %2182 = vmatpush2.msra.mxu0 0.0
    %2183 = vmatprep.subr.mxu0 0.0
    %2184 = vmatpush2.msra.mxu0 0.0
    %2185 = vmatprep.subr.mxu0 0.0
    %2186 = vmatpush2.msra.mxu0 0.0
    %2187 = vmatprep.subr.mxu0 0.0
    %2188 = vmatpush2.msra.mxu0 0.0
    %2189 = vmatprep.subr.mxu0 0.0
    %2190 = vmatpush2.msra.mxu0 0.0
    %2191 = vmatprep.subr.mxu0 0.0
    %2192 = vmatpush2.msra.mxu0 0.0
    %2193 = vmatprep.subr.mxu0 0.0
    %2194 = vmatpush2.msra.mxu0 0.0
    %2195 = vmatprep.subr.mxu0 0.0
    %2196 = vmatpush2.msra.mxu0 0.0
    %2197 = vmatprep.subr.mxu0 0.0
    %2198 = vmatpush2.msra.mxu0 0.0
    %2199 = vmatprep.mubr.f32.mxu0 0.0
    %v2200 = vand.u32 %v55, 4294901760
    %v2201 = vsub.f32 %v55, %v2200
    %v2202 = vand.u32 %v2201, 4294901760
    %2203 = vmatmul.mubr.f32.gmra.mxu0 %v2202
    %v2204 = vpop.f32.mrf.mxu0
    %v2205 = vadd.f32 %v2109, %v2204
    %v2206 = vpop.f32.mrf.mxu0
    %2207 = vmatprep.mubr.f32.mxu0 0.0
    %v2208 = vand.u32 %v58, 4294901760
    %v2209 = vsub.f32 %v58, %v2208
    %v2210 = vand.u32 %v2209, 4294901760
    %2211 = vmatmul.mubr.f32.gmra.mxu0 %v2210
    %v2212 = vpop.f32.mrf.mxu0
    %v2213 = vadd.f32 %v2116, %v2212
    %v2214 = vpop.f32.mrf.mxu0
    %2215 = vmatprep.mubr.f32.mxu0 0.0
    %v2216 = vand.u32 %v61, 4294901760
    %v2217 = vsub.f32 %v61, %v2216
    %v2218 = vand.u32 %v2217, 4294901760
    %2219 = vmatmul.mubr.f32.gmra.mxu0 %v2218
    %v2220 = vpop.f32.mrf.mxu0
    %v2221 = vadd.f32 %v2123, %v2220
    %v2222 = vpop.f32.mrf.mxu0
    %2223 = vmatprep.mubr.f32.mxu0 0.0
    %v2224 = vand.u32 %v64, 4294901760
    %v2225 = vsub.f32 %v64, %v2224
    %v2226 = vand.u32 %v2225, 4294901760
    %2227 = vmatmul.mubr.f32.gmra.mxu0 %v2226
    %v2228 = vpop.f32.mrf.mxu0
    %v2229 = vadd.f32 %v2130, %v2228
    %v2230 = vpop.f32.mrf.mxu0
    %2231 = vdwg.mxu0
    %2232 = vmatprep.subr.mxu0 0.0
    %2233 = vmatpush1.msra.mxu0 0.0
    %2234 = vmatprep.subr.mxu0 0.0
    %2235 = vmatpush1.msra.mxu0 0.0
    %2236 = vmatprep.subr.mxu0 0.0
    %2237 = vmatpush1.msra.mxu0 0.0
    %2238 = vmatprep.subr.mxu0 0.0
    %2239 = vmatpush1.msra.mxu0 0.0
    %2240 = vmatprep.subr.mxu0 0.0
    %2241 = vmatpush1.msra.mxu0 0.0
    %2242 = vmatprep.subr.mxu0 0.0
    %2243 = vmatpush1.msra.mxu0 0.0
    %2244 = vmatprep.subr.mxu0 0.0
    %2245 = vmatpush1.msra.mxu0 0.0
    %2246 = vmatprep.subr.mxu0 0.0
    %2247 = vmatpush1.msra.mxu0 0.0
    %2248 = vmatprep.subr.mxu0 0.0
    %2249 = vmatpush1.msra.mxu0 0.0
    %2250 = vmatprep.subr.mxu0 0.0
    %2251 = vmatpush1.msra.mxu0 0.0
    %2252 = vmatprep.subr.mxu0 0.0
    %2253 = vmatpush1.msra.mxu0 0.0
    %2254 = vmatprep.subr.mxu0 0.0
    %2255 = vmatpush1.msra.mxu0 0.0
    %2256 = vmatprep.subr.mxu0 0.0
    %2257 = vmatpush1.msra.mxu0 0.0
    %2258 = vmatprep.subr.mxu0 0.0
    %2259 = vmatpush1.msra.mxu0 0.0
    %2260 = vmatprep.subr.mxu0 0.0
    %v2261 = vand.u32 %v40, 4294901760
    %v2262 = vsub.f32 %v40, %v2261
    %v2263 = vand.u32 %v2262, 4294901760
    %2264 = vmatpush1.msra.mxu0 %v2263
    %2265 = vmatprep.subr.mxu0 0.0
    %v2266 = vand.u32 %v39, 4294901760
    %v2267 = vsub.f32 %v39, %v2266
    %v2268 = vand.u32 %v2267, 4294901760
    %2269 = vmatpush1.msra.mxu0 %v2268
    %2270 = vmatprep.subr.mxu0 0.0
    %2271 = vmatpush2.msra.mxu0 0.0
    %2272 = vmatprep.subr.mxu0 0.0
    %2273 = vmatpush2.msra.mxu0 0.0
    %2274 = vmatprep.subr.mxu0 0.0
    %2275 = vmatpush2.msra.mxu0 0.0
    %2276 = vmatprep.subr.mxu0 0.0
    %2277 = vmatpush2.msra.mxu0 0.0
    %2278 = vmatprep.subr.mxu0 0.0
    %2279 = vmatpush2.msra.mxu0 0.0
    %2280 = vmatprep.subr.mxu0 0.0
    %2281 = vmatpush2.msra.mxu0 0.0
    %2282 = vmatprep.subr.mxu0 0.0
    %2283 = vmatpush2.msra.mxu0 0.0
    %2284 = vmatprep.subr.mxu0 0.0
    %2285 = vmatpush2.msra.mxu0 0.0
    %2286 = vmatprep.subr.mxu0 0.0
    %2287 = vmatpush2.msra.mxu0 0.0
    %2288 = vmatprep.subr.mxu0 0.0
    %2289 = vmatpush2.msra.mxu0 0.0
    %2290 = vmatprep.subr.mxu0 0.0
    %2291 = vmatpush2.msra.mxu0 0.0
    %2292 = vmatprep.subr.mxu0 0.0
    %2293 = vmatpush2.msra.mxu0 0.0
    %2294 = vmatprep.subr.mxu0 0.0
    %2295 = vmatpush2.msra.mxu0 0.0
    %2296 = vmatprep.subr.mxu0 0.0
    %2297 = vmatpush2.msra.mxu0 0.0
    %2298 = vmatprep.subr.mxu0 0.0
    %2299 = vmatpush2.msra.mxu0 0.0
    %2300 = vmatprep.subr.mxu0 0.0
    %2301 = vmatpush2.msra.mxu0 0.0
    %2302 = vmatprep.mubr.f32.mxu0 0.0
    %v2303 = vand.u32 %v55, 4294901760
    %2304 = vmatmul.mubr.f32.gmra.mxu0 %v2303
    %v2305 = vpop.f32.mrf.mxu0
    %v2306 = vadd.f32 %v2205, %v2305
    %v2307 = vpop.f32.mrf.mxu0
    %2308 = vmatprep.mubr.f32.mxu0 0.0
    %v2309 = vand.u32 %v58, 4294901760
    %2310 = vmatmul.mubr.f32.gmra.mxu0 %v2309
    %v2311 = vpop.f32.mrf.mxu0
    %v2312 = vadd.f32 %v2213, %v2311
    %v2313 = vpop.f32.mrf.mxu0
    %2314 = vmatprep.mubr.f32.mxu0 0.0
    %v2315 = vand.u32 %v61, 4294901760
    %2316 = vmatmul.mubr.f32.gmra.mxu0 %v2315
    %v2317 = vpop.f32.mrf.mxu0
    %v2318 = vadd.f32 %v2221, %v2317
    %v2319 = vpop.f32.mrf.mxu0
    %2320 = vmatprep.mubr.f32.mxu0 0.0
    %v2321 = vand.u32 %v64, 4294901760
    %2322 = vmatmul.mubr.f32.gmra.mxu0 %v2321
    %v2323 = vpop.f32.mrf.mxu0
    %v2324 = vadd.f32 %v2229, %v2323
    %v2325 = vpop.f32.mrf.mxu0
    %2326 = vdwg.mxu0
    %2327 = vmatprep.subr.mxu0 0.0
    %2328 = vmatpush1.msra.mxu0 0.0
    %2329 = vmatprep.subr.mxu0 0.0
    %2330 = vmatpush1.msra.mxu0 0.0
    %2331 = vmatprep.subr.mxu0 0.0
    %2332 = vmatpush1.msra.mxu0 0.0
    %2333 = vmatprep.subr.mxu0 0.0
    %2334 = vmatpush1.msra.mxu0 0.0
    %2335 = vmatprep.subr.mxu0 0.0
    %2336 = vmatpush1.msra.mxu0 0.0
    %2337 = vmatprep.subr.mxu0 0.0
    %2338 = vmatpush1.msra.mxu0 0.0
    %2339 = vmatprep.subr.mxu0 0.0
    %2340 = vmatpush1.msra.mxu0 0.0
    %2341 = vmatprep.subr.mxu0 0.0
    %2342 = vmatpush1.msra.mxu0 0.0
    %2343 = vmatprep.subr.mxu0 0.0
    %2344 = vmatpush1.msra.mxu0 0.0
    %2345 = vmatprep.subr.mxu0 0.0
    %2346 = vmatpush1.msra.mxu0 0.0
    %2347 = vmatprep.subr.mxu0 0.0
    %2348 = vmatpush1.msra.mxu0 0.0
    %2349 = vmatprep.subr.mxu0 0.0
    %2350 = vmatpush1.msra.mxu0 0.0
    %2351 = vmatprep.subr.mxu0 0.0
    %2352 = vmatpush1.msra.mxu0 0.0
    %2353 = vmatprep.subr.mxu0 0.0
    %2354 = vmatpush1.msra.mxu0 0.0
    %2355 = vmatprep.subr.mxu0 0.0
    %v2356 = vand.u32 %v40, 4294901760
    %2357 = vmatpush1.msra.mxu0 %v2356
    %2358 = vmatprep.subr.mxu0 0.0
    %v2359 = vand.u32 %v39, 4294901760
    %2360 = vmatpush1.msra.mxu0 %v2359
    %2361 = vmatprep.subr.mxu0 0.0
    %2362 = vmatpush2.msra.mxu0 0.0
    %2363 = vmatprep.subr.mxu0 0.0
    %2364 = vmatpush2.msra.mxu0 0.0
    %2365 = vmatprep.subr.mxu0 0.0
    %2366 = vmatpush2.msra.mxu0 0.0
    %2367 = vmatprep.subr.mxu0 0.0
    %2368 = vmatpush2.msra.mxu0 0.0
    %2369 = vmatprep.subr.mxu0 0.0
    %2370 = vmatpush2.msra.mxu0 0.0
    %2371 = vmatprep.subr.mxu0 0.0
    %2372 = vmatpush2.msra.mxu0 0.0
    %2373 = vmatprep.subr.mxu0 0.0
    %2374 = vmatpush2.msra.mxu0 0.0
    %2375 = vmatprep.subr.mxu0 0.0
    %2376 = vmatpush2.msra.mxu0 0.0
    %2377 = vmatprep.subr.mxu0 0.0
    %2378 = vmatpush2.msra.mxu0 0.0
    %2379 = vmatprep.subr.mxu0 0.0
    %2380 = vmatpush2.msra.mxu0 0.0
    %2381 = vmatprep.subr.mxu0 0.0
    %2382 = vmatpush2.msra.mxu0 0.0
    %2383 = vmatprep.subr.mxu0 0.0
    %2384 = vmatpush2.msra.mxu0 0.0
    %2385 = vmatprep.subr.mxu0 0.0
    %2386 = vmatpush2.msra.mxu0 0.0
    %2387 = vmatprep.subr.mxu0 0.0
    %2388 = vmatpush2.msra.mxu0 0.0
    %2389 = vmatprep.subr.mxu0 0.0
    %2390 = vmatpush2.msra.mxu0 0.0
    %2391 = vmatprep.subr.mxu0 0.0
    %2392 = vmatpush2.msra.mxu0 0.0
    %2393 = vmatprep.mubr.f32.mxu0 0.0
    %v2394 = vand.u32 %v55, 4294901760
    %2395 = vmatmul.mubr.f32.gmra.mxu0 %v2394
    %v2396 = vpop.f32.mrf.mxu0
    %v2397 = vadd.f32 %v2306, %v2396
    %v2398 = vpop.f32.mrf.mxu0
    %2399 = vmatprep.mubr.f32.mxu0 0.0
    %v2400 = vand.u32 %v58, 4294901760
    %2401 = vmatmul.mubr.f32.gmra.mxu0 %v2400
    %v2402 = vpop.f32.mrf.mxu0
    %v2403 = vadd.f32 %v2312, %v2402
    %v2404 = vpop.f32.mrf.mxu0
    %2405 = vmatprep.mubr.f32.mxu0 0.0
    %v2406 = vand.u32 %v61, 4294901760
    %2407 = vmatmul.mubr.f32.gmra.mxu0 %v2406
    %v2408 = vpop.f32.mrf.mxu0
    %v2409 = vadd.f32 %v2318, %v2408
    %v2410 = vpop.f32.mrf.mxu0
    %2411 = vmatprep.mubr.f32.mxu0 0.0
    %v2412 = vand.u32 %v64, 4294901760
    %2413 = vmatmul.mubr.f32.gmra.mxu0 %v2412
    %v2414 = vpop.f32.mrf.mxu0
    %v2415 = vadd.f32 %v2324, %v2414
    %v2416 = vpop.f32.mrf.mxu0
    %2417 = vdwg.mxu0
    %2418 = vmatprep.subr.mxu0 0.0
    %2419 = vmatpush1.msra.mxu0 0.0
    %2420 = vmatprep.subr.mxu0 0.0
    %2421 = vmatpush1.msra.mxu0 0.0
    %2422 = vmatprep.subr.mxu0 0.0
    %2423 = vmatpush1.msra.mxu0 0.0
    %2424 = vmatprep.subr.mxu0 0.0
    %2425 = vmatpush1.msra.mxu0 0.0
    %2426 = vmatprep.subr.mxu0 0.0
    %2427 = vmatpush1.msra.mxu0 0.0
    %2428 = vmatprep.subr.mxu0 0.0
    %2429 = vmatpush1.msra.mxu0 0.0
    %2430 = vmatprep.subr.mxu0 0.0
    %2431 = vmatpush1.msra.mxu0 0.0
    %2432 = vmatprep.subr.mxu0 0.0
    %2433 = vmatpush1.msra.mxu0 0.0
    %2434 = vmatprep.subr.mxu0 0.0
    %2435 = vmatpush1.msra.mxu0 0.0
    %2436 = vmatprep.subr.mxu0 0.0
    %2437 = vmatpush1.msra.mxu0 0.0
    %2438 = vmatprep.subr.mxu0 0.0
    %2439 = vmatpush1.msra.mxu0 0.0
    %2440 = vmatprep.subr.mxu0 0.0
    %2441 = vmatpush1.msra.mxu0 0.0
    %2442 = vmatprep.subr.mxu0 0.0
    %2443 = vmatpush1.msra.mxu0 0.0
    %2444 = vmatprep.subr.mxu0 0.0
    %2445 = vmatpush1.msra.mxu0 0.0
    %2446 = vmatprep.subr.mxu0 0.0
    %v2447 = vand.u32 %v42, 4294901760
    %2448 = vmatpush1.msra.mxu0 %v2447
    %2449 = vmatprep.subr.mxu0 0.0
    %v2450 = vand.u32 %v41, 4294901760
    %2451 = vmatpush1.msra.mxu0 %v2450
    %2452 = vmatprep.subr.mxu0 0.0
    %2453 = vmatpush2.msra.mxu0 0.0
    %2454 = vmatprep.subr.mxu0 0.0
    %2455 = vmatpush2.msra.mxu0 0.0
    %2456 = vmatprep.subr.mxu0 0.0
    %2457 = vmatpush2.msra.mxu0 0.0
    %2458 = vmatprep.subr.mxu0 0.0
    %2459 = vmatpush2.msra.mxu0 0.0
    %2460 = vmatprep.subr.mxu0 0.0
    %2461 = vmatpush2.msra.mxu0 0.0
    %2462 = vmatprep.subr.mxu0 0.0
    %2463 = vmatpush2.msra.mxu0 0.0
    %2464 = vmatprep.subr.mxu0 0.0
    %2465 = vmatpush2.msra.mxu0 0.0
    %2466 = vmatprep.subr.mxu0 0.0
    %2467 = vmatpush2.msra.mxu0 0.0
    %2468 = vmatprep.subr.mxu0 0.0
    %2469 = vmatpush2.msra.mxu0 0.0
    %2470 = vmatprep.subr.mxu0 0.0
    %2471 = vmatpush2.msra.mxu0 0.0
    %2472 = vmatprep.subr.mxu0 0.0
    %2473 = vmatpush2.msra.mxu0 0.0
    %2474 = vmatprep.subr.mxu0 0.0
    %2475 = vmatpush2.msra.mxu0 0.0
    %2476 = vmatprep.subr.mxu0 0.0
    %2477 = vmatpush2.msra.mxu0 0.0
    %2478 = vmatprep.subr.mxu0 0.0
    %2479 = vmatpush2.msra.mxu0 0.0
    %2480 = vmatprep.subr.mxu0 0.0
    %2481 = vmatpush2.msra.mxu0 0.0
    %2482 = vmatprep.subr.mxu0 0.0
    %2483 = vmatpush2.msra.mxu0 0.0
    %2484 = vmatprep.mubr.f32.mxu0 0.0
    %v2485 = vand.u32 %v55, 4294901760
    %v2486 = vsub.f32 %v55, %v2485
    %v2487 = vand.u32 %v2486, 4294901760
    %v2488 = vsub.f32 %v2486, %v2487
    %v2489 = vand.u32 %v2488, 4294901760
    %2490 = vmatmul.mubr.f32.gmra.mxu0 %v2489
    %v2491 = vpop.f32.mrf.mxu0
    %v2492 = vadd.f32 0.0, %v2491
    %v2493 = vpop.f32.mrf.mxu0
    %2494 = vmatprep.mubr.f32.mxu0 0.0
    %v2495 = vand.u32 %v58, 4294901760
    %v2496 = vsub.f32 %v58, %v2495
    %v2497 = vand.u32 %v2496, 4294901760
    %v2498 = vsub.f32 %v2496, %v2497
    %v2499 = vand.u32 %v2498, 4294901760
    %2500 = vmatmul.mubr.f32.gmra.mxu0 %v2499
    %v2501 = vpop.f32.mrf.mxu0
    %v2502 = vadd.f32 0.0, %v2501
    %v2503 = vpop.f32.mrf.mxu0
    %2504 = vmatprep.mubr.f32.mxu0 0.0
    %v2505 = vand.u32 %v61, 4294901760
    %v2506 = vsub.f32 %v61, %v2505
    %v2507 = vand.u32 %v2506, 4294901760
    %v2508 = vsub.f32 %v2506, %v2507
    %v2509 = vand.u32 %v2508, 4294901760
    %2510 = vmatmul.mubr.f32.gmra.mxu0 %v2509
    %v2511 = vpop.f32.mrf.mxu0
    %v2512 = vadd.f32 0.0, %v2511
    %v2513 = vpop.f32.mrf.mxu0
    %2514 = vmatprep.mubr.f32.mxu0 0.0
    %v2515 = vand.u32 %v64, 4294901760
    %v2516 = vsub.f32 %v64, %v2515
    %v2517 = vand.u32 %v2516, 4294901760
    %v2518 = vsub.f32 %v2516, %v2517
    %v2519 = vand.u32 %v2518, 4294901760
    %2520 = vmatmul.mubr.f32.gmra.mxu0 %v2519
    %v2521 = vpop.f32.mrf.mxu0
    %v2522 = vadd.f32 0.0, %v2521
    %v2523 = vpop.f32.mrf.mxu0
    %2524 = vdwg.mxu0
    %2525 = vmatprep.subr.mxu0 0.0
    %2526 = vmatpush1.msra.mxu0 0.0
    %2527 = vmatprep.subr.mxu0 0.0
    %2528 = vmatpush1.msra.mxu0 0.0
    %2529 = vmatprep.subr.mxu0 0.0
    %2530 = vmatpush1.msra.mxu0 0.0
    %2531 = vmatprep.subr.mxu0 0.0
    %2532 = vmatpush1.msra.mxu0 0.0
    %2533 = vmatprep.subr.mxu0 0.0
    %2534 = vmatpush1.msra.mxu0 0.0
    %2535 = vmatprep.subr.mxu0 0.0
    %2536 = vmatpush1.msra.mxu0 0.0
    %2537 = vmatprep.subr.mxu0 0.0
    %2538 = vmatpush1.msra.mxu0 0.0
    %2539 = vmatprep.subr.mxu0 0.0
    %2540 = vmatpush1.msra.mxu0 0.0
    %2541 = vmatprep.subr.mxu0 0.0
    %2542 = vmatpush1.msra.mxu0 0.0
    %2543 = vmatprep.subr.mxu0 0.0
    %2544 = vmatpush1.msra.mxu0 0.0
    %2545 = vmatprep.subr.mxu0 0.0
    %2546 = vmatpush1.msra.mxu0 0.0
    %2547 = vmatprep.subr.mxu0 0.0
    %2548 = vmatpush1.msra.mxu0 0.0
    %2549 = vmatprep.subr.mxu0 0.0
    %2550 = vmatpush1.msra.mxu0 0.0
    %2551 = vmatprep.subr.mxu0 0.0
    %2552 = vmatpush1.msra.mxu0 0.0
    %2553 = vmatprep.subr.mxu0 0.0
    %v2554 = vand.u32 %v42, 4294901760
    %v2555 = vsub.f32 %v42, %v2554
    %v2556 = vand.u32 %v2555, 4294901760
    %v2557 = vsub.f32 %v2555, %v2556
    %v2558 = vand.u32 %v2557, 4294901760
    %2559 = vmatpush1.msra.mxu0 %v2558
    %2560 = vmatprep.subr.mxu0 0.0
    %v2561 = vand.u32 %v41, 4294901760
    %v2562 = vsub.f32 %v41, %v2561
    %v2563 = vand.u32 %v2562, 4294901760
    %v2564 = vsub.f32 %v2562, %v2563
    %v2565 = vand.u32 %v2564, 4294901760
    %2566 = vmatpush1.msra.mxu0 %v2565
    %2567 = vmatprep.subr.mxu0 0.0
    %2568 = vmatpush2.msra.mxu0 0.0
    %2569 = vmatprep.subr.mxu0 0.0
    %2570 = vmatpush2.msra.mxu0 0.0
    %2571 = vmatprep.subr.mxu0 0.0
    %2572 = vmatpush2.msra.mxu0 0.0
    %2573 = vmatprep.subr.mxu0 0.0
    %2574 = vmatpush2.msra.mxu0 0.0
    %2575 = vmatprep.subr.mxu0 0.0
    %2576 = vmatpush2.msra.mxu0 0.0
    %2577 = vmatprep.subr.mxu0 0.0
    %2578 = vmatpush2.msra.mxu0 0.0
    %2579 = vmatprep.subr.mxu0 0.0
    %2580 = vmatpush2.msra.mxu0 0.0
    %2581 = vmatprep.subr.mxu0 0.0
    %2582 = vmatpush2.msra.mxu0 0.0
    %2583 = vmatprep.subr.mxu0 0.0
    %2584 = vmatpush2.msra.mxu0 0.0
    %2585 = vmatprep.subr.mxu0 0.0
    %2586 = vmatpush2.msra.mxu0 0.0
    %2587 = vmatprep.subr.mxu0 0.0
    %2588 = vmatpush2.msra.mxu0 0.0
    %2589 = vmatprep.subr.mxu0 0.0
    %2590 = vmatpush2.msra.mxu0 0.0
    %2591 = vmatprep.subr.mxu0 0.0
    %2592 = vmatpush2.msra.mxu0 0.0
    %2593 = vmatprep.subr.mxu0 0.0
    %2594 = vmatpush2.msra.mxu0 0.0
    %2595 = vmatprep.subr.mxu0 0.0
    %2596 = vmatpush2.msra.mxu0 0.0
    %2597 = vmatprep.subr.mxu0 0.0
    %2598 = vmatpush2.msra.mxu0 0.0
    %2599 = vmatprep.mubr.f32.mxu0 0.0
    %v2600 = vand.u32 %v55, 4294901760
    %2601 = vmatmul.mubr.f32.gmra.mxu0 %v2600
    %v2602 = vpop.f32.mrf.mxu0
    %v2603 = vadd.f32 %v2492, %v2602
    %v2604 = vpop.f32.mrf.mxu0
    %2605 = vmatprep.mubr.f32.mxu0 0.0
    %v2606 = vand.u32 %v58, 4294901760
    %2607 = vmatmul.mubr.f32.gmra.mxu0 %v2606
    %v2608 = vpop.f32.mrf.mxu0
    %v2609 = vadd.f32 %v2502, %v2608
    %v2610 = vpop.f32.mrf.mxu0
    %2611 = vmatprep.mubr.f32.mxu0 0.0
    %v2612 = vand.u32 %v61, 4294901760
    %2613 = vmatmul.mubr.f32.gmra.mxu0 %v2612
    %v2614 = vpop.f32.mrf.mxu0
    %v2615 = vadd.f32 %v2512, %v2614
    %v2616 = vpop.f32.mrf.mxu0
    %2617 = vmatprep.mubr.f32.mxu0 0.0
    %v2618 = vand.u32 %v64, 4294901760
    %2619 = vmatmul.mubr.f32.gmra.mxu0 %v2618
    %v2620 = vpop.f32.mrf.mxu0
    %v2621 = vadd.f32 %v2522, %v2620
    %v2622 = vpop.f32.mrf.mxu0
    %2623 = vdwg.mxu0
    %2624 = vmatprep.subr.mxu0 0.0
    %2625 = vmatpush1.msra.mxu0 0.0
    %2626 = vmatprep.subr.mxu0 0.0
    %2627 = vmatpush1.msra.mxu0 0.0
    %2628 = vmatprep.subr.mxu0 0.0
    %2629 = vmatpush1.msra.mxu0 0.0
    %2630 = vmatprep.subr.mxu0 0.0
    %2631 = vmatpush1.msra.mxu0 0.0
    %2632 = vmatprep.subr.mxu0 0.0
    %2633 = vmatpush1.msra.mxu0 0.0
    %2634 = vmatprep.subr.mxu0 0.0
    %2635 = vmatpush1.msra.mxu0 0.0
    %2636 = vmatprep.subr.mxu0 0.0
    %2637 = vmatpush1.msra.mxu0 0.0
    %2638 = vmatprep.subr.mxu0 0.0
    %2639 = vmatpush1.msra.mxu0 0.0
    %2640 = vmatprep.subr.mxu0 0.0
    %2641 = vmatpush1.msra.mxu0 0.0
    %2642 = vmatprep.subr.mxu0 0.0
    %2643 = vmatpush1.msra.mxu0 0.0
    %2644 = vmatprep.subr.mxu0 0.0
    %2645 = vmatpush1.msra.mxu0 0.0
    %2646 = vmatprep.subr.mxu0 0.0
    %2647 = vmatpush1.msra.mxu0 0.0
    %2648 = vmatprep.subr.mxu0 0.0
    %2649 = vmatpush1.msra.mxu0 0.0
    %2650 = vmatprep.subr.mxu0 0.0
    %2651 = vmatpush1.msra.mxu0 0.0
    %2652 = vmatprep.subr.mxu0 0.0
    %v2653 = vand.u32 %v42, 4294901760
    %v2654 = vsub.f32 %v42, %v2653
    %2655 = vmatpush1.msra.mxu0 %v2654
    %2656 = vmatprep.subr.mxu0 0.0
    %v2657 = vand.u32 %v41, 4294901760
    %v2658 = vsub.f32 %v41, %v2657
    %2659 = vmatpush1.msra.mxu0 %v2658
    %2660 = vmatprep.subr.mxu0 0.0
    %2661 = vmatpush2.msra.mxu0 0.0
    %2662 = vmatprep.subr.mxu0 0.0
    %2663 = vmatpush2.msra.mxu0 0.0
    %2664 = vmatprep.subr.mxu0 0.0
    %2665 = vmatpush2.msra.mxu0 0.0
    %2666 = vmatprep.subr.mxu0 0.0
    %2667 = vmatpush2.msra.mxu0 0.0
    %2668 = vmatprep.subr.mxu0 0.0
    %2669 = vmatpush2.msra.mxu0 0.0
    %2670 = vmatprep.subr.mxu0 0.0
    %2671 = vmatpush2.msra.mxu0 0.0
    %2672 = vmatprep.subr.mxu0 0.0
    %2673 = vmatpush2.msra.mxu0 0.0
    %2674 = vmatprep.subr.mxu0 0.0
    %2675 = vmatpush2.msra.mxu0 0.0
    %2676 = vmatprep.subr.mxu0 0.0
    %2677 = vmatpush2.msra.mxu0 0.0
    %2678 = vmatprep.subr.mxu0 0.0
    %2679 = vmatpush2.msra.mxu0 0.0
    %2680 = vmatprep.subr.mxu0 0.0
    %2681 = vmatpush2.msra.mxu0 0.0
    %2682 = vmatprep.subr.mxu0 0.0
    %2683 = vmatpush2.msra.mxu0 0.0
    %2684 = vmatprep.subr.mxu0 0.0
    %2685 = vmatpush2.msra.mxu0 0.0
    %2686 = vmatprep.subr.mxu0 0.0
    %2687 = vmatpush2.msra.mxu0 0.0
    %2688 = vmatprep.subr.mxu0 0.0
    %2689 = vmatpush2.msra.mxu0 0.0
    %2690 = vmatprep.subr.mxu0 0.0
    %2691 = vmatpush2.msra.mxu0 0.0
    %2692 = vmatprep.mubr.f32.mxu0 0.0
    %v2693 = vand.u32 %v55, 4294901760
    %v2694 = vsub.f32 %v55, %v2693
    %2695 = vmatmul.mubr.f32.gmra.mxu0 %v2694
    %v2696 = vpop.f32.mrf.mxu0
    %v2697 = vadd.f32 %v2603, %v2696
    %v2698 = vpop.f32.mrf.mxu0
    %2699 = vmatprep.mubr.f32.mxu0 0.0
    %v2700 = vand.u32 %v58, 4294901760
    %v2701 = vsub.f32 %v58, %v2700
    %2702 = vmatmul.mubr.f32.gmra.mxu0 %v2701
    %v2703 = vpop.f32.mrf.mxu0
    %v2704 = vadd.f32 %v2609, %v2703
    %v2705 = vpop.f32.mrf.mxu0
    %2706 = vmatprep.mubr.f32.mxu0 0.0
    %v2707 = vand.u32 %v61, 4294901760
    %v2708 = vsub.f32 %v61, %v2707
    %2709 = vmatmul.mubr.f32.gmra.mxu0 %v2708
    %v2710 = vpop.f32.mrf.mxu0
    %v2711 = vadd.f32 %v2615, %v2710
    %v2712 = vpop.f32.mrf.mxu0
    %2713 = vmatprep.mubr.f32.mxu0 0.0
    %v2714 = vand.u32 %v64, 4294901760
    %v2715 = vsub.f32 %v64, %v2714
    %2716 = vmatmul.mubr.f32.gmra.mxu0 %v2715
    %v2717 = vpop.f32.mrf.mxu0
    %v2718 = vadd.f32 %v2621, %v2717
    %v2719 = vpop.f32.mrf.mxu0
    %2720 = vdwg.mxu0
    %2721 = vmatprep.subr.mxu0 0.0
    %2722 = vmatpush1.msra.mxu0 0.0
    %2723 = vmatprep.subr.mxu0 0.0
    %2724 = vmatpush1.msra.mxu0 0.0
    %2725 = vmatprep.subr.mxu0 0.0
    %2726 = vmatpush1.msra.mxu0 0.0
    %2727 = vmatprep.subr.mxu0 0.0
    %2728 = vmatpush1.msra.mxu0 0.0
    %2729 = vmatprep.subr.mxu0 0.0
    %2730 = vmatpush1.msra.mxu0 0.0
    %2731 = vmatprep.subr.mxu0 0.0
    %2732 = vmatpush1.msra.mxu0 0.0
    %2733 = vmatprep.subr.mxu0 0.0
    %2734 = vmatpush1.msra.mxu0 0.0
    %2735 = vmatprep.subr.mxu0 0.0
    %2736 = vmatpush1.msra.mxu0 0.0
    %2737 = vmatprep.subr.mxu0 0.0
    %2738 = vmatpush1.msra.mxu0 0.0
    %2739 = vmatprep.subr.mxu0 0.0
    %2740 = vmatpush1.msra.mxu0 0.0
    %2741 = vmatprep.subr.mxu0 0.0
    %2742 = vmatpush1.msra.mxu0 0.0
    %2743 = vmatprep.subr.mxu0 0.0
    %2744 = vmatpush1.msra.mxu0 0.0
    %2745 = vmatprep.subr.mxu0 0.0
    %2746 = vmatpush1.msra.mxu0 0.0
    %2747 = vmatprep.subr.mxu0 0.0
    %2748 = vmatpush1.msra.mxu0 0.0
    %2749 = vmatprep.subr.mxu0 0.0
    %v2750 = vand.u32 %v42, 4294901760
    %2751 = vmatpush1.msra.mxu0 %v2750
    %2752 = vmatprep.subr.mxu0 0.0
    %v2753 = vand.u32 %v41, 4294901760
    %2754 = vmatpush1.msra.mxu0 %v2753
    %2755 = vmatprep.subr.mxu0 0.0
    %2756 = vmatpush2.msra.mxu0 0.0
    %2757 = vmatprep.subr.mxu0 0.0
    %2758 = vmatpush2.msra.mxu0 0.0
    %2759 = vmatprep.subr.mxu0 0.0
    %2760 = vmatpush2.msra.mxu0 0.0
    %2761 = vmatprep.subr.mxu0 0.0
    %2762 = vmatpush2.msra.mxu0 0.0
    %2763 = vmatprep.subr.mxu0 0.0
    %2764 = vmatpush2.msra.mxu0 0.0
    %2765 = vmatprep.subr.mxu0 0.0
    %2766 = vmatpush2.msra.mxu0 0.0
    %2767 = vmatprep.subr.mxu0 0.0
    %2768 = vmatpush2.msra.mxu0 0.0
    %2769 = vmatprep.subr.mxu0 0.0
    %2770 = vmatpush2.msra.mxu0 0.0
    %2771 = vmatprep.subr.mxu0 0.0
    %2772 = vmatpush2.msra.mxu0 0.0
    %2773 = vmatprep.subr.mxu0 0.0
    %2774 = vmatpush2.msra.mxu0 0.0
    %2775 = vmatprep.subr.mxu0 0.0
    %2776 = vmatpush2.msra.mxu0 0.0
    %2777 = vmatprep.subr.mxu0 0.0
    %2778 = vmatpush2.msra.mxu0 0.0
    %2779 = vmatprep.subr.mxu0 0.0
    %2780 = vmatpush2.msra.mxu0 0.0
    %2781 = vmatprep.subr.mxu0 0.0
    %2782 = vmatpush2.msra.mxu0 0.0
    %2783 = vmatprep.subr.mxu0 0.0
    %2784 = vmatpush2.msra.mxu0 0.0
    %2785 = vmatprep.subr.mxu0 0.0
    %2786 = vmatpush2.msra.mxu0 0.0
    %2787 = vmatprep.mubr.f32.mxu0 0.0
    %v2788 = vand.u32 %v55, 4294901760
    %v2789 = vsub.f32 %v55, %v2788
    %v2790 = vand.u32 %v2789, 4294901760
    %2791 = vmatmul.mubr.f32.gmra.mxu0 %v2790
    %v2792 = vpop.f32.mrf.mxu0
    %v2793 = vadd.f32 %v2697, %v2792
    %v2794 = vpop.f32.mrf.mxu0
    %2795 = vmatprep.mubr.f32.mxu0 0.0
    %v2796 = vand.u32 %v58, 4294901760
    %v2797 = vsub.f32 %v58, %v2796
    %v2798 = vand.u32 %v2797, 4294901760
    %2799 = vmatmul.mubr.f32.gmra.mxu0 %v2798
    %v2800 = vpop.f32.mrf.mxu0
    %v2801 = vadd.f32 %v2704, %v2800
    %v2802 = vpop.f32.mrf.mxu0
    %2803 = vmatprep.mubr.f32.mxu0 0.0
    %v2804 = vand.u32 %v61, 4294901760
    %v2805 = vsub.f32 %v61, %v2804
    %v2806 = vand.u32 %v2805, 4294901760
    %2807 = vmatmul.mubr.f32.gmra.mxu0 %v2806
    %v2808 = vpop.f32.mrf.mxu0
    %v2809 = vadd.f32 %v2711, %v2808
    %v2810 = vpop.f32.mrf.mxu0
    %2811 = vmatprep.mubr.f32.mxu0 0.0
    %v2812 = vand.u32 %v64, 4294901760
    %v2813 = vsub.f32 %v64, %v2812
    %v2814 = vand.u32 %v2813, 4294901760
    %2815 = vmatmul.mubr.f32.gmra.mxu0 %v2814
    %v2816 = vpop.f32.mrf.mxu0
    %v2817 = vadd.f32 %v2718, %v2816
    %v2818 = vpop.f32.mrf.mxu0
    %2819 = vdwg.mxu0
    %2820 = vmatprep.subr.mxu0 0.0
    %2821 = vmatpush1.msra.mxu0 0.0
    %2822 = vmatprep.subr.mxu0 0.0
    %2823 = vmatpush1.msra.mxu0 0.0
    %2824 = vmatprep.subr.mxu0 0.0
    %2825 = vmatpush1.msra.mxu0 0.0
    %2826 = vmatprep.subr.mxu0 0.0
    %2827 = vmatpush1.msra.mxu0 0.0
    %2828 = vmatprep.subr.mxu0 0.0
    %2829 = vmatpush1.msra.mxu0 0.0
    %2830 = vmatprep.subr.mxu0 0.0
    %2831 = vmatpush1.msra.mxu0 0.0
    %2832 = vmatprep.subr.mxu0 0.0
    %2833 = vmatpush1.msra.mxu0 0.0
    %2834 = vmatprep.subr.mxu0 0.0
    %2835 = vmatpush1.msra.mxu0 0.0
    %2836 = vmatprep.subr.mxu0 0.0
    %2837 = vmatpush1.msra.mxu0 0.0
    %2838 = vmatprep.subr.mxu0 0.0
    %2839 = vmatpush1.msra.mxu0 0.0
    %2840 = vmatprep.subr.mxu0 0.0
    %2841 = vmatpush1.msra.mxu0 0.0
    %2842 = vmatprep.subr.mxu0 0.0
    %2843 = vmatpush1.msra.mxu0 0.0
    %2844 = vmatprep.subr.mxu0 0.0
    %2845 = vmatpush1.msra.mxu0 0.0
    %2846 = vmatprep.subr.mxu0 0.0
    %2847 = vmatpush1.msra.mxu0 0.0
    %2848 = vmatprep.subr.mxu0 0.0
    %v2849 = vand.u32 %v42, 4294901760
    %v2850 = vsub.f32 %v42, %v2849
    %v2851 = vand.u32 %v2850, 4294901760
    %2852 = vmatpush1.msra.mxu0 %v2851
    %2853 = vmatprep.subr.mxu0 0.0
    %v2854 = vand.u32 %v41, 4294901760
    %v2855 = vsub.f32 %v41, %v2854
    %v2856 = vand.u32 %v2855, 4294901760
    %2857 = vmatpush1.msra.mxu0 %v2856
    %2858 = vmatprep.subr.mxu0 0.0
    %2859 = vmatpush2.msra.mxu0 0.0
    %2860 = vmatprep.subr.mxu0 0.0
    %2861 = vmatpush2.msra.mxu0 0.0
    %2862 = vmatprep.subr.mxu0 0.0
    %2863 = vmatpush2.msra.mxu0 0.0
    %2864 = vmatprep.subr.mxu0 0.0
    %2865 = vmatpush2.msra.mxu0 0.0
    %2866 = vmatprep.subr.mxu0 0.0
    %2867 = vmatpush2.msra.mxu0 0.0
    %2868 = vmatprep.subr.mxu0 0.0
    %2869 = vmatpush2.msra.mxu0 0.0
    %2870 = vmatprep.subr.mxu0 0.0
    %2871 = vmatpush2.msra.mxu0 0.0
    %2872 = vmatprep.subr.mxu0 0.0
    %2873 = vmatpush2.msra.mxu0 0.0
    %2874 = vmatprep.subr.mxu0 0.0
    %2875 = vmatpush2.msra.mxu0 0.0
    %2876 = vmatprep.subr.mxu0 0.0
    %2877 = vmatpush2.msra.mxu0 0.0
    %2878 = vmatprep.subr.mxu0 0.0
    %2879 = vmatpush2.msra.mxu0 0.0
    %2880 = vmatprep.subr.mxu0 0.0
    %2881 = vmatpush2.msra.mxu0 0.0
    %2882 = vmatprep.subr.mxu0 0.0
    %2883 = vmatpush2.msra.mxu0 0.0
    %2884 = vmatprep.subr.mxu0 0.0
    %2885 = vmatpush2.msra.mxu0 0.0
    %2886 = vmatprep.subr.mxu0 0.0
    %2887 = vmatpush2.msra.mxu0 0.0
    %2888 = vmatprep.subr.mxu0 0.0
    %2889 = vmatpush2.msra.mxu0 0.0
    %2890 = vmatprep.mubr.f32.mxu0 0.0
    %v2891 = vand.u32 %v55, 4294901760
    %2892 = vmatmul.mubr.f32.gmra.mxu0 %v2891
    %v2893 = vpop.f32.mrf.mxu0
    %v2894 = vadd.f32 %v2793, %v2893
    %v2895 = vpop.f32.mrf.mxu0
    %2896 = vmatprep.mubr.f32.mxu0 0.0
    %v2897 = vand.u32 %v58, 4294901760
    %2898 = vmatmul.mubr.f32.gmra.mxu0 %v2897
    %v2899 = vpop.f32.mrf.mxu0
    %v2900 = vadd.f32 %v2801, %v2899
    %v2901 = vpop.f32.mrf.mxu0
    %2902 = vmatprep.mubr.f32.mxu0 0.0
    %v2903 = vand.u32 %v61, 4294901760
    %2904 = vmatmul.mubr.f32.gmra.mxu0 %v2903
    %v2905 = vpop.f32.mrf.mxu0
    %v2906 = vadd.f32 %v2809, %v2905
    %v2907 = vpop.f32.mrf.mxu0
    %2908 = vmatprep.mubr.f32.mxu0 0.0
    %v2909 = vand.u32 %v64, 4294901760
    %2910 = vmatmul.mubr.f32.gmra.mxu0 %v2909
    %v2911 = vpop.f32.mrf.mxu0
    %v2912 = vadd.f32 %v2817, %v2911
    %v2913 = vpop.f32.mrf.mxu0
    %2914 = vdwg.mxu0
    %2915 = vmatprep.subr.mxu0 0.0
    %2916 = vmatpush1.msra.mxu0 0.0
    %2917 = vmatprep.subr.mxu0 0.0
    %2918 = vmatpush1.msra.mxu0 0.0
    %2919 = vmatprep.subr.mxu0 0.0
    %2920 = vmatpush1.msra.mxu0 0.0
    %2921 = vmatprep.subr.mxu0 0.0
    %2922 = vmatpush1.msra.mxu0 0.0
    %2923 = vmatprep.subr.mxu0 0.0
    %2924 = vmatpush1.msra.mxu0 0.0
    %2925 = vmatprep.subr.mxu0 0.0
    %2926 = vmatpush1.msra.mxu0 0.0
    %2927 = vmatprep.subr.mxu0 0.0
    %2928 = vmatpush1.msra.mxu0 0.0
    %2929 = vmatprep.subr.mxu0 0.0
    %2930 = vmatpush1.msra.mxu0 0.0
    %2931 = vmatprep.subr.mxu0 0.0
    %2932 = vmatpush1.msra.mxu0 0.0
    %2933 = vmatprep.subr.mxu0 0.0
    %2934 = vmatpush1.msra.mxu0 0.0
    %2935 = vmatprep.subr.mxu0 0.0
    %2936 = vmatpush1.msra.mxu0 0.0
    %2937 = vmatprep.subr.mxu0 0.0
    %2938 = vmatpush1.msra.mxu0 0.0
    %2939 = vmatprep.subr.mxu0 0.0
    %2940 = vmatpush1.msra.mxu0 0.0
    %2941 = vmatprep.subr.mxu0 0.0
    %2942 = vmatpush1.msra.mxu0 0.0
    %2943 = vmatprep.subr.mxu0 0.0
    %v2944 = vand.u32 %v42, 4294901760
    %2945 = vmatpush1.msra.mxu0 %v2944
    %2946 = vmatprep.subr.mxu0 0.0
    %v2947 = vand.u32 %v41, 4294901760
    %2948 = vmatpush1.msra.mxu0 %v2947
    %2949 = vmatprep.subr.mxu0 0.0
    %2950 = vmatpush2.msra.mxu0 0.0
    %2951 = vmatprep.subr.mxu0 0.0
    %2952 = vmatpush2.msra.mxu0 0.0
    %2953 = vmatprep.subr.mxu0 0.0
    %2954 = vmatpush2.msra.mxu0 0.0
    %2955 = vmatprep.subr.mxu0 0.0
    %2956 = vmatpush2.msra.mxu0 0.0
    %2957 = vmatprep.subr.mxu0 0.0
    %2958 = vmatpush2.msra.mxu0 0.0
    %2959 = vmatprep.subr.mxu0 0.0
    %2960 = vmatpush2.msra.mxu0 0.0
    %2961 = vmatprep.subr.mxu0 0.0
    %2962 = vmatpush2.msra.mxu0 0.0
    %2963 = vmatprep.subr.mxu0 0.0
    %2964 = vmatpush2.msra.mxu0 0.0
    %2965 = vmatprep.subr.mxu0 0.0
    %2966 = vmatpush2.msra.mxu0 0.0
    %2967 = vmatprep.subr.mxu0 0.0
    %2968 = vmatpush2.msra.mxu0 0.0
    %2969 = vmatprep.subr.mxu0 0.0
    %2970 = vmatpush2.msra.mxu0 0.0
    %2971 = vmatprep.subr.mxu0 0.0
    %2972 = vmatpush2.msra.mxu0 0.0
    %2973 = vmatprep.subr.mxu0 0.0
    %2974 = vmatpush2.msra.mxu0 0.0
    %2975 = vmatprep.subr.mxu0 0.0
    %2976 = vmatpush2.msra.mxu0 0.0
    %2977 = vmatprep.subr.mxu0 0.0
    %2978 = vmatpush2.msra.mxu0 0.0
    %2979 = vmatprep.subr.mxu0 0.0
    %2980 = vmatpush2.msra.mxu0 0.0
    %2981 = vmatprep.mubr.f32.mxu0 0.0
    %v2982 = vand.u32 %v55, 4294901760
    %2983 = vmatmul.mubr.f32.gmra.mxu0 %v2982
    %v2984 = vpop.f32.mrf.mxu0
    %v2985 = vadd.f32 %v2894, %v2984
    %v2986 = vpop.f32.mrf.mxu0
    %2987 = vmatprep.mubr.f32.mxu0 0.0
    %v2988 = vand.u32 %v58, 4294901760
    %2989 = vmatmul.mubr.f32.gmra.mxu0 %v2988
    %v2990 = vpop.f32.mrf.mxu0
    %v2991 = vadd.f32 %v2900, %v2990
    %v2992 = vpop.f32.mrf.mxu0
    %2993 = vmatprep.mubr.f32.mxu0 0.0
    %v2994 = vand.u32 %v61, 4294901760
    %2995 = vmatmul.mubr.f32.gmra.mxu0 %v2994
    %v2996 = vpop.f32.mrf.mxu0
    %v2997 = vadd.f32 %v2906, %v2996
    %v2998 = vpop.f32.mrf.mxu0
    %2999 = vmatprep.mubr.f32.mxu0 0.0
    %v3000 = vand.u32 %v64, 4294901760
    %3001 = vmatmul.mubr.f32.gmra.mxu0 %v3000
    %v3002 = vpop.f32.mrf.mxu0
    %v3003 = vadd.f32 %v2912, %v3002
    %v3004 = vpop.f32.mrf.mxu0
    %3005 = vdwg.mxu0
    %3006 = vmatprep.subr.mxu0 0.0
    %3007 = vmatpush1.msra.mxu0 0.0
    %3008 = vmatprep.subr.mxu0 0.0
    %3009 = vmatpush1.msra.mxu0 0.0
    %3010 = vmatprep.subr.mxu0 0.0
    %3011 = vmatpush1.msra.mxu0 0.0
    %3012 = vmatprep.subr.mxu0 0.0
    %3013 = vmatpush1.msra.mxu0 0.0
    %3014 = vmatprep.subr.mxu0 0.0
    %3015 = vmatpush1.msra.mxu0 0.0
    %3016 = vmatprep.subr.mxu0 0.0
    %3017 = vmatpush1.msra.mxu0 0.0
    %3018 = vmatprep.subr.mxu0 0.0
    %3019 = vmatpush1.msra.mxu0 0.0
    %3020 = vmatprep.subr.mxu0 0.0
    %3021 = vmatpush1.msra.mxu0 0.0
    %3022 = vmatprep.subr.mxu0 0.0
    %3023 = vmatpush1.msra.mxu0 0.0
    %3024 = vmatprep.subr.mxu0 0.0
    %3025 = vmatpush1.msra.mxu0 0.0
    %3026 = vmatprep.subr.mxu0 0.0
    %3027 = vmatpush1.msra.mxu0 0.0
    %3028 = vmatprep.subr.mxu0 0.0
    %3029 = vmatpush1.msra.mxu0 0.0
    %3030 = vmatprep.subr.mxu0 0.0
    %3031 = vmatpush1.msra.mxu0 0.0
    %3032 = vmatprep.subr.mxu0 0.0
    %3033 = vmatpush1.msra.mxu0 0.0
    %3034 = vmatprep.subr.mxu0 0.0
    %v3035 = vand.u32 %v44, 4294901760
    %3036 = vmatpush1.msra.mxu0 %v3035
    %3037 = vmatprep.subr.mxu0 0.0
    %v3038 = vand.u32 %v43, 4294901760
    %3039 = vmatpush1.msra.mxu0 %v3038
    %3040 = vmatprep.subr.mxu0 0.0
    %3041 = vmatpush2.msra.mxu0 0.0
    %3042 = vmatprep.subr.mxu0 0.0
    %3043 = vmatpush2.msra.mxu0 0.0
    %3044 = vmatprep.subr.mxu0 0.0
    %3045 = vmatpush2.msra.mxu0 0.0
    %3046 = vmatprep.subr.mxu0 0.0
    %3047 = vmatpush2.msra.mxu0 0.0
    %3048 = vmatprep.subr.mxu0 0.0
    %3049 = vmatpush2.msra.mxu0 0.0
    %3050 = vmatprep.subr.mxu0 0.0
    %3051 = vmatpush2.msra.mxu0 0.0
    %3052 = vmatprep.subr.mxu0 0.0
    %3053 = vmatpush2.msra.mxu0 0.0
    %3054 = vmatprep.subr.mxu0 0.0
    %3055 = vmatpush2.msra.mxu0 0.0
    %3056 = vmatprep.subr.mxu0 0.0
    %3057 = vmatpush2.msra.mxu0 0.0
    %3058 = vmatprep.subr.mxu0 0.0
    %3059 = vmatpush2.msra.mxu0 0.0
    %3060 = vmatprep.subr.mxu0 0.0
    %3061 = vmatpush2.msra.mxu0 0.0
    %3062 = vmatprep.subr.mxu0 0.0
    %3063 = vmatpush2.msra.mxu0 0.0
    %3064 = vmatprep.subr.mxu0 0.0
    %3065 = vmatpush2.msra.mxu0 0.0
    %3066 = vmatprep.subr.mxu0 0.0
    %3067 = vmatpush2.msra.mxu0 0.0
    %3068 = vmatprep.subr.mxu0 0.0
    %3069 = vmatpush2.msra.mxu0 0.0
    %3070 = vmatprep.subr.mxu0 0.0
    %3071 = vmatpush2.msra.mxu0 0.0
    %3072 = vmatprep.mubr.f32.mxu0 0.0
    %v3073 = vand.u32 %v55, 4294901760
    %v3074 = vsub.f32 %v55, %v3073
    %v3075 = vand.u32 %v3074, 4294901760
    %v3076 = vsub.f32 %v3074, %v3075
    %v3077 = vand.u32 %v3076, 4294901760
    %3078 = vmatmul.mubr.f32.gmra.mxu0 %v3077
    %v3079 = vpop.f32.mrf.mxu0
    %v3080 = vadd.f32 0.0, %v3079
    %v3081 = vpop.f32.mrf.mxu0
    %3082 = vmatprep.mubr.f32.mxu0 0.0
    %v3083 = vand.u32 %v58, 4294901760
    %v3084 = vsub.f32 %v58, %v3083
    %v3085 = vand.u32 %v3084, 4294901760
    %v3086 = vsub.f32 %v3084, %v3085
    %v3087 = vand.u32 %v3086, 4294901760
    %3088 = vmatmul.mubr.f32.gmra.mxu0 %v3087
    %v3089 = vpop.f32.mrf.mxu0
    %v3090 = vadd.f32 0.0, %v3089
    %v3091 = vpop.f32.mrf.mxu0
    %3092 = vmatprep.mubr.f32.mxu0 0.0
    %v3093 = vand.u32 %v61, 4294901760
    %v3094 = vsub.f32 %v61, %v3093
    %v3095 = vand.u32 %v3094, 4294901760
    %v3096 = vsub.f32 %v3094, %v3095
    %v3097 = vand.u32 %v3096, 4294901760
    %3098 = vmatmul.mubr.f32.gmra.mxu0 %v3097
    %v3099 = vpop.f32.mrf.mxu0
    %v3100 = vadd.f32 0.0, %v3099
    %v3101 = vpop.f32.mrf.mxu0
    %3102 = vmatprep.mubr.f32.mxu0 0.0
    %v3103 = vand.u32 %v64, 4294901760
    %v3104 = vsub.f32 %v64, %v3103
    %v3105 = vand.u32 %v3104, 4294901760
    %v3106 = vsub.f32 %v3104, %v3105
    %v3107 = vand.u32 %v3106, 4294901760
    %3108 = vmatmul.mubr.f32.gmra.mxu0 %v3107
    %v3109 = vpop.f32.mrf.mxu0
    %v3110 = vadd.f32 0.0, %v3109
    %v3111 = vpop.f32.mrf.mxu0
    %3112 = vdwg.mxu0
    %3113 = vmatprep.subr.mxu0 0.0
    %3114 = vmatpush1.msra.mxu0 0.0
    %3115 = vmatprep.subr.mxu0 0.0
    %3116 = vmatpush1.msra.mxu0 0.0
    %3117 = vmatprep.subr.mxu0 0.0
    %3118 = vmatpush1.msra.mxu0 0.0
    %3119 = vmatprep.subr.mxu0 0.0
    %3120 = vmatpush1.msra.mxu0 0.0
    %3121 = vmatprep.subr.mxu0 0.0
    %3122 = vmatpush1.msra.mxu0 0.0
    %3123 = vmatprep.subr.mxu0 0.0
    %3124 = vmatpush1.msra.mxu0 0.0
    %3125 = vmatprep.subr.mxu0 0.0
    %3126 = vmatpush1.msra.mxu0 0.0
    %3127 = vmatprep.subr.mxu0 0.0
    %3128 = vmatpush1.msra.mxu0 0.0
    %3129 = vmatprep.subr.mxu0 0.0
    %3130 = vmatpush1.msra.mxu0 0.0
    %3131 = vmatprep.subr.mxu0 0.0
    %3132 = vmatpush1.msra.mxu0 0.0
    %3133 = vmatprep.subr.mxu0 0.0
    %3134 = vmatpush1.msra.mxu0 0.0
    %3135 = vmatprep.subr.mxu0 0.0
    %3136 = vmatpush1.msra.mxu0 0.0
    %3137 = vmatprep.subr.mxu0 0.0
    %3138 = vmatpush1.msra.mxu0 0.0
    %3139 = vmatprep.subr.mxu0 0.0
    %3140 = vmatpush1.msra.mxu0 0.0
    %3141 = vmatprep.subr.mxu0 0.0
    %v3142 = vand.u32 %v44, 4294901760
    %v3143 = vsub.f32 %v44, %v3142
    %v3144 = vand.u32 %v3143, 4294901760
    %v3145 = vsub.f32 %v3143, %v3144
    %v3146 = vand.u32 %v3145, 4294901760
    %3147 = vmatpush1.msra.mxu0 %v3146
    %3148 = vmatprep.subr.mxu0 0.0
    %v3149 = vand.u32 %v43, 4294901760
    %v3150 = vsub.f32 %v43, %v3149
    %v3151 = vand.u32 %v3150, 4294901760
    %v3152 = vsub.f32 %v3150, %v3151
    %v3153 = vand.u32 %v3152, 4294901760
    %3154 = vmatpush1.msra.mxu0 %v3153
    %3155 = vmatprep.subr.mxu0 0.0
    %3156 = vmatpush2.msra.mxu0 0.0
    %3157 = vmatprep.subr.mxu0 0.0
    %3158 = vmatpush2.msra.mxu0 0.0
    %3159 = vmatprep.subr.mxu0 0.0
    %3160 = vmatpush2.msra.mxu0 0.0
    %3161 = vmatprep.subr.mxu0 0.0
    %3162 = vmatpush2.msra.mxu0 0.0
    %3163 = vmatprep.subr.mxu0 0.0
    %3164 = vmatpush2.msra.mxu0 0.0
    %3165 = vmatprep.subr.mxu0 0.0
    %3166 = vmatpush2.msra.mxu0 0.0
    %3167 = vmatprep.subr.mxu0 0.0
    %3168 = vmatpush2.msra.mxu0 0.0
    %3169 = vmatprep.subr.mxu0 0.0
    %3170 = vmatpush2.msra.mxu0 0.0
    %3171 = vmatprep.subr.mxu0 0.0
    %3172 = vmatpush2.msra.mxu0 0.0
    %3173 = vmatprep.subr.mxu0 0.0
    %3174 = vmatpush2.msra.mxu0 0.0
    %3175 = vmatprep.subr.mxu0 0.0
    %3176 = vmatpush2.msra.mxu0 0.0
    %3177 = vmatprep.subr.mxu0 0.0
    %3178 = vmatpush2.msra.mxu0 0.0
    %3179 = vmatprep.subr.mxu0 0.0
    %3180 = vmatpush2.msra.mxu0 0.0
    %3181 = vmatprep.subr.mxu0 0.0
    %3182 = vmatpush2.msra.mxu0 0.0
    %3183 = vmatprep.subr.mxu0 0.0
    %3184 = vmatpush2.msra.mxu0 0.0
    %3185 = vmatprep.subr.mxu0 0.0
    %3186 = vmatpush2.msra.mxu0 0.0
    %3187 = vmatprep.mubr.f32.mxu0 0.0
    %v3188 = vand.u32 %v55, 4294901760
    %3189 = vmatmul.mubr.f32.gmra.mxu0 %v3188
    %v3190 = vpop.f32.mrf.mxu0
    %v3191 = vadd.f32 %v3080, %v3190
    %v3192 = vpop.f32.mrf.mxu0
    %3193 = vmatprep.mubr.f32.mxu0 0.0
    %v3194 = vand.u32 %v58, 4294901760
    %3195 = vmatmul.mubr.f32.gmra.mxu0 %v3194
    %v3196 = vpop.f32.mrf.mxu0
    %v3197 = vadd.f32 %v3090, %v3196
    %v3198 = vpop.f32.mrf.mxu0
    %3199 = vmatprep.mubr.f32.mxu0 0.0
    %v3200 = vand.u32 %v61, 4294901760
    %3201 = vmatmul.mubr.f32.gmra.mxu0 %v3200
    %v3202 = vpop.f32.mrf.mxu0
    %v3203 = vadd.f32 %v3100, %v3202
    %v3204 = vpop.f32.mrf.mxu0
    %3205 = vmatprep.mubr.f32.mxu0 0.0
    %v3206 = vand.u32 %v64, 4294901760
    %3207 = vmatmul.mubr.f32.gmra.mxu0 %v3206
    %v3208 = vpop.f32.mrf.mxu0
    %v3209 = vadd.f32 %v3110, %v3208
    %v3210 = vpop.f32.mrf.mxu0
    %3211 = vdwg.mxu0
    %3212 = vmatprep.subr.mxu0 0.0
    %3213 = vmatpush1.msra.mxu0 0.0
    %3214 = vmatprep.subr.mxu0 0.0
    %3215 = vmatpush1.msra.mxu0 0.0
    %3216 = vmatprep.subr.mxu0 0.0
    %3217 = vmatpush1.msra.mxu0 0.0
    %3218 = vmatprep.subr.mxu0 0.0
    %3219 = vmatpush1.msra.mxu0 0.0
    %3220 = vmatprep.subr.mxu0 0.0
    %3221 = vmatpush1.msra.mxu0 0.0
    %3222 = vmatprep.subr.mxu0 0.0
    %3223 = vmatpush1.msra.mxu0 0.0
    %3224 = vmatprep.subr.mxu0 0.0
    %3225 = vmatpush1.msra.mxu0 0.0
    %3226 = vmatprep.subr.mxu0 0.0
    %3227 = vmatpush1.msra.mxu0 0.0
    %3228 = vmatprep.subr.mxu0 0.0
    %3229 = vmatpush1.msra.mxu0 0.0
    %3230 = vmatprep.subr.mxu0 0.0
    %3231 = vmatpush1.msra.mxu0 0.0
    %3232 = vmatprep.subr.mxu0 0.0
    %3233 = vmatpush1.msra.mxu0 0.0
    %3234 = vmatprep.subr.mxu0 0.0
    %3235 = vmatpush1.msra.mxu0 0.0
    %3236 = vmatprep.subr.mxu0 0.0
    %3237 = vmatpush1.msra.mxu0 0.0
    %3238 = vmatprep.subr.mxu0 0.0
    %3239 = vmatpush1.msra.mxu0 0.0
    %3240 = vmatprep.subr.mxu0 0.0
    %v3241 = vand.u32 %v44, 4294901760
    %v3242 = vsub.f32 %v44, %v3241
    %3243 = vmatpush1.msra.mxu0 %v3242
    %3244 = vmatprep.subr.mxu0 0.0
    %v3245 = vand.u32 %v43, 4294901760
    %v3246 = vsub.f32 %v43, %v3245
    %3247 = vmatpush1.msra.mxu0 %v3246
    %3248 = vmatprep.subr.mxu0 0.0
    %3249 = vmatpush2.msra.mxu0 0.0
    %3250 = vmatprep.subr.mxu0 0.0
    %3251 = vmatpush2.msra.mxu0 0.0
    %3252 = vmatprep.subr.mxu0 0.0
    %3253 = vmatpush2.msra.mxu0 0.0
    %3254 = vmatprep.subr.mxu0 0.0
    %3255 = vmatpush2.msra.mxu0 0.0
    %3256 = vmatprep.subr.mxu0 0.0
    %3257 = vmatpush2.msra.mxu0 0.0
    %3258 = vmatprep.subr.mxu0 0.0
    %3259 = vmatpush2.msra.mxu0 0.0
    %3260 = vmatprep.subr.mxu0 0.0
    %3261 = vmatpush2.msra.mxu0 0.0
    %3262 = vmatprep.subr.mxu0 0.0
    %3263 = vmatpush2.msra.mxu0 0.0
    %3264 = vmatprep.subr.mxu0 0.0
    %3265 = vmatpush2.msra.mxu0 0.0
    %3266 = vmatprep.subr.mxu0 0.0
    %3267 = vmatpush2.msra.mxu0 0.0
    %3268 = vmatprep.subr.mxu0 0.0
    %3269 = vmatpush2.msra.mxu0 0.0
    %3270 = vmatprep.subr.mxu0 0.0
    %3271 = vmatpush2.msra.mxu0 0.0
    %3272 = vmatprep.subr.mxu0 0.0
    %3273 = vmatpush2.msra.mxu0 0.0
    %3274 = vmatprep.subr.mxu0 0.0
    %3275 = vmatpush2.msra.mxu0 0.0
    %3276 = vmatprep.subr.mxu0 0.0
    %3277 = vmatpush2.msra.mxu0 0.0
    %3278 = vmatprep.subr.mxu0 0.0
    %3279 = vmatpush2.msra.mxu0 0.0
    %3280 = vmatprep.mubr.f32.mxu0 0.0
    %v3281 = vand.u32 %v55, 4294901760
    %v3282 = vsub.f32 %v55, %v3281
    %3283 = vmatmul.mubr.f32.gmra.mxu0 %v3282
    %v3284 = vpop.f32.mrf.mxu0
    %v3285 = vadd.f32 %v3191, %v3284
    %v3286 = vpop.f32.mrf.mxu0
    %3287 = vmatprep.mubr.f32.mxu0 0.0
    %v3288 = vand.u32 %v58, 4294901760
    %v3289 = vsub.f32 %v58, %v3288
    %3290 = vmatmul.mubr.f32.gmra.mxu0 %v3289
    %v3291 = vpop.f32.mrf.mxu0
    %v3292 = vadd.f32 %v3197, %v3291
    %v3293 = vpop.f32.mrf.mxu0
    %3294 = vmatprep.mubr.f32.mxu0 0.0
    %v3295 = vand.u32 %v61, 4294901760
    %v3296 = vsub.f32 %v61, %v3295
    %3297 = vmatmul.mubr.f32.gmra.mxu0 %v3296
    %v3298 = vpop.f32.mrf.mxu0
    %v3299 = vadd.f32 %v3203, %v3298
    %v3300 = vpop.f32.mrf.mxu0
    %3301 = vmatprep.mubr.f32.mxu0 0.0
    %v3302 = vand.u32 %v64, 4294901760
    %v3303 = vsub.f32 %v64, %v3302
    %3304 = vmatmul.mubr.f32.gmra.mxu0 %v3303
    %v3305 = vpop.f32.mrf.mxu0
    %v3306 = vadd.f32 %v3209, %v3305
    %v3307 = vpop.f32.mrf.mxu0
    %3308 = vdwg.mxu0
    %3309 = vmatprep.subr.mxu0 0.0
    %3310 = vmatpush1.msra.mxu0 0.0
    %3311 = vmatprep.subr.mxu0 0.0
    %3312 = vmatpush1.msra.mxu0 0.0
    %3313 = vmatprep.subr.mxu0 0.0
    %3314 = vmatpush1.msra.mxu0 0.0
    %3315 = vmatprep.subr.mxu0 0.0
    %3316 = vmatpush1.msra.mxu0 0.0
    %3317 = vmatprep.subr.mxu0 0.0
    %3318 = vmatpush1.msra.mxu0 0.0
    %3319 = vmatprep.subr.mxu0 0.0
    %3320 = vmatpush1.msra.mxu0 0.0
    %3321 = vmatprep.subr.mxu0 0.0
    %3322 = vmatpush1.msra.mxu0 0.0
    %3323 = vmatprep.subr.mxu0 0.0
    %3324 = vmatpush1.msra.mxu0 0.0
    %3325 = vmatprep.subr.mxu0 0.0
    %3326 = vmatpush1.msra.mxu0 0.0
    %3327 = vmatprep.subr.mxu0 0.0
    %3328 = vmatpush1.msra.mxu0 0.0
    %3329 = vmatprep.subr.mxu0 0.0
    %3330 = vmatpush1.msra.mxu0 0.0
    %3331 = vmatprep.subr.mxu0 0.0
    %3332 = vmatpush1.msra.mxu0 0.0
    %3333 = vmatprep.subr.mxu0 0.0
    %3334 = vmatpush1.msra.mxu0 0.0
    %3335 = vmatprep.subr.mxu0 0.0
    %3336 = vmatpush1.msra.mxu0 0.0
    %3337 = vmatprep.subr.mxu0 0.0
    %v3338 = vand.u32 %v44, 4294901760
    %3339 = vmatpush1.msra.mxu0 %v3338
    %3340 = vmatprep.subr.mxu0 0.0
    %v3341 = vand.u32 %v43, 4294901760
    %3342 = vmatpush1.msra.mxu0 %v3341
    %3343 = vmatprep.subr.mxu0 0.0
    %3344 = vmatpush2.msra.mxu0 0.0
    %3345 = vmatprep.subr.mxu0 0.0
    %3346 = vmatpush2.msra.mxu0 0.0
    %3347 = vmatprep.subr.mxu0 0.0
    %3348 = vmatpush2.msra.mxu0 0.0
    %3349 = vmatprep.subr.mxu0 0.0
    %3350 = vmatpush2.msra.mxu0 0.0
    %3351 = vmatprep.subr.mxu0 0.0
    %3352 = vmatpush2.msra.mxu0 0.0
    %3353 = vmatprep.subr.mxu0 0.0
    %3354 = vmatpush2.msra.mxu0 0.0
    %3355 = vmatprep.subr.mxu0 0.0
    %3356 = vmatpush2.msra.mxu0 0.0
    %3357 = vmatprep.subr.mxu0 0.0
    %3358 = vmatpush2.msra.mxu0 0.0
    %3359 = vmatprep.subr.mxu0 0.0
    %3360 = vmatpush2.msra.mxu0 0.0
    %3361 = vmatprep.subr.mxu0 0.0
    %3362 = vmatpush2.msra.mxu0 0.0
    %3363 = vmatprep.subr.mxu0 0.0
    %3364 = vmatpush2.msra.mxu0 0.0
    %3365 = vmatprep.subr.mxu0 0.0
    %3366 = vmatpush2.msra.mxu0 0.0
    %3367 = vmatprep.subr.mxu0 0.0
    %3368 = vmatpush2.msra.mxu0 0.0
    %3369 = vmatprep.subr.mxu0 0.0
    %3370 = vmatpush2.msra.mxu0 0.0
    %3371 = vmatprep.subr.mxu0 0.0
    %3372 = vmatpush2.msra.mxu0 0.0
    %3373 = vmatprep.subr.mxu0 0.0
    %3374 = vmatpush2.msra.mxu0 0.0
    %3375 = vmatprep.mubr.f32.mxu0 0.0
    %v3376 = vand.u32 %v55, 4294901760
    %v3377 = vsub.f32 %v55, %v3376
    %v3378 = vand.u32 %v3377, 4294901760
    %3379 = vmatmul.mubr.f32.gmra.mxu0 %v3378
    %v3380 = vpop.f32.mrf.mxu0
    %v3381 = vadd.f32 %v3285, %v3380
    %v3382 = vpop.f32.mrf.mxu0
    %3383 = vmatprep.mubr.f32.mxu0 0.0
    %v3384 = vand.u32 %v58, 4294901760
    %v3385 = vsub.f32 %v58, %v3384
    %v3386 = vand.u32 %v3385, 4294901760
    %3387 = vmatmul.mubr.f32.gmra.mxu0 %v3386
    %v3388 = vpop.f32.mrf.mxu0
    %v3389 = vadd.f32 %v3292, %v3388
    %v3390 = vpop.f32.mrf.mxu0
    %3391 = vmatprep.mubr.f32.mxu0 0.0
    %v3392 = vand.u32 %v61, 4294901760
    %v3393 = vsub.f32 %v61, %v3392
    %v3394 = vand.u32 %v3393, 4294901760
    %3395 = vmatmul.mubr.f32.gmra.mxu0 %v3394
    %v3396 = vpop.f32.mrf.mxu0
    %v3397 = vadd.f32 %v3299, %v3396
    %v3398 = vpop.f32.mrf.mxu0
    %3399 = vmatprep.mubr.f32.mxu0 0.0
    %v3400 = vand.u32 %v64, 4294901760
    %v3401 = vsub.f32 %v64, %v3400
    %v3402 = vand.u32 %v3401, 4294901760
    %3403 = vmatmul.mubr.f32.gmra.mxu0 %v3402
    %v3404 = vpop.f32.mrf.mxu0
    %v3405 = vadd.f32 %v3306, %v3404
    %v3406 = vpop.f32.mrf.mxu0
    %3407 = vdwg.mxu0
    %3408 = vmatprep.subr.mxu0 0.0
    %3409 = vmatpush1.msra.mxu0 0.0
    %3410 = vmatprep.subr.mxu0 0.0
    %3411 = vmatpush1.msra.mxu0 0.0
    %3412 = vmatprep.subr.mxu0 0.0
    %3413 = vmatpush1.msra.mxu0 0.0
    %3414 = vmatprep.subr.mxu0 0.0
    %3415 = vmatpush1.msra.mxu0 0.0
    %3416 = vmatprep.subr.mxu0 0.0
    %3417 = vmatpush1.msra.mxu0 0.0
    %3418 = vmatprep.subr.mxu0 0.0
    %3419 = vmatpush1.msra.mxu0 0.0
    %3420 = vmatprep.subr.mxu0 0.0
    %3421 = vmatpush1.msra.mxu0 0.0
    %3422 = vmatprep.subr.mxu0 0.0
    %3423 = vmatpush1.msra.mxu0 0.0
    %3424 = vmatprep.subr.mxu0 0.0
    %3425 = vmatpush1.msra.mxu0 0.0
    %3426 = vmatprep.subr.mxu0 0.0
    %3427 = vmatpush1.msra.mxu0 0.0
    %3428 = vmatprep.subr.mxu0 0.0
    %3429 = vmatpush1.msra.mxu0 0.0
    %3430 = vmatprep.subr.mxu0 0.0
    %3431 = vmatpush1.msra.mxu0 0.0
    %3432 = vmatprep.subr.mxu0 0.0
    %3433 = vmatpush1.msra.mxu0 0.0
    %3434 = vmatprep.subr.mxu0 0.0
    %3435 = vmatpush1.msra.mxu0 0.0
    %3436 = vmatprep.subr.mxu0 0.0
    %v3437 = vand.u32 %v44, 4294901760
    %v3438 = vsub.f32 %v44, %v3437
    %v3439 = vand.u32 %v3438, 4294901760
    %3440 = vmatpush1.msra.mxu0 %v3439
    %3441 = vmatprep.subr.mxu0 0.0
    %v3442 = vand.u32 %v43, 4294901760
    %v3443 = vsub.f32 %v43, %v3442
    %v3444 = vand.u32 %v3443, 4294901760
    %3445 = vmatpush1.msra.mxu0 %v3444
    %3446 = vmatprep.subr.mxu0 0.0
    %3447 = vmatpush2.msra.mxu0 0.0
    %3448 = vmatprep.subr.mxu0 0.0
    %3449 = vmatpush2.msra.mxu0 0.0
    %3450 = vmatprep.subr.mxu0 0.0
    %3451 = vmatpush2.msra.mxu0 0.0
    %3452 = vmatprep.subr.mxu0 0.0
    %3453 = vmatpush2.msra.mxu0 0.0
    %3454 = vmatprep.subr.mxu0 0.0
    %3455 = vmatpush2.msra.mxu0 0.0
    %3456 = vmatprep.subr.mxu0 0.0
    %3457 = vmatpush2.msra.mxu0 0.0
    %3458 = vmatprep.subr.mxu0 0.0
    %3459 = vmatpush2.msra.mxu0 0.0
    %3460 = vmatprep.subr.mxu0 0.0
    %3461 = vmatpush2.msra.mxu0 0.0
    %3462 = vmatprep.subr.mxu0 0.0
    %3463 = vmatpush2.msra.mxu0 0.0
    %3464 = vmatprep.subr.mxu0 0.0
    %3465 = vmatpush2.msra.mxu0 0.0
    %3466 = vmatprep.subr.mxu0 0.0
    %3467 = vmatpush2.msra.mxu0 0.0
    %3468 = vmatprep.subr.mxu0 0.0
    %3469 = vmatpush2.msra.mxu0 0.0
    %3470 = vmatprep.subr.mxu0 0.0
    %3471 = vmatpush2.msra.mxu0 0.0
    %3472 = vmatprep.subr.mxu0 0.0
    %3473 = vmatpush2.msra.mxu0 0.0
    %3474 = vmatprep.subr.mxu0 0.0
    %3475 = vmatpush2.msra.mxu0 0.0
    %3476 = vmatprep.subr.mxu0 0.0
    %3477 = vmatpush2.msra.mxu0 0.0
    %3478 = vmatprep.mubr.f32.mxu0 0.0
    %v3479 = vand.u32 %v55, 4294901760
    %3480 = vmatmul.mubr.f32.gmra.mxu0 %v3479
    %v3481 = vpop.f32.mrf.mxu0
    %v3482 = vadd.f32 %v3381, %v3481
    %v3483 = vpop.f32.mrf.mxu0
    %3484 = vmatprep.mubr.f32.mxu0 0.0
    %v3485 = vand.u32 %v58, 4294901760
    %3486 = vmatmul.mubr.f32.gmra.mxu0 %v3485
    %v3487 = vpop.f32.mrf.mxu0
    %v3488 = vadd.f32 %v3389, %v3487
    %v3489 = vpop.f32.mrf.mxu0
    %3490 = vmatprep.mubr.f32.mxu0 0.0
    %v3491 = vand.u32 %v61, 4294901760
    %3492 = vmatmul.mubr.f32.gmra.mxu0 %v3491
    %v3493 = vpop.f32.mrf.mxu0
    %v3494 = vadd.f32 %v3397, %v3493
    %v3495 = vpop.f32.mrf.mxu0
    %3496 = vmatprep.mubr.f32.mxu0 0.0
    %v3497 = vand.u32 %v64, 4294901760
    %3498 = vmatmul.mubr.f32.gmra.mxu0 %v3497
    %v3499 = vpop.f32.mrf.mxu0
    %v3500 = vadd.f32 %v3405, %v3499
    %v3501 = vpop.f32.mrf.mxu0
    %3502 = vdwg.mxu0
    %3503 = vmatprep.subr.mxu0 0.0
    %3504 = vmatpush1.msra.mxu0 0.0
    %3505 = vmatprep.subr.mxu0 0.0
    %3506 = vmatpush1.msra.mxu0 0.0
    %3507 = vmatprep.subr.mxu0 0.0
    %3508 = vmatpush1.msra.mxu0 0.0
    %3509 = vmatprep.subr.mxu0 0.0
    %3510 = vmatpush1.msra.mxu0 0.0
    %3511 = vmatprep.subr.mxu0 0.0
    %3512 = vmatpush1.msra.mxu0 0.0
    %3513 = vmatprep.subr.mxu0 0.0
    %3514 = vmatpush1.msra.mxu0 0.0
    %3515 = vmatprep.subr.mxu0 0.0
    %3516 = vmatpush1.msra.mxu0 0.0
    %3517 = vmatprep.subr.mxu0 0.0
    %3518 = vmatpush1.msra.mxu0 0.0
    %3519 = vmatprep.subr.mxu0 0.0
    %3520 = vmatpush1.msra.mxu0 0.0
    %3521 = vmatprep.subr.mxu0 0.0
    %3522 = vmatpush1.msra.mxu0 0.0
    %3523 = vmatprep.subr.mxu0 0.0
    %3524 = vmatpush1.msra.mxu0 0.0
    %3525 = vmatprep.subr.mxu0 0.0
    %3526 = vmatpush1.msra.mxu0 0.0
    %3527 = vmatprep.subr.mxu0 0.0
    %3528 = vmatpush1.msra.mxu0 0.0
    %3529 = vmatprep.subr.mxu0 0.0
    %3530 = vmatpush1.msra.mxu0 0.0
    %3531 = vmatprep.subr.mxu0 0.0
    %v3532 = vand.u32 %v44, 4294901760
    %3533 = vmatpush1.msra.mxu0 %v3532
    %3534 = vmatprep.subr.mxu0 0.0
    %v3535 = vand.u32 %v43, 4294901760
    %3536 = vmatpush1.msra.mxu0 %v3535
    %3537 = vmatprep.subr.mxu0 0.0
    %3538 = vmatpush2.msra.mxu0 0.0
    %3539 = vmatprep.subr.mxu0 0.0
    %3540 = vmatpush2.msra.mxu0 0.0
    %3541 = vmatprep.subr.mxu0 0.0
    %3542 = vmatpush2.msra.mxu0 0.0
    %3543 = vmatprep.subr.mxu0 0.0
    %3544 = vmatpush2.msra.mxu0 0.0
    %3545 = vmatprep.subr.mxu0 0.0
    %3546 = vmatpush2.msra.mxu0 0.0
    %3547 = vmatprep.subr.mxu0 0.0
    %3548 = vmatpush2.msra.mxu0 0.0
    %3549 = vmatprep.subr.mxu0 0.0
    %3550 = vmatpush2.msra.mxu0 0.0
    %3551 = vmatprep.subr.mxu0 0.0
    %3552 = vmatpush2.msra.mxu0 0.0
    %3553 = vmatprep.subr.mxu0 0.0
    %3554 = vmatpush2.msra.mxu0 0.0
    %3555 = vmatprep.subr.mxu0 0.0
    %3556 = vmatpush2.msra.mxu0 0.0
    %3557 = vmatprep.subr.mxu0 0.0
    %3558 = vmatpush2.msra.mxu0 0.0
    %3559 = vmatprep.subr.mxu0 0.0
    %3560 = vmatpush2.msra.mxu0 0.0
    %3561 = vmatprep.subr.mxu0 0.0
    %3562 = vmatpush2.msra.mxu0 0.0
    %3563 = vmatprep.subr.mxu0 0.0
    %3564 = vmatpush2.msra.mxu0 0.0
    %3565 = vmatprep.subr.mxu0 0.0
    %3566 = vmatpush2.msra.mxu0 0.0
    %3567 = vmatprep.subr.mxu0 0.0
    %3568 = vmatpush2.msra.mxu0 0.0
    %3569 = vmatprep.mubr.f32.mxu0 0.0
    %v3570 = vand.u32 %v55, 4294901760
    %3571 = vmatmul.mubr.f32.gmra.mxu0 %v3570
    %v3572 = vpop.f32.mrf.mxu0
    %v3573 = vadd.f32 %v3482, %v3572
    %v3574 = vpop.f32.mrf.mxu0
    %3575 = vmatprep.mubr.f32.mxu0 0.0
    %v3576 = vand.u32 %v58, 4294901760
    %3577 = vmatmul.mubr.f32.gmra.mxu0 %v3576
    %v3578 = vpop.f32.mrf.mxu0
    %v3579 = vadd.f32 %v3488, %v3578
    %v3580 = vpop.f32.mrf.mxu0
    %3581 = vmatprep.mubr.f32.mxu0 0.0
    %v3582 = vand.u32 %v61, 4294901760
    %3583 = vmatmul.mubr.f32.gmra.mxu0 %v3582
    %v3584 = vpop.f32.mrf.mxu0
    %v3585 = vadd.f32 %v3494, %v3584
    %v3586 = vpop.f32.mrf.mxu0
    %3587 = vmatprep.mubr.f32.mxu0 0.0
    %v3588 = vand.u32 %v64, 4294901760
    %3589 = vmatmul.mubr.f32.gmra.mxu0 %v3588
    %v3590 = vpop.f32.mrf.mxu0
    %v3591 = vadd.f32 %v3500, %v3590
    %v3592 = vpop.f32.mrf.mxu0
    %3593 = vdwg.mxu0
    %3594 = vmatprep.subr.mxu0 0.0
    %3595 = vmatpush1.msra.mxu0 0.0
    %3596 = vmatprep.subr.mxu0 0.0
    %3597 = vmatpush1.msra.mxu0 0.0
    %3598 = vmatprep.subr.mxu0 0.0
    %3599 = vmatpush1.msra.mxu0 0.0
    %3600 = vmatprep.subr.mxu0 0.0
    %3601 = vmatpush1.msra.mxu0 0.0
    %3602 = vmatprep.subr.mxu0 0.0
    %3603 = vmatpush1.msra.mxu0 0.0
    %3604 = vmatprep.subr.mxu0 0.0
    %3605 = vmatpush1.msra.mxu0 0.0
    %3606 = vmatprep.subr.mxu0 0.0
    %3607 = vmatpush1.msra.mxu0 0.0
    %3608 = vmatprep.subr.mxu0 0.0
    %3609 = vmatpush1.msra.mxu0 0.0
    %3610 = vmatprep.subr.mxu0 0.0
    %3611 = vmatpush1.msra.mxu0 0.0
    %3612 = vmatprep.subr.mxu0 0.0
    %3613 = vmatpush1.msra.mxu0 0.0
    %3614 = vmatprep.subr.mxu0 0.0
    %3615 = vmatpush1.msra.mxu0 0.0
    %3616 = vmatprep.subr.mxu0 0.0
    %3617 = vmatpush1.msra.mxu0 0.0
    %3618 = vmatprep.subr.mxu0 0.0
    %3619 = vmatpush1.msra.mxu0 0.0
    %3620 = vmatprep.subr.mxu0 0.0
    %3621 = vmatpush1.msra.mxu0 0.0
    %3622 = vmatprep.subr.mxu0 0.0
    %v3623 = vand.u32 %v46, 4294901760
    %3624 = vmatpush1.msra.mxu0 %v3623
    %3625 = vmatprep.subr.mxu0 0.0
    %v3626 = vand.u32 %v45, 4294901760
    %3627 = vmatpush1.msra.mxu0 %v3626
    %3628 = vmatprep.subr.mxu0 0.0
    %3629 = vmatpush2.msra.mxu0 0.0
    %3630 = vmatprep.subr.mxu0 0.0
    %3631 = vmatpush2.msra.mxu0 0.0
    %3632 = vmatprep.subr.mxu0 0.0
    %3633 = vmatpush2.msra.mxu0 0.0
    %3634 = vmatprep.subr.mxu0 0.0
    %3635 = vmatpush2.msra.mxu0 0.0
    %3636 = vmatprep.subr.mxu0 0.0
    %3637 = vmatpush2.msra.mxu0 0.0
    %3638 = vmatprep.subr.mxu0 0.0
    %3639 = vmatpush2.msra.mxu0 0.0
    %3640 = vmatprep.subr.mxu0 0.0
    %3641 = vmatpush2.msra.mxu0 0.0
    %3642 = vmatprep.subr.mxu0 0.0
    %3643 = vmatpush2.msra.mxu0 0.0
    %3644 = vmatprep.subr.mxu0 0.0
    %3645 = vmatpush2.msra.mxu0 0.0
    %3646 = vmatprep.subr.mxu0 0.0
    %3647 = vmatpush2.msra.mxu0 0.0
    %3648 = vmatprep.subr.mxu0 0.0
    %3649 = vmatpush2.msra.mxu0 0.0
    %3650 = vmatprep.subr.mxu0 0.0
    %3651 = vmatpush2.msra.mxu0 0.0
    %3652 = vmatprep.subr.mxu0 0.0
    %3653 = vmatpush2.msra.mxu0 0.0
    %3654 = vmatprep.subr.mxu0 0.0
    %3655 = vmatpush2.msra.mxu0 0.0
    %3656 = vmatprep.subr.mxu0 0.0
    %3657 = vmatpush2.msra.mxu0 0.0
    %3658 = vmatprep.subr.mxu0 0.0
    %3659 = vmatpush2.msra.mxu0 0.0
    %3660 = vmatprep.mubr.f32.mxu0 0.0
    %v3661 = vand.u32 %v55, 4294901760
    %v3662 = vsub.f32 %v55, %v3661
    %v3663 = vand.u32 %v3662, 4294901760
    %v3664 = vsub.f32 %v3662, %v3663
    %v3665 = vand.u32 %v3664, 4294901760
    %3666 = vmatmul.mubr.f32.gmra.mxu0 %v3665
    %v3667 = vpop.f32.mrf.mxu0
    %v3668 = vadd.f32 0.0, %v3667
    %v3669 = vpop.f32.mrf.mxu0
    %3670 = vmatprep.mubr.f32.mxu0 0.0
    %v3671 = vand.u32 %v58, 4294901760
    %v3672 = vsub.f32 %v58, %v3671
    %v3673 = vand.u32 %v3672, 4294901760
    %v3674 = vsub.f32 %v3672, %v3673
    %v3675 = vand.u32 %v3674, 4294901760
    %3676 = vmatmul.mubr.f32.gmra.mxu0 %v3675
    %v3677 = vpop.f32.mrf.mxu0
    %v3678 = vadd.f32 0.0, %v3677
    %v3679 = vpop.f32.mrf.mxu0
    %3680 = vmatprep.mubr.f32.mxu0 0.0
    %v3681 = vand.u32 %v61, 4294901760
    %v3682 = vsub.f32 %v61, %v3681
    %v3683 = vand.u32 %v3682, 4294901760
    %v3684 = vsub.f32 %v3682, %v3683
    %v3685 = vand.u32 %v3684, 4294901760
    %3686 = vmatmul.mubr.f32.gmra.mxu0 %v3685
    %v3687 = vpop.f32.mrf.mxu0
    %v3688 = vadd.f32 0.0, %v3687
    %v3689 = vpop.f32.mrf.mxu0
    %3690 = vmatprep.mubr.f32.mxu0 0.0
    %v3691 = vand.u32 %v64, 4294901760
    %v3692 = vsub.f32 %v64, %v3691
    %v3693 = vand.u32 %v3692, 4294901760
    %v3694 = vsub.f32 %v3692, %v3693
    %v3695 = vand.u32 %v3694, 4294901760
    %3696 = vmatmul.mubr.f32.gmra.mxu0 %v3695
    %v3697 = vpop.f32.mrf.mxu0
    %v3698 = vadd.f32 0.0, %v3697
    %v3699 = vpop.f32.mrf.mxu0
    %3700 = vdwg.mxu0
    %3701 = vmatprep.subr.mxu0 0.0
    %3702 = vmatpush1.msra.mxu0 0.0
    %3703 = vmatprep.subr.mxu0 0.0
    %3704 = vmatpush1.msra.mxu0 0.0
    %3705 = vmatprep.subr.mxu0 0.0
    %3706 = vmatpush1.msra.mxu0 0.0
    %3707 = vmatprep.subr.mxu0 0.0
    %3708 = vmatpush1.msra.mxu0 0.0
    %3709 = vmatprep.subr.mxu0 0.0
    %3710 = vmatpush1.msra.mxu0 0.0
    %3711 = vmatprep.subr.mxu0 0.0
    %3712 = vmatpush1.msra.mxu0 0.0
    %3713 = vmatprep.subr.mxu0 0.0
    %3714 = vmatpush1.msra.mxu0 0.0
    %3715 = vmatprep.subr.mxu0 0.0
    %3716 = vmatpush1.msra.mxu0 0.0
    %3717 = vmatprep.subr.mxu0 0.0
    %3718 = vmatpush1.msra.mxu0 0.0
    %3719 = vmatprep.subr.mxu0 0.0
    %3720 = vmatpush1.msra.mxu0 0.0
    %3721 = vmatprep.subr.mxu0 0.0
    %3722 = vmatpush1.msra.mxu0 0.0
    %3723 = vmatprep.subr.mxu0 0.0
    %3724 = vmatpush1.msra.mxu0 0.0
    %3725 = vmatprep.subr.mxu0 0.0
    %3726 = vmatpush1.msra.mxu0 0.0
    %3727 = vmatprep.subr.mxu0 0.0
    %3728 = vmatpush1.msra.mxu0 0.0
    %3729 = vmatprep.subr.mxu0 0.0
    %v3730 = vand.u32 %v46, 4294901760
    %v3731 = vsub.f32 %v46, %v3730
    %v3732 = vand.u32 %v3731, 4294901760
    %v3733 = vsub.f32 %v3731, %v3732
    %v3734 = vand.u32 %v3733, 4294901760
    %3735 = vmatpush1.msra.mxu0 %v3734
    %3736 = vmatprep.subr.mxu0 0.0
    %v3737 = vand.u32 %v45, 4294901760
    %v3738 = vsub.f32 %v45, %v3737
    %v3739 = vand.u32 %v3738, 4294901760
    %v3740 = vsub.f32 %v3738, %v3739
    %v3741 = vand.u32 %v3740, 4294901760
    %3742 = vmatpush1.msra.mxu0 %v3741
    %3743 = vmatprep.subr.mxu0 0.0
    %3744 = vmatpush2.msra.mxu0 0.0
    %3745 = vmatprep.subr.mxu0 0.0
    %3746 = vmatpush2.msra.mxu0 0.0
    %3747 = vmatprep.subr.mxu0 0.0
    %3748 = vmatpush2.msra.mxu0 0.0
    %3749 = vmatprep.subr.mxu0 0.0
    %3750 = vmatpush2.msra.mxu0 0.0
    %3751 = vmatprep.subr.mxu0 0.0
    %3752 = vmatpush2.msra.mxu0 0.0
    %3753 = vmatprep.subr.mxu0 0.0
    %3754 = vmatpush2.msra.mxu0 0.0
    %3755 = vmatprep.subr.mxu0 0.0
    %3756 = vmatpush2.msra.mxu0 0.0
    %3757 = vmatprep.subr.mxu0 0.0
    %3758 = vmatpush2.msra.mxu0 0.0
    %3759 = vmatprep.subr.mxu0 0.0
    %3760 = vmatpush2.msra.mxu0 0.0
    %3761 = vmatprep.subr.mxu0 0.0
    %3762 = vmatpush2.msra.mxu0 0.0
    %3763 = vmatprep.subr.mxu0 0.0
    %3764 = vmatpush2.msra.mxu0 0.0
    %3765 = vmatprep.subr.mxu0 0.0
    %3766 = vmatpush2.msra.mxu0 0.0
    %3767 = vmatprep.subr.mxu0 0.0
    %3768 = vmatpush2.msra.mxu0 0.0
    %3769 = vmatprep.subr.mxu0 0.0
    %3770 = vmatpush2.msra.mxu0 0.0
    %3771 = vmatprep.subr.mxu0 0.0
    %3772 = vmatpush2.msra.mxu0 0.0
    %3773 = vmatprep.subr.mxu0 0.0
    %3774 = vmatpush2.msra.mxu0 0.0
    %3775 = vmatprep.mubr.f32.mxu0 0.0
    %v3776 = vand.u32 %v55, 4294901760
    %3777 = vmatmul.mubr.f32.gmra.mxu0 %v3776
    %v3778 = vpop.f32.mrf.mxu0
    %v3779 = vadd.f32 %v3668, %v3778
    %v3780 = vpop.f32.mrf.mxu0
    %3781 = vmatprep.mubr.f32.mxu0 0.0
    %v3782 = vand.u32 %v58, 4294901760
    %3783 = vmatmul.mubr.f32.gmra.mxu0 %v3782
    %v3784 = vpop.f32.mrf.mxu0
    %v3785 = vadd.f32 %v3678, %v3784
    %v3786 = vpop.f32.mrf.mxu0
    %3787 = vmatprep.mubr.f32.mxu0 0.0
    %v3788 = vand.u32 %v61, 4294901760
    %3789 = vmatmul.mubr.f32.gmra.mxu0 %v3788
    %v3790 = vpop.f32.mrf.mxu0
    %v3791 = vadd.f32 %v3688, %v3790
    %v3792 = vpop.f32.mrf.mxu0
    %3793 = vmatprep.mubr.f32.mxu0 0.0
    %v3794 = vand.u32 %v64, 4294901760
    %3795 = vmatmul.mubr.f32.gmra.mxu0 %v3794
    %v3796 = vpop.f32.mrf.mxu0
    %v3797 = vadd.f32 %v3698, %v3796
    %v3798 = vpop.f32.mrf.mxu0
    %3799 = vdwg.mxu0
    %3800 = vmatprep.subr.mxu0 0.0
    %3801 = vmatpush1.msra.mxu0 0.0
    %3802 = vmatprep.subr.mxu0 0.0
    %3803 = vmatpush1.msra.mxu0 0.0
    %3804 = vmatprep.subr.mxu0 0.0
    %3805 = vmatpush1.msra.mxu0 0.0
    %3806 = vmatprep.subr.mxu0 0.0
    %3807 = vmatpush1.msra.mxu0 0.0
    %3808 = vmatprep.subr.mxu0 0.0
    %3809 = vmatpush1.msra.mxu0 0.0
    %3810 = vmatprep.subr.mxu0 0.0
    %3811 = vmatpush1.msra.mxu0 0.0
    %3812 = vmatprep.subr.mxu0 0.0
    %3813 = vmatpush1.msra.mxu0 0.0
    %3814 = vmatprep.subr.mxu0 0.0
    %3815 = vmatpush1.msra.mxu0 0.0
    %3816 = vmatprep.subr.mxu0 0.0
    %3817 = vmatpush1.msra.mxu0 0.0
    %3818 = vmatprep.subr.mxu0 0.0
    %3819 = vmatpush1.msra.mxu0 0.0
    %3820 = vmatprep.subr.mxu0 0.0
    %3821 = vmatpush1.msra.mxu0 0.0
    %3822 = vmatprep.subr.mxu0 0.0
    %3823 = vmatpush1.msra.mxu0 0.0
    %3824 = vmatprep.subr.mxu0 0.0
    %3825 = vmatpush1.msra.mxu0 0.0
    %3826 = vmatprep.subr.mxu0 0.0
    %3827 = vmatpush1.msra.mxu0 0.0
    %3828 = vmatprep.subr.mxu0 0.0
    %v3829 = vand.u32 %v46, 4294901760
    %v3830 = vsub.f32 %v46, %v3829
    %3831 = vmatpush1.msra.mxu0 %v3830
    %3832 = vmatprep.subr.mxu0 0.0
    %v3833 = vand.u32 %v45, 4294901760
    %v3834 = vsub.f32 %v45, %v3833
    %3835 = vmatpush1.msra.mxu0 %v3834
    %3836 = vmatprep.subr.mxu0 0.0
    %3837 = vmatpush2.msra.mxu0 0.0
    %3838 = vmatprep.subr.mxu0 0.0
    %3839 = vmatpush2.msra.mxu0 0.0
    %3840 = vmatprep.subr.mxu0 0.0
    %3841 = vmatpush2.msra.mxu0 0.0
    %3842 = vmatprep.subr.mxu0 0.0
    %3843 = vmatpush2.msra.mxu0 0.0
    %3844 = vmatprep.subr.mxu0 0.0
    %3845 = vmatpush2.msra.mxu0 0.0
    %3846 = vmatprep.subr.mxu0 0.0
    %3847 = vmatpush2.msra.mxu0 0.0
    %3848 = vmatprep.subr.mxu0 0.0
    %3849 = vmatpush2.msra.mxu0 0.0
    %3850 = vmatprep.subr.mxu0 0.0
    %3851 = vmatpush2.msra.mxu0 0.0
    %3852 = vmatprep.subr.mxu0 0.0
    %3853 = vmatpush2.msra.mxu0 0.0
    %3854 = vmatprep.subr.mxu0 0.0
    %3855 = vmatpush2.msra.mxu0 0.0
    %3856 = vmatprep.subr.mxu0 0.0
    %3857 = vmatpush2.msra.mxu0 0.0
    %3858 = vmatprep.subr.mxu0 0.0
    %3859 = vmatpush2.msra.mxu0 0.0
    %3860 = vmatprep.subr.mxu0 0.0
    %3861 = vmatpush2.msra.mxu0 0.0
    %3862 = vmatprep.subr.mxu0 0.0
    %3863 = vmatpush2.msra.mxu0 0.0
    %3864 = vmatprep.subr.mxu0 0.0
    %3865 = vmatpush2.msra.mxu0 0.0
    %3866 = vmatprep.subr.mxu0 0.0
    %3867 = vmatpush2.msra.mxu0 0.0
    %3868 = vmatprep.mubr.f32.mxu0 0.0
    %v3869 = vand.u32 %v55, 4294901760
    %v3870 = vsub.f32 %v55, %v3869
    %3871 = vmatmul.mubr.f32.gmra.mxu0 %v3870
    %v3872 = vpop.f32.mrf.mxu0
    %v3873 = vadd.f32 %v3779, %v3872
    %v3874 = vpop.f32.mrf.mxu0
    %3875 = vmatprep.mubr.f32.mxu0 0.0
    %v3876 = vand.u32 %v58, 4294901760
    %v3877 = vsub.f32 %v58, %v3876
    %3878 = vmatmul.mubr.f32.gmra.mxu0 %v3877
    %v3879 = vpop.f32.mrf.mxu0
    %v3880 = vadd.f32 %v3785, %v3879
    %v3881 = vpop.f32.mrf.mxu0
    %3882 = vmatprep.mubr.f32.mxu0 0.0
    %v3883 = vand.u32 %v61, 4294901760
    %v3884 = vsub.f32 %v61, %v3883
    %3885 = vmatmul.mubr.f32.gmra.mxu0 %v3884
    %v3886 = vpop.f32.mrf.mxu0
    %v3887 = vadd.f32 %v3791, %v3886
    %v3888 = vpop.f32.mrf.mxu0
    %3889 = vmatprep.mubr.f32.mxu0 0.0
    %v3890 = vand.u32 %v64, 4294901760
    %v3891 = vsub.f32 %v64, %v3890
    %3892 = vmatmul.mubr.f32.gmra.mxu0 %v3891
    %v3893 = vpop.f32.mrf.mxu0
    %v3894 = vadd.f32 %v3797, %v3893
    %v3895 = vpop.f32.mrf.mxu0
    %3896 = vdwg.mxu0
    %3897 = vmatprep.subr.mxu0 0.0
    %3898 = vmatpush1.msra.mxu0 0.0
    %3899 = vmatprep.subr.mxu0 0.0
    %3900 = vmatpush1.msra.mxu0 0.0
    %3901 = vmatprep.subr.mxu0 0.0
    %3902 = vmatpush1.msra.mxu0 0.0
    %3903 = vmatprep.subr.mxu0 0.0
    %3904 = vmatpush1.msra.mxu0 0.0
    %3905 = vmatprep.subr.mxu0 0.0
    %3906 = vmatpush1.msra.mxu0 0.0
    %3907 = vmatprep.subr.mxu0 0.0
    %3908 = vmatpush1.msra.mxu0 0.0
    %3909 = vmatprep.subr.mxu0 0.0
    %3910 = vmatpush1.msra.mxu0 0.0
    %3911 = vmatprep.subr.mxu0 0.0
    %3912 = vmatpush1.msra.mxu0 0.0
    %3913 = vmatprep.subr.mxu0 0.0
    %3914 = vmatpush1.msra.mxu0 0.0
    %3915 = vmatprep.subr.mxu0 0.0
    %3916 = vmatpush1.msra.mxu0 0.0
    %3917 = vmatprep.subr.mxu0 0.0
    %3918 = vmatpush1.msra.mxu0 0.0
    %3919 = vmatprep.subr.mxu0 0.0
    %3920 = vmatpush1.msra.mxu0 0.0
    %3921 = vmatprep.subr.mxu0 0.0
    %3922 = vmatpush1.msra.mxu0 0.0
    %3923 = vmatprep.subr.mxu0 0.0
    %3924 = vmatpush1.msra.mxu0 0.0
    %3925 = vmatprep.subr.mxu0 0.0
    %v3926 = vand.u32 %v46, 4294901760
    %3927 = vmatpush1.msra.mxu0 %v3926
    %3928 = vmatprep.subr.mxu0 0.0
    %v3929 = vand.u32 %v45, 4294901760
    %3930 = vmatpush1.msra.mxu0 %v3929
    %3931 = vmatprep.subr.mxu0 0.0
    %3932 = vmatpush2.msra.mxu0 0.0
    %3933 = vmatprep.subr.mxu0 0.0
    %3934 = vmatpush2.msra.mxu0 0.0
    %3935 = vmatprep.subr.mxu0 0.0
    %3936 = vmatpush2.msra.mxu0 0.0
    %3937 = vmatprep.subr.mxu0 0.0
    %3938 = vmatpush2.msra.mxu0 0.0
    %3939 = vmatprep.subr.mxu0 0.0
    %3940 = vmatpush2.msra.mxu0 0.0
    %3941 = vmatprep.subr.mxu0 0.0
    %3942 = vmatpush2.msra.mxu0 0.0
    %3943 = vmatprep.subr.mxu0 0.0
    %3944 = vmatpush2.msra.mxu0 0.0
    %3945 = vmatprep.subr.mxu0 0.0
    %3946 = vmatpush2.msra.mxu0 0.0
    %3947 = vmatprep.subr.mxu0 0.0
    %3948 = vmatpush2.msra.mxu0 0.0
    %3949 = vmatprep.subr.mxu0 0.0
    %3950 = vmatpush2.msra.mxu0 0.0
    %3951 = vmatprep.subr.mxu0 0.0
    %3952 = vmatpush2.msra.mxu0 0.0
    %3953 = vmatprep.subr.mxu0 0.0
    %3954 = vmatpush2.msra.mxu0 0.0
    %3955 = vmatprep.subr.mxu0 0.0
    %3956 = vmatpush2.msra.mxu0 0.0
    %3957 = vmatprep.subr.mxu0 0.0
    %3958 = vmatpush2.msra.mxu0 0.0
    %3959 = vmatprep.subr.mxu0 0.0
    %3960 = vmatpush2.msra.mxu0 0.0
    %3961 = vmatprep.subr.mxu0 0.0
    %3962 = vmatpush2.msra.mxu0 0.0
    %3963 = vmatprep.mubr.f32.mxu0 0.0
    %v3964 = vand.u32 %v55, 4294901760
    %v3965 = vsub.f32 %v55, %v3964
    %v3966 = vand.u32 %v3965, 4294901760
    %3967 = vmatmul.mubr.f32.gmra.mxu0 %v3966
    %v3968 = vpop.f32.mrf.mxu0
    %v3969 = vadd.f32 %v3873, %v3968
    %v3970 = vpop.f32.mrf.mxu0
    %3971 = vmatprep.mubr.f32.mxu0 0.0
    %v3972 = vand.u32 %v58, 4294901760
    %v3973 = vsub.f32 %v58, %v3972
    %v3974 = vand.u32 %v3973, 4294901760
    %3975 = vmatmul.mubr.f32.gmra.mxu0 %v3974
    %v3976 = vpop.f32.mrf.mxu0
    %v3977 = vadd.f32 %v3880, %v3976
    %v3978 = vpop.f32.mrf.mxu0
    %3979 = vmatprep.mubr.f32.mxu0 0.0
    %v3980 = vand.u32 %v61, 4294901760
    %v3981 = vsub.f32 %v61, %v3980
    %v3982 = vand.u32 %v3981, 4294901760
    %3983 = vmatmul.mubr.f32.gmra.mxu0 %v3982
    %v3984 = vpop.f32.mrf.mxu0
    %v3985 = vadd.f32 %v3887, %v3984
    %v3986 = vpop.f32.mrf.mxu0
    %3987 = vmatprep.mubr.f32.mxu0 0.0
    %v3988 = vand.u32 %v64, 4294901760
    %v3989 = vsub.f32 %v64, %v3988
    %v3990 = vand.u32 %v3989, 4294901760
    %3991 = vmatmul.mubr.f32.gmra.mxu0 %v3990
    %v3992 = vpop.f32.mrf.mxu0
    %v3993 = vadd.f32 %v3894, %v3992
    %v3994 = vpop.f32.mrf.mxu0
    %3995 = vdwg.mxu0
    %3996 = vmatprep.subr.mxu0 0.0
    %3997 = vmatpush1.msra.mxu0 0.0
    %3998 = vmatprep.subr.mxu0 0.0
    %3999 = vmatpush1.msra.mxu0 0.0
    %4000 = vmatprep.subr.mxu0 0.0
    %4001 = vmatpush1.msra.mxu0 0.0
    %4002 = vmatprep.subr.mxu0 0.0
    %4003 = vmatpush1.msra.mxu0 0.0
    %4004 = vmatprep.subr.mxu0 0.0
    %4005 = vmatpush1.msra.mxu0 0.0
    %4006 = vmatprep.subr.mxu0 0.0
    %4007 = vmatpush1.msra.mxu0 0.0
    %4008 = vmatprep.subr.mxu0 0.0
    %4009 = vmatpush1.msra.mxu0 0.0
    %4010 = vmatprep.subr.mxu0 0.0
    %4011 = vmatpush1.msra.mxu0 0.0
    %4012 = vmatprep.subr.mxu0 0.0
    %4013 = vmatpush1.msra.mxu0 0.0
    %4014 = vmatprep.subr.mxu0 0.0
    %4015 = vmatpush1.msra.mxu0 0.0
    %4016 = vmatprep.subr.mxu0 0.0
    %4017 = vmatpush1.msra.mxu0 0.0
    %4018 = vmatprep.subr.mxu0 0.0
    %4019 = vmatpush1.msra.mxu0 0.0
    %4020 = vmatprep.subr.mxu0 0.0
    %4021 = vmatpush1.msra.mxu0 0.0
    %4022 = vmatprep.subr.mxu0 0.0
    %4023 = vmatpush1.msra.mxu0 0.0
    %4024 = vmatprep.subr.mxu0 0.0
    %v4025 = vand.u32 %v46, 4294901760
    %v4026 = vsub.f32 %v46, %v4025
    %v4027 = vand.u32 %v4026, 4294901760
    %4028 = vmatpush1.msra.mxu0 %v4027
    %4029 = vmatprep.subr.mxu0 0.0
    %v4030 = vand.u32 %v45, 4294901760
    %v4031 = vsub.f32 %v45, %v4030
    %v4032 = vand.u32 %v4031, 4294901760
    %4033 = vmatpush1.msra.mxu0 %v4032
    %4034 = vmatprep.subr.mxu0 0.0
    %4035 = vmatpush2.msra.mxu0 0.0
    %4036 = vmatprep.subr.mxu0 0.0
    %4037 = vmatpush2.msra.mxu0 0.0
    %4038 = vmatprep.subr.mxu0 0.0
    %4039 = vmatpush2.msra.mxu0 0.0
    %4040 = vmatprep.subr.mxu0 0.0
    %4041 = vmatpush2.msra.mxu0 0.0
    %4042 = vmatprep.subr.mxu0 0.0
    %4043 = vmatpush2.msra.mxu0 0.0
    %4044 = vmatprep.subr.mxu0 0.0
    %4045 = vmatpush2.msra.mxu0 0.0
    %4046 = vmatprep.subr.mxu0 0.0
    %4047 = vmatpush2.msra.mxu0 0.0
    %4048 = vmatprep.subr.mxu0 0.0
    %4049 = vmatpush2.msra.mxu0 0.0
    %4050 = vmatprep.subr.mxu0 0.0
    %4051 = vmatpush2.msra.mxu0 0.0
    %4052 = vmatprep.subr.mxu0 0.0
    %4053 = vmatpush2.msra.mxu0 0.0
    %4054 = vmatprep.subr.mxu0 0.0
    %4055 = vmatpush2.msra.mxu0 0.0
    %4056 = vmatprep.subr.mxu0 0.0
    %4057 = vmatpush2.msra.mxu0 0.0
    %4058 = vmatprep.subr.mxu0 0.0
    %4059 = vmatpush2.msra.mxu0 0.0
    %4060 = vmatprep.subr.mxu0 0.0
    %4061 = vmatpush2.msra.mxu0 0.0
    %4062 = vmatprep.subr.mxu0 0.0
    %4063 = vmatpush2.msra.mxu0 0.0
    %4064 = vmatprep.subr.mxu0 0.0
    %4065 = vmatpush2.msra.mxu0 0.0
    %4066 = vmatprep.mubr.f32.mxu0 0.0
    %v4067 = vand.u32 %v55, 4294901760
    %4068 = vmatmul.mubr.f32.gmra.mxu0 %v4067
    %v4069 = vpop.f32.mrf.mxu0
    %v4070 = vadd.f32 %v3969, %v4069
    %v4071 = vpop.f32.mrf.mxu0
    %4072 = vmatprep.mubr.f32.mxu0 0.0
    %v4073 = vand.u32 %v58, 4294901760
    %4074 = vmatmul.mubr.f32.gmra.mxu0 %v4073
    %v4075 = vpop.f32.mrf.mxu0
    %v4076 = vadd.f32 %v3977, %v4075
    %v4077 = vpop.f32.mrf.mxu0
    %4078 = vmatprep.mubr.f32.mxu0 0.0
    %v4079 = vand.u32 %v61, 4294901760
    %4080 = vmatmul.mubr.f32.gmra.mxu0 %v4079
    %v4081 = vpop.f32.mrf.mxu0
    %v4082 = vadd.f32 %v3985, %v4081
    %v4083 = vpop.f32.mrf.mxu0
    %4084 = vmatprep.mubr.f32.mxu0 0.0
    %v4085 = vand.u32 %v64, 4294901760
    %4086 = vmatmul.mubr.f32.gmra.mxu0 %v4085
    %v4087 = vpop.f32.mrf.mxu0
    %v4088 = vadd.f32 %v3993, %v4087
    %v4089 = vpop.f32.mrf.mxu0
    %4090 = vdwg.mxu0
    %4091 = vmatprep.subr.mxu0 0.0
    %4092 = vmatpush1.msra.mxu0 0.0
    %4093 = vmatprep.subr.mxu0 0.0
    %4094 = vmatpush1.msra.mxu0 0.0
    %4095 = vmatprep.subr.mxu0 0.0
    %4096 = vmatpush1.msra.mxu0 0.0
    %4097 = vmatprep.subr.mxu0 0.0
    %4098 = vmatpush1.msra.mxu0 0.0
    %4099 = vmatprep.subr.mxu0 0.0
    %4100 = vmatpush1.msra.mxu0 0.0
    %4101 = vmatprep.subr.mxu0 0.0
    %4102 = vmatpush1.msra.mxu0 0.0
    %4103 = vmatprep.subr.mxu0 0.0
    %4104 = vmatpush1.msra.mxu0 0.0
    %4105 = vmatprep.subr.mxu0 0.0
    %4106 = vmatpush1.msra.mxu0 0.0
    %4107 = vmatprep.subr.mxu0 0.0
    %4108 = vmatpush1.msra.mxu0 0.0
    %4109 = vmatprep.subr.mxu0 0.0
    %4110 = vmatpush1.msra.mxu0 0.0
    %4111 = vmatprep.subr.mxu0 0.0
    %4112 = vmatpush1.msra.mxu0 0.0
    %4113 = vmatprep.subr.mxu0 0.0
    %4114 = vmatpush1.msra.mxu0 0.0
    %4115 = vmatprep.subr.mxu0 0.0
    %4116 = vmatpush1.msra.mxu0 0.0
    %4117 = vmatprep.subr.mxu0 0.0
    %4118 = vmatpush1.msra.mxu0 0.0
    %4119 = vmatprep.subr.mxu0 0.0
    %v4120 = vand.u32 %v46, 4294901760
    %4121 = vmatpush1.msra.mxu0 %v4120
    %4122 = vmatprep.subr.mxu0 0.0
    %v4123 = vand.u32 %v45, 4294901760
    %4124 = vmatpush1.msra.mxu0 %v4123
    %4125 = vmatprep.subr.mxu0 0.0
    %4126 = vmatpush2.msra.mxu0 0.0
    %4127 = vmatprep.subr.mxu0 0.0
    %4128 = vmatpush2.msra.mxu0 0.0
    %4129 = vmatprep.subr.mxu0 0.0
    %4130 = vmatpush2.msra.mxu0 0.0
    %4131 = vmatprep.subr.mxu0 0.0
    %4132 = vmatpush2.msra.mxu0 0.0
    %4133 = vmatprep.subr.mxu0 0.0
    %4134 = vmatpush2.msra.mxu0 0.0
    %4135 = vmatprep.subr.mxu0 0.0
    %4136 = vmatpush2.msra.mxu0 0.0
    %4137 = vmatprep.subr.mxu0 0.0
    %4138 = vmatpush2.msra.mxu0 0.0
    %4139 = vmatprep.subr.mxu0 0.0
    %4140 = vmatpush2.msra.mxu0 0.0
    %4141 = vmatprep.subr.mxu0 0.0
    %4142 = vmatpush2.msra.mxu0 0.0
    %4143 = vmatprep.subr.mxu0 0.0
    %4144 = vmatpush2.msra.mxu0 0.0
    %4145 = vmatprep.subr.mxu0 0.0
    %4146 = vmatpush2.msra.mxu0 0.0
    %4147 = vmatprep.subr.mxu0 0.0
    %4148 = vmatpush2.msra.mxu0 0.0
    %4149 = vmatprep.subr.mxu0 0.0
    %4150 = vmatpush2.msra.mxu0 0.0
    %4151 = vmatprep.subr.mxu0 0.0
    %4152 = vmatpush2.msra.mxu0 0.0
    %4153 = vmatprep.subr.mxu0 0.0
    %4154 = vmatpush2.msra.mxu0 0.0
    %4155 = vmatprep.subr.mxu0 0.0
    %4156 = vmatpush2.msra.mxu0 0.0
    %4157 = vmatprep.mubr.f32.mxu0 0.0
    %v4158 = vand.u32 %v55, 4294901760
    %4159 = vmatmul.mubr.f32.gmra.mxu0 %v4158
    %v4160 = vpop.f32.mrf.mxu0
    %v4161 = vadd.f32 %v4070, %v4160
    %v4162 = vpop.f32.mrf.mxu0
    %4163 = vmatprep.mubr.f32.mxu0 0.0
    %v4164 = vand.u32 %v58, 4294901760
    %4165 = vmatmul.mubr.f32.gmra.mxu0 %v4164
    %v4166 = vpop.f32.mrf.mxu0
    %v4167 = vadd.f32 %v4076, %v4166
    %v4168 = vpop.f32.mrf.mxu0
    %4169 = vmatprep.mubr.f32.mxu0 0.0
    %v4170 = vand.u32 %v61, 4294901760
    %4171 = vmatmul.mubr.f32.gmra.mxu0 %v4170
    %v4172 = vpop.f32.mrf.mxu0
    %v4173 = vadd.f32 %v4082, %v4172
    %v4174 = vpop.f32.mrf.mxu0
    %4175 = vmatprep.mubr.f32.mxu0 0.0
    %v4176 = vand.u32 %v64, 4294901760
    %4177 = vmatmul.mubr.f32.gmra.mxu0 %v4176
    %v4178 = vpop.f32.mrf.mxu0
    %v4179 = vadd.f32 %v4088, %v4178
    %v4180 = vpop.f32.mrf.mxu0
    %4181 = vdwg.mxu0
    %4182 = vmatprep.subr.mxu0 0.0
    %4183 = vmatpush1.msra.mxu0 0.0
    %4184 = vmatprep.subr.mxu0 0.0
    %4185 = vmatpush1.msra.mxu0 0.0
    %4186 = vmatprep.subr.mxu0 0.0
    %4187 = vmatpush1.msra.mxu0 0.0
    %4188 = vmatprep.subr.mxu0 0.0
    %4189 = vmatpush1.msra.mxu0 0.0
    %4190 = vmatprep.subr.mxu0 0.0
    %4191 = vmatpush1.msra.mxu0 0.0
    %4192 = vmatprep.subr.mxu0 0.0
    %4193 = vmatpush1.msra.mxu0 0.0
    %4194 = vmatprep.subr.mxu0 0.0
    %4195 = vmatpush1.msra.mxu0 0.0
    %4196 = vmatprep.subr.mxu0 0.0
    %4197 = vmatpush1.msra.mxu0 0.0
    %4198 = vmatprep.subr.mxu0 0.0
    %4199 = vmatpush1.msra.mxu0 0.0
    %4200 = vmatprep.subr.mxu0 0.0
    %4201 = vmatpush1.msra.mxu0 0.0
    %4202 = vmatprep.subr.mxu0 0.0
    %4203 = vmatpush1.msra.mxu0 0.0
    %4204 = vmatprep.subr.mxu0 0.0
    %4205 = vmatpush1.msra.mxu0 0.0
    %4206 = vmatprep.subr.mxu0 0.0
    %4207 = vmatpush1.msra.mxu0 0.0
    %4208 = vmatprep.subr.mxu0 0.0
    %4209 = vmatpush1.msra.mxu0 0.0
    %4210 = vmatprep.subr.mxu0 0.0
    %v4211 = vand.u32 %v48, 4294901760
    %4212 = vmatpush1.msra.mxu0 %v4211
    %4213 = vmatprep.subr.mxu0 0.0
    %v4214 = vand.u32 %v47, 4294901760
    %4215 = vmatpush1.msra.mxu0 %v4214
    %4216 = vmatprep.subr.mxu0 0.0
    %4217 = vmatpush2.msra.mxu0 0.0
    %4218 = vmatprep.subr.mxu0 0.0
    %4219 = vmatpush2.msra.mxu0 0.0
    %4220 = vmatprep.subr.mxu0 0.0
    %4221 = vmatpush2.msra.mxu0 0.0
    %4222 = vmatprep.subr.mxu0 0.0
    %4223 = vmatpush2.msra.mxu0 0.0
    %4224 = vmatprep.subr.mxu0 0.0
    %4225 = vmatpush2.msra.mxu0 0.0
    %4226 = vmatprep.subr.mxu0 0.0
    %4227 = vmatpush2.msra.mxu0 0.0
    %4228 = vmatprep.subr.mxu0 0.0
    %4229 = vmatpush2.msra.mxu0 0.0
    %4230 = vmatprep.subr.mxu0 0.0
    %4231 = vmatpush2.msra.mxu0 0.0
    %4232 = vmatprep.subr.mxu0 0.0
    %4233 = vmatpush2.msra.mxu0 0.0
    %4234 = vmatprep.subr.mxu0 0.0
    %4235 = vmatpush2.msra.mxu0 0.0
    %4236 = vmatprep.subr.mxu0 0.0
    %4237 = vmatpush2.msra.mxu0 0.0
    %4238 = vmatprep.subr.mxu0 0.0
    %4239 = vmatpush2.msra.mxu0 0.0
    %4240 = vmatprep.subr.mxu0 0.0
    %4241 = vmatpush2.msra.mxu0 0.0
    %4242 = vmatprep.subr.mxu0 0.0
    %4243 = vmatpush2.msra.mxu0 0.0
    %4244 = vmatprep.subr.mxu0 0.0
    %4245 = vmatpush2.msra.mxu0 0.0
    %4246 = vmatprep.subr.mxu0 0.0
    %4247 = vmatpush2.msra.mxu0 0.0
    %4248 = vmatprep.mubr.f32.mxu0 0.0
    %v4249 = vand.u32 %v55, 4294901760
    %v4250 = vsub.f32 %v55, %v4249
    %v4251 = vand.u32 %v4250, 4294901760
    %v4252 = vsub.f32 %v4250, %v4251
    %v4253 = vand.u32 %v4252, 4294901760
    %4254 = vmatmul.mubr.f32.gmra.mxu0 %v4253
    %v4255 = vpop.f32.mrf.mxu0
    %v4256 = vadd.f32 0.0, %v4255
    %v4257 = vpop.f32.mrf.mxu0
    %4258 = vmatprep.mubr.f32.mxu0 0.0
    %v4259 = vand.u32 %v58, 4294901760
    %v4260 = vsub.f32 %v58, %v4259
    %v4261 = vand.u32 %v4260, 4294901760
    %v4262 = vsub.f32 %v4260, %v4261
    %v4263 = vand.u32 %v4262, 4294901760
    %4264 = vmatmul.mubr.f32.gmra.mxu0 %v4263
    %v4265 = vpop.f32.mrf.mxu0
    %v4266 = vadd.f32 0.0, %v4265
    %v4267 = vpop.f32.mrf.mxu0
    %4268 = vmatprep.mubr.f32.mxu0 0.0
    %v4269 = vand.u32 %v61, 4294901760
    %v4270 = vsub.f32 %v61, %v4269
    %v4271 = vand.u32 %v4270, 4294901760
    %v4272 = vsub.f32 %v4270, %v4271
    %v4273 = vand.u32 %v4272, 4294901760
    %4274 = vmatmul.mubr.f32.gmra.mxu0 %v4273
    %v4275 = vpop.f32.mrf.mxu0
    %v4276 = vadd.f32 0.0, %v4275
    %v4277 = vpop.f32.mrf.mxu0
    %4278 = vmatprep.mubr.f32.mxu0 0.0
    %v4279 = vand.u32 %v64, 4294901760
    %v4280 = vsub.f32 %v64, %v4279
    %v4281 = vand.u32 %v4280, 4294901760
    %v4282 = vsub.f32 %v4280, %v4281
    %v4283 = vand.u32 %v4282, 4294901760
    %4284 = vmatmul.mubr.f32.gmra.mxu0 %v4283
    %v4285 = vpop.f32.mrf.mxu0
    %v4286 = vadd.f32 0.0, %v4285
    %v4287 = vpop.f32.mrf.mxu0
    %4288 = vdwg.mxu0
    %4289 = vmatprep.subr.mxu0 0.0
    %4290 = vmatpush1.msra.mxu0 0.0
    %4291 = vmatprep.subr.mxu0 0.0
    %4292 = vmatpush1.msra.mxu0 0.0
    %4293 = vmatprep.subr.mxu0 0.0
    %4294 = vmatpush1.msra.mxu0 0.0
    %4295 = vmatprep.subr.mxu0 0.0
    %4296 = vmatpush1.msra.mxu0 0.0
    %4297 = vmatprep.subr.mxu0 0.0
    %4298 = vmatpush1.msra.mxu0 0.0
    %4299 = vmatprep.subr.mxu0 0.0
    %4300 = vmatpush1.msra.mxu0 0.0
    %4301 = vmatprep.subr.mxu0 0.0
    %4302 = vmatpush1.msra.mxu0 0.0
    %4303 = vmatprep.subr.mxu0 0.0
    %4304 = vmatpush1.msra.mxu0 0.0
    %4305 = vmatprep.subr.mxu0 0.0
    %4306 = vmatpush1.msra.mxu0 0.0
    %4307 = vmatprep.subr.mxu0 0.0
    %4308 = vmatpush1.msra.mxu0 0.0
    %4309 = vmatprep.subr.mxu0 0.0
    %4310 = vmatpush1.msra.mxu0 0.0
    %4311 = vmatprep.subr.mxu0 0.0
    %4312 = vmatpush1.msra.mxu0 0.0
    %4313 = vmatprep.subr.mxu0 0.0
    %4314 = vmatpush1.msra.mxu0 0.0
    %4315 = vmatprep.subr.mxu0 0.0
    %4316 = vmatpush1.msra.mxu0 0.0
    %4317 = vmatprep.subr.mxu0 0.0
    %v4318 = vand.u32 %v48, 4294901760
    %v4319 = vsub.f32 %v48, %v4318
    %v4320 = vand.u32 %v4319, 4294901760
    %v4321 = vsub.f32 %v4319, %v4320
    %v4322 = vand.u32 %v4321, 4294901760
    %4323 = vmatpush1.msra.mxu0 %v4322
    %4324 = vmatprep.subr.mxu0 0.0
    %v4325 = vand.u32 %v47, 4294901760
    %v4326 = vsub.f32 %v47, %v4325
    %v4327 = vand.u32 %v4326, 4294901760
    %v4328 = vsub.f32 %v4326, %v4327
    %v4329 = vand.u32 %v4328, 4294901760
    %4330 = vmatpush1.msra.mxu0 %v4329
    %4331 = vmatprep.subr.mxu0 0.0
    %4332 = vmatpush2.msra.mxu0 0.0
    %4333 = vmatprep.subr.mxu0 0.0
    %4334 = vmatpush2.msra.mxu0 0.0
    %4335 = vmatprep.subr.mxu0 0.0
    %4336 = vmatpush2.msra.mxu0 0.0
    %4337 = vmatprep.subr.mxu0 0.0
    %4338 = vmatpush2.msra.mxu0 0.0
    %4339 = vmatprep.subr.mxu0 0.0
    %4340 = vmatpush2.msra.mxu0 0.0
    %4341 = vmatprep.subr.mxu0 0.0
    %4342 = vmatpush2.msra.mxu0 0.0
    %4343 = vmatprep.subr.mxu0 0.0
    %4344 = vmatpush2.msra.mxu0 0.0
    %4345 = vmatprep.subr.mxu0 0.0
    %4346 = vmatpush2.msra.mxu0 0.0
    %4347 = vmatprep.subr.mxu0 0.0
    %4348 = vmatpush2.msra.mxu0 0.0
    %4349 = vmatprep.subr.mxu0 0.0
    %4350 = vmatpush2.msra.mxu0 0.0
    %4351 = vmatprep.subr.mxu0 0.0
    %4352 = vmatpush2.msra.mxu0 0.0
    %4353 = vmatprep.subr.mxu0 0.0
    %4354 = vmatpush2.msra.mxu0 0.0
    %4355 = vmatprep.subr.mxu0 0.0
    %4356 = vmatpush2.msra.mxu0 0.0
    %4357 = vmatprep.subr.mxu0 0.0
    %4358 = vmatpush2.msra.mxu0 0.0
    %4359 = vmatprep.subr.mxu0 0.0
    %4360 = vmatpush2.msra.mxu0 0.0
    %4361 = vmatprep.subr.mxu0 0.0
    %4362 = vmatpush2.msra.mxu0 0.0
    %4363 = vmatprep.mubr.f32.mxu0 0.0
    %v4364 = vand.u32 %v55, 4294901760
    %4365 = vmatmul.mubr.f32.gmra.mxu0 %v4364
    %v4366 = vpop.f32.mrf.mxu0
    %v4367 = vadd.f32 %v4256, %v4366
    %v4368 = vpop.f32.mrf.mxu0
    %4369 = vmatprep.mubr.f32.mxu0 0.0
    %v4370 = vand.u32 %v58, 4294901760
    %4371 = vmatmul.mubr.f32.gmra.mxu0 %v4370
    %v4372 = vpop.f32.mrf.mxu0
    %v4373 = vadd.f32 %v4266, %v4372
    %v4374 = vpop.f32.mrf.mxu0
    %4375 = vmatprep.mubr.f32.mxu0 0.0
    %v4376 = vand.u32 %v61, 4294901760
    %4377 = vmatmul.mubr.f32.gmra.mxu0 %v4376
    %v4378 = vpop.f32.mrf.mxu0
    %v4379 = vadd.f32 %v4276, %v4378
    %v4380 = vpop.f32.mrf.mxu0
    %4381 = vmatprep.mubr.f32.mxu0 0.0
    %v4382 = vand.u32 %v64, 4294901760
    %4383 = vmatmul.mubr.f32.gmra.mxu0 %v4382
    %v4384 = vpop.f32.mrf.mxu0
    %v4385 = vadd.f32 %v4286, %v4384
    %v4386 = vpop.f32.mrf.mxu0
    %4387 = vdwg.mxu0
    %4388 = vmatprep.subr.mxu0 0.0
    %4389 = vmatpush1.msra.mxu0 0.0
    %4390 = vmatprep.subr.mxu0 0.0
    %4391 = vmatpush1.msra.mxu0 0.0
    %4392 = vmatprep.subr.mxu0 0.0
    %4393 = vmatpush1.msra.mxu0 0.0
    %4394 = vmatprep.subr.mxu0 0.0
    %4395 = vmatpush1.msra.mxu0 0.0
    %4396 = vmatprep.subr.mxu0 0.0
    %4397 = vmatpush1.msra.mxu0 0.0
    %4398 = vmatprep.subr.mxu0 0.0
    %4399 = vmatpush1.msra.mxu0 0.0
    %4400 = vmatprep.subr.mxu0 0.0
    %4401 = vmatpush1.msra.mxu0 0.0
    %4402 = vmatprep.subr.mxu0 0.0
    %4403 = vmatpush1.msra.mxu0 0.0
    %4404 = vmatprep.subr.mxu0 0.0
    %4405 = vmatpush1.msra.mxu0 0.0
    %4406 = vmatprep.subr.mxu0 0.0
    %4407 = vmatpush1.msra.mxu0 0.0
    %4408 = vmatprep.subr.mxu0 0.0
    %4409 = vmatpush1.msra.mxu0 0.0
    %4410 = vmatprep.subr.mxu0 0.0
    %4411 = vmatpush1.msra.mxu0 0.0
    %4412 = vmatprep.subr.mxu0 0.0
    %4413 = vmatpush1.msra.mxu0 0.0
    %4414 = vmatprep.subr.mxu0 0.0
    %4415 = vmatpush1.msra.mxu0 0.0
    %4416 = vmatprep.subr.mxu0 0.0
    %v4417 = vand.u32 %v48, 4294901760
    %v4418 = vsub.f32 %v48, %v4417
    %4419 = vmatpush1.msra.mxu0 %v4418
    %4420 = vmatprep.subr.mxu0 0.0
    %v4421 = vand.u32 %v47, 4294901760
    %v4422 = vsub.f32 %v47, %v4421
    %4423 = vmatpush1.msra.mxu0 %v4422
    %4424 = vmatprep.subr.mxu0 0.0
    %4425 = vmatpush2.msra.mxu0 0.0
    %4426 = vmatprep.subr.mxu0 0.0
    %4427 = vmatpush2.msra.mxu0 0.0
    %4428 = vmatprep.subr.mxu0 0.0
    %4429 = vmatpush2.msra.mxu0 0.0
    %4430 = vmatprep.subr.mxu0 0.0
    %4431 = vmatpush2.msra.mxu0 0.0
    %4432 = vmatprep.subr.mxu0 0.0
    %4433 = vmatpush2.msra.mxu0 0.0
    %4434 = vmatprep.subr.mxu0 0.0
    %4435 = vmatpush2.msra.mxu0 0.0
    %4436 = vmatprep.subr.mxu0 0.0
    %4437 = vmatpush2.msra.mxu0 0.0
    %4438 = vmatprep.subr.mxu0 0.0
    %4439 = vmatpush2.msra.mxu0 0.0
    %4440 = vmatprep.subr.mxu0 0.0
    %4441 = vmatpush2.msra.mxu0 0.0
    %4442 = vmatprep.subr.mxu0 0.0
    %4443 = vmatpush2.msra.mxu0 0.0
    %4444 = vmatprep.subr.mxu0 0.0
    %4445 = vmatpush2.msra.mxu0 0.0
    %4446 = vmatprep.subr.mxu0 0.0
    %4447 = vmatpush2.msra.mxu0 0.0
    %4448 = vmatprep.subr.mxu0 0.0
    %4449 = vmatpush2.msra.mxu0 0.0
    %4450 = vmatprep.subr.mxu0 0.0
    %4451 = vmatpush2.msra.mxu0 0.0
    %4452 = vmatprep.subr.mxu0 0.0
    %4453 = vmatpush2.msra.mxu0 0.0
    %4454 = vmatprep.subr.mxu0 0.0
    %4455 = vmatpush2.msra.mxu0 0.0
    %4456 = vmatprep.mubr.f32.mxu0 0.0
    %v4457 = vand.u32 %v55, 4294901760
    %v4458 = vsub.f32 %v55, %v4457
    %4459 = vmatmul.mubr.f32.gmra.mxu0 %v4458
    %v4460 = vpop.f32.mrf.mxu0
    %v4461 = vadd.f32 %v4367, %v4460
    %v4462 = vpop.f32.mrf.mxu0
    %4463 = vmatprep.mubr.f32.mxu0 0.0
    %v4464 = vand.u32 %v58, 4294901760
    %v4465 = vsub.f32 %v58, %v4464
    %4466 = vmatmul.mubr.f32.gmra.mxu0 %v4465
    %v4467 = vpop.f32.mrf.mxu0
    %v4468 = vadd.f32 %v4373, %v4467
    %v4469 = vpop.f32.mrf.mxu0
    %4470 = vmatprep.mubr.f32.mxu0 0.0
    %v4471 = vand.u32 %v61, 4294901760
    %v4472 = vsub.f32 %v61, %v4471
    %4473 = vmatmul.mubr.f32.gmra.mxu0 %v4472
    %v4474 = vpop.f32.mrf.mxu0
    %v4475 = vadd.f32 %v4379, %v4474
    %v4476 = vpop.f32.mrf.mxu0
    %4477 = vmatprep.mubr.f32.mxu0 0.0
    %v4478 = vand.u32 %v64, 4294901760
    %v4479 = vsub.f32 %v64, %v4478
    %4480 = vmatmul.mubr.f32.gmra.mxu0 %v4479
    %v4481 = vpop.f32.mrf.mxu0
    %v4482 = vadd.f32 %v4385, %v4481
    %v4483 = vpop.f32.mrf.mxu0
    %4484 = vdwg.mxu0
    %4485 = vmatprep.subr.mxu0 0.0
    %4486 = vmatpush1.msra.mxu0 0.0
    %4487 = vmatprep.subr.mxu0 0.0
    %4488 = vmatpush1.msra.mxu0 0.0
    %4489 = vmatprep.subr.mxu0 0.0
    %4490 = vmatpush1.msra.mxu0 0.0
    %4491 = vmatprep.subr.mxu0 0.0
    %4492 = vmatpush1.msra.mxu0 0.0
    %4493 = vmatprep.subr.mxu0 0.0
    %4494 = vmatpush1.msra.mxu0 0.0
    %4495 = vmatprep.subr.mxu0 0.0
    %4496 = vmatpush1.msra.mxu0 0.0
    %4497 = vmatprep.subr.mxu0 0.0
    %4498 = vmatpush1.msra.mxu0 0.0
    %4499 = vmatprep.subr.mxu0 0.0
    %4500 = vmatpush1.msra.mxu0 0.0
    %4501 = vmatprep.subr.mxu0 0.0
    %4502 = vmatpush1.msra.mxu0 0.0
    %4503 = vmatprep.subr.mxu0 0.0
    %4504 = vmatpush1.msra.mxu0 0.0
    %4505 = vmatprep.subr.mxu0 0.0
    %4506 = vmatpush1.msra.mxu0 0.0
    %4507 = vmatprep.subr.mxu0 0.0
    %4508 = vmatpush1.msra.mxu0 0.0
    %4509 = vmatprep.subr.mxu0 0.0
    %4510 = vmatpush1.msra.mxu0 0.0
    %4511 = vmatprep.subr.mxu0 0.0
    %4512 = vmatpush1.msra.mxu0 0.0
    %4513 = vmatprep.subr.mxu0 0.0
    %v4514 = vand.u32 %v48, 4294901760
    %4515 = vmatpush1.msra.mxu0 %v4514
    %4516 = vmatprep.subr.mxu0 0.0
    %v4517 = vand.u32 %v47, 4294901760
    %4518 = vmatpush1.msra.mxu0 %v4517
    %4519 = vmatprep.subr.mxu0 0.0
    %4520 = vmatpush2.msra.mxu0 0.0
    %4521 = vmatprep.subr.mxu0 0.0
    %4522 = vmatpush2.msra.mxu0 0.0
    %4523 = vmatprep.subr.mxu0 0.0
    %4524 = vmatpush2.msra.mxu0 0.0
    %4525 = vmatprep.subr.mxu0 0.0
    %4526 = vmatpush2.msra.mxu0 0.0
    %4527 = vmatprep.subr.mxu0 0.0
    %4528 = vmatpush2.msra.mxu0 0.0
    %4529 = vmatprep.subr.mxu0 0.0
    %4530 = vmatpush2.msra.mxu0 0.0
    %4531 = vmatprep.subr.mxu0 0.0
    %4532 = vmatpush2.msra.mxu0 0.0
    %4533 = vmatprep.subr.mxu0 0.0
    %4534 = vmatpush2.msra.mxu0 0.0
    %4535 = vmatprep.subr.mxu0 0.0
    %4536 = vmatpush2.msra.mxu0 0.0
    %4537 = vmatprep.subr.mxu0 0.0
    %4538 = vmatpush2.msra.mxu0 0.0
    %4539 = vmatprep.subr.mxu0 0.0
    %4540 = vmatpush2.msra.mxu0 0.0
    %4541 = vmatprep.subr.mxu0 0.0
    %4542 = vmatpush2.msra.mxu0 0.0
    %4543 = vmatprep.subr.mxu0 0.0
    %4544 = vmatpush2.msra.mxu0 0.0
    %4545 = vmatprep.subr.mxu0 0.0
    %4546 = vmatpush2.msra.mxu0 0.0
    %4547 = vmatprep.subr.mxu0 0.0
    %4548 = vmatpush2.msra.mxu0 0.0
    %4549 = vmatprep.subr.mxu0 0.0
    %4550 = vmatpush2.msra.mxu0 0.0
    %4551 = vmatprep.mubr.f32.mxu0 0.0
    %v4552 = vand.u32 %v55, 4294901760
    %v4553 = vsub.f32 %v55, %v4552
    %v4554 = vand.u32 %v4553, 4294901760
    %4555 = vmatmul.mubr.f32.gmra.mxu0 %v4554
    %v4556 = vpop.f32.mrf.mxu0
    %v4557 = vadd.f32 %v4461, %v4556
    %v4558 = vpop.f32.mrf.mxu0
    %4559 = vmatprep.mubr.f32.mxu0 0.0
    %v4560 = vand.u32 %v58, 4294901760
    %v4561 = vsub.f32 %v58, %v4560
    %v4562 = vand.u32 %v4561, 4294901760
    %4563 = vmatmul.mubr.f32.gmra.mxu0 %v4562
    %v4564 = vpop.f32.mrf.mxu0
    %v4565 = vadd.f32 %v4468, %v4564
    %v4566 = vpop.f32.mrf.mxu0
    %4567 = vmatprep.mubr.f32.mxu0 0.0
    %v4568 = vand.u32 %v61, 4294901760
    %v4569 = vsub.f32 %v61, %v4568
    %v4570 = vand.u32 %v4569, 4294901760
    %4571 = vmatmul.mubr.f32.gmra.mxu0 %v4570
    %v4572 = vpop.f32.mrf.mxu0
    %v4573 = vadd.f32 %v4475, %v4572
    %v4574 = vpop.f32.mrf.mxu0
    %4575 = vmatprep.mubr.f32.mxu0 0.0
    %v4576 = vand.u32 %v64, 4294901760
    %v4577 = vsub.f32 %v64, %v4576
    %v4578 = vand.u32 %v4577, 4294901760
    %4579 = vmatmul.mubr.f32.gmra.mxu0 %v4578
    %v4580 = vpop.f32.mrf.mxu0
    %v4581 = vadd.f32 %v4482, %v4580
    %v4582 = vpop.f32.mrf.mxu0
    %4583 = vdwg.mxu0
    %4584 = vmatprep.subr.mxu0 0.0
    %4585 = vmatpush1.msra.mxu0 0.0
    %4586 = vmatprep.subr.mxu0 0.0
    %4587 = vmatpush1.msra.mxu0 0.0
    %4588 = vmatprep.subr.mxu0 0.0
    %4589 = vmatpush1.msra.mxu0 0.0
    %4590 = vmatprep.subr.mxu0 0.0
    %4591 = vmatpush1.msra.mxu0 0.0
    %4592 = vmatprep.subr.mxu0 0.0
    %4593 = vmatpush1.msra.mxu0 0.0
    %4594 = vmatprep.subr.mxu0 0.0
    %4595 = vmatpush1.msra.mxu0 0.0
    %4596 = vmatprep.subr.mxu0 0.0
    %4597 = vmatpush1.msra.mxu0 0.0
    %4598 = vmatprep.subr.mxu0 0.0
    %4599 = vmatpush1.msra.mxu0 0.0
    %4600 = vmatprep.subr.mxu0 0.0
    %4601 = vmatpush1.msra.mxu0 0.0
    %4602 = vmatprep.subr.mxu0 0.0
    %4603 = vmatpush1.msra.mxu0 0.0
    %4604 = vmatprep.subr.mxu0 0.0
    %4605 = vmatpush1.msra.mxu0 0.0
    %4606 = vmatprep.subr.mxu0 0.0
    %4607 = vmatpush1.msra.mxu0 0.0
    %4608 = vmatprep.subr.mxu0 0.0
    %4609 = vmatpush1.msra.mxu0 0.0
    %4610 = vmatprep.subr.mxu0 0.0
    %4611 = vmatpush1.msra.mxu0 0.0
    %4612 = vmatprep.subr.mxu0 0.0
    %v4613 = vand.u32 %v48, 4294901760
    %v4614 = vsub.f32 %v48, %v4613
    %v4615 = vand.u32 %v4614, 4294901760
    %4616 = vmatpush1.msra.mxu0 %v4615
    %4617 = vmatprep.subr.mxu0 0.0
    %v4618 = vand.u32 %v47, 4294901760
    %v4619 = vsub.f32 %v47, %v4618
    %v4620 = vand.u32 %v4619, 4294901760
    %4621 = vmatpush1.msra.mxu0 %v4620
    %4622 = vmatprep.subr.mxu0 0.0
    %4623 = vmatpush2.msra.mxu0 0.0
    %4624 = vmatprep.subr.mxu0 0.0
    %4625 = vmatpush2.msra.mxu0 0.0
    %4626 = vmatprep.subr.mxu0 0.0
    %4627 = vmatpush2.msra.mxu0 0.0
    %4628 = vmatprep.subr.mxu0 0.0
    %4629 = vmatpush2.msra.mxu0 0.0
    %4630 = vmatprep.subr.mxu0 0.0
    %4631 = vmatpush2.msra.mxu0 0.0
    %4632 = vmatprep.subr.mxu0 0.0
    %4633 = vmatpush2.msra.mxu0 0.0
    %4634 = vmatprep.subr.mxu0 0.0
    %4635 = vmatpush2.msra.mxu0 0.0
    %4636 = vmatprep.subr.mxu0 0.0
    %4637 = vmatpush2.msra.mxu0 0.0
    %4638 = vmatprep.subr.mxu0 0.0
    %4639 = vmatpush2.msra.mxu0 0.0
    %4640 = vmatprep.subr.mxu0 0.0
    %4641 = vmatpush2.msra.mxu0 0.0
    %4642 = vmatprep.subr.mxu0 0.0
    %4643 = vmatpush2.msra.mxu0 0.0
    %4644 = vmatprep.subr.mxu0 0.0
    %4645 = vmatpush2.msra.mxu0 0.0
    %4646 = vmatprep.subr.mxu0 0.0
    %4647 = vmatpush2.msra.mxu0 0.0
    %4648 = vmatprep.subr.mxu0 0.0
    %4649 = vmatpush2.msra.mxu0 0.0
    %4650 = vmatprep.subr.mxu0 0.0
    %4651 = vmatpush2.msra.mxu0 0.0
    %4652 = vmatprep.subr.mxu0 0.0
    %4653 = vmatpush2.msra.mxu0 0.0
    %4654 = vmatprep.mubr.f32.mxu0 0.0
    %v4655 = vand.u32 %v55, 4294901760
    %4656 = vmatmul.mubr.f32.gmra.mxu0 %v4655
    %v4657 = vpop.f32.mrf.mxu0
    %v4658 = vadd.f32 %v4557, %v4657
    %v4659 = vpop.f32.mrf.mxu0
    %4660 = vmatprep.mubr.f32.mxu0 0.0
    %v4661 = vand.u32 %v58, 4294901760
    %4662 = vmatmul.mubr.f32.gmra.mxu0 %v4661
    %v4663 = vpop.f32.mrf.mxu0
    %v4664 = vadd.f32 %v4565, %v4663
    %v4665 = vpop.f32.mrf.mxu0
    %4666 = vmatprep.mubr.f32.mxu0 0.0
    %v4667 = vand.u32 %v61, 4294901760
    %4668 = vmatmul.mubr.f32.gmra.mxu0 %v4667
    %v4669 = vpop.f32.mrf.mxu0
    %v4670 = vadd.f32 %v4573, %v4669
    %v4671 = vpop.f32.mrf.mxu0
    %4672 = vmatprep.mubr.f32.mxu0 0.0
    %v4673 = vand.u32 %v64, 4294901760
    %4674 = vmatmul.mubr.f32.gmra.mxu0 %v4673
    %v4675 = vpop.f32.mrf.mxu0
    %v4676 = vadd.f32 %v4581, %v4675
    %v4677 = vpop.f32.mrf.mxu0
    %4678 = vdwg.mxu0
    %4679 = vmatprep.subr.mxu0 0.0
    %4680 = vmatpush1.msra.mxu0 0.0
    %4681 = vmatprep.subr.mxu0 0.0
    %4682 = vmatpush1.msra.mxu0 0.0
    %4683 = vmatprep.subr.mxu0 0.0
    %4684 = vmatpush1.msra.mxu0 0.0
    %4685 = vmatprep.subr.mxu0 0.0
    %4686 = vmatpush1.msra.mxu0 0.0
    %4687 = vmatprep.subr.mxu0 0.0
    %4688 = vmatpush1.msra.mxu0 0.0
    %4689 = vmatprep.subr.mxu0 0.0
    %4690 = vmatpush1.msra.mxu0 0.0
    %4691 = vmatprep.subr.mxu0 0.0
    %4692 = vmatpush1.msra.mxu0 0.0
    %4693 = vmatprep.subr.mxu0 0.0
    %4694 = vmatpush1.msra.mxu0 0.0
    %4695 = vmatprep.subr.mxu0 0.0
    %4696 = vmatpush1.msra.mxu0 0.0
    %4697 = vmatprep.subr.mxu0 0.0
    %4698 = vmatpush1.msra.mxu0 0.0
    %4699 = vmatprep.subr.mxu0 0.0
    %4700 = vmatpush1.msra.mxu0 0.0
    %4701 = vmatprep.subr.mxu0 0.0
    %4702 = vmatpush1.msra.mxu0 0.0
    %4703 = vmatprep.subr.mxu0 0.0
    %4704 = vmatpush1.msra.mxu0 0.0
    %4705 = vmatprep.subr.mxu0 0.0
    %4706 = vmatpush1.msra.mxu0 0.0
    %4707 = vmatprep.subr.mxu0 0.0
    %v4708 = vand.u32 %v48, 4294901760
    %4709 = vmatpush1.msra.mxu0 %v4708
    %4710 = vmatprep.subr.mxu0 0.0
    %v4711 = vand.u32 %v47, 4294901760
    %4712 = vmatpush1.msra.mxu0 %v4711
    %4713 = vmatprep.subr.mxu0 0.0
    %4714 = vmatpush2.msra.mxu0 0.0
    %4715 = vmatprep.subr.mxu0 0.0
    %4716 = vmatpush2.msra.mxu0 0.0
    %4717 = vmatprep.subr.mxu0 0.0
    %4718 = vmatpush2.msra.mxu0 0.0
    %4719 = vmatprep.subr.mxu0 0.0
    %4720 = vmatpush2.msra.mxu0 0.0
    %4721 = vmatprep.subr.mxu0 0.0
    %4722 = vmatpush2.msra.mxu0 0.0
    %4723 = vmatprep.subr.mxu0 0.0
    %4724 = vmatpush2.msra.mxu0 0.0
    %4725 = vmatprep.subr.mxu0 0.0
    %4726 = vmatpush2.msra.mxu0 0.0
    %4727 = vmatprep.subr.mxu0 0.0
    %4728 = vmatpush2.msra.mxu0 0.0
    %4729 = vmatprep.subr.mxu0 0.0
    %4730 = vmatpush2.msra.mxu0 0.0
    %4731 = vmatprep.subr.mxu0 0.0
    %4732 = vmatpush2.msra.mxu0 0.0
    %4733 = vmatprep.subr.mxu0 0.0
    %4734 = vmatpush2.msra.mxu0 0.0
    %4735 = vmatprep.subr.mxu0 0.0
    %4736 = vmatpush2.msra.mxu0 0.0
    %4737 = vmatprep.subr.mxu0 0.0
    %4738 = vmatpush2.msra.mxu0 0.0
    %4739 = vmatprep.subr.mxu0 0.0
    %4740 = vmatpush2.msra.mxu0 0.0
    %4741 = vmatprep.subr.mxu0 0.0
    %4742 = vmatpush2.msra.mxu0 0.0
    %4743 = vmatprep.subr.mxu0 0.0
    %4744 = vmatpush2.msra.mxu0 0.0
    %4745 = vmatprep.mubr.f32.mxu0 0.0
    %v4746 = vand.u32 %v55, 4294901760
    %4747 = vmatmul.mubr.f32.gmra.mxu0 %v4746
    %v4748 = vpop.f32.mrf.mxu0
    %v4749 = vadd.f32 %v4658, %v4748
    %v4750 = vpop.f32.mrf.mxu0
    %4751 = vmatprep.mubr.f32.mxu0 0.0
    %v4752 = vand.u32 %v58, 4294901760
    %4753 = vmatmul.mubr.f32.gmra.mxu0 %v4752
    %v4754 = vpop.f32.mrf.mxu0
    %v4755 = vadd.f32 %v4664, %v4754
    %v4756 = vpop.f32.mrf.mxu0
    %4757 = vmatprep.mubr.f32.mxu0 0.0
    %v4758 = vand.u32 %v61, 4294901760
    %4759 = vmatmul.mubr.f32.gmra.mxu0 %v4758
    %v4760 = vpop.f32.mrf.mxu0
    %v4761 = vadd.f32 %v4670, %v4760
    %v4762 = vpop.f32.mrf.mxu0
    %4763 = vmatprep.mubr.f32.mxu0 0.0
    %v4764 = vand.u32 %v64, 4294901760
    %4765 = vmatmul.mubr.f32.gmra.mxu0 %v4764
    %v4766 = vpop.f32.mrf.mxu0
    %v4767 = vadd.f32 %v4676, %v4766
    %v4768 = vpop.f32.mrf.mxu0
    %4769 = vdwg.mxu0
    %v4770 = vld [vmem:[%s2] sm:$0xff]
    %v4771 = vld [vmem:[%s2 + $0x8] sm:$0xff]
    %v4773 = vsel %vm53, %v633, 0
    %v4776 = vsel %vm53, %v639, 0
    %v4779 = vsel %vm53, %v645, 0
    %v4782 = vsel %vm53, %v651, 0
    %4784 = vmatprep.subr.mxu0 0.0
    %4785 = vmatpush1.msra.mxu0 0.0
    %4786 = vmatprep.subr.mxu0 0.0
    %4787 = vmatpush1.msra.mxu0 0.0
    %4788 = vmatprep.subr.mxu0 0.0
    %4789 = vmatpush1.msra.mxu0 0.0
    %4790 = vmatprep.subr.mxu0 0.0
    %4791 = vmatpush1.msra.mxu0 0.0
    %4792 = vmatprep.subr.mxu0 0.0
    %4793 = vmatpush1.msra.mxu0 0.0
    %4794 = vmatprep.subr.mxu0 0.0
    %4795 = vmatpush1.msra.mxu0 0.0
    %4796 = vmatprep.subr.mxu0 0.0
    %4797 = vmatpush1.msra.mxu0 0.0
    %4798 = vmatprep.subr.mxu0 0.0
    %4799 = vmatpush1.msra.mxu0 0.0
    %4800 = vmatprep.subr.mxu0 0.0
    %4801 = vmatpush1.msra.mxu0 0.0
    %4802 = vmatprep.subr.mxu0 0.0
    %4803 = vmatpush1.msra.mxu0 0.0
    %4804 = vmatprep.subr.mxu0 0.0
    %4805 = vmatpush1.msra.mxu0 0.0
    %4806 = vmatprep.subr.mxu0 0.0
    %4807 = vmatpush1.msra.mxu0 0.0
    %4808 = vmatprep.subr.mxu0 0.0
    %4809 = vmatpush1.msra.mxu0 0.0
    %4810 = vmatprep.subr.mxu0 0.0
    %4811 = vmatpush1.msra.mxu0 0.0
    %4812 = vmatprep.subr.mxu0 0.0
    %v4813 = vand.u32 %v4771, 4294901760
    %4814 = vmatpush1.msra.mxu0 %v4813
    %4815 = vmatprep.subr.mxu0 0.0
    %v4816 = vand.u32 %v4770, 4294901760
    %4817 = vmatpush1.msra.mxu0 %v4816
    %4818 = vmatprep.subr.mxu0 0.0
    %4819 = vmatpush2.msra.mxu0 0.0
    %4820 = vmatprep.subr.mxu0 0.0
    %4821 = vmatpush2.msra.mxu0 0.0
    %4822 = vmatprep.subr.mxu0 0.0
    %4823 = vmatpush2.msra.mxu0 0.0
    %4824 = vmatprep.subr.mxu0 0.0
    %4825 = vmatpush2.msra.mxu0 0.0
    %4826 = vmatprep.subr.mxu0 0.0
    %4827 = vmatpush2.msra.mxu0 0.0
    %4828 = vmatprep.subr.mxu0 0.0
    %4829 = vmatpush2.msra.mxu0 0.0
    %4830 = vmatprep.subr.mxu0 0.0
    %4831 = vmatpush2.msra.mxu0 0.0
    %4832 = vmatprep.subr.mxu0 0.0
    %4833 = vmatpush2.msra.mxu0 0.0
    %4834 = vmatprep.subr.mxu0 0.0
    %4835 = vmatpush2.msra.mxu0 0.0
    %4836 = vmatprep.subr.mxu0 0.0
    %4837 = vmatpush2.msra.mxu0 0.0
    %4838 = vmatprep.subr.mxu0 0.0
    %4839 = vmatpush2.msra.mxu0 0.0
    %4840 = vmatprep.subr.mxu0 0.0
    %4841 = vmatpush2.msra.mxu0 0.0
    %4842 = vmatprep.subr.mxu0 0.0
    %4843 = vmatpush2.msra.mxu0 0.0
    %4844 = vmatprep.subr.mxu0 0.0
    %4845 = vmatpush2.msra.mxu0 0.0
    %4846 = vmatprep.subr.mxu0 0.0
    %4847 = vmatpush2.msra.mxu0 0.0
    %4848 = vmatprep.subr.mxu0 0.0
    %4849 = vmatpush2.msra.mxu0 0.0
    %4850 = vmatprep.mubr.f32.mxu0 0.0
    %v4851 = vand.u32 %v4773, 4294901760
    %v4852 = vsub.f32 %v4773, %v4851
    %v4853 = vand.u32 %v4852, 4294901760
    %v4854 = vsub.f32 %v4852, %v4853
    %v4855 = vand.u32 %v4854, 4294901760
    %4856 = vmatmul.mubr.f32.gmra.mxu0 %v4855
    %v4857 = vpop.f32.mrf.mxu0
    %v4858 = vadd.f32 0.0, %v4857
    %v4859 = vpop.f32.mrf.mxu0
    %4860 = vmatprep.mubr.f32.mxu0 0.0
    %v4861 = vand.u32 %v4776, 4294901760
    %v4862 = vsub.f32 %v4776, %v4861
    %v4863 = vand.u32 %v4862, 4294901760
    %v4864 = vsub.f32 %v4862, %v4863
    %v4865 = vand.u32 %v4864, 4294901760
    %4866 = vmatmul.mubr.f32.gmra.mxu0 %v4865
    %v4867 = vpop.f32.mrf.mxu0
    %v4868 = vadd.f32 0.0, %v4867
    %v4869 = vpop.f32.mrf.mxu0
    %4870 = vmatprep.mubr.f32.mxu0 0.0
    %v4871 = vand.u32 %v4779, 4294901760
    %v4872 = vsub.f32 %v4779, %v4871
    %v4873 = vand.u32 %v4872, 4294901760
    %v4874 = vsub.f32 %v4872, %v4873
    %v4875 = vand.u32 %v4874, 4294901760
    %4876 = vmatmul.mubr.f32.gmra.mxu0 %v4875
    %v4877 = vpop.f32.mrf.mxu0
    %v4878 = vadd.f32 0.0, %v4877
    %v4879 = vpop.f32.mrf.mxu0
    %4880 = vmatprep.mubr.f32.mxu0 0.0
    %v4881 = vand.u32 %v4782, 4294901760
    %v4882 = vsub.f32 %v4782, %v4881
    %v4883 = vand.u32 %v4882, 4294901760
    %v4884 = vsub.f32 %v4882, %v4883
    %v4885 = vand.u32 %v4884, 4294901760
    %4886 = vmatmul.mubr.f32.gmra.mxu0 %v4885
    %v4887 = vpop.f32.mrf.mxu0
    %v4888 = vadd.f32 0.0, %v4887
    %v4889 = vpop.f32.mrf.mxu0
    %4890 = vdwg.mxu0
    %4891 = vmatprep.subr.mxu0 0.0
    %4892 = vmatpush1.msra.mxu0 0.0
    %4893 = vmatprep.subr.mxu0 0.0
    %4894 = vmatpush1.msra.mxu0 0.0
    %4895 = vmatprep.subr.mxu0 0.0
    %4896 = vmatpush1.msra.mxu0 0.0
    %4897 = vmatprep.subr.mxu0 0.0
    %4898 = vmatpush1.msra.mxu0 0.0
    %4899 = vmatprep.subr.mxu0 0.0
    %4900 = vmatpush1.msra.mxu0 0.0
    %4901 = vmatprep.subr.mxu0 0.0
    %4902 = vmatpush1.msra.mxu0 0.0
    %4903 = vmatprep.subr.mxu0 0.0
    %4904 = vmatpush1.msra.mxu0 0.0
    %4905 = vmatprep.subr.mxu0 0.0
    %4906 = vmatpush1.msra.mxu0 0.0
    %4907 = vmatprep.subr.mxu0 0.0
    %4908 = vmatpush1.msra.mxu0 0.0
    %4909 = vmatprep.subr.mxu0 0.0
    %4910 = vmatpush1.msra.mxu0 0.0
    %4911 = vmatprep.subr.mxu0 0.0
    %4912 = vmatpush1.msra.mxu0 0.0
    %4913 = vmatprep.subr.mxu0 0.0
    %4914 = vmatpush1.msra.mxu0 0.0
    %4915 = vmatprep.subr.mxu0 0.0
    %4916 = vmatpush1.msra.mxu0 0.0
    %4917 = vmatprep.subr.mxu0 0.0
    %4918 = vmatpush1.msra.mxu0 0.0
    %4919 = vmatprep.subr.mxu0 0.0
    %v4920 = vand.u32 %v4771, 4294901760
    %v4921 = vsub.f32 %v4771, %v4920
    %v4922 = vand.u32 %v4921, 4294901760
    %v4923 = vsub.f32 %v4921, %v4922
    %v4924 = vand.u32 %v4923, 4294901760
    %4925 = vmatpush1.msra.mxu0 %v4924
    %4926 = vmatprep.subr.mxu0 0.0
    %v4927 = vand.u32 %v4770, 4294901760
    %v4928 = vsub.f32 %v4770, %v4927
    %v4929 = vand.u32 %v4928, 4294901760
    %v4930 = vsub.f32 %v4928, %v4929
    %v4931 = vand.u32 %v4930, 4294901760
    %4932 = vmatpush1.msra.mxu0 %v4931
    %4933 = vmatprep.subr.mxu0 0.0
    %4934 = vmatpush2.msra.mxu0 0.0
    %4935 = vmatprep.subr.mxu0 0.0
    %4936 = vmatpush2.msra.mxu0 0.0
    %4937 = vmatprep.subr.mxu0 0.0
    %4938 = vmatpush2.msra.mxu0 0.0
    %4939 = vmatprep.subr.mxu0 0.0
    %4940 = vmatpush2.msra.mxu0 0.0
    %4941 = vmatprep.subr.mxu0 0.0
    %4942 = vmatpush2.msra.mxu0 0.0
    %4943 = vmatprep.subr.mxu0 0.0
    %4944 = vmatpush2.msra.mxu0 0.0
    %4945 = vmatprep.subr.mxu0 0.0
    %4946 = vmatpush2.msra.mxu0 0.0
    %4947 = vmatprep.subr.mxu0 0.0
    %4948 = vmatpush2.msra.mxu0 0.0
    %4949 = vmatprep.subr.mxu0 0.0
    %4950 = vmatpush2.msra.mxu0 0.0
    %4951 = vmatprep.subr.mxu0 0.0
    %4952 = vmatpush2.msra.mxu0 0.0
    %4953 = vmatprep.subr.mxu0 0.0
    %4954 = vmatpush2.msra.mxu0 0.0
    %4955 = vmatprep.subr.mxu0 0.0
    %4956 = vmatpush2.msra.mxu0 0.0
    %4957 = vmatprep.subr.mxu0 0.0
    %4958 = vmatpush2.msra.mxu0 0.0
    %4959 = vmatprep.subr.mxu0 0.0
    %4960 = vmatpush2.msra.mxu0 0.0
    %4961 = vmatprep.subr.mxu0 0.0
    %4962 = vmatpush2.msra.mxu0 0.0
    %4963 = vmatprep.subr.mxu0 0.0
    %4964 = vmatpush2.msra.mxu0 0.0
    %4965 = vmatprep.mubr.f32.mxu0 0.0
    %v4966 = vand.u32 %v4773, 4294901760
    %4967 = vmatmul.mubr.f32.gmra.mxu0 %v4966
    %v4968 = vpop.f32.mrf.mxu0
    %v4969 = vadd.f32 %v4858, %v4968
    %v4970 = vpop.f32.mrf.mxu0
    %4971 = vmatprep.mubr.f32.mxu0 0.0
    %v4972 = vand.u32 %v4776, 4294901760
    %4973 = vmatmul.mubr.f32.gmra.mxu0 %v4972
    %v4974 = vpop.f32.mrf.mxu0
    %v4975 = vadd.f32 %v4868, %v4974
    %v4976 = vpop.f32.mrf.mxu0
    %4977 = vmatprep.mubr.f32.mxu0 0.0
    %v4978 = vand.u32 %v4779, 4294901760
    %4979 = vmatmul.mubr.f32.gmra.mxu0 %v4978
    %v4980 = vpop.f32.mrf.mxu0
    %v4981 = vadd.f32 %v4878, %v4980
    %v4982 = vpop.f32.mrf.mxu0
    %4983 = vmatprep.mubr.f32.mxu0 0.0
    %v4984 = vand.u32 %v4782, 4294901760
    %4985 = vmatmul.mubr.f32.gmra.mxu0 %v4984
    %v4986 = vpop.f32.mrf.mxu0
    %v4987 = vadd.f32 %v4888, %v4986
    %v4988 = vpop.f32.mrf.mxu0
    %4989 = vdwg.mxu0
    %4990 = vmatprep.subr.mxu0 0.0
    %4991 = vmatpush1.msra.mxu0 0.0
    %4992 = vmatprep.subr.mxu0 0.0
    %4993 = vmatpush1.msra.mxu0 0.0
    %4994 = vmatprep.subr.mxu0 0.0
    %4995 = vmatpush1.msra.mxu0 0.0
    %4996 = vmatprep.subr.mxu0 0.0
    %4997 = vmatpush1.msra.mxu0 0.0
    %4998 = vmatprep.subr.mxu0 0.0
    %4999 = vmatpush1.msra.mxu0 0.0
    %5000 = vmatprep.subr.mxu0 0.0
    %5001 = vmatpush1.msra.mxu0 0.0
    %5002 = vmatprep.subr.mxu0 0.0
    %5003 = vmatpush1.msra.mxu0 0.0
    %5004 = vmatprep.subr.mxu0 0.0
    %5005 = vmatpush1.msra.mxu0 0.0
    %5006 = vmatprep.subr.mxu0 0.0
    %5007 = vmatpush1.msra.mxu0 0.0
    %5008 = vmatprep.subr.mxu0 0.0
    %5009 = vmatpush1.msra.mxu0 0.0
    %5010 = vmatprep.subr.mxu0 0.0
    %5011 = vmatpush1.msra.mxu0 0.0
    %5012 = vmatprep.subr.mxu0 0.0
    %5013 = vmatpush1.msra.mxu0 0.0
    %5014 = vmatprep.subr.mxu0 0.0
    %5015 = vmatpush1.msra.mxu0 0.0
    %5016 = vmatprep.subr.mxu0 0.0
    %5017 = vmatpush1.msra.mxu0 0.0
    %5018 = vmatprep.subr.mxu0 0.0
    %v5019 = vand.u32 %v4771, 4294901760
    %v5020 = vsub.f32 %v4771, %v5019
    %5021 = vmatpush1.msra.mxu0 %v5020
    %5022 = vmatprep.subr.mxu0 0.0
    %v5023 = vand.u32 %v4770, 4294901760
    %v5024 = vsub.f32 %v4770, %v5023
    %5025 = vmatpush1.msra.mxu0 %v5024
    %5026 = vmatprep.subr.mxu0 0.0
    %5027 = vmatpush2.msra.mxu0 0.0
    %5028 = vmatprep.subr.mxu0 0.0
    %5029 = vmatpush2.msra.mxu0 0.0
    %5030 = vmatprep.subr.mxu0 0.0
    %5031 = vmatpush2.msra.mxu0 0.0
    %5032 = vmatprep.subr.mxu0 0.0
    %5033 = vmatpush2.msra.mxu0 0.0
    %5034 = vmatprep.subr.mxu0 0.0
    %5035 = vmatpush2.msra.mxu0 0.0
    %5036 = vmatprep.subr.mxu0 0.0
    %5037 = vmatpush2.msra.mxu0 0.0
    %5038 = vmatprep.subr.mxu0 0.0
    %5039 = vmatpush2.msra.mxu0 0.0
    %5040 = vmatprep.subr.mxu0 0.0
    %5041 = vmatpush2.msra.mxu0 0.0
    %5042 = vmatprep.subr.mxu0 0.0
    %5043 = vmatpush2.msra.mxu0 0.0
    %5044 = vmatprep.subr.mxu0 0.0
    %5045 = vmatpush2.msra.mxu0 0.0
    %5046 = vmatprep.subr.mxu0 0.0
    %5047 = vmatpush2.msra.mxu0 0.0
    %5048 = vmatprep.subr.mxu0 0.0
    %5049 = vmatpush2.msra.mxu0 0.0
    %5050 = vmatprep.subr.mxu0 0.0
    %5051 = vmatpush2.msra.mxu0 0.0
    %5052 = vmatprep.subr.mxu0 0.0
    %5053 = vmatpush2.msra.mxu0 0.0
    %5054 = vmatprep.subr.mxu0 0.0
    %5055 = vmatpush2.msra.mxu0 0.0
    %5056 = vmatprep.subr.mxu0 0.0
    %5057 = vmatpush2.msra.mxu0 0.0
    %5058 = vmatprep.mubr.f32.mxu0 0.0
    %v5059 = vand.u32 %v4773, 4294901760
    %v5060 = vsub.f32 %v4773, %v5059
    %5061 = vmatmul.mubr.f32.gmra.mxu0 %v5060
    %v5062 = vpop.f32.mrf.mxu0
    %v5063 = vadd.f32 %v4969, %v5062
    %v5064 = vpop.f32.mrf.mxu0
    %5065 = vmatprep.mubr.f32.mxu0 0.0
    %v5066 = vand.u32 %v4776, 4294901760
    %v5067 = vsub.f32 %v4776, %v5066
    %5068 = vmatmul.mubr.f32.gmra.mxu0 %v5067
    %v5069 = vpop.f32.mrf.mxu0
    %v5070 = vadd.f32 %v4975, %v5069
    %v5071 = vpop.f32.mrf.mxu0
    %5072 = vmatprep.mubr.f32.mxu0 0.0
    %v5073 = vand.u32 %v4779, 4294901760
    %v5074 = vsub.f32 %v4779, %v5073
    %5075 = vmatmul.mubr.f32.gmra.mxu0 %v5074
    %v5076 = vpop.f32.mrf.mxu0
    %v5077 = vadd.f32 %v4981, %v5076
    %v5078 = vpop.f32.mrf.mxu0
    %5079 = vmatprep.mubr.f32.mxu0 0.0
    %v5080 = vand.u32 %v4782, 4294901760
    %v5081 = vsub.f32 %v4782, %v5080
    %5082 = vmatmul.mubr.f32.gmra.mxu0 %v5081
    %v5083 = vpop.f32.mrf.mxu0
    %v5084 = vadd.f32 %v4987, %v5083
    %v5085 = vpop.f32.mrf.mxu0
    %5086 = vdwg.mxu0
    %5087 = vmatprep.subr.mxu0 0.0
    %5088 = vmatpush1.msra.mxu0 0.0
    %5089 = vmatprep.subr.mxu0 0.0
    %5090 = vmatpush1.msra.mxu0 0.0
    %5091 = vmatprep.subr.mxu0 0.0
    %5092 = vmatpush1.msra.mxu0 0.0
    %5093 = vmatprep.subr.mxu0 0.0
    %5094 = vmatpush1.msra.mxu0 0.0
    %5095 = vmatprep.subr.mxu0 0.0
    %5096 = vmatpush1.msra.mxu0 0.0
    %5097 = vmatprep.subr.mxu0 0.0
    %5098 = vmatpush1.msra.mxu0 0.0
    %5099 = vmatprep.subr.mxu0 0.0
    %5100 = vmatpush1.msra.mxu0 0.0
    %5101 = vmatprep.subr.mxu0 0.0
    %5102 = vmatpush1.msra.mxu0 0.0
    %5103 = vmatprep.subr.mxu0 0.0
    %5104 = vmatpush1.msra.mxu0 0.0
    %5105 = vmatprep.subr.mxu0 0.0
    %5106 = vmatpush1.msra.mxu0 0.0
    %5107 = vmatprep.subr.mxu0 0.0
    %5108 = vmatpush1.msra.mxu0 0.0
    %5109 = vmatprep.subr.mxu0 0.0
    %5110 = vmatpush1.msra.mxu0 0.0
    %5111 = vmatprep.subr.mxu0 0.0
    %5112 = vmatpush1.msra.mxu0 0.0
    %5113 = vmatprep.subr.mxu0 0.0
    %5114 = vmatpush1.msra.mxu0 0.0
    %5115 = vmatprep.subr.mxu0 0.0
    %v5116 = vand.u32 %v4771, 4294901760
    %5117 = vmatpush1.msra.mxu0 %v5116
    %5118 = vmatprep.subr.mxu0 0.0
    %v5119 = vand.u32 %v4770, 4294901760
    %5120 = vmatpush1.msra.mxu0 %v5119
    %5121 = vmatprep.subr.mxu0 0.0
    %5122 = vmatpush2.msra.mxu0 0.0
    %5123 = vmatprep.subr.mxu0 0.0
    %5124 = vmatpush2.msra.mxu0 0.0
    %5125 = vmatprep.subr.mxu0 0.0
    %5126 = vmatpush2.msra.mxu0 0.0
    %5127 = vmatprep.subr.mxu0 0.0
    %5128 = vmatpush2.msra.mxu0 0.0
    %5129 = vmatprep.subr.mxu0 0.0
    %5130 = vmatpush2.msra.mxu0 0.0
    %5131 = vmatprep.subr.mxu0 0.0
    %5132 = vmatpush2.msra.mxu0 0.0
    %5133 = vmatprep.subr.mxu0 0.0
    %5134 = vmatpush2.msra.mxu0 0.0
    %5135 = vmatprep.subr.mxu0 0.0
    %5136 = vmatpush2.msra.mxu0 0.0
    %5137 = vmatprep.subr.mxu0 0.0
    %5138 = vmatpush2.msra.mxu0 0.0
    %5139 = vmatprep.subr.mxu0 0.0
    %5140 = vmatpush2.msra.mxu0 0.0
    %5141 = vmatprep.subr.mxu0 0.0
    %5142 = vmatpush2.msra.mxu0 0.0
    %5143 = vmatprep.subr.mxu0 0.0
    %5144 = vmatpush2.msra.mxu0 0.0
    %5145 = vmatprep.subr.mxu0 0.0
    %5146 = vmatpush2.msra.mxu0 0.0
    %5147 = vmatprep.subr.mxu0 0.0
    %5148 = vmatpush2.msra.mxu0 0.0
    %5149 = vmatprep.subr.mxu0 0.0
    %5150 = vmatpush2.msra.mxu0 0.0
    %5151 = vmatprep.subr.mxu0 0.0
    %5152 = vmatpush2.msra.mxu0 0.0
    %5153 = vmatprep.mubr.f32.mxu0 0.0
    %v5154 = vand.u32 %v4773, 4294901760
    %v5155 = vsub.f32 %v4773, %v5154
    %v5156 = vand.u32 %v5155, 4294901760
    %5157 = vmatmul.mubr.f32.gmra.mxu0 %v5156
    %v5158 = vpop.f32.mrf.mxu0
    %v5159 = vadd.f32 %v5063, %v5158
    %v5160 = vpop.f32.mrf.mxu0
    %5161 = vmatprep.mubr.f32.mxu0 0.0
    %v5162 = vand.u32 %v4776, 4294901760
    %v5163 = vsub.f32 %v4776, %v5162
    %v5164 = vand.u32 %v5163, 4294901760
    %5165 = vmatmul.mubr.f32.gmra.mxu0 %v5164
    %v5166 = vpop.f32.mrf.mxu0
    %v5167 = vadd.f32 %v5070, %v5166
    %v5168 = vpop.f32.mrf.mxu0
    %5169 = vmatprep.mubr.f32.mxu0 0.0
    %v5170 = vand.u32 %v4779, 4294901760
    %v5171 = vsub.f32 %v4779, %v5170
    %v5172 = vand.u32 %v5171, 4294901760
    %5173 = vmatmul.mubr.f32.gmra.mxu0 %v5172
    %v5174 = vpop.f32.mrf.mxu0
    %v5175 = vadd.f32 %v5077, %v5174
    %v5176 = vpop.f32.mrf.mxu0
    %5177 = vmatprep.mubr.f32.mxu0 0.0
    %v5178 = vand.u32 %v4782, 4294901760
    %v5179 = vsub.f32 %v4782, %v5178
    %v5180 = vand.u32 %v5179, 4294901760
    %5181 = vmatmul.mubr.f32.gmra.mxu0 %v5180
    %v5182 = vpop.f32.mrf.mxu0
    %v5183 = vadd.f32 %v5084, %v5182
    %v5184 = vpop.f32.mrf.mxu0
    %5185 = vdwg.mxu0
    %5186 = vmatprep.subr.mxu0 0.0
    %5187 = vmatpush1.msra.mxu0 0.0
    %5188 = vmatprep.subr.mxu0 0.0
    %5189 = vmatpush1.msra.mxu0 0.0
    %5190 = vmatprep.subr.mxu0 0.0
    %5191 = vmatpush1.msra.mxu0 0.0
    %5192 = vmatprep.subr.mxu0 0.0
    %5193 = vmatpush1.msra.mxu0 0.0
    %5194 = vmatprep.subr.mxu0 0.0
    %5195 = vmatpush1.msra.mxu0 0.0
    %5196 = vmatprep.subr.mxu0 0.0
    %5197 = vmatpush1.msra.mxu0 0.0
    %5198 = vmatprep.subr.mxu0 0.0
    %5199 = vmatpush1.msra.mxu0 0.0
    %5200 = vmatprep.subr.mxu0 0.0
    %5201 = vmatpush1.msra.mxu0 0.0
    %5202 = vmatprep.subr.mxu0 0.0
    %5203 = vmatpush1.msra.mxu0 0.0
    %5204 = vmatprep.subr.mxu0 0.0
    %5205 = vmatpush1.msra.mxu0 0.0
    %5206 = vmatprep.subr.mxu0 0.0
    %5207 = vmatpush1.msra.mxu0 0.0
    %5208 = vmatprep.subr.mxu0 0.0
    %5209 = vmatpush1.msra.mxu0 0.0
    %5210 = vmatprep.subr.mxu0 0.0
    %5211 = vmatpush1.msra.mxu0 0.0
    %5212 = vmatprep.subr.mxu0 0.0
    %5213 = vmatpush1.msra.mxu0 0.0
    %5214 = vmatprep.subr.mxu0 0.0
    %v5215 = vand.u32 %v4771, 4294901760
    %v5216 = vsub.f32 %v4771, %v5215
    %v5217 = vand.u32 %v5216, 4294901760
    %5218 = vmatpush1.msra.mxu0 %v5217
    %5219 = vmatprep.subr.mxu0 0.0
    %v5220 = vand.u32 %v4770, 4294901760
    %v5221 = vsub.f32 %v4770, %v5220
    %v5222 = vand.u32 %v5221, 4294901760
    %5223 = vmatpush1.msra.mxu0 %v5222
    %5224 = vmatprep.subr.mxu0 0.0
    %5225 = vmatpush2.msra.mxu0 0.0
    %5226 = vmatprep.subr.mxu0 0.0
    %5227 = vmatpush2.msra.mxu0 0.0
    %5228 = vmatprep.subr.mxu0 0.0
    %5229 = vmatpush2.msra.mxu0 0.0
    %5230 = vmatprep.subr.mxu0 0.0
    %5231 = vmatpush2.msra.mxu0 0.0
    %5232 = vmatprep.subr.mxu0 0.0
    %5233 = vmatpush2.msra.mxu0 0.0
    %5234 = vmatprep.subr.mxu0 0.0
    %5235 = vmatpush2.msra.mxu0 0.0
    %5236 = vmatprep.subr.mxu0 0.0
    %5237 = vmatpush2.msra.mxu0 0.0
    %5238 = vmatprep.subr.mxu0 0.0
    %5239 = vmatpush2.msra.mxu0 0.0
    %5240 = vmatprep.subr.mxu0 0.0
    %5241 = vmatpush2.msra.mxu0 0.0
    %5242 = vmatprep.subr.mxu0 0.0
    %5243 = vmatpush2.msra.mxu0 0.0
    %5244 = vmatprep.subr.mxu0 0.0
    %5245 = vmatpush2.msra.mxu0 0.0
    %5246 = vmatprep.subr.mxu0 0.0
    %5247 = vmatpush2.msra.mxu0 0.0
    %5248 = vmatprep.subr.mxu0 0.0
    %5249 = vmatpush2.msra.mxu0 0.0
    %5250 = vmatprep.subr.mxu0 0.0
    %5251 = vmatpush2.msra.mxu0 0.0
    %5252 = vmatprep.subr.mxu0 0.0
    %5253 = vmatpush2.msra.mxu0 0.0
    %5254 = vmatprep.subr.mxu0 0.0
    %5255 = vmatpush2.msra.mxu0 0.0
    %5256 = vmatprep.mubr.f32.mxu0 0.0
    %v5257 = vand.u32 %v4773, 4294901760
    %5258 = vmatmul.mubr.f32.gmra.mxu0 %v5257
    %v5259 = vpop.f32.mrf.mxu0
    %v5260 = vadd.f32 %v5159, %v5259
    %v5261 = vpop.f32.mrf.mxu0
    %5262 = vmatprep.mubr.f32.mxu0 0.0
    %v5263 = vand.u32 %v4776, 4294901760
    %5264 = vmatmul.mubr.f32.gmra.mxu0 %v5263
    %v5265 = vpop.f32.mrf.mxu0
    %v5266 = vadd.f32 %v5167, %v5265
    %v5267 = vpop.f32.mrf.mxu0
    %5268 = vmatprep.mubr.f32.mxu0 0.0
    %v5269 = vand.u32 %v4779, 4294901760
    %5270 = vmatmul.mubr.f32.gmra.mxu0 %v5269
    %v5271 = vpop.f32.mrf.mxu0
    %v5272 = vadd.f32 %v5175, %v5271
    %v5273 = vpop.f32.mrf.mxu0
    %5274 = vmatprep.mubr.f32.mxu0 0.0
    %v5275 = vand.u32 %v4782, 4294901760
    %5276 = vmatmul.mubr.f32.gmra.mxu0 %v5275
    %v5277 = vpop.f32.mrf.mxu0
    %v5278 = vadd.f32 %v5183, %v5277
    %v5279 = vpop.f32.mrf.mxu0
    %5280 = vdwg.mxu0
    %5281 = vmatprep.subr.mxu0 0.0
    %5282 = vmatpush1.msra.mxu0 0.0
    %5283 = vmatprep.subr.mxu0 0.0
    %5284 = vmatpush1.msra.mxu0 0.0
    %5285 = vmatprep.subr.mxu0 0.0
    %5286 = vmatpush1.msra.mxu0 0.0
    %5287 = vmatprep.subr.mxu0 0.0
    %5288 = vmatpush1.msra.mxu0 0.0
    %5289 = vmatprep.subr.mxu0 0.0
    %5290 = vmatpush1.msra.mxu0 0.0
    %5291 = vmatprep.subr.mxu0 0.0
    %5292 = vmatpush1.msra.mxu0 0.0
    %5293 = vmatprep.subr.mxu0 0.0
    %5294 = vmatpush1.msra.mxu0 0.0
    %5295 = vmatprep.subr.mxu0 0.0
    %5296 = vmatpush1.msra.mxu0 0.0
    %5297 = vmatprep.subr.mxu0 0.0
    %5298 = vmatpush1.msra.mxu0 0.0
    %5299 = vmatprep.subr.mxu0 0.0
    %5300 = vmatpush1.msra.mxu0 0.0
    %5301 = vmatprep.subr.mxu0 0.0
    %5302 = vmatpush1.msra.mxu0 0.0
    %5303 = vmatprep.subr.mxu0 0.0
    %5304 = vmatpush1.msra.mxu0 0.0
    %5305 = vmatprep.subr.mxu0 0.0
    %5306 = vmatpush1.msra.mxu0 0.0
    %5307 = vmatprep.subr.mxu0 0.0
    %5308 = vmatpush1.msra.mxu0 0.0
    %5309 = vmatprep.subr.mxu0 0.0
    %v5310 = vand.u32 %v4771, 4294901760
    %5311 = vmatpush1.msra.mxu0 %v5310
    %5312 = vmatprep.subr.mxu0 0.0
    %v5313 = vand.u32 %v4770, 4294901760
    %5314 = vmatpush1.msra.mxu0 %v5313
    %5315 = vmatprep.subr.mxu0 0.0
    %5316 = vmatpush2.msra.mxu0 0.0
    %5317 = vmatprep.subr.mxu0 0.0
    %5318 = vmatpush2.msra.mxu0 0.0
    %5319 = vmatprep.subr.mxu0 0.0
    %5320 = vmatpush2.msra.mxu0 0.0
    %5321 = vmatprep.subr.mxu0 0.0
    %5322 = vmatpush2.msra.mxu0 0.0
    %5323 = vmatprep.subr.mxu0 0.0
    %5324 = vmatpush2.msra.mxu0 0.0
    %5325 = vmatprep.subr.mxu0 0.0
    %5326 = vmatpush2.msra.mxu0 0.0
    %5327 = vmatprep.subr.mxu0 0.0
    %5328 = vmatpush2.msra.mxu0 0.0
    %5329 = vmatprep.subr.mxu0 0.0
    %5330 = vmatpush2.msra.mxu0 0.0
    %5331 = vmatprep.subr.mxu0 0.0
    %5332 = vmatpush2.msra.mxu0 0.0
    %5333 = vmatprep.subr.mxu0 0.0
    %5334 = vmatpush2.msra.mxu0 0.0
    %5335 = vmatprep.subr.mxu0 0.0
    %5336 = vmatpush2.msra.mxu0 0.0
    %5337 = vmatprep.subr.mxu0 0.0
    %5338 = vmatpush2.msra.mxu0 0.0
    %5339 = vmatprep.subr.mxu0 0.0
    %5340 = vmatpush2.msra.mxu0 0.0
    %5341 = vmatprep.subr.mxu0 0.0
    %5342 = vmatpush2.msra.mxu0 0.0
    %5343 = vmatprep.subr.mxu0 0.0
    %5344 = vmatpush2.msra.mxu0 0.0
    %5345 = vmatprep.subr.mxu0 0.0
    %5346 = vmatpush2.msra.mxu0 0.0
    %5347 = vmatprep.mubr.f32.mxu0 0.0
    %v5348 = vand.u32 %v4773, 4294901760
    %5349 = vmatmul.mubr.f32.gmra.mxu0 %v5348
    %v5350 = vpop.f32.mrf.mxu0
    %v5351 = vadd.f32 %v5260, %v5350
    %v5352 = vpop.f32.mrf.mxu0
    %5353 = vmatprep.mubr.f32.mxu0 0.0
    %v5354 = vand.u32 %v4776, 4294901760
    %5355 = vmatmul.mubr.f32.gmra.mxu0 %v5354
    %v5356 = vpop.f32.mrf.mxu0
    %v5357 = vadd.f32 %v5266, %v5356
    %v5358 = vpop.f32.mrf.mxu0
    %5359 = vmatprep.mubr.f32.mxu0 0.0
    %v5360 = vand.u32 %v4779, 4294901760
    %5361 = vmatmul.mubr.f32.gmra.mxu0 %v5360
    %v5362 = vpop.f32.mrf.mxu0
    %v5363 = vadd.f32 %v5272, %v5362
    %v5364 = vpop.f32.mrf.mxu0
    %5365 = vmatprep.mubr.f32.mxu0 0.0
    %v5366 = vand.u32 %v4782, 4294901760
    %5367 = vmatmul.mubr.f32.gmra.mxu0 %v5366
    %v5368 = vpop.f32.mrf.mxu0
    %v5369 = vadd.f32 %v5278, %v5368
    %v5370 = vpop.f32.mrf.mxu0
    %5371 = vdwg.mxu0
    %v5373 = vsel %vm53, %v1221, 0
    %v5376 = vsel %vm53, %v1227, 0
    %v5379 = vsel %vm53, %v1233, 0
    %v5382 = vsel %vm53, %v1239, 0
    %5384 = vmatprep.subr.mxu0 0.0
    %5385 = vmatpush1.msra.mxu0 0.0
    %5386 = vmatprep.subr.mxu0 0.0
    %5387 = vmatpush1.msra.mxu0 0.0
    %5388 = vmatprep.subr.mxu0 0.0
    %5389 = vmatpush1.msra.mxu0 0.0
    %5390 = vmatprep.subr.mxu0 0.0
    %5391 = vmatpush1.msra.mxu0 0.0
    %5392 = vmatprep.subr.mxu0 0.0
    %5393 = vmatpush1.msra.mxu0 0.0
    %5394 = vmatprep.subr.mxu0 0.0
    %5395 = vmatpush1.msra.mxu0 0.0
    %5396 = vmatprep.subr.mxu0 0.0
    %5397 = vmatpush1.msra.mxu0 0.0
    %5398 = vmatprep.subr.mxu0 0.0
    %5399 = vmatpush1.msra.mxu0 0.0
    %5400 = vmatprep.subr.mxu0 0.0
    %5401 = vmatpush1.msra.mxu0 0.0
    %5402 = vmatprep.subr.mxu0 0.0
    %5403 = vmatpush1.msra.mxu0 0.0
    %5404 = vmatprep.subr.mxu0 0.0
    %5405 = vmatpush1.msra.mxu0 0.0
    %5406 = vmatprep.subr.mxu0 0.0
    %5407 = vmatpush1.msra.mxu0 0.0
    %5408 = vmatprep.subr.mxu0 0.0
    %5409 = vmatpush1.msra.mxu0 0.0
    %5410 = vmatprep.subr.mxu0 0.0
    %5411 = vmatpush1.msra.mxu0 0.0
    %5412 = vmatprep.subr.mxu0 0.0
    %v5413 = vand.u32 %v4771, 4294901760
    %5414 = vmatpush1.msra.mxu0 %v5413
    %5415 = vmatprep.subr.mxu0 0.0
    %v5416 = vand.u32 %v4770, 4294901760
    %5417 = vmatpush1.msra.mxu0 %v5416
    %5418 = vmatprep.subr.mxu0 0.0
    %5419 = vmatpush2.msra.mxu0 0.0
    %5420 = vmatprep.subr.mxu0 0.0
    %5421 = vmatpush2.msra.mxu0 0.0
    %5422 = vmatprep.subr.mxu0 0.0
    %5423 = vmatpush2.msra.mxu0 0.0
    %5424 = vmatprep.subr.mxu0 0.0
    %5425 = vmatpush2.msra.mxu0 0.0
    %5426 = vmatprep.subr.mxu0 0.0
    %5427 = vmatpush2.msra.mxu0 0.0
    %5428 = vmatprep.subr.mxu0 0.0
    %5429 = vmatpush2.msra.mxu0 0.0
    %5430 = vmatprep.subr.mxu0 0.0
    %5431 = vmatpush2.msra.mxu0 0.0
    %5432 = vmatprep.subr.mxu0 0.0
    %5433 = vmatpush2.msra.mxu0 0.0
    %5434 = vmatprep.subr.mxu0 0.0
    %5435 = vmatpush2.msra.mxu0 0.0
    %5436 = vmatprep.subr.mxu0 0.0
    %5437 = vmatpush2.msra.mxu0 0.0
    %5438 = vmatprep.subr.mxu0 0.0
    %5439 = vmatpush2.msra.mxu0 0.0
    %5440 = vmatprep.subr.mxu0 0.0
    %5441 = vmatpush2.msra.mxu0 0.0
    %5442 = vmatprep.subr.mxu0 0.0
    %5443 = vmatpush2.msra.mxu0 0.0
    %5444 = vmatprep.subr.mxu0 0.0
    %5445 = vmatpush2.msra.mxu0 0.0
    %5446 = vmatprep.subr.mxu0 0.0
    %5447 = vmatpush2.msra.mxu0 0.0
    %5448 = vmatprep.subr.mxu0 0.0
    %5449 = vmatpush2.msra.mxu0 0.0
    %5450 = vmatprep.mubr.f32.mxu0 0.0
    %v5451 = vand.u32 %v5373, 4294901760
    %v5452 = vsub.f32 %v5373, %v5451
    %v5453 = vand.u32 %v5452, 4294901760
    %v5454 = vsub.f32 %v5452, %v5453
    %v5455 = vand.u32 %v5454, 4294901760
    %5456 = vmatmul.mubr.f32.gmra.mxu0 %v5455
    %v5457 = vpop.f32.mrf.mxu0
    %v5458 = vadd.f32 0.0, %v5457
    %v5459 = vpop.f32.mrf.mxu0
    %5460 = vmatprep.mubr.f32.mxu0 0.0
    %v5461 = vand.u32 %v5376, 4294901760
    %v5462 = vsub.f32 %v5376, %v5461
    %v5463 = vand.u32 %v5462, 4294901760
    %v5464 = vsub.f32 %v5462, %v5463
    %v5465 = vand.u32 %v5464, 4294901760
    %5466 = vmatmul.mubr.f32.gmra.mxu0 %v5465
    %v5467 = vpop.f32.mrf.mxu0
    %v5468 = vadd.f32 0.0, %v5467
    %v5469 = vpop.f32.mrf.mxu0
    %5470 = vmatprep.mubr.f32.mxu0 0.0
    %v5471 = vand.u32 %v5379, 4294901760
    %v5472 = vsub.f32 %v5379, %v5471
    %v5473 = vand.u32 %v5472, 4294901760
    %v5474 = vsub.f32 %v5472, %v5473
    %v5475 = vand.u32 %v5474, 4294901760
    %5476 = vmatmul.mubr.f32.gmra.mxu0 %v5475
    %v5477 = vpop.f32.mrf.mxu0
    %v5478 = vadd.f32 0.0, %v5477
    %v5479 = vpop.f32.mrf.mxu0
    %5480 = vmatprep.mubr.f32.mxu0 0.0
    %v5481 = vand.u32 %v5382, 4294901760
    %v5482 = vsub.f32 %v5382, %v5481
    %v5483 = vand.u32 %v5482, 4294901760
    %v5484 = vsub.f32 %v5482, %v5483
    %v5485 = vand.u32 %v5484, 4294901760
    %5486 = vmatmul.mubr.f32.gmra.mxu0 %v5485
    %v5487 = vpop.f32.mrf.mxu0
    %v5488 = vadd.f32 0.0, %v5487
    %v5489 = vpop.f32.mrf.mxu0
    %5490 = vdwg.mxu0
    %5491 = vmatprep.subr.mxu0 0.0
    %5492 = vmatpush1.msra.mxu0 0.0
    %5493 = vmatprep.subr.mxu0 0.0
    %5494 = vmatpush1.msra.mxu0 0.0
    %5495 = vmatprep.subr.mxu0 0.0
    %5496 = vmatpush1.msra.mxu0 0.0
    %5497 = vmatprep.subr.mxu0 0.0
    %5498 = vmatpush1.msra.mxu0 0.0
    %5499 = vmatprep.subr.mxu0 0.0
    %5500 = vmatpush1.msra.mxu0 0.0
    %5501 = vmatprep.subr.mxu0 0.0
    %5502 = vmatpush1.msra.mxu0 0.0
    %5503 = vmatprep.subr.mxu0 0.0
    %5504 = vmatpush1.msra.mxu0 0.0
    %5505 = vmatprep.subr.mxu0 0.0
    %5506 = vmatpush1.msra.mxu0 0.0
    %5507 = vmatprep.subr.mxu0 0.0
    %5508 = vmatpush1.msra.mxu0 0.0
    %5509 = vmatprep.subr.mxu0 0.0
    %5510 = vmatpush1.msra.mxu0 0.0
    %5511 = vmatprep.subr.mxu0 0.0
    %5512 = vmatpush1.msra.mxu0 0.0
    %5513 = vmatprep.subr.mxu0 0.0
    %5514 = vmatpush1.msra.mxu0 0.0
    %5515 = vmatprep.subr.mxu0 0.0
    %5516 = vmatpush1.msra.mxu0 0.0
    %5517 = vmatprep.subr.mxu0 0.0
    %5518 = vmatpush1.msra.mxu0 0.0
    %5519 = vmatprep.subr.mxu0 0.0
    %v5520 = vand.u32 %v4771, 4294901760
    %v5521 = vsub.f32 %v4771, %v5520
    %v5522 = vand.u32 %v5521, 4294901760
    %v5523 = vsub.f32 %v5521, %v5522
    %v5524 = vand.u32 %v5523, 4294901760
    %5525 = vmatpush1.msra.mxu0 %v5524
    %5526 = vmatprep.subr.mxu0 0.0
    %v5527 = vand.u32 %v4770, 4294901760
    %v5528 = vsub.f32 %v4770, %v5527
    %v5529 = vand.u32 %v5528, 4294901760
    %v5530 = vsub.f32 %v5528, %v5529
    %v5531 = vand.u32 %v5530, 4294901760
    %5532 = vmatpush1.msra.mxu0 %v5531
    %5533 = vmatprep.subr.mxu0 0.0
    %5534 = vmatpush2.msra.mxu0 0.0
    %5535 = vmatprep.subr.mxu0 0.0
    %5536 = vmatpush2.msra.mxu0 0.0
    %5537 = vmatprep.subr.mxu0 0.0
    %5538 = vmatpush2.msra.mxu0 0.0
    %5539 = vmatprep.subr.mxu0 0.0
    %5540 = vmatpush2.msra.mxu0 0.0
    %5541 = vmatprep.subr.mxu0 0.0
    %5542 = vmatpush2.msra.mxu0 0.0
    %5543 = vmatprep.subr.mxu0 0.0
    %5544 = vmatpush2.msra.mxu0 0.0
    %5545 = vmatprep.subr.mxu0 0.0
    %5546 = vmatpush2.msra.mxu0 0.0
    %5547 = vmatprep.subr.mxu0 0.0
    %5548 = vmatpush2.msra.mxu0 0.0
    %5549 = vmatprep.subr.mxu0 0.0
    %5550 = vmatpush2.msra.mxu0 0.0
    %5551 = vmatprep.subr.mxu0 0.0
    %5552 = vmatpush2.msra.mxu0 0.0
    %5553 = vmatprep.subr.mxu0 0.0
    %5554 = vmatpush2.msra.mxu0 0.0
    %5555 = vmatprep.subr.mxu0 0.0
    %5556 = vmatpush2.msra.mxu0 0.0
    %5557 = vmatprep.subr.mxu0 0.0
    %5558 = vmatpush2.msra.mxu0 0.0
    %5559 = vmatprep.subr.mxu0 0.0
    %5560 = vmatpush2.msra.mxu0 0.0
    %5561 = vmatprep.subr.mxu0 0.0
    %5562 = vmatpush2.msra.mxu0 0.0
    %5563 = vmatprep.subr.mxu0 0.0
    %5564 = vmatpush2.msra.mxu0 0.0
    %5565 = vmatprep.mubr.f32.mxu0 0.0
    %v5566 = vand.u32 %v5373, 4294901760
    %5567 = vmatmul.mubr.f32.gmra.mxu0 %v5566
    %v5568 = vpop.f32.mrf.mxu0
    %v5569 = vadd.f32 %v5458, %v5568
    %v5570 = vpop.f32.mrf.mxu0
    %5571 = vmatprep.mubr.f32.mxu0 0.0
    %v5572 = vand.u32 %v5376, 4294901760
    %5573 = vmatmul.mubr.f32.gmra.mxu0 %v5572
    %v5574 = vpop.f32.mrf.mxu0
    %v5575 = vadd.f32 %v5468, %v5574
    %v5576 = vpop.f32.mrf.mxu0
    %5577 = vmatprep.mubr.f32.mxu0 0.0
    %v5578 = vand.u32 %v5379, 4294901760
    %5579 = vmatmul.mubr.f32.gmra.mxu0 %v5578
    %v5580 = vpop.f32.mrf.mxu0
    %v5581 = vadd.f32 %v5478, %v5580
    %v5582 = vpop.f32.mrf.mxu0
    %5583 = vmatprep.mubr.f32.mxu0 0.0
    %v5584 = vand.u32 %v5382, 4294901760
    %5585 = vmatmul.mubr.f32.gmra.mxu0 %v5584
    %v5586 = vpop.f32.mrf.mxu0
    %v5587 = vadd.f32 %v5488, %v5586
    %v5588 = vpop.f32.mrf.mxu0
    %5589 = vdwg.mxu0
    %5590 = vmatprep.subr.mxu0 0.0
    %5591 = vmatpush1.msra.mxu0 0.0
    %5592 = vmatprep.subr.mxu0 0.0
    %5593 = vmatpush1.msra.mxu0 0.0
    %5594 = vmatprep.subr.mxu0 0.0
    %5595 = vmatpush1.msra.mxu0 0.0
    %5596 = vmatprep.subr.mxu0 0.0
    %5597 = vmatpush1.msra.mxu0 0.0
    %5598 = vmatprep.subr.mxu0 0.0
    %5599 = vmatpush1.msra.mxu0 0.0
    %5600 = vmatprep.subr.mxu0 0.0
    %5601 = vmatpush1.msra.mxu0 0.0
    %5602 = vmatprep.subr.mxu0 0.0
    %5603 = vmatpush1.msra.mxu0 0.0
    %5604 = vmatprep.subr.mxu0 0.0
    %5605 = vmatpush1.msra.mxu0 0.0
    %5606 = vmatprep.subr.mxu0 0.0
    %5607 = vmatpush1.msra.mxu0 0.0
    %5608 = vmatprep.subr.mxu0 0.0
    %5609 = vmatpush1.msra.mxu0 0.0
    %5610 = vmatprep.subr.mxu0 0.0
    %5611 = vmatpush1.msra.mxu0 0.0
    %5612 = vmatprep.subr.mxu0 0.0
    %5613 = vmatpush1.msra.mxu0 0.0
    %5614 = vmatprep.subr.mxu0 0.0
    %5615 = vmatpush1.msra.mxu0 0.0
    %5616 = vmatprep.subr.mxu0 0.0
    %5617 = vmatpush1.msra.mxu0 0.0
    %5618 = vmatprep.subr.mxu0 0.0
    %v5619 = vand.u32 %v4771, 4294901760
    %v5620 = vsub.f32 %v4771, %v5619
    %5621 = vmatpush1.msra.mxu0 %v5620
    %5622 = vmatprep.subr.mxu0 0.0
    %v5623 = vand.u32 %v4770, 4294901760
    %v5624 = vsub.f32 %v4770, %v5623
    %5625 = vmatpush1.msra.mxu0 %v5624
    %5626 = vmatprep.subr.mxu0 0.0
    %5627 = vmatpush2.msra.mxu0 0.0
    %5628 = vmatprep.subr.mxu0 0.0
    %5629 = vmatpush2.msra.mxu0 0.0
    %5630 = vmatprep.subr.mxu0 0.0
    %5631 = vmatpush2.msra.mxu0 0.0
    %5632 = vmatprep.subr.mxu0 0.0
    %5633 = vmatpush2.msra.mxu0 0.0
    %5634 = vmatprep.subr.mxu0 0.0
    %5635 = vmatpush2.msra.mxu0 0.0
    %5636 = vmatprep.subr.mxu0 0.0
    %5637 = vmatpush2.msra.mxu0 0.0
    %5638 = vmatprep.subr.mxu0 0.0
    %5639 = vmatpush2.msra.mxu0 0.0
    %5640 = vmatprep.subr.mxu0 0.0
    %5641 = vmatpush2.msra.mxu0 0.0
    %5642 = vmatprep.subr.mxu0 0.0
    %5643 = vmatpush2.msra.mxu0 0.0
    %5644 = vmatprep.subr.mxu0 0.0
    %5645 = vmatpush2.msra.mxu0 0.0
    %5646 = vmatprep.subr.mxu0 0.0
    %5647 = vmatpush2.msra.mxu0 0.0
    %5648 = vmatprep.subr.mxu0 0.0
    %5649 = vmatpush2.msra.mxu0 0.0
    %5650 = vmatprep.subr.mxu0 0.0
    %5651 = vmatpush2.msra.mxu0 0.0
    %5652 = vmatprep.subr.mxu0 0.0
    %5653 = vmatpush2.msra.mxu0 0.0
    %5654 = vmatprep.subr.mxu0 0.0
    %5655 = vmatpush2.msra.mxu0 0.0
    %5656 = vmatprep.subr.mxu0 0.0
    %5657 = vmatpush2.msra.mxu0 0.0
    %5658 = vmatprep.mubr.f32.mxu0 0.0
    %v5659 = vand.u32 %v5373, 4294901760
    %v5660 = vsub.f32 %v5373, %v5659
    %5661 = vmatmul.mubr.f32.gmra.mxu0 %v5660
    %v5662 = vpop.f32.mrf.mxu0
    %v5663 = vadd.f32 %v5569, %v5662
    %v5664 = vpop.f32.mrf.mxu0
    %5665 = vmatprep.mubr.f32.mxu0 0.0
    %v5666 = vand.u32 %v5376, 4294901760
    %v5667 = vsub.f32 %v5376, %v5666
    %5668 = vmatmul.mubr.f32.gmra.mxu0 %v5667
    %v5669 = vpop.f32.mrf.mxu0
    %v5670 = vadd.f32 %v5575, %v5669
    %v5671 = vpop.f32.mrf.mxu0
    %5672 = vmatprep.mubr.f32.mxu0 0.0
    %v5673 = vand.u32 %v5379, 4294901760
    %v5674 = vsub.f32 %v5379, %v5673
    %5675 = vmatmul.mubr.f32.gmra.mxu0 %v5674
    %v5676 = vpop.f32.mrf.mxu0
    %v5677 = vadd.f32 %v5581, %v5676
    %v5678 = vpop.f32.mrf.mxu0
    %5679 = vmatprep.mubr.f32.mxu0 0.0
    %v5680 = vand.u32 %v5382, 4294901760
    %v5681 = vsub.f32 %v5382, %v5680
    %5682 = vmatmul.mubr.f32.gmra.mxu0 %v5681
    %v5683 = vpop.f32.mrf.mxu0
    %v5684 = vadd.f32 %v5587, %v5683
    %v5685 = vpop.f32.mrf.mxu0
    %5686 = vdwg.mxu0
    %5687 = vmatprep.subr.mxu0 0.0
    %5688 = vmatpush1.msra.mxu0 0.0
    %5689 = vmatprep.subr.mxu0 0.0
    %5690 = vmatpush1.msra.mxu0 0.0
    %5691 = vmatprep.subr.mxu0 0.0
    %5692 = vmatpush1.msra.mxu0 0.0
    %5693 = vmatprep.subr.mxu0 0.0
    %5694 = vmatpush1.msra.mxu0 0.0
    %5695 = vmatprep.subr.mxu0 0.0
    %5696 = vmatpush1.msra.mxu0 0.0
    %5697 = vmatprep.subr.mxu0 0.0
    %5698 = vmatpush1.msra.mxu0 0.0
    %5699 = vmatprep.subr.mxu0 0.0
    %5700 = vmatpush1.msra.mxu0 0.0
    %5701 = vmatprep.subr.mxu0 0.0
    %5702 = vmatpush1.msra.mxu0 0.0
    %5703 = vmatprep.subr.mxu0 0.0
    %5704 = vmatpush1.msra.mxu0 0.0
    %5705 = vmatprep.subr.mxu0 0.0
    %5706 = vmatpush1.msra.mxu0 0.0
    %5707 = vmatprep.subr.mxu0 0.0
    %5708 = vmatpush1.msra.mxu0 0.0
    %5709 = vmatprep.subr.mxu0 0.0
    %5710 = vmatpush1.msra.mxu0 0.0
    %5711 = vmatprep.subr.mxu0 0.0
    %5712 = vmatpush1.msra.mxu0 0.0
    %5713 = vmatprep.subr.mxu0 0.0
    %5714 = vmatpush1.msra.mxu0 0.0
    %5715 = vmatprep.subr.mxu0 0.0
    %v5716 = vand.u32 %v4771, 4294901760
    %5717 = vmatpush1.msra.mxu0 %v5716
    %5718 = vmatprep.subr.mxu0 0.0
    %v5719 = vand.u32 %v4770, 4294901760
    %5720 = vmatpush1.msra.mxu0 %v5719
    %5721 = vmatprep.subr.mxu0 0.0
    %5722 = vmatpush2.msra.mxu0 0.0
    %5723 = vmatprep.subr.mxu0 0.0
    %5724 = vmatpush2.msra.mxu0 0.0
    %5725 = vmatprep.subr.mxu0 0.0
    %5726 = vmatpush2.msra.mxu0 0.0
    %5727 = vmatprep.subr.mxu0 0.0
    %5728 = vmatpush2.msra.mxu0 0.0
    %5729 = vmatprep.subr.mxu0 0.0
    %5730 = vmatpush2.msra.mxu0 0.0
    %5731 = vmatprep.subr.mxu0 0.0
    %5732 = vmatpush2.msra.mxu0 0.0
    %5733 = vmatprep.subr.mxu0 0.0
    %5734 = vmatpush2.msra.mxu0 0.0
    %5735 = vmatprep.subr.mxu0 0.0
    %5736 = vmatpush2.msra.mxu0 0.0
    %5737 = vmatprep.subr.mxu0 0.0
    %5738 = vmatpush2.msra.mxu0 0.0
    %5739 = vmatprep.subr.mxu0 0.0
    %5740 = vmatpush2.msra.mxu0 0.0
    %5741 = vmatprep.subr.mxu0 0.0
    %5742 = vmatpush2.msra.mxu0 0.0
    %5743 = vmatprep.subr.mxu0 0.0
    %5744 = vmatpush2.msra.mxu0 0.0
    %5745 = vmatprep.subr.mxu0 0.0
    %5746 = vmatpush2.msra.mxu0 0.0
    %5747 = vmatprep.subr.mxu0 0.0
    %5748 = vmatpush2.msra.mxu0 0.0
    %5749 = vmatprep.subr.mxu0 0.0
    %5750 = vmatpush2.msra.mxu0 0.0
    %5751 = vmatprep.subr.mxu0 0.0
    %5752 = vmatpush2.msra.mxu0 0.0
    %5753 = vmatprep.mubr.f32.mxu0 0.0
    %v5754 = vand.u32 %v5373, 4294901760
    %v5755 = vsub.f32 %v5373, %v5754
    %v5756 = vand.u32 %v5755, 4294901760
    %5757 = vmatmul.mubr.f32.gmra.mxu0 %v5756
    %v5758 = vpop.f32.mrf.mxu0
    %v5759 = vadd.f32 %v5663, %v5758
    %v5760 = vpop.f32.mrf.mxu0
    %5761 = vmatprep.mubr.f32.mxu0 0.0
    %v5762 = vand.u32 %v5376, 4294901760
    %v5763 = vsub.f32 %v5376, %v5762
    %v5764 = vand.u32 %v5763, 4294901760
    %5765 = vmatmul.mubr.f32.gmra.mxu0 %v5764
    %v5766 = vpop.f32.mrf.mxu0
    %v5767 = vadd.f32 %v5670, %v5766
    %v5768 = vpop.f32.mrf.mxu0
    %5769 = vmatprep.mubr.f32.mxu0 0.0
    %v5770 = vand.u32 %v5379, 4294901760
    %v5771 = vsub.f32 %v5379, %v5770
    %v5772 = vand.u32 %v5771, 4294901760
    %5773 = vmatmul.mubr.f32.gmra.mxu0 %v5772
    %v5774 = vpop.f32.mrf.mxu0
    %v5775 = vadd.f32 %v5677, %v5774
    %v5776 = vpop.f32.mrf.mxu0
    %5777 = vmatprep.mubr.f32.mxu0 0.0
    %v5778 = vand.u32 %v5382, 4294901760
    %v5779 = vsub.f32 %v5382, %v5778
    %v5780 = vand.u32 %v5779, 4294901760
    %5781 = vmatmul.mubr.f32.gmra.mxu0 %v5780
    %v5782 = vpop.f32.mrf.mxu0
    %v5783 = vadd.f32 %v5684, %v5782
    %v5784 = vpop.f32.mrf.mxu0
    %5785 = vdwg.mxu0
    %5786 = vmatprep.subr.mxu0 0.0
    %5787 = vmatpush1.msra.mxu0 0.0
    %5788 = vmatprep.subr.mxu0 0.0
    %5789 = vmatpush1.msra.mxu0 0.0
    %5790 = vmatprep.subr.mxu0 0.0
    %5791 = vmatpush1.msra.mxu0 0.0
    %5792 = vmatprep.subr.mxu0 0.0
    %5793 = vmatpush1.msra.mxu0 0.0
    %5794 = vmatprep.subr.mxu0 0.0
    %5795 = vmatpush1.msra.mxu0 0.0
    %5796 = vmatprep.subr.mxu0 0.0
    %5797 = vmatpush1.msra.mxu0 0.0
    %5798 = vmatprep.subr.mxu0 0.0
    %5799 = vmatpush1.msra.mxu0 0.0
    %5800 = vmatprep.subr.mxu0 0.0
    %5801 = vmatpush1.msra.mxu0 0.0
    %5802 = vmatprep.subr.mxu0 0.0
    %5803 = vmatpush1.msra.mxu0 0.0
    %5804 = vmatprep.subr.mxu0 0.0
    %5805 = vmatpush1.msra.mxu0 0.0
    %5806 = vmatprep.subr.mxu0 0.0
    %5807 = vmatpush1.msra.mxu0 0.0
    %5808 = vmatprep.subr.mxu0 0.0
    %5809 = vmatpush1.msra.mxu0 0.0
    %5810 = vmatprep.subr.mxu0 0.0
    %5811 = vmatpush1.msra.mxu0 0.0
    %5812 = vmatprep.subr.mxu0 0.0
    %5813 = vmatpush1.msra.mxu0 0.0
    %5814 = vmatprep.subr.mxu0 0.0
    %v5815 = vand.u32 %v4771, 4294901760
    %v5816 = vsub.f32 %v4771, %v5815
    %v5817 = vand.u32 %v5816, 4294901760
    %5818 = vmatpush1.msra.mxu0 %v5817
    %5819 = vmatprep.subr.mxu0 0.0
    %v5820 = vand.u32 %v4770, 4294901760
    %v5821 = vsub.f32 %v4770, %v5820
    %v5822 = vand.u32 %v5821, 4294901760
    %5823 = vmatpush1.msra.mxu0 %v5822
    %5824 = vmatprep.subr.mxu0 0.0
    %5825 = vmatpush2.msra.mxu0 0.0
    %5826 = vmatprep.subr.mxu0 0.0
    %5827 = vmatpush2.msra.mxu0 0.0
    %5828 = vmatprep.subr.mxu0 0.0
    %5829 = vmatpush2.msra.mxu0 0.0
    %5830 = vmatprep.subr.mxu0 0.0
    %5831 = vmatpush2.msra.mxu0 0.0
    %5832 = vmatprep.subr.mxu0 0.0
    %5833 = vmatpush2.msra.mxu0 0.0
    %5834 = vmatprep.subr.mxu0 0.0
    %5835 = vmatpush2.msra.mxu0 0.0
    %5836 = vmatprep.subr.mxu0 0.0
    %5837 = vmatpush2.msra.mxu0 0.0
    %5838 = vmatprep.subr.mxu0 0.0
    %5839 = vmatpush2.msra.mxu0 0.0
    %5840 = vmatprep.subr.mxu0 0.0
    %5841 = vmatpush2.msra.mxu0 0.0
    %5842 = vmatprep.subr.mxu0 0.0
    %5843 = vmatpush2.msra.mxu0 0.0
    %5844 = vmatprep.subr.mxu0 0.0
    %5845 = vmatpush2.msra.mxu0 0.0
    %5846 = vmatprep.subr.mxu0 0.0
    %5847 = vmatpush2.msra.mxu0 0.0
    %5848 = vmatprep.subr.mxu0 0.0
    %5849 = vmatpush2.msra.mxu0 0.0
    %5850 = vmatprep.subr.mxu0 0.0
    %5851 = vmatpush2.msra.mxu0 0.0
    %5852 = vmatprep.subr.mxu0 0.0
    %5853 = vmatpush2.msra.mxu0 0.0
    %5854 = vmatprep.subr.mxu0 0.0
    %5855 = vmatpush2.msra.mxu0 0.0
    %5856 = vmatprep.mubr.f32.mxu0 0.0
    %v5857 = vand.u32 %v5373, 4294901760
    %5858 = vmatmul.mubr.f32.gmra.mxu0 %v5857
    %v5859 = vpop.f32.mrf.mxu0
    %v5860 = vadd.f32 %v5759, %v5859
    %v5861 = vpop.f32.mrf.mxu0
    %5862 = vmatprep.mubr.f32.mxu0 0.0
    %v5863 = vand.u32 %v5376, 4294901760
    %5864 = vmatmul.mubr.f32.gmra.mxu0 %v5863
    %v5865 = vpop.f32.mrf.mxu0
    %v5866 = vadd.f32 %v5767, %v5865
    %v5867 = vpop.f32.mrf.mxu0
    %5868 = vmatprep.mubr.f32.mxu0 0.0
    %v5869 = vand.u32 %v5379, 4294901760
    %5870 = vmatmul.mubr.f32.gmra.mxu0 %v5869
    %v5871 = vpop.f32.mrf.mxu0
    %v5872 = vadd.f32 %v5775, %v5871
    %v5873 = vpop.f32.mrf.mxu0
    %5874 = vmatprep.mubr.f32.mxu0 0.0
    %v5875 = vand.u32 %v5382, 4294901760
    %5876 = vmatmul.mubr.f32.gmra.mxu0 %v5875
    %v5877 = vpop.f32.mrf.mxu0
    %v5878 = vadd.f32 %v5783, %v5877
    %v5879 = vpop.f32.mrf.mxu0
    %5880 = vdwg.mxu0
    %5881 = vmatprep.subr.mxu0 0.0
    %5882 = vmatpush1.msra.mxu0 0.0
    %5883 = vmatprep.subr.mxu0 0.0
    %5884 = vmatpush1.msra.mxu0 0.0
    %5885 = vmatprep.subr.mxu0 0.0
    %5886 = vmatpush1.msra.mxu0 0.0
    %5887 = vmatprep.subr.mxu0 0.0
    %5888 = vmatpush1.msra.mxu0 0.0
    %5889 = vmatprep.subr.mxu0 0.0
    %5890 = vmatpush1.msra.mxu0 0.0
    %5891 = vmatprep.subr.mxu0 0.0
    %5892 = vmatpush1.msra.mxu0 0.0
    %5893 = vmatprep.subr.mxu0 0.0
    %5894 = vmatpush1.msra.mxu0 0.0
    %5895 = vmatprep.subr.mxu0 0.0
    %5896 = vmatpush1.msra.mxu0 0.0
    %5897 = vmatprep.subr.mxu0 0.0
    %5898 = vmatpush1.msra.mxu0 0.0
    %5899 = vmatprep.subr.mxu0 0.0
    %5900 = vmatpush1.msra.mxu0 0.0
    %5901 = vmatprep.subr.mxu0 0.0
    %5902 = vmatpush1.msra.mxu0 0.0
    %5903 = vmatprep.subr.mxu0 0.0
    %5904 = vmatpush1.msra.mxu0 0.0
    %5905 = vmatprep.subr.mxu0 0.0
    %5906 = vmatpush1.msra.mxu0 0.0
    %5907 = vmatprep.subr.mxu0 0.0
    %5908 = vmatpush1.msra.mxu0 0.0
    %5909 = vmatprep.subr.mxu0 0.0
    %v5910 = vand.u32 %v4771, 4294901760
    %5911 = vmatpush1.msra.mxu0 %v5910
    %5912 = vmatprep.subr.mxu0 0.0
    %v5913 = vand.u32 %v4770, 4294901760
    %5914 = vmatpush1.msra.mxu0 %v5913
    %5915 = vmatprep.subr.mxu0 0.0
    %5916 = vmatpush2.msra.mxu0 0.0
    %5917 = vmatprep.subr.mxu0 0.0
    %5918 = vmatpush2.msra.mxu0 0.0
    %5919 = vmatprep.subr.mxu0 0.0
    %5920 = vmatpush2.msra.mxu0 0.0
    %5921 = vmatprep.subr.mxu0 0.0
    %5922 = vmatpush2.msra.mxu0 0.0
    %5923 = vmatprep.subr.mxu0 0.0
    %5924 = vmatpush2.msra.mxu0 0.0
    %5925 = vmatprep.subr.mxu0 0.0
    %5926 = vmatpush2.msra.mxu0 0.0
    %5927 = vmatprep.subr.mxu0 0.0
    %5928 = vmatpush2.msra.mxu0 0.0
    %5929 = vmatprep.subr.mxu0 0.0
    %5930 = vmatpush2.msra.mxu0 0.0
    %5931 = vmatprep.subr.mxu0 0.0
    %5932 = vmatpush2.msra.mxu0 0.0
    %5933 = vmatprep.subr.mxu0 0.0
    %5934 = vmatpush2.msra.mxu0 0.0
    %5935 = vmatprep.subr.mxu0 0.0
    %5936 = vmatpush2.msra.mxu0 0.0
    %5937 = vmatprep.subr.mxu0 0.0
    %5938 = vmatpush2.msra.mxu0 0.0
    %5939 = vmatprep.subr.mxu0 0.0
    %5940 = vmatpush2.msra.mxu0 0.0
    %5941 = vmatprep.subr.mxu0 0.0
    %5942 = vmatpush2.msra.mxu0 0.0
    %5943 = vmatprep.subr.mxu0 0.0
    %5944 = vmatpush2.msra.mxu0 0.0
    %5945 = vmatprep.subr.mxu0 0.0
    %5946 = vmatpush2.msra.mxu0 0.0
    %5947 = vmatprep.mubr.f32.mxu0 0.0
    %v5948 = vand.u32 %v5373, 4294901760
    %5949 = vmatmul.mubr.f32.gmra.mxu0 %v5948
    %v5950 = vpop.f32.mrf.mxu0
    %v5951 = vadd.f32 %v5860, %v5950
    %v5952 = vpop.f32.mrf.mxu0
    %5953 = vmatprep.mubr.f32.mxu0 0.0
    %v5954 = vand.u32 %v5376, 4294901760
    %5955 = vmatmul.mubr.f32.gmra.mxu0 %v5954
    %v5956 = vpop.f32.mrf.mxu0
    %v5957 = vadd.f32 %v5866, %v5956
    %v5958 = vpop.f32.mrf.mxu0
    %5959 = vmatprep.mubr.f32.mxu0 0.0
    %v5960 = vand.u32 %v5379, 4294901760
    %5961 = vmatmul.mubr.f32.gmra.mxu0 %v5960
    %v5962 = vpop.f32.mrf.mxu0
    %v5963 = vadd.f32 %v5872, %v5962
    %v5964 = vpop.f32.mrf.mxu0
    %5965 = vmatprep.mubr.f32.mxu0 0.0
    %v5966 = vand.u32 %v5382, 4294901760
    %5967 = vmatmul.mubr.f32.gmra.mxu0 %v5966
    %v5968 = vpop.f32.mrf.mxu0
    %v5969 = vadd.f32 %v5878, %v5968
    %v5970 = vpop.f32.mrf.mxu0
    %5971 = vdwg.mxu0
    %v5973 = vsel %vm53, %v1809, 0
    %v5976 = vsel %vm53, %v1815, 0
    %v5979 = vsel %vm53, %v1821, 0
    %v5982 = vsel %vm53, %v1827, 0
    %5984 = vmatprep.subr.mxu0 0.0
    %5985 = vmatpush1.msra.mxu0 0.0
    %5986 = vmatprep.subr.mxu0 0.0
    %5987 = vmatpush1.msra.mxu0 0.0
    %5988 = vmatprep.subr.mxu0 0.0
    %5989 = vmatpush1.msra.mxu0 0.0
    %5990 = vmatprep.subr.mxu0 0.0
    %5991 = vmatpush1.msra.mxu0 0.0
    %5992 = vmatprep.subr.mxu0 0.0
    %5993 = vmatpush1.msra.mxu0 0.0
    %5994 = vmatprep.subr.mxu0 0.0
    %5995 = vmatpush1.msra.mxu0 0.0
    %5996 = vmatprep.subr.mxu0 0.0
    %5997 = vmatpush1.msra.mxu0 0.0
    %5998 = vmatprep.subr.mxu0 0.0
    %5999 = vmatpush1.msra.mxu0 0.0
    %6000 = vmatprep.subr.mxu0 0.0
    %6001 = vmatpush1.msra.mxu0 0.0
    %6002 = vmatprep.subr.mxu0 0.0
    %6003 = vmatpush1.msra.mxu0 0.0
    %6004 = vmatprep.subr.mxu0 0.0
    %6005 = vmatpush1.msra.mxu0 0.0
    %6006 = vmatprep.subr.mxu0 0.0
    %6007 = vmatpush1.msra.mxu0 0.0
    %6008 = vmatprep.subr.mxu0 0.0
    %6009 = vmatpush1.msra.mxu0 0.0
    %6010 = vmatprep.subr.mxu0 0.0
    %6011 = vmatpush1.msra.mxu0 0.0
    %6012 = vmatprep.subr.mxu0 0.0
    %v6013 = vand.u32 %v4771, 4294901760
    %6014 = vmatpush1.msra.mxu0 %v6013
    %6015 = vmatprep.subr.mxu0 0.0
    %v6016 = vand.u32 %v4770, 4294901760
    %6017 = vmatpush1.msra.mxu0 %v6016
    %6018 = vmatprep.subr.mxu0 0.0
    %6019 = vmatpush2.msra.mxu0 0.0
    %6020 = vmatprep.subr.mxu0 0.0
    %6021 = vmatpush2.msra.mxu0 0.0
    %6022 = vmatprep.subr.mxu0 0.0
    %6023 = vmatpush2.msra.mxu0 0.0
    %6024 = vmatprep.subr.mxu0 0.0
    %6025 = vmatpush2.msra.mxu0 0.0
    %6026 = vmatprep.subr.mxu0 0.0
    %6027 = vmatpush2.msra.mxu0 0.0
    %6028 = vmatprep.subr.mxu0 0.0
    %6029 = vmatpush2.msra.mxu0 0.0
    %6030 = vmatprep.subr.mxu0 0.0
    %6031 = vmatpush2.msra.mxu0 0.0
    %6032 = vmatprep.subr.mxu0 0.0
    %6033 = vmatpush2.msra.mxu0 0.0
    %6034 = vmatprep.subr.mxu0 0.0
    %6035 = vmatpush2.msra.mxu0 0.0
    %6036 = vmatprep.subr.mxu0 0.0
    %6037 = vmatpush2.msra.mxu0 0.0
    %6038 = vmatprep.subr.mxu0 0.0
    %6039 = vmatpush2.msra.mxu0 0.0
    %6040 = vmatprep.subr.mxu0 0.0
    %6041 = vmatpush2.msra.mxu0 0.0
    %6042 = vmatprep.subr.mxu0 0.0
    %6043 = vmatpush2.msra.mxu0 0.0
    %6044 = vmatprep.subr.mxu0 0.0
    %6045 = vmatpush2.msra.mxu0 0.0
    %6046 = vmatprep.subr.mxu0 0.0
    %6047 = vmatpush2.msra.mxu0 0.0
    %6048 = vmatprep.subr.mxu0 0.0
    %6049 = vmatpush2.msra.mxu0 0.0
    %6050 = vmatprep.mubr.f32.mxu0 0.0
    %v6051 = vand.u32 %v5973, 4294901760
    %v6052 = vsub.f32 %v5973, %v6051
    %v6053 = vand.u32 %v6052, 4294901760
    %v6054 = vsub.f32 %v6052, %v6053
    %v6055 = vand.u32 %v6054, 4294901760
    %6056 = vmatmul.mubr.f32.gmra.mxu0 %v6055
    %v6057 = vpop.f32.mrf.mxu0
    %v6058 = vadd.f32 0.0, %v6057
    %v6059 = vpop.f32.mrf.mxu0
    %6060 = vmatprep.mubr.f32.mxu0 0.0
    %v6061 = vand.u32 %v5976, 4294901760
    %v6062 = vsub.f32 %v5976, %v6061
    %v6063 = vand.u32 %v6062, 4294901760
    %v6064 = vsub.f32 %v6062, %v6063
    %v6065 = vand.u32 %v6064, 4294901760
    %6066 = vmatmul.mubr.f32.gmra.mxu0 %v6065
    %v6067 = vpop.f32.mrf.mxu0
    %v6068 = vadd.f32 0.0, %v6067
    %v6069 = vpop.f32.mrf.mxu0
    %6070 = vmatprep.mubr.f32.mxu0 0.0
    %v6071 = vand.u32 %v5979, 4294901760
    %v6072 = vsub.f32 %v5979, %v6071
    %v6073 = vand.u32 %v6072, 4294901760
    %v6074 = vsub.f32 %v6072, %v6073
    %v6075 = vand.u32 %v6074, 4294901760
    %6076 = vmatmul.mubr.f32.gmra.mxu0 %v6075
    %v6077 = vpop.f32.mrf.mxu0
    %v6078 = vadd.f32 0.0, %v6077
    %v6079 = vpop.f32.mrf.mxu0
    %6080 = vmatprep.mubr.f32.mxu0 0.0
    %v6081 = vand.u32 %v5982, 4294901760
    %v6082 = vsub.f32 %v5982, %v6081
    %v6083 = vand.u32 %v6082, 4294901760
    %v6084 = vsub.f32 %v6082, %v6083
    %v6085 = vand.u32 %v6084, 4294901760
    %6086 = vmatmul.mubr.f32.gmra.mxu0 %v6085
    %v6087 = vpop.f32.mrf.mxu0
    %v6088 = vadd.f32 0.0, %v6087
    %v6089 = vpop.f32.mrf.mxu0
    %6090 = vdwg.mxu0
    %6091 = vmatprep.subr.mxu0 0.0
    %6092 = vmatpush1.msra.mxu0 0.0
    %6093 = vmatprep.subr.mxu0 0.0
    %6094 = vmatpush1.msra.mxu0 0.0
    %6095 = vmatprep.subr.mxu0 0.0
    %6096 = vmatpush1.msra.mxu0 0.0
    %6097 = vmatprep.subr.mxu0 0.0
    %6098 = vmatpush1.msra.mxu0 0.0
    %6099 = vmatprep.subr.mxu0 0.0
    %6100 = vmatpush1.msra.mxu0 0.0
    %6101 = vmatprep.subr.mxu0 0.0
    %6102 = vmatpush1.msra.mxu0 0.0
    %6103 = vmatprep.subr.mxu0 0.0
    %6104 = vmatpush1.msra.mxu0 0.0
    %6105 = vmatprep.subr.mxu0 0.0
    %6106 = vmatpush1.msra.mxu0 0.0
    %6107 = vmatprep.subr.mxu0 0.0
    %6108 = vmatpush1.msra.mxu0 0.0
    %6109 = vmatprep.subr.mxu0 0.0
    %6110 = vmatpush1.msra.mxu0 0.0
    %6111 = vmatprep.subr.mxu0 0.0
    %6112 = vmatpush1.msra.mxu0 0.0
    %6113 = vmatprep.subr.mxu0 0.0
    %6114 = vmatpush1.msra.mxu0 0.0
    %6115 = vmatprep.subr.mxu0 0.0
    %6116 = vmatpush1.msra.mxu0 0.0
    %6117 = vmatprep.subr.mxu0 0.0
    %6118 = vmatpush1.msra.mxu0 0.0
    %6119 = vmatprep.subr.mxu0 0.0
    %v6120 = vand.u32 %v4771, 4294901760
    %v6121 = vsub.f32 %v4771, %v6120
    %v6122 = vand.u32 %v6121, 4294901760
    %v6123 = vsub.f32 %v6121, %v6122
    %v6124 = vand.u32 %v6123, 4294901760
    %6125 = vmatpush1.msra.mxu0 %v6124
    %6126 = vmatprep.subr.mxu0 0.0
    %v6127 = vand.u32 %v4770, 4294901760
    %v6128 = vsub.f32 %v4770, %v6127
    %v6129 = vand.u32 %v6128, 4294901760
    %v6130 = vsub.f32 %v6128, %v6129
    %v6131 = vand.u32 %v6130, 4294901760
    %6132 = vmatpush1.msra.mxu0 %v6131
    %6133 = vmatprep.subr.mxu0 0.0
    %6134 = vmatpush2.msra.mxu0 0.0
    %6135 = vmatprep.subr.mxu0 0.0
    %6136 = vmatpush2.msra.mxu0 0.0
    %6137 = vmatprep.subr.mxu0 0.0
    %6138 = vmatpush2.msra.mxu0 0.0
    %6139 = vmatprep.subr.mxu0 0.0
    %6140 = vmatpush2.msra.mxu0 0.0
    %6141 = vmatprep.subr.mxu0 0.0
    %6142 = vmatpush2.msra.mxu0 0.0
    %6143 = vmatprep.subr.mxu0 0.0
    %6144 = vmatpush2.msra.mxu0 0.0
    %6145 = vmatprep.subr.mxu0 0.0
    %6146 = vmatpush2.msra.mxu0 0.0
    %6147 = vmatprep.subr.mxu0 0.0
    %6148 = vmatpush2.msra.mxu0 0.0
    %6149 = vmatprep.subr.mxu0 0.0
    %6150 = vmatpush2.msra.mxu0 0.0
    %6151 = vmatprep.subr.mxu0 0.0
    %6152 = vmatpush2.msra.mxu0 0.0
    %6153 = vmatprep.subr.mxu0 0.0
    %6154 = vmatpush2.msra.mxu0 0.0
    %6155 = vmatprep.subr.mxu0 0.0
    %6156 = vmatpush2.msra.mxu0 0.0
    %6157 = vmatprep.subr.mxu0 0.0
    %6158 = vmatpush2.msra.mxu0 0.0
    %6159 = vmatprep.subr.mxu0 0.0
    %6160 = vmatpush2.msra.mxu0 0.0
    %6161 = vmatprep.subr.mxu0 0.0
    %6162 = vmatpush2.msra.mxu0 0.0
    %6163 = vmatprep.subr.mxu0 0.0
    %6164 = vmatpush2.msra.mxu0 0.0
    %6165 = vmatprep.mubr.f32.mxu0 0.0
    %v6166 = vand.u32 %v5973, 4294901760
    %6167 = vmatmul.mubr.f32.gmra.mxu0 %v6166
    %v6168 = vpop.f32.mrf.mxu0
    %v6169 = vadd.f32 %v6058, %v6168
    %v6170 = vpop.f32.mrf.mxu0
    %6171 = vmatprep.mubr.f32.mxu0 0.0
    %v6172 = vand.u32 %v5976, 4294901760
    %6173 = vmatmul.mubr.f32.gmra.mxu0 %v6172
    %v6174 = vpop.f32.mrf.mxu0
    %v6175 = vadd.f32 %v6068, %v6174
    %v6176 = vpop.f32.mrf.mxu0
    %6177 = vmatprep.mubr.f32.mxu0 0.0
    %v6178 = vand.u32 %v5979, 4294901760
    %6179 = vmatmul.mubr.f32.gmra.mxu0 %v6178
    %v6180 = vpop.f32.mrf.mxu0
    %v6181 = vadd.f32 %v6078, %v6180
    %v6182 = vpop.f32.mrf.mxu0
    %6183 = vmatprep.mubr.f32.mxu0 0.0
    %v6184 = vand.u32 %v5982, 4294901760
    %6185 = vmatmul.mubr.f32.gmra.mxu0 %v6184
    %v6186 = vpop.f32.mrf.mxu0
    %v6187 = vadd.f32 %v6088, %v6186
    %v6188 = vpop.f32.mrf.mxu0
    %6189 = vdwg.mxu0
    %6190 = vmatprep.subr.mxu0 0.0
    %6191 = vmatpush1.msra.mxu0 0.0
    %6192 = vmatprep.subr.mxu0 0.0
    %6193 = vmatpush1.msra.mxu0 0.0
    %6194 = vmatprep.subr.mxu0 0.0
    %6195 = vmatpush1.msra.mxu0 0.0
    %6196 = vmatprep.subr.mxu0 0.0
    %6197 = vmatpush1.msra.mxu0 0.0
    %6198 = vmatprep.subr.mxu0 0.0
    %6199 = vmatpush1.msra.mxu0 0.0
    %6200 = vmatprep.subr.mxu0 0.0
    %6201 = vmatpush1.msra.mxu0 0.0
    %6202 = vmatprep.subr.mxu0 0.0
    %6203 = vmatpush1.msra.mxu0 0.0
    %6204 = vmatprep.subr.mxu0 0.0
    %6205 = vmatpush1.msra.mxu0 0.0
    %6206 = vmatprep.subr.mxu0 0.0
    %6207 = vmatpush1.msra.mxu0 0.0
    %6208 = vmatprep.subr.mxu0 0.0
    %6209 = vmatpush1.msra.mxu0 0.0
    %6210 = vmatprep.subr.mxu0 0.0
    %6211 = vmatpush1.msra.mxu0 0.0
    %6212 = vmatprep.subr.mxu0 0.0
    %6213 = vmatpush1.msra.mxu0 0.0
    %6214 = vmatprep.subr.mxu0 0.0
    %6215 = vmatpush1.msra.mxu0 0.0
    %6216 = vmatprep.subr.mxu0 0.0
    %6217 = vmatpush1.msra.mxu0 0.0
    %6218 = vmatprep.subr.mxu0 0.0
    %v6219 = vand.u32 %v4771, 4294901760
    %v6220 = vsub.f32 %v4771, %v6219
    %6221 = vmatpush1.msra.mxu0 %v6220
    %6222 = vmatprep.subr.mxu0 0.0
    %v6223 = vand.u32 %v4770, 4294901760
    %v6224 = vsub.f32 %v4770, %v6223
    %6225 = vmatpush1.msra.mxu0 %v6224
    %6226 = vmatprep.subr.mxu0 0.0
    %6227 = vmatpush2.msra.mxu0 0.0
    %6228 = vmatprep.subr.mxu0 0.0
    %6229 = vmatpush2.msra.mxu0 0.0
    %6230 = vmatprep.subr.mxu0 0.0
    %6231 = vmatpush2.msra.mxu0 0.0
    %6232 = vmatprep.subr.mxu0 0.0
    %6233 = vmatpush2.msra.mxu0 0.0
    %6234 = vmatprep.subr.mxu0 0.0
    %6235 = vmatpush2.msra.mxu0 0.0
    %6236 = vmatprep.subr.mxu0 0.0
    %6237 = vmatpush2.msra.mxu0 0.0
    %6238 = vmatprep.subr.mxu0 0.0
    %6239 = vmatpush2.msra.mxu0 0.0
    %6240 = vmatprep.subr.mxu0 0.0
    %6241 = vmatpush2.msra.mxu0 0.0
    %6242 = vmatprep.subr.mxu0 0.0
    %6243 = vmatpush2.msra.mxu0 0.0
    %6244 = vmatprep.subr.mxu0 0.0
    %6245 = vmatpush2.msra.mxu0 0.0
    %6246 = vmatprep.subr.mxu0 0.0
    %6247 = vmatpush2.msra.mxu0 0.0
    %6248 = vmatprep.subr.mxu0 0.0
    %6249 = vmatpush2.msra.mxu0 0.0
    %6250 = vmatprep.subr.mxu0 0.0
    %6251 = vmatpush2.msra.mxu0 0.0
    %6252 = vmatprep.subr.mxu0 0.0
    %6253 = vmatpush2.msra.mxu0 0.0
    %6254 = vmatprep.subr.mxu0 0.0
    %6255 = vmatpush2.msra.mxu0 0.0
    %6256 = vmatprep.subr.mxu0 0.0
    %6257 = vmatpush2.msra.mxu0 0.0
    %6258 = vmatprep.mubr.f32.mxu0 0.0
    %v6259 = vand.u32 %v5973, 4294901760
    %v6260 = vsub.f32 %v5973, %v6259
    %6261 = vmatmul.mubr.f32.gmra.mxu0 %v6260
    %v6262 = vpop.f32.mrf.mxu0
    %v6263 = vadd.f32 %v6169, %v6262
    %v6264 = vpop.f32.mrf.mxu0
    %6265 = vmatprep.mubr.f32.mxu0 0.0
    %v6266 = vand.u32 %v5976, 4294901760
    %v6267 = vsub.f32 %v5976, %v6266
    %6268 = vmatmul.mubr.f32.gmra.mxu0 %v6267
    %v6269 = vpop.f32.mrf.mxu0
    %v6270 = vadd.f32 %v6175, %v6269
    %v6271 = vpop.f32.mrf.mxu0
    %6272 = vmatprep.mubr.f32.mxu0 0.0
    %v6273 = vand.u32 %v5979, 4294901760
    %v6274 = vsub.f32 %v5979, %v6273
    %6275 = vmatmul.mubr.f32.gmra.mxu0 %v6274
    %v6276 = vpop.f32.mrf.mxu0
    %v6277 = vadd.f32 %v6181, %v6276
    %v6278 = vpop.f32.mrf.mxu0
    %6279 = vmatprep.mubr.f32.mxu0 0.0
    %v6280 = vand.u32 %v5982, 4294901760
    %v6281 = vsub.f32 %v5982, %v6280
    %6282 = vmatmul.mubr.f32.gmra.mxu0 %v6281
    %v6283 = vpop.f32.mrf.mxu0
    %v6284 = vadd.f32 %v6187, %v6283
    %v6285 = vpop.f32.mrf.mxu0
    %6286 = vdwg.mxu0
    %6287 = vmatprep.subr.mxu0 0.0
    %6288 = vmatpush1.msra.mxu0 0.0
    %6289 = vmatprep.subr.mxu0 0.0
    %6290 = vmatpush1.msra.mxu0 0.0
    %6291 = vmatprep.subr.mxu0 0.0
    %6292 = vmatpush1.msra.mxu0 0.0
    %6293 = vmatprep.subr.mxu0 0.0
    %6294 = vmatpush1.msra.mxu0 0.0
    %6295 = vmatprep.subr.mxu0 0.0
    %6296 = vmatpush1.msra.mxu0 0.0
    %6297 = vmatprep.subr.mxu0 0.0
    %6298 = vmatpush1.msra.mxu0 0.0
    %6299 = vmatprep.subr.mxu0 0.0
    %6300 = vmatpush1.msra.mxu0 0.0
    %6301 = vmatprep.subr.mxu0 0.0
    %6302 = vmatpush1.msra.mxu0 0.0
    %6303 = vmatprep.subr.mxu0 0.0
    %6304 = vmatpush1.msra.mxu0 0.0
    %6305 = vmatprep.subr.mxu0 0.0
    %6306 = vmatpush1.msra.mxu0 0.0
    %6307 = vmatprep.subr.mxu0 0.0
    %6308 = vmatpush1.msra.mxu0 0.0
    %6309 = vmatprep.subr.mxu0 0.0
    %6310 = vmatpush1.msra.mxu0 0.0
    %6311 = vmatprep.subr.mxu0 0.0
    %6312 = vmatpush1.msra.mxu0 0.0
    %6313 = vmatprep.subr.mxu0 0.0
    %6314 = vmatpush1.msra.mxu0 0.0
    %6315 = vmatprep.subr.mxu0 0.0
    %v6316 = vand.u32 %v4771, 4294901760
    %6317 = vmatpush1.msra.mxu0 %v6316
    %6318 = vmatprep.subr.mxu0 0.0
    %v6319 = vand.u32 %v4770, 4294901760
    %6320 = vmatpush1.msra.mxu0 %v6319
    %6321 = vmatprep.subr.mxu0 0.0
    %6322 = vmatpush2.msra.mxu0 0.0
    %6323 = vmatprep.subr.mxu0 0.0
    %6324 = vmatpush2.msra.mxu0 0.0
    %6325 = vmatprep.subr.mxu0 0.0
    %6326 = vmatpush2.msra.mxu0 0.0
    %6327 = vmatprep.subr.mxu0 0.0
    %6328 = vmatpush2.msra.mxu0 0.0
    %6329 = vmatprep.subr.mxu0 0.0
    %6330 = vmatpush2.msra.mxu0 0.0
    %6331 = vmatprep.subr.mxu0 0.0
    %6332 = vmatpush2.msra.mxu0 0.0
    %6333 = vmatprep.subr.mxu0 0.0
    %6334 = vmatpush2.msra.mxu0 0.0
    %6335 = vmatprep.subr.mxu0 0.0
    %6336 = vmatpush2.msra.mxu0 0.0
    %6337 = vmatprep.subr.mxu0 0.0
    %6338 = vmatpush2.msra.mxu0 0.0
    %6339 = vmatprep.subr.mxu0 0.0
    %6340 = vmatpush2.msra.mxu0 0.0
    %6341 = vmatprep.subr.mxu0 0.0
    %6342 = vmatpush2.msra.mxu0 0.0
    %6343 = vmatprep.subr.mxu0 0.0
    %6344 = vmatpush2.msra.mxu0 0.0
    %6345 = vmatprep.subr.mxu0 0.0
    %6346 = vmatpush2.msra.mxu0 0.0
    %6347 = vmatprep.subr.mxu0 0.0
    %6348 = vmatpush2.msra.mxu0 0.0
    %6349 = vmatprep.subr.mxu0 0.0
    %6350 = vmatpush2.msra.mxu0 0.0
    %6351 = vmatprep.subr.mxu0 0.0
    %6352 = vmatpush2.msra.mxu0 0.0
    %6353 = vmatprep.mubr.f32.mxu0 0.0
    %v6354 = vand.u32 %v5973, 4294901760
    %v6355 = vsub.f32 %v5973, %v6354
    %v6356 = vand.u32 %v6355, 4294901760
    %6357 = vmatmul.mubr.f32.gmra.mxu0 %v6356
    %v6358 = vpop.f32.mrf.mxu0
    %v6359 = vadd.f32 %v6263, %v6358
    %v6360 = vpop.f32.mrf.mxu0
    %6361 = vmatprep.mubr.f32.mxu0 0.0
    %v6362 = vand.u32 %v5976, 4294901760
    %v6363 = vsub.f32 %v5976, %v6362
    %v6364 = vand.u32 %v6363, 4294901760
    %6365 = vmatmul.mubr.f32.gmra.mxu0 %v6364
    %v6366 = vpop.f32.mrf.mxu0
    %v6367 = vadd.f32 %v6270, %v6366
    %v6368 = vpop.f32.mrf.mxu0
    %6369 = vmatprep.mubr.f32.mxu0 0.0
    %v6370 = vand.u32 %v5979, 4294901760
    %v6371 = vsub.f32 %v5979, %v6370
    %v6372 = vand.u32 %v6371, 4294901760
    %6373 = vmatmul.mubr.f32.gmra.mxu0 %v6372
    %v6374 = vpop.f32.mrf.mxu0
    %v6375 = vadd.f32 %v6277, %v6374
    %v6376 = vpop.f32.mrf.mxu0
    %6377 = vmatprep.mubr.f32.mxu0 0.0
    %v6378 = vand.u32 %v5982, 4294901760
    %v6379 = vsub.f32 %v5982, %v6378
    %v6380 = vand.u32 %v6379, 4294901760
    %6381 = vmatmul.mubr.f32.gmra.mxu0 %v6380
    %v6382 = vpop.f32.mrf.mxu0
    %v6383 = vadd.f32 %v6284, %v6382
    %v6384 = vpop.f32.mrf.mxu0
    %6385 = vdwg.mxu0
    %6386 = vmatprep.subr.mxu0 0.0
    %6387 = vmatpush1.msra.mxu0 0.0
    %6388 = vmatprep.subr.mxu0 0.0
    %6389 = vmatpush1.msra.mxu0 0.0
    %6390 = vmatprep.subr.mxu0 0.0
    %6391 = vmatpush1.msra.mxu0 0.0
    %6392 = vmatprep.subr.mxu0 0.0
    %6393 = vmatpush1.msra.mxu0 0.0
    %6394 = vmatprep.subr.mxu0 0.0
    %6395 = vmatpush1.msra.mxu0 0.0
    %6396 = vmatprep.subr.mxu0 0.0
    %6397 = vmatpush1.msra.mxu0 0.0
    %6398 = vmatprep.subr.mxu0 0.0
    %6399 = vmatpush1.msra.mxu0 0.0
    %6400 = vmatprep.subr.mxu0 0.0
    %6401 = vmatpush1.msra.mxu0 0.0
    %6402 = vmatprep.subr.mxu0 0.0
    %6403 = vmatpush1.msra.mxu0 0.0
    %6404 = vmatprep.subr.mxu0 0.0
    %6405 = vmatpush1.msra.mxu0 0.0
    %6406 = vmatprep.subr.mxu0 0.0
    %6407 = vmatpush1.msra.mxu0 0.0
    %6408 = vmatprep.subr.mxu0 0.0
    %6409 = vmatpush1.msra.mxu0 0.0
    %6410 = vmatprep.subr.mxu0 0.0
    %6411 = vmatpush1.msra.mxu0 0.0
    %6412 = vmatprep.subr.mxu0 0.0
    %6413 = vmatpush1.msra.mxu0 0.0
    %6414 = vmatprep.subr.mxu0 0.0
    %v6415 = vand.u32 %v4771, 4294901760
    %v6416 = vsub.f32 %v4771, %v6415
    %v6417 = vand.u32 %v6416, 4294901760
    %6418 = vmatpush1.msra.mxu0 %v6417
    %6419 = vmatprep.subr.mxu0 0.0
    %v6420 = vand.u32 %v4770, 4294901760
    %v6421 = vsub.f32 %v4770, %v6420
    %v6422 = vand.u32 %v6421, 4294901760
    %6423 = vmatpush1.msra.mxu0 %v6422
    %6424 = vmatprep.subr.mxu0 0.0
    %6425 = vmatpush2.msra.mxu0 0.0
    %6426 = vmatprep.subr.mxu0 0.0
    %6427 = vmatpush2.msra.mxu0 0.0
    %6428 = vmatprep.subr.mxu0 0.0
    %6429 = vmatpush2.msra.mxu0 0.0
    %6430 = vmatprep.subr.mxu0 0.0
    %6431 = vmatpush2.msra.mxu0 0.0
    %6432 = vmatprep.subr.mxu0 0.0
    %6433 = vmatpush2.msra.mxu0 0.0
    %6434 = vmatprep.subr.mxu0 0.0
    %6435 = vmatpush2.msra.mxu0 0.0
    %6436 = vmatprep.subr.mxu0 0.0
    %6437 = vmatpush2.msra.mxu0 0.0
    %6438 = vmatprep.subr.mxu0 0.0
    %6439 = vmatpush2.msra.mxu0 0.0
    %6440 = vmatprep.subr.mxu0 0.0
    %6441 = vmatpush2.msra.mxu0 0.0
    %6442 = vmatprep.subr.mxu0 0.0
    %6443 = vmatpush2.msra.mxu0 0.0
    %6444 = vmatprep.subr.mxu0 0.0
    %6445 = vmatpush2.msra.mxu0 0.0
    %6446 = vmatprep.subr.mxu0 0.0
    %6447 = vmatpush2.msra.mxu0 0.0
    %6448 = vmatprep.subr.mxu0 0.0
    %6449 = vmatpush2.msra.mxu0 0.0
    %6450 = vmatprep.subr.mxu0 0.0
    %6451 = vmatpush2.msra.mxu0 0.0
    %6452 = vmatprep.subr.mxu0 0.0
    %6453 = vmatpush2.msra.mxu0 0.0
    %6454 = vmatprep.subr.mxu0 0.0
    %6455 = vmatpush2.msra.mxu0 0.0
    %6456 = vmatprep.mubr.f32.mxu0 0.0
    %v6457 = vand.u32 %v5973, 4294901760
    %6458 = vmatmul.mubr.f32.gmra.mxu0 %v6457
    %v6459 = vpop.f32.mrf.mxu0
    %v6460 = vadd.f32 %v6359, %v6459
    %v6461 = vpop.f32.mrf.mxu0
    %6462 = vmatprep.mubr.f32.mxu0 0.0
    %v6463 = vand.u32 %v5976, 4294901760
    %6464 = vmatmul.mubr.f32.gmra.mxu0 %v6463
    %v6465 = vpop.f32.mrf.mxu0
    %v6466 = vadd.f32 %v6367, %v6465
    %v6467 = vpop.f32.mrf.mxu0
    %6468 = vmatprep.mubr.f32.mxu0 0.0
    %v6469 = vand.u32 %v5979, 4294901760
    %6470 = vmatmul.mubr.f32.gmra.mxu0 %v6469
    %v6471 = vpop.f32.mrf.mxu0
    %v6472 = vadd.f32 %v6375, %v6471
    %v6473 = vpop.f32.mrf.mxu0
    %6474 = vmatprep.mubr.f32.mxu0 0.0
    %v6475 = vand.u32 %v5982, 4294901760
    %6476 = vmatmul.mubr.f32.gmra.mxu0 %v6475
    %v6477 = vpop.f32.mrf.mxu0
    %v6478 = vadd.f32 %v6383, %v6477
    %v6479 = vpop.f32.mrf.mxu0
    %6480 = vdwg.mxu0
    %6481 = vmatprep.subr.mxu0 0.0
    %6482 = vmatpush1.msra.mxu0 0.0
    %6483 = vmatprep.subr.mxu0 0.0
    %6484 = vmatpush1.msra.mxu0 0.0
    %6485 = vmatprep.subr.mxu0 0.0
    %6486 = vmatpush1.msra.mxu0 0.0
    %6487 = vmatprep.subr.mxu0 0.0
    %6488 = vmatpush1.msra.mxu0 0.0
    %6489 = vmatprep.subr.mxu0 0.0
    %6490 = vmatpush1.msra.mxu0 0.0
    %6491 = vmatprep.subr.mxu0 0.0
    %6492 = vmatpush1.msra.mxu0 0.0
    %6493 = vmatprep.subr.mxu0 0.0
    %6494 = vmatpush1.msra.mxu0 0.0
    %6495 = vmatprep.subr.mxu0 0.0
    %6496 = vmatpush1.msra.mxu0 0.0
    %6497 = vmatprep.subr.mxu0 0.0
    %6498 = vmatpush1.msra.mxu0 0.0
    %6499 = vmatprep.subr.mxu0 0.0
    %6500 = vmatpush1.msra.mxu0 0.0
    %6501 = vmatprep.subr.mxu0 0.0
    %6502 = vmatpush1.msra.mxu0 0.0
    %6503 = vmatprep.subr.mxu0 0.0
    %6504 = vmatpush1.msra.mxu0 0.0
    %6505 = vmatprep.subr.mxu0 0.0
    %6506 = vmatpush1.msra.mxu0 0.0
    %6507 = vmatprep.subr.mxu0 0.0
    %6508 = vmatpush1.msra.mxu0 0.0
    %6509 = vmatprep.subr.mxu0 0.0
    %v6510 = vand.u32 %v4771, 4294901760
    %6511 = vmatpush1.msra.mxu0 %v6510
    %6512 = vmatprep.subr.mxu0 0.0
    %v6513 = vand.u32 %v4770, 4294901760
    %6514 = vmatpush1.msra.mxu0 %v6513
    %6515 = vmatprep.subr.mxu0 0.0
    %6516 = vmatpush2.msra.mxu0 0.0
    %6517 = vmatprep.subr.mxu0 0.0
    %6518 = vmatpush2.msra.mxu0 0.0
    %6519 = vmatprep.subr.mxu0 0.0
    %6520 = vmatpush2.msra.mxu0 0.0
    %6521 = vmatprep.subr.mxu0 0.0
    %6522 = vmatpush2.msra.mxu0 0.0
    %6523 = vmatprep.subr.mxu0 0.0
    %6524 = vmatpush2.msra.mxu0 0.0
    %6525 = vmatprep.subr.mxu0 0.0
    %6526 = vmatpush2.msra.mxu0 0.0
    %6527 = vmatprep.subr.mxu0 0.0
    %6528 = vmatpush2.msra.mxu0 0.0
    %6529 = vmatprep.subr.mxu0 0.0
    %6530 = vmatpush2.msra.mxu0 0.0
    %6531 = vmatprep.subr.mxu0 0.0
    %6532 = vmatpush2.msra.mxu0 0.0
    %6533 = vmatprep.subr.mxu0 0.0
    %6534 = vmatpush2.msra.mxu0 0.0
    %6535 = vmatprep.subr.mxu0 0.0
    %6536 = vmatpush2.msra.mxu0 0.0
    %6537 = vmatprep.subr.mxu0 0.0
    %6538 = vmatpush2.msra.mxu0 0.0
    %6539 = vmatprep.subr.mxu0 0.0
    %6540 = vmatpush2.msra.mxu0 0.0
    %6541 = vmatprep.subr.mxu0 0.0
    %6542 = vmatpush2.msra.mxu0 0.0
    %6543 = vmatprep.subr.mxu0 0.0
    %6544 = vmatpush2.msra.mxu0 0.0
    %6545 = vmatprep.subr.mxu0 0.0
    %6546 = vmatpush2.msra.mxu0 0.0
    %6547 = vmatprep.mubr.f32.mxu0 0.0
    %v6548 = vand.u32 %v5973, 4294901760
    %6549 = vmatmul.mubr.f32.gmra.mxu0 %v6548
    %v6550 = vpop.f32.mrf.mxu0
    %v6551 = vadd.f32 %v6460, %v6550
    %v6552 = vpop.f32.mrf.mxu0
    %6553 = vmatprep.mubr.f32.mxu0 0.0
    %v6554 = vand.u32 %v5976, 4294901760
    %6555 = vmatmul.mubr.f32.gmra.mxu0 %v6554
    %v6556 = vpop.f32.mrf.mxu0
    %v6557 = vadd.f32 %v6466, %v6556
    %v6558 = vpop.f32.mrf.mxu0
    %6559 = vmatprep.mubr.f32.mxu0 0.0
    %v6560 = vand.u32 %v5979, 4294901760
    %6561 = vmatmul.mubr.f32.gmra.mxu0 %v6560
    %v6562 = vpop.f32.mrf.mxu0
    %v6563 = vadd.f32 %v6472, %v6562
    %v6564 = vpop.f32.mrf.mxu0
    %6565 = vmatprep.mubr.f32.mxu0 0.0
    %v6566 = vand.u32 %v5982, 4294901760
    %6567 = vmatmul.mubr.f32.gmra.mxu0 %v6566
    %v6568 = vpop.f32.mrf.mxu0
    %v6569 = vadd.f32 %v6478, %v6568
    %v6570 = vpop.f32.mrf.mxu0
    %6571 = vdwg.mxu0
    %v6573 = vsel %vm53, %v2397, 0
    %v6576 = vsel %vm53, %v2403, 0
    %v6579 = vsel %vm53, %v2409, 0
    %v6582 = vsel %vm53, %v2415, 0
    %6584 = vmatprep.subr.mxu0 0.0
    %6585 = vmatpush1.msra.mxu0 0.0
    %6586 = vmatprep.subr.mxu0 0.0
    %6587 = vmatpush1.msra.mxu0 0.0
    %6588 = vmatprep.subr.mxu0 0.0
    %6589 = vmatpush1.msra.mxu0 0.0
    %6590 = vmatprep.subr.mxu0 0.0
    %6591 = vmatpush1.msra.mxu0 0.0
    %6592 = vmatprep.subr.mxu0 0.0
    %6593 = vmatpush1.msra.mxu0 0.0
    %6594 = vmatprep.subr.mxu0 0.0
    %6595 = vmatpush1.msra.mxu0 0.0
    %6596 = vmatprep.subr.mxu0 0.0
    %6597 = vmatpush1.msra.mxu0 0.0
    %6598 = vmatprep.subr.mxu0 0.0
    %6599 = vmatpush1.msra.mxu0 0.0
    %6600 = vmatprep.subr.mxu0 0.0
    %6601 = vmatpush1.msra.mxu0 0.0
    %6602 = vmatprep.subr.mxu0 0.0
    %6603 = vmatpush1.msra.mxu0 0.0
    %6604 = vmatprep.subr.mxu0 0.0
    %6605 = vmatpush1.msra.mxu0 0.0
    %6606 = vmatprep.subr.mxu0 0.0
    %6607 = vmatpush1.msra.mxu0 0.0
    %6608 = vmatprep.subr.mxu0 0.0
    %6609 = vmatpush1.msra.mxu0 0.0
    %6610 = vmatprep.subr.mxu0 0.0
    %6611 = vmatpush1.msra.mxu0 0.0
    %6612 = vmatprep.subr.mxu0 0.0
    %v6613 = vand.u32 %v4771, 4294901760
    %6614 = vmatpush1.msra.mxu0 %v6613
    %6615 = vmatprep.subr.mxu0 0.0
    %v6616 = vand.u32 %v4770, 4294901760
    %6617 = vmatpush1.msra.mxu0 %v6616
    %6618 = vmatprep.subr.mxu0 0.0
    %6619 = vmatpush2.msra.mxu0 0.0
    %6620 = vmatprep.subr.mxu0 0.0
    %6621 = vmatpush2.msra.mxu0 0.0
    %6622 = vmatprep.subr.mxu0 0.0
    %6623 = vmatpush2.msra.mxu0 0.0
    %6624 = vmatprep.subr.mxu0 0.0
    %6625 = vmatpush2.msra.mxu0 0.0
    %6626 = vmatprep.subr.mxu0 0.0
    %6627 = vmatpush2.msra.mxu0 0.0
    %6628 = vmatprep.subr.mxu0 0.0
    %6629 = vmatpush2.msra.mxu0 0.0
    %6630 = vmatprep.subr.mxu0 0.0
    %6631 = vmatpush2.msra.mxu0 0.0
    %6632 = vmatprep.subr.mxu0 0.0
    %6633 = vmatpush2.msra.mxu0 0.0
    %6634 = vmatprep.subr.mxu0 0.0
    %6635 = vmatpush2.msra.mxu0 0.0
    %6636 = vmatprep.subr.mxu0 0.0
    %6637 = vmatpush2.msra.mxu0 0.0
    %6638 = vmatprep.subr.mxu0 0.0
    %6639 = vmatpush2.msra.mxu0 0.0
    %6640 = vmatprep.subr.mxu0 0.0
    %6641 = vmatpush2.msra.mxu0 0.0
    %6642 = vmatprep.subr.mxu0 0.0
    %6643 = vmatpush2.msra.mxu0 0.0
    %6644 = vmatprep.subr.mxu0 0.0
    %6645 = vmatpush2.msra.mxu0 0.0
    %6646 = vmatprep.subr.mxu0 0.0
    %6647 = vmatpush2.msra.mxu0 0.0
    %6648 = vmatprep.subr.mxu0 0.0
    %6649 = vmatpush2.msra.mxu0 0.0
    %6650 = vmatprep.mubr.f32.mxu0 0.0
    %v6651 = vand.u32 %v6573, 4294901760
    %v6652 = vsub.f32 %v6573, %v6651
    %v6653 = vand.u32 %v6652, 4294901760
    %v6654 = vsub.f32 %v6652, %v6653
    %v6655 = vand.u32 %v6654, 4294901760
    %6656 = vmatmul.mubr.f32.gmra.mxu0 %v6655
    %v6657 = vpop.f32.mrf.mxu0
    %v6658 = vadd.f32 0.0, %v6657
    %v6659 = vpop.f32.mrf.mxu0
    %6660 = vmatprep.mubr.f32.mxu0 0.0
    %v6661 = vand.u32 %v6576, 4294901760
    %v6662 = vsub.f32 %v6576, %v6661
    %v6663 = vand.u32 %v6662, 4294901760
    %v6664 = vsub.f32 %v6662, %v6663
    %v6665 = vand.u32 %v6664, 4294901760
    %6666 = vmatmul.mubr.f32.gmra.mxu0 %v6665
    %v6667 = vpop.f32.mrf.mxu0
    %v6668 = vadd.f32 0.0, %v6667
    %v6669 = vpop.f32.mrf.mxu0
    %6670 = vmatprep.mubr.f32.mxu0 0.0
    %v6671 = vand.u32 %v6579, 4294901760
    %v6672 = vsub.f32 %v6579, %v6671
    %v6673 = vand.u32 %v6672, 4294901760
    %v6674 = vsub.f32 %v6672, %v6673
    %v6675 = vand.u32 %v6674, 4294901760
    %6676 = vmatmul.mubr.f32.gmra.mxu0 %v6675
    %v6677 = vpop.f32.mrf.mxu0
    %v6678 = vadd.f32 0.0, %v6677
    %v6679 = vpop.f32.mrf.mxu0
    %6680 = vmatprep.mubr.f32.mxu0 0.0
    %v6681 = vand.u32 %v6582, 4294901760
    %v6682 = vsub.f32 %v6582, %v6681
    %v6683 = vand.u32 %v6682, 4294901760
    %v6684 = vsub.f32 %v6682, %v6683
    %v6685 = vand.u32 %v6684, 4294901760
    %6686 = vmatmul.mubr.f32.gmra.mxu0 %v6685
    %v6687 = vpop.f32.mrf.mxu0
    %v6688 = vadd.f32 0.0, %v6687
    %v6689 = vpop.f32.mrf.mxu0
    %6690 = vdwg.mxu0
    %6691 = vmatprep.subr.mxu0 0.0
    %6692 = vmatpush1.msra.mxu0 0.0
    %6693 = vmatprep.subr.mxu0 0.0
    %6694 = vmatpush1.msra.mxu0 0.0
    %6695 = vmatprep.subr.mxu0 0.0
    %6696 = vmatpush1.msra.mxu0 0.0
    %6697 = vmatprep.subr.mxu0 0.0
    %6698 = vmatpush1.msra.mxu0 0.0
    %6699 = vmatprep.subr.mxu0 0.0
    %6700 = vmatpush1.msra.mxu0 0.0
    %6701 = vmatprep.subr.mxu0 0.0
    %6702 = vmatpush1.msra.mxu0 0.0
    %6703 = vmatprep.subr.mxu0 0.0
    %6704 = vmatpush1.msra.mxu0 0.0
    %6705 = vmatprep.subr.mxu0 0.0
    %6706 = vmatpush1.msra.mxu0 0.0
    %6707 = vmatprep.subr.mxu0 0.0
    %6708 = vmatpush1.msra.mxu0 0.0
    %6709 = vmatprep.subr.mxu0 0.0
    %6710 = vmatpush1.msra.mxu0 0.0
    %6711 = vmatprep.subr.mxu0 0.0
    %6712 = vmatpush1.msra.mxu0 0.0
    %6713 = vmatprep.subr.mxu0 0.0
    %6714 = vmatpush1.msra.mxu0 0.0
    %6715 = vmatprep.subr.mxu0 0.0
    %6716 = vmatpush1.msra.mxu0 0.0
    %6717 = vmatprep.subr.mxu0 0.0
    %6718 = vmatpush1.msra.mxu0 0.0
    %6719 = vmatprep.subr.mxu0 0.0
    %v6720 = vand.u32 %v4771, 4294901760
    %v6721 = vsub.f32 %v4771, %v6720
    %v6722 = vand.u32 %v6721, 4294901760
    %v6723 = vsub.f32 %v6721, %v6722
    %v6724 = vand.u32 %v6723, 4294901760
    %6725 = vmatpush1.msra.mxu0 %v6724
    %6726 = vmatprep.subr.mxu0 0.0
    %v6727 = vand.u32 %v4770, 4294901760
    %v6728 = vsub.f32 %v4770, %v6727
    %v6729 = vand.u32 %v6728, 4294901760
    %v6730 = vsub.f32 %v6728, %v6729
    %v6731 = vand.u32 %v6730, 4294901760
    %6732 = vmatpush1.msra.mxu0 %v6731
    %6733 = vmatprep.subr.mxu0 0.0
    %6734 = vmatpush2.msra.mxu0 0.0
    %6735 = vmatprep.subr.mxu0 0.0
    %6736 = vmatpush2.msra.mxu0 0.0
    %6737 = vmatprep.subr.mxu0 0.0
    %6738 = vmatpush2.msra.mxu0 0.0
    %6739 = vmatprep.subr.mxu0 0.0
    %6740 = vmatpush2.msra.mxu0 0.0
    %6741 = vmatprep.subr.mxu0 0.0
    %6742 = vmatpush2.msra.mxu0 0.0
    %6743 = vmatprep.subr.mxu0 0.0
    %6744 = vmatpush2.msra.mxu0 0.0
    %6745 = vmatprep.subr.mxu0 0.0
    %6746 = vmatpush2.msra.mxu0 0.0
    %6747 = vmatprep.subr.mxu0 0.0
    %6748 = vmatpush2.msra.mxu0 0.0
    %6749 = vmatprep.subr.mxu0 0.0
    %6750 = vmatpush2.msra.mxu0 0.0
    %6751 = vmatprep.subr.mxu0 0.0
    %6752 = vmatpush2.msra.mxu0 0.0
    %6753 = vmatprep.subr.mxu0 0.0
    %6754 = vmatpush2.msra.mxu0 0.0
    %6755 = vmatprep.subr.mxu0 0.0
    %6756 = vmatpush2.msra.mxu0 0.0
    %6757 = vmatprep.subr.mxu0 0.0
    %6758 = vmatpush2.msra.mxu0 0.0
    %6759 = vmatprep.subr.mxu0 0.0
    %6760 = vmatpush2.msra.mxu0 0.0
    %6761 = vmatprep.subr.mxu0 0.0
    %6762 = vmatpush2.msra.mxu0 0.0
    %6763 = vmatprep.subr.mxu0 0.0
    %6764 = vmatpush2.msra.mxu0 0.0
    %6765 = vmatprep.mubr.f32.mxu0 0.0
    %v6766 = vand.u32 %v6573, 4294901760
    %6767 = vmatmul.mubr.f32.gmra.mxu0 %v6766
    %v6768 = vpop.f32.mrf.mxu0
    %v6769 = vadd.f32 %v6658, %v6768
    %v6770 = vpop.f32.mrf.mxu0
    %6771 = vmatprep.mubr.f32.mxu0 0.0
    %v6772 = vand.u32 %v6576, 4294901760
    %6773 = vmatmul.mubr.f32.gmra.mxu0 %v6772
    %v6774 = vpop.f32.mrf.mxu0
    %v6775 = vadd.f32 %v6668, %v6774
    %v6776 = vpop.f32.mrf.mxu0
    %6777 = vmatprep.mubr.f32.mxu0 0.0
    %v6778 = vand.u32 %v6579, 4294901760
    %6779 = vmatmul.mubr.f32.gmra.mxu0 %v6778
    %v6780 = vpop.f32.mrf.mxu0
    %v6781 = vadd.f32 %v6678, %v6780
    %v6782 = vpop.f32.mrf.mxu0
    %6783 = vmatprep.mubr.f32.mxu0 0.0
    %v6784 = vand.u32 %v6582, 4294901760
    %6785 = vmatmul.mubr.f32.gmra.mxu0 %v6784
    %v6786 = vpop.f32.mrf.mxu0
    %v6787 = vadd.f32 %v6688, %v6786
    %v6788 = vpop.f32.mrf.mxu0
    %6789 = vdwg.mxu0
    %6790 = vmatprep.subr.mxu0 0.0
    %6791 = vmatpush1.msra.mxu0 0.0
    %6792 = vmatprep.subr.mxu0 0.0
    %6793 = vmatpush1.msra.mxu0 0.0
    %6794 = vmatprep.subr.mxu0 0.0
    %6795 = vmatpush1.msra.mxu0 0.0
    %6796 = vmatprep.subr.mxu0 0.0
    %6797 = vmatpush1.msra.mxu0 0.0
    %6798 = vmatprep.subr.mxu0 0.0
    %6799 = vmatpush1.msra.mxu0 0.0
    %6800 = vmatprep.subr.mxu0 0.0
    %6801 = vmatpush1.msra.mxu0 0.0
    %6802 = vmatprep.subr.mxu0 0.0
    %6803 = vmatpush1.msra.mxu0 0.0
    %6804 = vmatprep.subr.mxu0 0.0
    %6805 = vmatpush1.msra.mxu0 0.0
    %6806 = vmatprep.subr.mxu0 0.0
    %6807 = vmatpush1.msra.mxu0 0.0
    %6808 = vmatprep.subr.mxu0 0.0
    %6809 = vmatpush1.msra.mxu0 0.0
    %6810 = vmatprep.subr.mxu0 0.0
    %6811 = vmatpush1.msra.mxu0 0.0
    %6812 = vmatprep.subr.mxu0 0.0
    %6813 = vmatpush1.msra.mxu0 0.0
    %6814 = vmatprep.subr.mxu0 0.0
    %6815 = vmatpush1.msra.mxu0 0.0
    %6816 = vmatprep.subr.mxu0 0.0
    %6817 = vmatpush1.msra.mxu0 0.0
    %6818 = vmatprep.subr.mxu0 0.0
    %v6819 = vand.u32 %v4771, 4294901760
    %v6820 = vsub.f32 %v4771, %v6819
    %6821 = vmatpush1.msra.mxu0 %v6820
    %6822 = vmatprep.subr.mxu0 0.0
    %v6823 = vand.u32 %v4770, 4294901760
    %v6824 = vsub.f32 %v4770, %v6823
    %6825 = vmatpush1.msra.mxu0 %v6824
    %6826 = vmatprep.subr.mxu0 0.0
    %6827 = vmatpush2.msra.mxu0 0.0
    %6828 = vmatprep.subr.mxu0 0.0
    %6829 = vmatpush2.msra.mxu0 0.0
    %6830 = vmatprep.subr.mxu0 0.0
    %6831 = vmatpush2.msra.mxu0 0.0
    %6832 = vmatprep.subr.mxu0 0.0
    %6833 = vmatpush2.msra.mxu0 0.0
    %6834 = vmatprep.subr.mxu0 0.0
    %6835 = vmatpush2.msra.mxu0 0.0
    %6836 = vmatprep.subr.mxu0 0.0
    %6837 = vmatpush2.msra.mxu0 0.0
    %6838 = vmatprep.subr.mxu0 0.0
    %6839 = vmatpush2.msra.mxu0 0.0
    %6840 = vmatprep.subr.mxu0 0.0
    %6841 = vmatpush2.msra.mxu0 0.0
    %6842 = vmatprep.subr.mxu0 0.0
    %6843 = vmatpush2.msra.mxu0 0.0
    %6844 = vmatprep.subr.mxu0 0.0
    %6845 = vmatpush2.msra.mxu0 0.0
    %6846 = vmatprep.subr.mxu0 0.0
    %6847 = vmatpush2.msra.mxu0 0.0
    %6848 = vmatprep.subr.mxu0 0.0
    %6849 = vmatpush2.msra.mxu0 0.0
    %6850 = vmatprep.subr.mxu0 0.0
    %6851 = vmatpush2.msra.mxu0 0.0
    %6852 = vmatprep.subr.mxu0 0.0
    %6853 = vmatpush2.msra.mxu0 0.0
    %6854 = vmatprep.subr.mxu0 0.0
    %6855 = vmatpush2.msra.mxu0 0.0
    %6856 = vmatprep.subr.mxu0 0.0
    %6857 = vmatpush2.msra.mxu0 0.0
    %6858 = vmatprep.mubr.f32.mxu0 0.0
    %v6859 = vand.u32 %v6573, 4294901760
    %v6860 = vsub.f32 %v6573, %v6859
    %6861 = vmatmul.mubr.f32.gmra.mxu0 %v6860
    %v6862 = vpop.f32.mrf.mxu0
    %v6863 = vadd.f32 %v6769, %v6862
    %v6864 = vpop.f32.mrf.mxu0
    %6865 = vmatprep.mubr.f32.mxu0 0.0
    %v6866 = vand.u32 %v6576, 4294901760
    %v6867 = vsub.f32 %v6576, %v6866
    %6868 = vmatmul.mubr.f32.gmra.mxu0 %v6867
    %v6869 = vpop.f32.mrf.mxu0
    %v6870 = vadd.f32 %v6775, %v6869
    %v6871 = vpop.f32.mrf.mxu0
    %6872 = vmatprep.mubr.f32.mxu0 0.0
    %v6873 = vand.u32 %v6579, 4294901760
    %v6874 = vsub.f32 %v6579, %v6873
    %6875 = vmatmul.mubr.f32.gmra.mxu0 %v6874
    %v6876 = vpop.f32.mrf.mxu0
    %v6877 = vadd.f32 %v6781, %v6876
    %v6878 = vpop.f32.mrf.mxu0
    %6879 = vmatprep.mubr.f32.mxu0 0.0
    %v6880 = vand.u32 %v6582, 4294901760
    %v6881 = vsub.f32 %v6582, %v6880
    %6882 = vmatmul.mubr.f32.gmra.mxu0 %v6881
    %v6883 = vpop.f32.mrf.mxu0
    %v6884 = vadd.f32 %v6787, %v6883
    %v6885 = vpop.f32.mrf.mxu0
    %6886 = vdwg.mxu0
    %6887 = vmatprep.subr.mxu0 0.0
    %6888 = vmatpush1.msra.mxu0 0.0
    %6889 = vmatprep.subr.mxu0 0.0
    %6890 = vmatpush1.msra.mxu0 0.0
    %6891 = vmatprep.subr.mxu0 0.0
    %6892 = vmatpush1.msra.mxu0 0.0
    %6893 = vmatprep.subr.mxu0 0.0
    %6894 = vmatpush1.msra.mxu0 0.0
    %6895 = vmatprep.subr.mxu0 0.0
    %6896 = vmatpush1.msra.mxu0 0.0
    %6897 = vmatprep.subr.mxu0 0.0
    %6898 = vmatpush1.msra.mxu0 0.0
    %6899 = vmatprep.subr.mxu0 0.0
    %6900 = vmatpush1.msra.mxu0 0.0
    %6901 = vmatprep.subr.mxu0 0.0
    %6902 = vmatpush1.msra.mxu0 0.0
    %6903 = vmatprep.subr.mxu0 0.0
    %6904 = vmatpush1.msra.mxu0 0.0
    %6905 = vmatprep.subr.mxu0 0.0
    %6906 = vmatpush1.msra.mxu0 0.0
    %6907 = vmatprep.subr.mxu0 0.0
    %6908 = vmatpush1.msra.mxu0 0.0
    %6909 = vmatprep.subr.mxu0 0.0
    %6910 = vmatpush1.msra.mxu0 0.0
    %6911 = vmatprep.subr.mxu0 0.0
    %6912 = vmatpush1.msra.mxu0 0.0
    %6913 = vmatprep.subr.mxu0 0.0
    %6914 = vmatpush1.msra.mxu0 0.0
    %6915 = vmatprep.subr.mxu0 0.0
    %v6916 = vand.u32 %v4771, 4294901760
    %6917 = vmatpush1.msra.mxu0 %v6916
    %6918 = vmatprep.subr.mxu0 0.0
    %v6919 = vand.u32 %v4770, 4294901760
    %6920 = vmatpush1.msra.mxu0 %v6919
    %6921 = vmatprep.subr.mxu0 0.0
    %6922 = vmatpush2.msra.mxu0 0.0
    %6923 = vmatprep.subr.mxu0 0.0
    %6924 = vmatpush2.msra.mxu0 0.0
    %6925 = vmatprep.subr.mxu0 0.0
    %6926 = vmatpush2.msra.mxu0 0.0
    %6927 = vmatprep.subr.mxu0 0.0
    %6928 = vmatpush2.msra.mxu0 0.0
    %6929 = vmatprep.subr.mxu0 0.0
    %6930 = vmatpush2.msra.mxu0 0.0
    %6931 = vmatprep.subr.mxu0 0.0
    %6932 = vmatpush2.msra.mxu0 0.0
    %6933 = vmatprep.subr.mxu0 0.0
    %6934 = vmatpush2.msra.mxu0 0.0
    %6935 = vmatprep.subr.mxu0 0.0
    %6936 = vmatpush2.msra.mxu0 0.0
    %6937 = vmatprep.subr.mxu0 0.0
    %6938 = vmatpush2.msra.mxu0 0.0
    %6939 = vmatprep.subr.mxu0 0.0
    %6940 = vmatpush2.msra.mxu0 0.0
    %6941 = vmatprep.subr.mxu0 0.0
    %6942 = vmatpush2.msra.mxu0 0.0
    %6943 = vmatprep.subr.mxu0 0.0
    %6944 = vmatpush2.msra.mxu0 0.0
    %6945 = vmatprep.subr.mxu0 0.0
    %6946 = vmatpush2.msra.mxu0 0.0
    %6947 = vmatprep.subr.mxu0 0.0
    %6948 = vmatpush2.msra.mxu0 0.0
    %6949 = vmatprep.subr.mxu0 0.0
    %6950 = vmatpush2.msra.mxu0 0.0
    %6951 = vmatprep.subr.mxu0 0.0
    %6952 = vmatpush2.msra.mxu0 0.0
    %6953 = vmatprep.mubr.f32.mxu0 0.0
    %v6954 = vand.u32 %v6573, 4294901760
    %v6955 = vsub.f32 %v6573, %v6954
    %v6956 = vand.u32 %v6955, 4294901760
    %6957 = vmatmul.mubr.f32.gmra.mxu0 %v6956
    %v6958 = vpop.f32.mrf.mxu0
    %v6959 = vadd.f32 %v6863, %v6958
    %v6960 = vpop.f32.mrf.mxu0
    %6961 = vmatprep.mubr.f32.mxu0 0.0
    %v6962 = vand.u32 %v6576, 4294901760
    %v6963 = vsub.f32 %v6576, %v6962
    %v6964 = vand.u32 %v6963, 4294901760
    %6965 = vmatmul.mubr.f32.gmra.mxu0 %v6964
    %v6966 = vpop.f32.mrf.mxu0
    %v6967 = vadd.f32 %v6870, %v6966
    %v6968 = vpop.f32.mrf.mxu0
    %6969 = vmatprep.mubr.f32.mxu0 0.0
    %v6970 = vand.u32 %v6579, 4294901760
    %v6971 = vsub.f32 %v6579, %v6970
    %v6972 = vand.u32 %v6971, 4294901760
    %6973 = vmatmul.mubr.f32.gmra.mxu0 %v6972
    %v6974 = vpop.f32.mrf.mxu0
    %v6975 = vadd.f32 %v6877, %v6974
    %v6976 = vpop.f32.mrf.mxu0
    %6977 = vmatprep.mubr.f32.mxu0 0.0
    %v6978 = vand.u32 %v6582, 4294901760
    %v6979 = vsub.f32 %v6582, %v6978
    %v6980 = vand.u32 %v6979, 4294901760
    %6981 = vmatmul.mubr.f32.gmra.mxu0 %v6980
    %v6982 = vpop.f32.mrf.mxu0
    %v6983 = vadd.f32 %v6884, %v6982
    %v6984 = vpop.f32.mrf.mxu0
    %6985 = vdwg.mxu0
    %6986 = vmatprep.subr.mxu0 0.0
    %6987 = vmatpush1.msra.mxu0 0.0
    %6988 = vmatprep.subr.mxu0 0.0
    %6989 = vmatpush1.msra.mxu0 0.0
    %6990 = vmatprep.subr.mxu0 0.0
    %6991 = vmatpush1.msra.mxu0 0.0
    %6992 = vmatprep.subr.mxu0 0.0
    %6993 = vmatpush1.msra.mxu0 0.0
    %6994 = vmatprep.subr.mxu0 0.0
    %6995 = vmatpush1.msra.mxu0 0.0
    %6996 = vmatprep.subr.mxu0 0.0
    %6997 = vmatpush1.msra.mxu0 0.0
    %6998 = vmatprep.subr.mxu0 0.0
    %6999 = vmatpush1.msra.mxu0 0.0
    %7000 = vmatprep.subr.mxu0 0.0
    %7001 = vmatpush1.msra.mxu0 0.0
    %7002 = vmatprep.subr.mxu0 0.0
    %7003 = vmatpush1.msra.mxu0 0.0
    %7004 = vmatprep.subr.mxu0 0.0
    %7005 = vmatpush1.msra.mxu0 0.0
    %7006 = vmatprep.subr.mxu0 0.0
    %7007 = vmatpush1.msra.mxu0 0.0
    %7008 = vmatprep.subr.mxu0 0.0
    %7009 = vmatpush1.msra.mxu0 0.0
    %7010 = vmatprep.subr.mxu0 0.0
    %7011 = vmatpush1.msra.mxu0 0.0
    %7012 = vmatprep.subr.mxu0 0.0
    %7013 = vmatpush1.msra.mxu0 0.0
    %7014 = vmatprep.subr.mxu0 0.0
    %v7015 = vand.u32 %v4771, 4294901760
    %v7016 = vsub.f32 %v4771, %v7015
    %v7017 = vand.u32 %v7016, 4294901760
    %7018 = vmatpush1.msra.mxu0 %v7017
    %7019 = vmatprep.subr.mxu0 0.0
    %v7020 = vand.u32 %v4770, 4294901760
    %v7021 = vsub.f32 %v4770, %v7020
    %v7022 = vand.u32 %v7021, 4294901760
    %7023 = vmatpush1.msra.mxu0 %v7022
    %7024 = vmatprep.subr.mxu0 0.0
    %7025 = vmatpush2.msra.mxu0 0.0
    %7026 = vmatprep.subr.mxu0 0.0
    %7027 = vmatpush2.msra.mxu0 0.0
    %7028 = vmatprep.subr.mxu0 0.0
    %7029 = vmatpush2.msra.mxu0 0.0
    %7030 = vmatprep.subr.mxu0 0.0
    %7031 = vmatpush2.msra.mxu0 0.0
    %7032 = vmatprep.subr.mxu0 0.0
    %7033 = vmatpush2.msra.mxu0 0.0
    %7034 = vmatprep.subr.mxu0 0.0
    %7035 = vmatpush2.msra.mxu0 0.0
    %7036 = vmatprep.subr.mxu0 0.0
    %7037 = vmatpush2.msra.mxu0 0.0
    %7038 = vmatprep.subr.mxu0 0.0
    %7039 = vmatpush2.msra.mxu0 0.0
    %7040 = vmatprep.subr.mxu0 0.0
    %7041 = vmatpush2.msra.mxu0 0.0
    %7042 = vmatprep.subr.mxu0 0.0
    %7043 = vmatpush2.msra.mxu0 0.0
    %7044 = vmatprep.subr.mxu0 0.0
    %7045 = vmatpush2.msra.mxu0 0.0
    %7046 = vmatprep.subr.mxu0 0.0
    %7047 = vmatpush2.msra.mxu0 0.0
    %7048 = vmatprep.subr.mxu0 0.0
    %7049 = vmatpush2.msra.mxu0 0.0
    %7050 = vmatprep.subr.mxu0 0.0
    %7051 = vmatpush2.msra.mxu0 0.0
    %7052 = vmatprep.subr.mxu0 0.0
    %7053 = vmatpush2.msra.mxu0 0.0
    %7054 = vmatprep.subr.mxu0 0.0
    %7055 = vmatpush2.msra.mxu0 0.0
    %7056 = vmatprep.mubr.f32.mxu0 0.0
    %v7057 = vand.u32 %v6573, 4294901760
    %7058 = vmatmul.mubr.f32.gmra.mxu0 %v7057
    %v7059 = vpop.f32.mrf.mxu0
    %v7060 = vadd.f32 %v6959, %v7059
    %v7061 = vpop.f32.mrf.mxu0
    %7062 = vmatprep.mubr.f32.mxu0 0.0
    %v7063 = vand.u32 %v6576, 4294901760
    %7064 = vmatmul.mubr.f32.gmra.mxu0 %v7063
    %v7065 = vpop.f32.mrf.mxu0
    %v7066 = vadd.f32 %v6967, %v7065
    %v7067 = vpop.f32.mrf.mxu0
    %7068 = vmatprep.mubr.f32.mxu0 0.0
    %v7069 = vand.u32 %v6579, 4294901760
    %7070 = vmatmul.mubr.f32.gmra.mxu0 %v7069
    %v7071 = vpop.f32.mrf.mxu0
    %v7072 = vadd.f32 %v6975, %v7071
    %v7073 = vpop.f32.mrf.mxu0
    %7074 = vmatprep.mubr.f32.mxu0 0.0
    %v7075 = vand.u32 %v6582, 4294901760
    %7076 = vmatmul.mubr.f32.gmra.mxu0 %v7075
    %v7077 = vpop.f32.mrf.mxu0
    %v7078 = vadd.f32 %v6983, %v7077
    %v7079 = vpop.f32.mrf.mxu0
    %7080 = vdwg.mxu0
    %7081 = vmatprep.subr.mxu0 0.0
    %7082 = vmatpush1.msra.mxu0 0.0
    %7083 = vmatprep.subr.mxu0 0.0
    %7084 = vmatpush1.msra.mxu0 0.0
    %7085 = vmatprep.subr.mxu0 0.0
    %7086 = vmatpush1.msra.mxu0 0.0
    %7087 = vmatprep.subr.mxu0 0.0
    %7088 = vmatpush1.msra.mxu0 0.0
    %7089 = vmatprep.subr.mxu0 0.0
    %7090 = vmatpush1.msra.mxu0 0.0
    %7091 = vmatprep.subr.mxu0 0.0
    %7092 = vmatpush1.msra.mxu0 0.0
    %7093 = vmatprep.subr.mxu0 0.0
    %7094 = vmatpush1.msra.mxu0 0.0
    %7095 = vmatprep.subr.mxu0 0.0
    %7096 = vmatpush1.msra.mxu0 0.0
    %7097 = vmatprep.subr.mxu0 0.0
    %7098 = vmatpush1.msra.mxu0 0.0
    %7099 = vmatprep.subr.mxu0 0.0
    %7100 = vmatpush1.msra.mxu0 0.0
    %7101 = vmatprep.subr.mxu0 0.0
    %7102 = vmatpush1.msra.mxu0 0.0
    %7103 = vmatprep.subr.mxu0 0.0
    %7104 = vmatpush1.msra.mxu0 0.0
    %7105 = vmatprep.subr.mxu0 0.0
    %7106 = vmatpush1.msra.mxu0 0.0
    %7107 = vmatprep.subr.mxu0 0.0
    %7108 = vmatpush1.msra.mxu0 0.0
    %7109 = vmatprep.subr.mxu0 0.0
    %v7110 = vand.u32 %v4771, 4294901760
    %7111 = vmatpush1.msra.mxu0 %v7110
    %7112 = vmatprep.subr.mxu0 0.0
    %v7113 = vand.u32 %v4770, 4294901760
    %7114 = vmatpush1.msra.mxu0 %v7113
    %7115 = vmatprep.subr.mxu0 0.0
    %7116 = vmatpush2.msra.mxu0 0.0
    %7117 = vmatprep.subr.mxu0 0.0
    %7118 = vmatpush2.msra.mxu0 0.0
    %7119 = vmatprep.subr.mxu0 0.0
    %7120 = vmatpush2.msra.mxu0 0.0
    %7121 = vmatprep.subr.mxu0 0.0
    %7122 = vmatpush2.msra.mxu0 0.0
    %7123 = vmatprep.subr.mxu0 0.0
    %7124 = vmatpush2.msra.mxu0 0.0
    %7125 = vmatprep.subr.mxu0 0.0
    %7126 = vmatpush2.msra.mxu0 0.0
    %7127 = vmatprep.subr.mxu0 0.0
    %7128 = vmatpush2.msra.mxu0 0.0
    %7129 = vmatprep.subr.mxu0 0.0
    %7130 = vmatpush2.msra.mxu0 0.0
    %7131 = vmatprep.subr.mxu0 0.0
    %7132 = vmatpush2.msra.mxu0 0.0
    %7133 = vmatprep.subr.mxu0 0.0
    %7134 = vmatpush2.msra.mxu0 0.0
    %7135 = vmatprep.subr.mxu0 0.0
    %7136 = vmatpush2.msra.mxu0 0.0
    %7137 = vmatprep.subr.mxu0 0.0
    %7138 = vmatpush2.msra.mxu0 0.0
    %7139 = vmatprep.subr.mxu0 0.0
    %7140 = vmatpush2.msra.mxu0 0.0
    %7141 = vmatprep.subr.mxu0 0.0
    %7142 = vmatpush2.msra.mxu0 0.0
    %7143 = vmatprep.subr.mxu0 0.0
    %7144 = vmatpush2.msra.mxu0 0.0
    %7145 = vmatprep.subr.mxu0 0.0
    %7146 = vmatpush2.msra.mxu0 0.0
    %7147 = vmatprep.mubr.f32.mxu0 0.0
    %v7148 = vand.u32 %v6573, 4294901760
    %7149 = vmatmul.mubr.f32.gmra.mxu0 %v7148
    %v7150 = vpop.f32.mrf.mxu0
    %v7151 = vadd.f32 %v7060, %v7150
    %v7152 = vpop.f32.mrf.mxu0
    %7153 = vmatprep.mubr.f32.mxu0 0.0
    %v7154 = vand.u32 %v6576, 4294901760
    %7155 = vmatmul.mubr.f32.gmra.mxu0 %v7154
    %v7156 = vpop.f32.mrf.mxu0
    %v7157 = vadd.f32 %v7066, %v7156
    %v7158 = vpop.f32.mrf.mxu0
    %7159 = vmatprep.mubr.f32.mxu0 0.0
    %v7160 = vand.u32 %v6579, 4294901760
    %7161 = vmatmul.mubr.f32.gmra.mxu0 %v7160
    %v7162 = vpop.f32.mrf.mxu0
    %v7163 = vadd.f32 %v7072, %v7162
    %v7164 = vpop.f32.mrf.mxu0
    %7165 = vmatprep.mubr.f32.mxu0 0.0
    %v7166 = vand.u32 %v6582, 4294901760
    %7167 = vmatmul.mubr.f32.gmra.mxu0 %v7166
    %v7168 = vpop.f32.mrf.mxu0
    %v7169 = vadd.f32 %v7078, %v7168
    %v7170 = vpop.f32.mrf.mxu0
    %7171 = vdwg.mxu0
    %v7173 = vsel %vm53, %v2985, 0
    %v7176 = vsel %vm53, %v2991, 0
    %v7179 = vsel %vm53, %v2997, 0
    %v7182 = vsel %vm53, %v3003, 0
    %7184 = vmatprep.subr.mxu0 0.0
    %7185 = vmatpush1.msra.mxu0 0.0
    %7186 = vmatprep.subr.mxu0 0.0
    %7187 = vmatpush1.msra.mxu0 0.0
    %7188 = vmatprep.subr.mxu0 0.0
    %7189 = vmatpush1.msra.mxu0 0.0
    %7190 = vmatprep.subr.mxu0 0.0
    %7191 = vmatpush1.msra.mxu0 0.0
    %7192 = vmatprep.subr.mxu0 0.0
    %7193 = vmatpush1.msra.mxu0 0.0
    %7194 = vmatprep.subr.mxu0 0.0
    %7195 = vmatpush1.msra.mxu0 0.0
    %7196 = vmatprep.subr.mxu0 0.0
    %7197 = vmatpush1.msra.mxu0 0.0
    %7198 = vmatprep.subr.mxu0 0.0
    %7199 = vmatpush1.msra.mxu0 0.0
    %7200 = vmatprep.subr.mxu0 0.0
    %7201 = vmatpush1.msra.mxu0 0.0
    %7202 = vmatprep.subr.mxu0 0.0
    %7203 = vmatpush1.msra.mxu0 0.0
    %7204 = vmatprep.subr.mxu0 0.0
    %7205 = vmatpush1.msra.mxu0 0.0
    %7206 = vmatprep.subr.mxu0 0.0
    %7207 = vmatpush1.msra.mxu0 0.0
    %7208 = vmatprep.subr.mxu0 0.0
    %7209 = vmatpush1.msra.mxu0 0.0
    %7210 = vmatprep.subr.mxu0 0.0
    %7211 = vmatpush1.msra.mxu0 0.0
    %7212 = vmatprep.subr.mxu0 0.0
    %v7213 = vand.u32 %v4771, 4294901760
    %7214 = vmatpush1.msra.mxu0 %v7213
    %7215 = vmatprep.subr.mxu0 0.0
    %v7216 = vand.u32 %v4770, 4294901760
    %7217 = vmatpush1.msra.mxu0 %v7216
    %7218 = vmatprep.subr.mxu0 0.0
    %7219 = vmatpush2.msra.mxu0 0.0
    %7220 = vmatprep.subr.mxu0 0.0
    %7221 = vmatpush2.msra.mxu0 0.0
    %7222 = vmatprep.subr.mxu0 0.0
    %7223 = vmatpush2.msra.mxu0 0.0
    %7224 = vmatprep.subr.mxu0 0.0
    %7225 = vmatpush2.msra.mxu0 0.0
    %7226 = vmatprep.subr.mxu0 0.0
    %7227 = vmatpush2.msra.mxu0 0.0
    %7228 = vmatprep.subr.mxu0 0.0
    %7229 = vmatpush2.msra.mxu0 0.0
    %7230 = vmatprep.subr.mxu0 0.0
    %7231 = vmatpush2.msra.mxu0 0.0
    %7232 = vmatprep.subr.mxu0 0.0
    %7233 = vmatpush2.msra.mxu0 0.0
    %7234 = vmatprep.subr.mxu0 0.0
    %7235 = vmatpush2.msra.mxu0 0.0
    %7236 = vmatprep.subr.mxu0 0.0
    %7237 = vmatpush2.msra.mxu0 0.0
    %7238 = vmatprep.subr.mxu0 0.0
    %7239 = vmatpush2.msra.mxu0 0.0
    %7240 = vmatprep.subr.mxu0 0.0
    %7241 = vmatpush2.msra.mxu0 0.0
    %7242 = vmatprep.subr.mxu0 0.0
    %7243 = vmatpush2.msra.mxu0 0.0
    %7244 = vmatprep.subr.mxu0 0.0
    %7245 = vmatpush2.msra.mxu0 0.0
    %7246 = vmatprep.subr.mxu0 0.0
    %7247 = vmatpush2.msra.mxu0 0.0
    %7248 = vmatprep.subr.mxu0 0.0
    %7249 = vmatpush2.msra.mxu0 0.0
    %7250 = vmatprep.mubr.f32.mxu0 0.0
    %v7251 = vand.u32 %v7173, 4294901760
    %v7252 = vsub.f32 %v7173, %v7251
    %v7253 = vand.u32 %v7252, 4294901760
    %v7254 = vsub.f32 %v7252, %v7253
    %v7255 = vand.u32 %v7254, 4294901760
    %7256 = vmatmul.mubr.f32.gmra.mxu0 %v7255
    %v7257 = vpop.f32.mrf.mxu0
    %v7258 = vadd.f32 0.0, %v7257
    %v7259 = vpop.f32.mrf.mxu0
    %7260 = vmatprep.mubr.f32.mxu0 0.0
    %v7261 = vand.u32 %v7176, 4294901760
    %v7262 = vsub.f32 %v7176, %v7261
    %v7263 = vand.u32 %v7262, 4294901760
    %v7264 = vsub.f32 %v7262, %v7263
    %v7265 = vand.u32 %v7264, 4294901760
    %7266 = vmatmul.mubr.f32.gmra.mxu0 %v7265
    %v7267 = vpop.f32.mrf.mxu0
    %v7268 = vadd.f32 0.0, %v7267
    %v7269 = vpop.f32.mrf.mxu0
    %7270 = vmatprep.mubr.f32.mxu0 0.0
    %v7271 = vand.u32 %v7179, 4294901760
    %v7272 = vsub.f32 %v7179, %v7271
    %v7273 = vand.u32 %v7272, 4294901760
    %v7274 = vsub.f32 %v7272, %v7273
    %v7275 = vand.u32 %v7274, 4294901760
    %7276 = vmatmul.mubr.f32.gmra.mxu0 %v7275
    %v7277 = vpop.f32.mrf.mxu0
    %v7278 = vadd.f32 0.0, %v7277
    %v7279 = vpop.f32.mrf.mxu0
    %7280 = vmatprep.mubr.f32.mxu0 0.0
    %v7281 = vand.u32 %v7182, 4294901760
    %v7282 = vsub.f32 %v7182, %v7281
    %v7283 = vand.u32 %v7282, 4294901760
    %v7284 = vsub.f32 %v7282, %v7283
    %v7285 = vand.u32 %v7284, 4294901760
    %7286 = vmatmul.mubr.f32.gmra.mxu0 %v7285
    %v7287 = vpop.f32.mrf.mxu0
    %v7288 = vadd.f32 0.0, %v7287
    %v7289 = vpop.f32.mrf.mxu0
    %7290 = vdwg.mxu0
    %7291 = vmatprep.subr.mxu0 0.0
    %7292 = vmatpush1.msra.mxu0 0.0
    %7293 = vmatprep.subr.mxu0 0.0
    %7294 = vmatpush1.msra.mxu0 0.0
    %7295 = vmatprep.subr.mxu0 0.0
    %7296 = vmatpush1.msra.mxu0 0.0
    %7297 = vmatprep.subr.mxu0 0.0
    %7298 = vmatpush1.msra.mxu0 0.0
    %7299 = vmatprep.subr.mxu0 0.0
    %7300 = vmatpush1.msra.mxu0 0.0
    %7301 = vmatprep.subr.mxu0 0.0
    %7302 = vmatpush1.msra.mxu0 0.0
    %7303 = vmatprep.subr.mxu0 0.0
    %7304 = vmatpush1.msra.mxu0 0.0
    %7305 = vmatprep.subr.mxu0 0.0
    %7306 = vmatpush1.msra.mxu0 0.0
    %7307 = vmatprep.subr.mxu0 0.0
    %7308 = vmatpush1.msra.mxu0 0.0
    %7309 = vmatprep.subr.mxu0 0.0
    %7310 = vmatpush1.msra.mxu0 0.0
    %7311 = vmatprep.subr.mxu0 0.0
    %7312 = vmatpush1.msra.mxu0 0.0
    %7313 = vmatprep.subr.mxu0 0.0
    %7314 = vmatpush1.msra.mxu0 0.0
    %7315 = vmatprep.subr.mxu0 0.0
    %7316 = vmatpush1.msra.mxu0 0.0
    %7317 = vmatprep.subr.mxu0 0.0
    %7318 = vmatpush1.msra.mxu0 0.0
    %7319 = vmatprep.subr.mxu0 0.0
    %v7320 = vand.u32 %v4771, 4294901760
    %v7321 = vsub.f32 %v4771, %v7320
    %v7322 = vand.u32 %v7321, 4294901760
    %v7323 = vsub.f32 %v7321, %v7322
    %v7324 = vand.u32 %v7323, 4294901760
    %7325 = vmatpush1.msra.mxu0 %v7324
    %7326 = vmatprep.subr.mxu0 0.0
    %v7327 = vand.u32 %v4770, 4294901760
    %v7328 = vsub.f32 %v4770, %v7327
    %v7329 = vand.u32 %v7328, 4294901760
    %v7330 = vsub.f32 %v7328, %v7329
    %v7331 = vand.u32 %v7330, 4294901760
    %7332 = vmatpush1.msra.mxu0 %v7331
    %7333 = vmatprep.subr.mxu0 0.0
    %7334 = vmatpush2.msra.mxu0 0.0
    %7335 = vmatprep.subr.mxu0 0.0
    %7336 = vmatpush2.msra.mxu0 0.0
    %7337 = vmatprep.subr.mxu0 0.0
    %7338 = vmatpush2.msra.mxu0 0.0
    %7339 = vmatprep.subr.mxu0 0.0
    %7340 = vmatpush2.msra.mxu0 0.0
    %7341 = vmatprep.subr.mxu0 0.0
    %7342 = vmatpush2.msra.mxu0 0.0
    %7343 = vmatprep.subr.mxu0 0.0
    %7344 = vmatpush2.msra.mxu0 0.0
    %7345 = vmatprep.subr.mxu0 0.0
    %7346 = vmatpush2.msra.mxu0 0.0
    %7347 = vmatprep.subr.mxu0 0.0
    %7348 = vmatpush2.msra.mxu0 0.0
    %7349 = vmatprep.subr.mxu0 0.0
    %7350 = vmatpush2.msra.mxu0 0.0
    %7351 = vmatprep.subr.mxu0 0.0
    %7352 = vmatpush2.msra.mxu0 0.0
    %7353 = vmatprep.subr.mxu0 0.0
    %7354 = vmatpush2.msra.mxu0 0.0
    %7355 = vmatprep.subr.mxu0 0.0
    %7356 = vmatpush2.msra.mxu0 0.0
    %7357 = vmatprep.subr.mxu0 0.0
    %7358 = vmatpush2.msra.mxu0 0.0
    %7359 = vmatprep.subr.mxu0 0.0
    %7360 = vmatpush2.msra.mxu0 0.0
    %7361 = vmatprep.subr.mxu0 0.0
    %7362 = vmatpush2.msra.mxu0 0.0
    %7363 = vmatprep.subr.mxu0 0.0
    %7364 = vmatpush2.msra.mxu0 0.0
    %7365 = vmatprep.mubr.f32.mxu0 0.0
    %v7366 = vand.u32 %v7173, 4294901760
    %7367 = vmatmul.mubr.f32.gmra.mxu0 %v7366
    %v7368 = vpop.f32.mrf.mxu0
    %v7369 = vadd.f32 %v7258, %v7368
    %v7370 = vpop.f32.mrf.mxu0
    %7371 = vmatprep.mubr.f32.mxu0 0.0
    %v7372 = vand.u32 %v7176, 4294901760
    %7373 = vmatmul.mubr.f32.gmra.mxu0 %v7372
    %v7374 = vpop.f32.mrf.mxu0
    %v7375 = vadd.f32 %v7268, %v7374
    %v7376 = vpop.f32.mrf.mxu0
    %7377 = vmatprep.mubr.f32.mxu0 0.0
    %v7378 = vand.u32 %v7179, 4294901760
    %7379 = vmatmul.mubr.f32.gmra.mxu0 %v7378
    %v7380 = vpop.f32.mrf.mxu0
    %v7381 = vadd.f32 %v7278, %v7380
    %v7382 = vpop.f32.mrf.mxu0
    %7383 = vmatprep.mubr.f32.mxu0 0.0
    %v7384 = vand.u32 %v7182, 4294901760
    %7385 = vmatmul.mubr.f32.gmra.mxu0 %v7384
    %v7386 = vpop.f32.mrf.mxu0
    %v7387 = vadd.f32 %v7288, %v7386
    %v7388 = vpop.f32.mrf.mxu0
    %7389 = vdwg.mxu0
    %7390 = vmatprep.subr.mxu0 0.0
    %7391 = vmatpush1.msra.mxu0 0.0
    %7392 = vmatprep.subr.mxu0 0.0
    %7393 = vmatpush1.msra.mxu0 0.0
    %7394 = vmatprep.subr.mxu0 0.0
    %7395 = vmatpush1.msra.mxu0 0.0
    %7396 = vmatprep.subr.mxu0 0.0
    %7397 = vmatpush1.msra.mxu0 0.0
    %7398 = vmatprep.subr.mxu0 0.0
    %7399 = vmatpush1.msra.mxu0 0.0
    %7400 = vmatprep.subr.mxu0 0.0
    %7401 = vmatpush1.msra.mxu0 0.0
    %7402 = vmatprep.subr.mxu0 0.0
    %7403 = vmatpush1.msra.mxu0 0.0
    %7404 = vmatprep.subr.mxu0 0.0
    %7405 = vmatpush1.msra.mxu0 0.0
    %7406 = vmatprep.subr.mxu0 0.0
    %7407 = vmatpush1.msra.mxu0 0.0
    %7408 = vmatprep.subr.mxu0 0.0
    %7409 = vmatpush1.msra.mxu0 0.0
    %7410 = vmatprep.subr.mxu0 0.0
    %7411 = vmatpush1.msra.mxu0 0.0
    %7412 = vmatprep.subr.mxu0 0.0
    %7413 = vmatpush1.msra.mxu0 0.0
    %7414 = vmatprep.subr.mxu0 0.0
    %7415 = vmatpush1.msra.mxu0 0.0
    %7416 = vmatprep.subr.mxu0 0.0
    %7417 = vmatpush1.msra.mxu0 0.0
    %7418 = vmatprep.subr.mxu0 0.0
    %v7419 = vand.u32 %v4771, 4294901760
    %v7420 = vsub.f32 %v4771, %v7419
    %7421 = vmatpush1.msra.mxu0 %v7420
    %7422 = vmatprep.subr.mxu0 0.0
    %v7423 = vand.u32 %v4770, 4294901760
    %v7424 = vsub.f32 %v4770, %v7423
    %7425 = vmatpush1.msra.mxu0 %v7424
    %7426 = vmatprep.subr.mxu0 0.0
    %7427 = vmatpush2.msra.mxu0 0.0
    %7428 = vmatprep.subr.mxu0 0.0
    %7429 = vmatpush2.msra.mxu0 0.0
    %7430 = vmatprep.subr.mxu0 0.0
    %7431 = vmatpush2.msra.mxu0 0.0
    %7432 = vmatprep.subr.mxu0 0.0
    %7433 = vmatpush2.msra.mxu0 0.0
    %7434 = vmatprep.subr.mxu0 0.0
    %7435 = vmatpush2.msra.mxu0 0.0
    %7436 = vmatprep.subr.mxu0 0.0
    %7437 = vmatpush2.msra.mxu0 0.0
    %7438 = vmatprep.subr.mxu0 0.0
    %7439 = vmatpush2.msra.mxu0 0.0
    %7440 = vmatprep.subr.mxu0 0.0
    %7441 = vmatpush2.msra.mxu0 0.0
    %7442 = vmatprep.subr.mxu0 0.0
    %7443 = vmatpush2.msra.mxu0 0.0
    %7444 = vmatprep.subr.mxu0 0.0
    %7445 = vmatpush2.msra.mxu0 0.0
    %7446 = vmatprep.subr.mxu0 0.0
    %7447 = vmatpush2.msra.mxu0 0.0
    %7448 = vmatprep.subr.mxu0 0.0
    %7449 = vmatpush2.msra.mxu0 0.0
    %7450 = vmatprep.subr.mxu0 0.0
    %7451 = vmatpush2.msra.mxu0 0.0
    %7452 = vmatprep.subr.mxu0 0.0
    %7453 = vmatpush2.msra.mxu0 0.0
    %7454 = vmatprep.subr.mxu0 0.0
    %7455 = vmatpush2.msra.mxu0 0.0
    %7456 = vmatprep.subr.mxu0 0.0
    %7457 = vmatpush2.msra.mxu0 0.0
    %7458 = vmatprep.mubr.f32.mxu0 0.0
    %v7459 = vand.u32 %v7173, 4294901760
    %v7460 = vsub.f32 %v7173, %v7459
    %7461 = vmatmul.mubr.f32.gmra.mxu0 %v7460
    %v7462 = vpop.f32.mrf.mxu0
    %v7463 = vadd.f32 %v7369, %v7462
    %v7464 = vpop.f32.mrf.mxu0
    %7465 = vmatprep.mubr.f32.mxu0 0.0
    %v7466 = vand.u32 %v7176, 4294901760
    %v7467 = vsub.f32 %v7176, %v7466
    %7468 = vmatmul.mubr.f32.gmra.mxu0 %v7467
    %v7469 = vpop.f32.mrf.mxu0
    %v7470 = vadd.f32 %v7375, %v7469
    %v7471 = vpop.f32.mrf.mxu0
    %7472 = vmatprep.mubr.f32.mxu0 0.0
    %v7473 = vand.u32 %v7179, 4294901760
    %v7474 = vsub.f32 %v7179, %v7473
    %7475 = vmatmul.mubr.f32.gmra.mxu0 %v7474
    %v7476 = vpop.f32.mrf.mxu0
    %v7477 = vadd.f32 %v7381, %v7476
    %v7478 = vpop.f32.mrf.mxu0
    %7479 = vmatprep.mubr.f32.mxu0 0.0
    %v7480 = vand.u32 %v7182, 4294901760
    %v7481 = vsub.f32 %v7182, %v7480
    %7482 = vmatmul.mubr.f32.gmra.mxu0 %v7481
    %v7483 = vpop.f32.mrf.mxu0
    %v7484 = vadd.f32 %v7387, %v7483
    %v7485 = vpop.f32.mrf.mxu0
    %7486 = vdwg.mxu0
    %7487 = vmatprep.subr.mxu0 0.0
    %7488 = vmatpush1.msra.mxu0 0.0
    %7489 = vmatprep.subr.mxu0 0.0
    %7490 = vmatpush1.msra.mxu0 0.0
    %7491 = vmatprep.subr.mxu0 0.0
    %7492 = vmatpush1.msra.mxu0 0.0
    %7493 = vmatprep.subr.mxu0 0.0
    %7494 = vmatpush1.msra.mxu0 0.0
    %7495 = vmatprep.subr.mxu0 0.0
    %7496 = vmatpush1.msra.mxu0 0.0
    %7497 = vmatprep.subr.mxu0 0.0
    %7498 = vmatpush1.msra.mxu0 0.0
    %7499 = vmatprep.subr.mxu0 0.0
    %7500 = vmatpush1.msra.mxu0 0.0
    %7501 = vmatprep.subr.mxu0 0.0
    %7502 = vmatpush1.msra.mxu0 0.0
    %7503 = vmatprep.subr.mxu0 0.0
    %7504 = vmatpush1.msra.mxu0 0.0
    %7505 = vmatprep.subr.mxu0 0.0
    %7506 = vmatpush1.msra.mxu0 0.0
    %7507 = vmatprep.subr.mxu0 0.0
    %7508 = vmatpush1.msra.mxu0 0.0
    %7509 = vmatprep.subr.mxu0 0.0
    %7510 = vmatpush1.msra.mxu0 0.0
    %7511 = vmatprep.subr.mxu0 0.0
    %7512 = vmatpush1.msra.mxu0 0.0
    %7513 = vmatprep.subr.mxu0 0.0
    %7514 = vmatpush1.msra.mxu0 0.0
    %7515 = vmatprep.subr.mxu0 0.0
    %v7516 = vand.u32 %v4771, 4294901760
    %7517 = vmatpush1.msra.mxu0 %v7516
    %7518 = vmatprep.subr.mxu0 0.0
    %v7519 = vand.u32 %v4770, 4294901760
    %7520 = vmatpush1.msra.mxu0 %v7519
    %7521 = vmatprep.subr.mxu0 0.0
    %7522 = vmatpush2.msra.mxu0 0.0
    %7523 = vmatprep.subr.mxu0 0.0
    %7524 = vmatpush2.msra.mxu0 0.0
    %7525 = vmatprep.subr.mxu0 0.0
    %7526 = vmatpush2.msra.mxu0 0.0
    %7527 = vmatprep.subr.mxu0 0.0
    %7528 = vmatpush2.msra.mxu0 0.0
    %7529 = vmatprep.subr.mxu0 0.0
    %7530 = vmatpush2.msra.mxu0 0.0
    %7531 = vmatprep.subr.mxu0 0.0
    %7532 = vmatpush2.msra.mxu0 0.0
    %7533 = vmatprep.subr.mxu0 0.0
    %7534 = vmatpush2.msra.mxu0 0.0
    %7535 = vmatprep.subr.mxu0 0.0
    %7536 = vmatpush2.msra.mxu0 0.0
    %7537 = vmatprep.subr.mxu0 0.0
    %7538 = vmatpush2.msra.mxu0 0.0
    %7539 = vmatprep.subr.mxu0 0.0
    %7540 = vmatpush2.msra.mxu0 0.0
    %7541 = vmatprep.subr.mxu0 0.0
    %7542 = vmatpush2.msra.mxu0 0.0
    %7543 = vmatprep.subr.mxu0 0.0
    %7544 = vmatpush2.msra.mxu0 0.0
    %7545 = vmatprep.subr.mxu0 0.0
    %7546 = vmatpush2.msra.mxu0 0.0
    %7547 = vmatprep.subr.mxu0 0.0
    %7548 = vmatpush2.msra.mxu0 0.0
    %7549 = vmatprep.subr.mxu0 0.0
    %7550 = vmatpush2.msra.mxu0 0.0
    %7551 = vmatprep.subr.mxu0 0.0
    %7552 = vmatpush2.msra.mxu0 0.0
    %7553 = vmatprep.mubr.f32.mxu0 0.0
    %v7554 = vand.u32 %v7173, 4294901760
    %v7555 = vsub.f32 %v7173, %v7554
    %v7556 = vand.u32 %v7555, 4294901760
    %7557 = vmatmul.mubr.f32.gmra.mxu0 %v7556
    %v7558 = vpop.f32.mrf.mxu0
    %v7559 = vadd.f32 %v7463, %v7558
    %v7560 = vpop.f32.mrf.mxu0
    %7561 = vmatprep.mubr.f32.mxu0 0.0
    %v7562 = vand.u32 %v7176, 4294901760
    %v7563 = vsub.f32 %v7176, %v7562
    %v7564 = vand.u32 %v7563, 4294901760
    %7565 = vmatmul.mubr.f32.gmra.mxu0 %v7564
    %v7566 = vpop.f32.mrf.mxu0
    %v7567 = vadd.f32 %v7470, %v7566
    %v7568 = vpop.f32.mrf.mxu0
    %7569 = vmatprep.mubr.f32.mxu0 0.0
    %v7570 = vand.u32 %v7179, 4294901760
    %v7571 = vsub.f32 %v7179, %v7570
    %v7572 = vand.u32 %v7571, 4294901760
    %7573 = vmatmul.mubr.f32.gmra.mxu0 %v7572
    %v7574 = vpop.f32.mrf.mxu0
    %v7575 = vadd.f32 %v7477, %v7574
    %v7576 = vpop.f32.mrf.mxu0
    %7577 = vmatprep.mubr.f32.mxu0 0.0
    %v7578 = vand.u32 %v7182, 4294901760
    %v7579 = vsub.f32 %v7182, %v7578
    %v7580 = vand.u32 %v7579, 4294901760
    %7581 = vmatmul.mubr.f32.gmra.mxu0 %v7580
    %v7582 = vpop.f32.mrf.mxu0
    %v7583 = vadd.f32 %v7484, %v7582
    %v7584 = vpop.f32.mrf.mxu0
    %7585 = vdwg.mxu0
    %7586 = vmatprep.subr.mxu0 0.0
    %7587 = vmatpush1.msra.mxu0 0.0
    %7588 = vmatprep.subr.mxu0 0.0
    %7589 = vmatpush1.msra.mxu0 0.0
    %7590 = vmatprep.subr.mxu0 0.0
    %7591 = vmatpush1.msra.mxu0 0.0
    %7592 = vmatprep.subr.mxu0 0.0
    %7593 = vmatpush1.msra.mxu0 0.0
    %7594 = vmatprep.subr.mxu0 0.0
    %7595 = vmatpush1.msra.mxu0 0.0
    %7596 = vmatprep.subr.mxu0 0.0
    %7597 = vmatpush1.msra.mxu0 0.0
    %7598 = vmatprep.subr.mxu0 0.0
    %7599 = vmatpush1.msra.mxu0 0.0
    %7600 = vmatprep.subr.mxu0 0.0
    %7601 = vmatpush1.msra.mxu0 0.0
    %7602 = vmatprep.subr.mxu0 0.0
    %7603 = vmatpush1.msra.mxu0 0.0
    %7604 = vmatprep.subr.mxu0 0.0
    %7605 = vmatpush1.msra.mxu0 0.0
    %7606 = vmatprep.subr.mxu0 0.0
    %7607 = vmatpush1.msra.mxu0 0.0
    %7608 = vmatprep.subr.mxu0 0.0
    %7609 = vmatpush1.msra.mxu0 0.0
    %7610 = vmatprep.subr.mxu0 0.0
    %7611 = vmatpush1.msra.mxu0 0.0
    %7612 = vmatprep.subr.mxu0 0.0
    %7613 = vmatpush1.msra.mxu0 0.0
    %7614 = vmatprep.subr.mxu0 0.0
    %v7615 = vand.u32 %v4771, 4294901760
    %v7616 = vsub.f32 %v4771, %v7615
    %v7617 = vand.u32 %v7616, 4294901760
    %7618 = vmatpush1.msra.mxu0 %v7617
    %7619 = vmatprep.subr.mxu0 0.0
    %v7620 = vand.u32 %v4770, 4294901760
    %v7621 = vsub.f32 %v4770, %v7620
    %v7622 = vand.u32 %v7621, 4294901760
    %7623 = vmatpush1.msra.mxu0 %v7622
    %7624 = vmatprep.subr.mxu0 0.0
    %7625 = vmatpush2.msra.mxu0 0.0
    %7626 = vmatprep.subr.mxu0 0.0
    %7627 = vmatpush2.msra.mxu0 0.0
    %7628 = vmatprep.subr.mxu0 0.0
    %7629 = vmatpush2.msra.mxu0 0.0
    %7630 = vmatprep.subr.mxu0 0.0
    %7631 = vmatpush2.msra.mxu0 0.0
    %7632 = vmatprep.subr.mxu0 0.0
    %7633 = vmatpush2.msra.mxu0 0.0
    %7634 = vmatprep.subr.mxu0 0.0
    %7635 = vmatpush2.msra.mxu0 0.0
    %7636 = vmatprep.subr.mxu0 0.0
    %7637 = vmatpush2.msra.mxu0 0.0
    %7638 = vmatprep.subr.mxu0 0.0
    %7639 = vmatpush2.msra.mxu0 0.0
    %7640 = vmatprep.subr.mxu0 0.0
    %7641 = vmatpush2.msra.mxu0 0.0
    %7642 = vmatprep.subr.mxu0 0.0
    %7643 = vmatpush2.msra.mxu0 0.0
    %7644 = vmatprep.subr.mxu0 0.0
    %7645 = vmatpush2.msra.mxu0 0.0
    %7646 = vmatprep.subr.mxu0 0.0
    %7647 = vmatpush2.msra.mxu0 0.0
    %7648 = vmatprep.subr.mxu0 0.0
    %7649 = vmatpush2.msra.mxu0 0.0
    %7650 = vmatprep.subr.mxu0 0.0
    %7651 = vmatpush2.msra.mxu0 0.0
    %7652 = vmatprep.subr.mxu0 0.0
    %7653 = vmatpush2.msra.mxu0 0.0
    %7654 = vmatprep.subr.mxu0 0.0
    %7655 = vmatpush2.msra.mxu0 0.0
    %7656 = vmatprep.mubr.f32.mxu0 0.0
    %v7657 = vand.u32 %v7173, 4294901760
    %7658 = vmatmul.mubr.f32.gmra.mxu0 %v7657
    %v7659 = vpop.f32.mrf.mxu0
    %v7660 = vadd.f32 %v7559, %v7659
    %v7661 = vpop.f32.mrf.mxu0
    %7662 = vmatprep.mubr.f32.mxu0 0.0
    %v7663 = vand.u32 %v7176, 4294901760
    %7664 = vmatmul.mubr.f32.gmra.mxu0 %v7663
    %v7665 = vpop.f32.mrf.mxu0
    %v7666 = vadd.f32 %v7567, %v7665
    %v7667 = vpop.f32.mrf.mxu0
    %7668 = vmatprep.mubr.f32.mxu0 0.0
    %v7669 = vand.u32 %v7179, 4294901760
    %7670 = vmatmul.mubr.f32.gmra.mxu0 %v7669
    %v7671 = vpop.f32.mrf.mxu0
    %v7672 = vadd.f32 %v7575, %v7671
    %v7673 = vpop.f32.mrf.mxu0
    %7674 = vmatprep.mubr.f32.mxu0 0.0
    %v7675 = vand.u32 %v7182, 4294901760
    %7676 = vmatmul.mubr.f32.gmra.mxu0 %v7675
    %v7677 = vpop.f32.mrf.mxu0
    %v7678 = vadd.f32 %v7583, %v7677
    %v7679 = vpop.f32.mrf.mxu0
    %7680 = vdwg.mxu0
    %7681 = vmatprep.subr.mxu0 0.0
    %7682 = vmatpush1.msra.mxu0 0.0
    %7683 = vmatprep.subr.mxu0 0.0
    %7684 = vmatpush1.msra.mxu0 0.0
    %7685 = vmatprep.subr.mxu0 0.0
    %7686 = vmatpush1.msra.mxu0 0.0
    %7687 = vmatprep.subr.mxu0 0.0
    %7688 = vmatpush1.msra.mxu0 0.0
    %7689 = vmatprep.subr.mxu0 0.0
    %7690 = vmatpush1.msra.mxu0 0.0
    %7691 = vmatprep.subr.mxu0 0.0
    %7692 = vmatpush1.msra.mxu0 0.0
    %7693 = vmatprep.subr.mxu0 0.0
    %7694 = vmatpush1.msra.mxu0 0.0
    %7695 = vmatprep.subr.mxu0 0.0
    %7696 = vmatpush1.msra.mxu0 0.0
    %7697 = vmatprep.subr.mxu0 0.0
    %7698 = vmatpush1.msra.mxu0 0.0
    %7699 = vmatprep.subr.mxu0 0.0
    %7700 = vmatpush1.msra.mxu0 0.0
    %7701 = vmatprep.subr.mxu0 0.0
    %7702 = vmatpush1.msra.mxu0 0.0
    %7703 = vmatprep.subr.mxu0 0.0
    %7704 = vmatpush1.msra.mxu0 0.0
    %7705 = vmatprep.subr.mxu0 0.0
    %7706 = vmatpush1.msra.mxu0 0.0
    %7707 = vmatprep.subr.mxu0 0.0
    %7708 = vmatpush1.msra.mxu0 0.0
    %7709 = vmatprep.subr.mxu0 0.0
    %v7710 = vand.u32 %v4771, 4294901760
    %7711 = vmatpush1.msra.mxu0 %v7710
    %7712 = vmatprep.subr.mxu0 0.0
    %v7713 = vand.u32 %v4770, 4294901760
    %7714 = vmatpush1.msra.mxu0 %v7713
    %7715 = vmatprep.subr.mxu0 0.0
    %7716 = vmatpush2.msra.mxu0 0.0
    %7717 = vmatprep.subr.mxu0 0.0
    %7718 = vmatpush2.msra.mxu0 0.0
    %7719 = vmatprep.subr.mxu0 0.0
    %7720 = vmatpush2.msra.mxu0 0.0
    %7721 = vmatprep.subr.mxu0 0.0
    %7722 = vmatpush2.msra.mxu0 0.0
    %7723 = vmatprep.subr.mxu0 0.0
    %7724 = vmatpush2.msra.mxu0 0.0
    %7725 = vmatprep.subr.mxu0 0.0
    %7726 = vmatpush2.msra.mxu0 0.0
    %7727 = vmatprep.subr.mxu0 0.0
    %7728 = vmatpush2.msra.mxu0 0.0
    %7729 = vmatprep.subr.mxu0 0.0
    %7730 = vmatpush2.msra.mxu0 0.0
    %7731 = vmatprep.subr.mxu0 0.0
    %7732 = vmatpush2.msra.mxu0 0.0
    %7733 = vmatprep.subr.mxu0 0.0
    %7734 = vmatpush2.msra.mxu0 0.0
    %7735 = vmatprep.subr.mxu0 0.0
    %7736 = vmatpush2.msra.mxu0 0.0
    %7737 = vmatprep.subr.mxu0 0.0
    %7738 = vmatpush2.msra.mxu0 0.0
    %7739 = vmatprep.subr.mxu0 0.0
    %7740 = vmatpush2.msra.mxu0 0.0
    %7741 = vmatprep.subr.mxu0 0.0
    %7742 = vmatpush2.msra.mxu0 0.0
    %7743 = vmatprep.subr.mxu0 0.0
    %7744 = vmatpush2.msra.mxu0 0.0
    %7745 = vmatprep.subr.mxu0 0.0
    %7746 = vmatpush2.msra.mxu0 0.0
    %7747 = vmatprep.mubr.f32.mxu0 0.0
    %v7748 = vand.u32 %v7173, 4294901760
    %7749 = vmatmul.mubr.f32.gmra.mxu0 %v7748
    %v7750 = vpop.f32.mrf.mxu0
    %v7751 = vadd.f32 %v7660, %v7750
    %v7752 = vpop.f32.mrf.mxu0
    %7753 = vmatprep.mubr.f32.mxu0 0.0
    %v7754 = vand.u32 %v7176, 4294901760
    %7755 = vmatmul.mubr.f32.gmra.mxu0 %v7754
    %v7756 = vpop.f32.mrf.mxu0
    %v7757 = vadd.f32 %v7666, %v7756
    %v7758 = vpop.f32.mrf.mxu0
    %7759 = vmatprep.mubr.f32.mxu0 0.0
    %v7760 = vand.u32 %v7179, 4294901760
    %7761 = vmatmul.mubr.f32.gmra.mxu0 %v7760
    %v7762 = vpop.f32.mrf.mxu0
    %v7763 = vadd.f32 %v7672, %v7762
    %v7764 = vpop.f32.mrf.mxu0
    %7765 = vmatprep.mubr.f32.mxu0 0.0
    %v7766 = vand.u32 %v7182, 4294901760
    %7767 = vmatmul.mubr.f32.gmra.mxu0 %v7766
    %v7768 = vpop.f32.mrf.mxu0
    %v7769 = vadd.f32 %v7678, %v7768
    %v7770 = vpop.f32.mrf.mxu0
    %7771 = vdwg.mxu0
    %v7773 = vsel %vm53, %v3573, 0
    %v7776 = vsel %vm53, %v3579, 0
    %v7779 = vsel %vm53, %v3585, 0
    %v7782 = vsel %vm53, %v3591, 0
    %7784 = vmatprep.subr.mxu0 0.0
    %7785 = vmatpush1.msra.mxu0 0.0
    %7786 = vmatprep.subr.mxu0 0.0
    %7787 = vmatpush1.msra.mxu0 0.0
    %7788 = vmatprep.subr.mxu0 0.0
    %7789 = vmatpush1.msra.mxu0 0.0
    %7790 = vmatprep.subr.mxu0 0.0
    %7791 = vmatpush1.msra.mxu0 0.0
    %7792 = vmatprep.subr.mxu0 0.0
    %7793 = vmatpush1.msra.mxu0 0.0
    %7794 = vmatprep.subr.mxu0 0.0
    %7795 = vmatpush1.msra.mxu0 0.0
    %7796 = vmatprep.subr.mxu0 0.0
    %7797 = vmatpush1.msra.mxu0 0.0
    %7798 = vmatprep.subr.mxu0 0.0
    %7799 = vmatpush1.msra.mxu0 0.0
    %7800 = vmatprep.subr.mxu0 0.0
    %7801 = vmatpush1.msra.mxu0 0.0
    %7802 = vmatprep.subr.mxu0 0.0
    %7803 = vmatpush1.msra.mxu0 0.0
    %7804 = vmatprep.subr.mxu0 0.0
    %7805 = vmatpush1.msra.mxu0 0.0
    %7806 = vmatprep.subr.mxu0 0.0
    %7807 = vmatpush1.msra.mxu0 0.0
    %7808 = vmatprep.subr.mxu0 0.0
    %7809 = vmatpush1.msra.mxu0 0.0
    %7810 = vmatprep.subr.mxu0 0.0
    %7811 = vmatpush1.msra.mxu0 0.0
    %7812 = vmatprep.subr.mxu0 0.0
    %v7813 = vand.u32 %v4771, 4294901760
    %7814 = vmatpush1.msra.mxu0 %v7813
    %7815 = vmatprep.subr.mxu0 0.0
    %v7816 = vand.u32 %v4770, 4294901760
    %7817 = vmatpush1.msra.mxu0 %v7816
    %7818 = vmatprep.subr.mxu0 0.0
    %7819 = vmatpush2.msra.mxu0 0.0
    %7820 = vmatprep.subr.mxu0 0.0
    %7821 = vmatpush2.msra.mxu0 0.0
    %7822 = vmatprep.subr.mxu0 0.0
    %7823 = vmatpush2.msra.mxu0 0.0
    %7824 = vmatprep.subr.mxu0 0.0
    %7825 = vmatpush2.msra.mxu0 0.0
    %7826 = vmatprep.subr.mxu0 0.0
    %7827 = vmatpush2.msra.mxu0 0.0
    %7828 = vmatprep.subr.mxu0 0.0
    %7829 = vmatpush2.msra.mxu0 0.0
    %7830 = vmatprep.subr.mxu0 0.0
    %7831 = vmatpush2.msra.mxu0 0.0
    %7832 = vmatprep.subr.mxu0 0.0
    %7833 = vmatpush2.msra.mxu0 0.0
    %7834 = vmatprep.subr.mxu0 0.0
    %7835 = vmatpush2.msra.mxu0 0.0
    %7836 = vmatprep.subr.mxu0 0.0
    %7837 = vmatpush2.msra.mxu0 0.0
    %7838 = vmatprep.subr.mxu0 0.0
    %7839 = vmatpush2.msra.mxu0 0.0
    %7840 = vmatprep.subr.mxu0 0.0
    %7841 = vmatpush2.msra.mxu0 0.0
    %7842 = vmatprep.subr.mxu0 0.0
    %7843 = vmatpush2.msra.mxu0 0.0
    %7844 = vmatprep.subr.mxu0 0.0
    %7845 = vmatpush2.msra.mxu0 0.0
    %7846 = vmatprep.subr.mxu0 0.0
    %7847 = vmatpush2.msra.mxu0 0.0
    %7848 = vmatprep.subr.mxu0 0.0
    %7849 = vmatpush2.msra.mxu0 0.0
    %7850 = vmatprep.mubr.f32.mxu0 0.0
    %v7851 = vand.u32 %v7773, 4294901760
    %v7852 = vsub.f32 %v7773, %v7851
    %v7853 = vand.u32 %v7852, 4294901760
    %v7854 = vsub.f32 %v7852, %v7853
    %v7855 = vand.u32 %v7854, 4294901760
    %7856 = vmatmul.mubr.f32.gmra.mxu0 %v7855
    %v7857 = vpop.f32.mrf.mxu0
    %v7858 = vadd.f32 0.0, %v7857
    %v7859 = vpop.f32.mrf.mxu0
    %7860 = vmatprep.mubr.f32.mxu0 0.0
    %v7861 = vand.u32 %v7776, 4294901760
    %v7862 = vsub.f32 %v7776, %v7861
    %v7863 = vand.u32 %v7862, 4294901760
    %v7864 = vsub.f32 %v7862, %v7863
    %v7865 = vand.u32 %v7864, 4294901760
    %7866 = vmatmul.mubr.f32.gmra.mxu0 %v7865
    %v7867 = vpop.f32.mrf.mxu0
    %v7868 = vadd.f32 0.0, %v7867
    %v7869 = vpop.f32.mrf.mxu0
    %7870 = vmatprep.mubr.f32.mxu0 0.0
    %v7871 = vand.u32 %v7779, 4294901760
    %v7872 = vsub.f32 %v7779, %v7871
    %v7873 = vand.u32 %v7872, 4294901760
    %v7874 = vsub.f32 %v7872, %v7873
    %v7875 = vand.u32 %v7874, 4294901760
    %7876 = vmatmul.mubr.f32.gmra.mxu0 %v7875
    %v7877 = vpop.f32.mrf.mxu0
    %v7878 = vadd.f32 0.0, %v7877
    %v7879 = vpop.f32.mrf.mxu0
    %7880 = vmatprep.mubr.f32.mxu0 0.0
    %v7881 = vand.u32 %v7782, 4294901760
    %v7882 = vsub.f32 %v7782, %v7881
    %v7883 = vand.u32 %v7882, 4294901760
    %v7884 = vsub.f32 %v7882, %v7883
    %v7885 = vand.u32 %v7884, 4294901760
    %7886 = vmatmul.mubr.f32.gmra.mxu0 %v7885
    %v7887 = vpop.f32.mrf.mxu0
    %v7888 = vadd.f32 0.0, %v7887
    %v7889 = vpop.f32.mrf.mxu0
    %7890 = vdwg.mxu0
    %7891 = vmatprep.subr.mxu0 0.0
    %7892 = vmatpush1.msra.mxu0 0.0
    %7893 = vmatprep.subr.mxu0 0.0
    %7894 = vmatpush1.msra.mxu0 0.0
    %7895 = vmatprep.subr.mxu0 0.0
    %7896 = vmatpush1.msra.mxu0 0.0
    %7897 = vmatprep.subr.mxu0 0.0
    %7898 = vmatpush1.msra.mxu0 0.0
    %7899 = vmatprep.subr.mxu0 0.0
    %7900 = vmatpush1.msra.mxu0 0.0
    %7901 = vmatprep.subr.mxu0 0.0
    %7902 = vmatpush1.msra.mxu0 0.0
    %7903 = vmatprep.subr.mxu0 0.0
    %7904 = vmatpush1.msra.mxu0 0.0
    %7905 = vmatprep.subr.mxu0 0.0
    %7906 = vmatpush1.msra.mxu0 0.0
    %7907 = vmatprep.subr.mxu0 0.0
    %7908 = vmatpush1.msra.mxu0 0.0
    %7909 = vmatprep.subr.mxu0 0.0
    %7910 = vmatpush1.msra.mxu0 0.0
    %7911 = vmatprep.subr.mxu0 0.0
    %7912 = vmatpush1.msra.mxu0 0.0
    %7913 = vmatprep.subr.mxu0 0.0
    %7914 = vmatpush1.msra.mxu0 0.0
    %7915 = vmatprep.subr.mxu0 0.0
    %7916 = vmatpush1.msra.mxu0 0.0
    %7917 = vmatprep.subr.mxu0 0.0
    %7918 = vmatpush1.msra.mxu0 0.0
    %7919 = vmatprep.subr.mxu0 0.0
    %v7920 = vand.u32 %v4771, 4294901760
    %v7921 = vsub.f32 %v4771, %v7920
    %v7922 = vand.u32 %v7921, 4294901760
    %v7923 = vsub.f32 %v7921, %v7922
    %v7924 = vand.u32 %v7923, 4294901760
    %7925 = vmatpush1.msra.mxu0 %v7924
    %7926 = vmatprep.subr.mxu0 0.0
    %v7927 = vand.u32 %v4770, 4294901760
    %v7928 = vsub.f32 %v4770, %v7927
    %v7929 = vand.u32 %v7928, 4294901760
    %v7930 = vsub.f32 %v7928, %v7929
    %v7931 = vand.u32 %v7930, 4294901760
    %7932 = vmatpush1.msra.mxu0 %v7931
    %7933 = vmatprep.subr.mxu0 0.0
    %7934 = vmatpush2.msra.mxu0 0.0
    %7935 = vmatprep.subr.mxu0 0.0
    %7936 = vmatpush2.msra.mxu0 0.0
    %7937 = vmatprep.subr.mxu0 0.0
    %7938 = vmatpush2.msra.mxu0 0.0
    %7939 = vmatprep.subr.mxu0 0.0
    %7940 = vmatpush2.msra.mxu0 0.0
    %7941 = vmatprep.subr.mxu0 0.0
    %7942 = vmatpush2.msra.mxu0 0.0
    %7943 = vmatprep.subr.mxu0 0.0
    %7944 = vmatpush2.msra.mxu0 0.0
    %7945 = vmatprep.subr.mxu0 0.0
    %7946 = vmatpush2.msra.mxu0 0.0
    %7947 = vmatprep.subr.mxu0 0.0
    %7948 = vmatpush2.msra.mxu0 0.0
    %7949 = vmatprep.subr.mxu0 0.0
    %7950 = vmatpush2.msra.mxu0 0.0
    %7951 = vmatprep.subr.mxu0 0.0
    %7952 = vmatpush2.msra.mxu0 0.0
    %7953 = vmatprep.subr.mxu0 0.0
    %7954 = vmatpush2.msra.mxu0 0.0
    %7955 = vmatprep.subr.mxu0 0.0
    %7956 = vmatpush2.msra.mxu0 0.0
    %7957 = vmatprep.subr.mxu0 0.0
    %7958 = vmatpush2.msra.mxu0 0.0
    %7959 = vmatprep.subr.mxu0 0.0
    %7960 = vmatpush2.msra.mxu0 0.0
    %7961 = vmatprep.subr.mxu0 0.0
    %7962 = vmatpush2.msra.mxu0 0.0
    %7963 = vmatprep.subr.mxu0 0.0
    %7964 = vmatpush2.msra.mxu0 0.0
    %7965 = vmatprep.mubr.f32.mxu0 0.0
    %v7966 = vand.u32 %v7773, 4294901760
    %7967 = vmatmul.mubr.f32.gmra.mxu0 %v7966
    %v7968 = vpop.f32.mrf.mxu0
    %v7969 = vadd.f32 %v7858, %v7968
    %v7970 = vpop.f32.mrf.mxu0
    %7971 = vmatprep.mubr.f32.mxu0 0.0
    %v7972 = vand.u32 %v7776, 4294901760
    %7973 = vmatmul.mubr.f32.gmra.mxu0 %v7972
    %v7974 = vpop.f32.mrf.mxu0
    %v7975 = vadd.f32 %v7868, %v7974
    %v7976 = vpop.f32.mrf.mxu0
    %7977 = vmatprep.mubr.f32.mxu0 0.0
    %v7978 = vand.u32 %v7779, 4294901760
    %7979 = vmatmul.mubr.f32.gmra.mxu0 %v7978
    %v7980 = vpop.f32.mrf.mxu0
    %v7981 = vadd.f32 %v7878, %v7980
    %v7982 = vpop.f32.mrf.mxu0
    %7983 = vmatprep.mubr.f32.mxu0 0.0
    %v7984 = vand.u32 %v7782, 4294901760
    %7985 = vmatmul.mubr.f32.gmra.mxu0 %v7984
    %v7986 = vpop.f32.mrf.mxu0
    %v7987 = vadd.f32 %v7888, %v7986
    %v7988 = vpop.f32.mrf.mxu0
    %7989 = vdwg.mxu0
    %7990 = vmatprep.subr.mxu0 0.0
    %7991 = vmatpush1.msra.mxu0 0.0
    %7992 = vmatprep.subr.mxu0 0.0
    %7993 = vmatpush1.msra.mxu0 0.0
    %7994 = vmatprep.subr.mxu0 0.0
    %7995 = vmatpush1.msra.mxu0 0.0
    %7996 = vmatprep.subr.mxu0 0.0
    %7997 = vmatpush1.msra.mxu0 0.0
    %7998 = vmatprep.subr.mxu0 0.0
    %7999 = vmatpush1.msra.mxu0 0.0
    %8000 = vmatprep.subr.mxu0 0.0
    %8001 = vmatpush1.msra.mxu0 0.0
    %8002 = vmatprep.subr.mxu0 0.0
    %8003 = vmatpush1.msra.mxu0 0.0
    %8004 = vmatprep.subr.mxu0 0.0
    %8005 = vmatpush1.msra.mxu0 0.0
    %8006 = vmatprep.subr.mxu0 0.0
    %8007 = vmatpush1.msra.mxu0 0.0
    %8008 = vmatprep.subr.mxu0 0.0
    %8009 = vmatpush1.msra.mxu0 0.0
    %8010 = vmatprep.subr.mxu0 0.0
    %8011 = vmatpush1.msra.mxu0 0.0
    %8012 = vmatprep.subr.mxu0 0.0
    %8013 = vmatpush1.msra.mxu0 0.0
    %8014 = vmatprep.subr.mxu0 0.0
    %8015 = vmatpush1.msra.mxu0 0.0
    %8016 = vmatprep.subr.mxu0 0.0
    %8017 = vmatpush1.msra.mxu0 0.0
    %8018 = vmatprep.subr.mxu0 0.0
    %v8019 = vand.u32 %v4771, 4294901760
    %v8020 = vsub.f32 %v4771, %v8019
    %8021 = vmatpush1.msra.mxu0 %v8020
    %8022 = vmatprep.subr.mxu0 0.0
    %v8023 = vand.u32 %v4770, 4294901760
    %v8024 = vsub.f32 %v4770, %v8023
    %8025 = vmatpush1.msra.mxu0 %v8024
    %8026 = vmatprep.subr.mxu0 0.0
    %8027 = vmatpush2.msra.mxu0 0.0
    %8028 = vmatprep.subr.mxu0 0.0
    %8029 = vmatpush2.msra.mxu0 0.0
    %8030 = vmatprep.subr.mxu0 0.0
    %8031 = vmatpush2.msra.mxu0 0.0
    %8032 = vmatprep.subr.mxu0 0.0
    %8033 = vmatpush2.msra.mxu0 0.0
    %8034 = vmatprep.subr.mxu0 0.0
    %8035 = vmatpush2.msra.mxu0 0.0
    %8036 = vmatprep.subr.mxu0 0.0
    %8037 = vmatpush2.msra.mxu0 0.0
    %8038 = vmatprep.subr.mxu0 0.0
    %8039 = vmatpush2.msra.mxu0 0.0
    %8040 = vmatprep.subr.mxu0 0.0
    %8041 = vmatpush2.msra.mxu0 0.0
    %8042 = vmatprep.subr.mxu0 0.0
    %8043 = vmatpush2.msra.mxu0 0.0
    %8044 = vmatprep.subr.mxu0 0.0
    %8045 = vmatpush2.msra.mxu0 0.0
    %8046 = vmatprep.subr.mxu0 0.0
    %8047 = vmatpush2.msra.mxu0 0.0
    %8048 = vmatprep.subr.mxu0 0.0
    %8049 = vmatpush2.msra.mxu0 0.0
    %8050 = vmatprep.subr.mxu0 0.0
    %8051 = vmatpush2.msra.mxu0 0.0
    %8052 = vmatprep.subr.mxu0 0.0
    %8053 = vmatpush2.msra.mxu0 0.0
    %8054 = vmatprep.subr.mxu0 0.0
    %8055 = vmatpush2.msra.mxu0 0.0
    %8056 = vmatprep.subr.mxu0 0.0
    %8057 = vmatpush2.msra.mxu0 0.0
    %8058 = vmatprep.mubr.f32.mxu0 0.0
    %v8059 = vand.u32 %v7773, 4294901760
    %v8060 = vsub.f32 %v7773, %v8059
    %8061 = vmatmul.mubr.f32.gmra.mxu0 %v8060
    %v8062 = vpop.f32.mrf.mxu0
    %v8063 = vadd.f32 %v7969, %v8062
    %v8064 = vpop.f32.mrf.mxu0
    %8065 = vmatprep.mubr.f32.mxu0 0.0
    %v8066 = vand.u32 %v7776, 4294901760
    %v8067 = vsub.f32 %v7776, %v8066
    %8068 = vmatmul.mubr.f32.gmra.mxu0 %v8067
    %v8069 = vpop.f32.mrf.mxu0
    %v8070 = vadd.f32 %v7975, %v8069
    %v8071 = vpop.f32.mrf.mxu0
    %8072 = vmatprep.mubr.f32.mxu0 0.0
    %v8073 = vand.u32 %v7779, 4294901760
    %v8074 = vsub.f32 %v7779, %v8073
    %8075 = vmatmul.mubr.f32.gmra.mxu0 %v8074
    %v8076 = vpop.f32.mrf.mxu0
    %v8077 = vadd.f32 %v7981, %v8076
    %v8078 = vpop.f32.mrf.mxu0
    %8079 = vmatprep.mubr.f32.mxu0 0.0
    %v8080 = vand.u32 %v7782, 4294901760
    %v8081 = vsub.f32 %v7782, %v8080
    %8082 = vmatmul.mubr.f32.gmra.mxu0 %v8081
    %v8083 = vpop.f32.mrf.mxu0
    %v8084 = vadd.f32 %v7987, %v8083
    %v8085 = vpop.f32.mrf.mxu0
    %8086 = vdwg.mxu0
    %8087 = vmatprep.subr.mxu0 0.0
    %8088 = vmatpush1.msra.mxu0 0.0
    %8089 = vmatprep.subr.mxu0 0.0
    %8090 = vmatpush1.msra.mxu0 0.0
    %8091 = vmatprep.subr.mxu0 0.0
    %8092 = vmatpush1.msra.mxu0 0.0
    %8093 = vmatprep.subr.mxu0 0.0
    %8094 = vmatpush1.msra.mxu0 0.0
    %8095 = vmatprep.subr.mxu0 0.0
    %8096 = vmatpush1.msra.mxu0 0.0
    %8097 = vmatprep.subr.mxu0 0.0
    %8098 = vmatpush1.msra.mxu0 0.0
    %8099 = vmatprep.subr.mxu0 0.0
    %8100 = vmatpush1.msra.mxu0 0.0
    %8101 = vmatprep.subr.mxu0 0.0
    %8102 = vmatpush1.msra.mxu0 0.0
    %8103 = vmatprep.subr.mxu0 0.0
    %8104 = vmatpush1.msra.mxu0 0.0
    %8105 = vmatprep.subr.mxu0 0.0
    %8106 = vmatpush1.msra.mxu0 0.0
    %8107 = vmatprep.subr.mxu0 0.0
    %8108 = vmatpush1.msra.mxu0 0.0
    %8109 = vmatprep.subr.mxu0 0.0
    %8110 = vmatpush1.msra.mxu0 0.0
    %8111 = vmatprep.subr.mxu0 0.0
    %8112 = vmatpush1.msra.mxu0 0.0
    %8113 = vmatprep.subr.mxu0 0.0
    %8114 = vmatpush1.msra.mxu0 0.0
    %8115 = vmatprep.subr.mxu0 0.0
    %v8116 = vand.u32 %v4771, 4294901760
    %8117 = vmatpush1.msra.mxu0 %v8116
    %8118 = vmatprep.subr.mxu0 0.0
    %v8119 = vand.u32 %v4770, 4294901760
    %8120 = vmatpush1.msra.mxu0 %v8119
    %8121 = vmatprep.subr.mxu0 0.0
    %8122 = vmatpush2.msra.mxu0 0.0
    %8123 = vmatprep.subr.mxu0 0.0
    %8124 = vmatpush2.msra.mxu0 0.0
    %8125 = vmatprep.subr.mxu0 0.0
    %8126 = vmatpush2.msra.mxu0 0.0
    %8127 = vmatprep.subr.mxu0 0.0
    %8128 = vmatpush2.msra.mxu0 0.0
    %8129 = vmatprep.subr.mxu0 0.0
    %8130 = vmatpush2.msra.mxu0 0.0
    %8131 = vmatprep.subr.mxu0 0.0
    %8132 = vmatpush2.msra.mxu0 0.0
    %8133 = vmatprep.subr.mxu0 0.0
    %8134 = vmatpush2.msra.mxu0 0.0
    %8135 = vmatprep.subr.mxu0 0.0
    %8136 = vmatpush2.msra.mxu0 0.0
    %8137 = vmatprep.subr.mxu0 0.0
    %8138 = vmatpush2.msra.mxu0 0.0
    %8139 = vmatprep.subr.mxu0 0.0
    %8140 = vmatpush2.msra.mxu0 0.0
    %8141 = vmatprep.subr.mxu0 0.0
    %8142 = vmatpush2.msra.mxu0 0.0
    %8143 = vmatprep.subr.mxu0 0.0
    %8144 = vmatpush2.msra.mxu0 0.0
    %8145 = vmatprep.subr.mxu0 0.0
    %8146 = vmatpush2.msra.mxu0 0.0
    %8147 = vmatprep.subr.mxu0 0.0
    %8148 = vmatpush2.msra.mxu0 0.0
    %8149 = vmatprep.subr.mxu0 0.0
    %8150 = vmatpush2.msra.mxu0 0.0
    %8151 = vmatprep.subr.mxu0 0.0
    %8152 = vmatpush2.msra.mxu0 0.0
    %8153 = vmatprep.mubr.f32.mxu0 0.0
    %v8154 = vand.u32 %v7773, 4294901760
    %v8155 = vsub.f32 %v7773, %v8154
    %v8156 = vand.u32 %v8155, 4294901760
    %8157 = vmatmul.mubr.f32.gmra.mxu0 %v8156
    %v8158 = vpop.f32.mrf.mxu0
    %v8159 = vadd.f32 %v8063, %v8158
    %v8160 = vpop.f32.mrf.mxu0
    %8161 = vmatprep.mubr.f32.mxu0 0.0
    %v8162 = vand.u32 %v7776, 4294901760
    %v8163 = vsub.f32 %v7776, %v8162
    %v8164 = vand.u32 %v8163, 4294901760
    %8165 = vmatmul.mubr.f32.gmra.mxu0 %v8164
    %v8166 = vpop.f32.mrf.mxu0
    %v8167 = vadd.f32 %v8070, %v8166
    %v8168 = vpop.f32.mrf.mxu0
    %8169 = vmatprep.mubr.f32.mxu0 0.0
    %v8170 = vand.u32 %v7779, 4294901760
    %v8171 = vsub.f32 %v7779, %v8170
    %v8172 = vand.u32 %v8171, 4294901760
    %8173 = vmatmul.mubr.f32.gmra.mxu0 %v8172
    %v8174 = vpop.f32.mrf.mxu0
    %v8175 = vadd.f32 %v8077, %v8174
    %v8176 = vpop.f32.mrf.mxu0
    %8177 = vmatprep.mubr.f32.mxu0 0.0
    %v8178 = vand.u32 %v7782, 4294901760
    %v8179 = vsub.f32 %v7782, %v8178
    %v8180 = vand.u32 %v8179, 4294901760
    %8181 = vmatmul.mubr.f32.gmra.mxu0 %v8180
    %v8182 = vpop.f32.mrf.mxu0
    %v8183 = vadd.f32 %v8084, %v8182
    %v8184 = vpop.f32.mrf.mxu0
    %8185 = vdwg.mxu0
    %8186 = vmatprep.subr.mxu0 0.0
    %8187 = vmatpush1.msra.mxu0 0.0
    %8188 = vmatprep.subr.mxu0 0.0
    %8189 = vmatpush1.msra.mxu0 0.0
    %8190 = vmatprep.subr.mxu0 0.0
    %8191 = vmatpush1.msra.mxu0 0.0
    %8192 = vmatprep.subr.mxu0 0.0
    %8193 = vmatpush1.msra.mxu0 0.0
    %8194 = vmatprep.subr.mxu0 0.0
    %8195 = vmatpush1.msra.mxu0 0.0
    %8196 = vmatprep.subr.mxu0 0.0
    %8197 = vmatpush1.msra.mxu0 0.0
    %8198 = vmatprep.subr.mxu0 0.0
    %8199 = vmatpush1.msra.mxu0 0.0
    %8200 = vmatprep.subr.mxu0 0.0
    %8201 = vmatpush1.msra.mxu0 0.0
    %8202 = vmatprep.subr.mxu0 0.0
    %8203 = vmatpush1.msra.mxu0 0.0
    %8204 = vmatprep.subr.mxu0 0.0
    %8205 = vmatpush1.msra.mxu0 0.0
    %8206 = vmatprep.subr.mxu0 0.0
    %8207 = vmatpush1.msra.mxu0 0.0
    %8208 = vmatprep.subr.mxu0 0.0
    %8209 = vmatpush1.msra.mxu0 0.0
    %8210 = vmatprep.subr.mxu0 0.0
    %8211 = vmatpush1.msra.mxu0 0.0
    %8212 = vmatprep.subr.mxu0 0.0
    %8213 = vmatpush1.msra.mxu0 0.0
    %8214 = vmatprep.subr.mxu0 0.0
    %v8215 = vand.u32 %v4771, 4294901760
    %v8216 = vsub.f32 %v4771, %v8215
    %v8217 = vand.u32 %v8216, 4294901760
    %8218 = vmatpush1.msra.mxu0 %v8217
    %8219 = vmatprep.subr.mxu0 0.0
    %v8220 = vand.u32 %v4770, 4294901760
    %v8221 = vsub.f32 %v4770, %v8220
    %v8222 = vand.u32 %v8221, 4294901760
    %8223 = vmatpush1.msra.mxu0 %v8222
    %8224 = vmatprep.subr.mxu0 0.0
    %8225 = vmatpush2.msra.mxu0 0.0
    %8226 = vmatprep.subr.mxu0 0.0
    %8227 = vmatpush2.msra.mxu0 0.0
    %8228 = vmatprep.subr.mxu0 0.0
    %8229 = vmatpush2.msra.mxu0 0.0
    %8230 = vmatprep.subr.mxu0 0.0
    %8231 = vmatpush2.msra.mxu0 0.0
    %8232 = vmatprep.subr.mxu0 0.0
    %8233 = vmatpush2.msra.mxu0 0.0
    %8234 = vmatprep.subr.mxu0 0.0
    %8235 = vmatpush2.msra.mxu0 0.0
    %8236 = vmatprep.subr.mxu0 0.0
    %8237 = vmatpush2.msra.mxu0 0.0
    %8238 = vmatprep.subr.mxu0 0.0
    %8239 = vmatpush2.msra.mxu0 0.0
    %8240 = vmatprep.subr.mxu0 0.0
    %8241 = vmatpush2.msra.mxu0 0.0
    %8242 = vmatprep.subr.mxu0 0.0
    %8243 = vmatpush2.msra.mxu0 0.0
    %8244 = vmatprep.subr.mxu0 0.0
    %8245 = vmatpush2.msra.mxu0 0.0
    %8246 = vmatprep.subr.mxu0 0.0
    %8247 = vmatpush2.msra.mxu0 0.0
    %8248 = vmatprep.subr.mxu0 0.0
    %8249 = vmatpush2.msra.mxu0 0.0
    %8250 = vmatprep.subr.mxu0 0.0
    %8251 = vmatpush2.msra.mxu0 0.0
    %8252 = vmatprep.subr.mxu0 0.0
    %8253 = vmatpush2.msra.mxu0 0.0
    %8254 = vmatprep.subr.mxu0 0.0
    %8255 = vmatpush2.msra.mxu0 0.0
    %8256 = vmatprep.mubr.f32.mxu0 0.0
    %v8257 = vand.u32 %v7773, 4294901760
    %8258 = vmatmul.mubr.f32.gmra.mxu0 %v8257
    %v8259 = vpop.f32.mrf.mxu0
    %v8260 = vadd.f32 %v8159, %v8259
    %v8261 = vpop.f32.mrf.mxu0
    %8262 = vmatprep.mubr.f32.mxu0 0.0
    %v8263 = vand.u32 %v7776, 4294901760
    %8264 = vmatmul.mubr.f32.gmra.mxu0 %v8263
    %v8265 = vpop.f32.mrf.mxu0
    %v8266 = vadd.f32 %v8167, %v8265
    %v8267 = vpop.f32.mrf.mxu0
    %8268 = vmatprep.mubr.f32.mxu0 0.0
    %v8269 = vand.u32 %v7779, 4294901760
    %8270 = vmatmul.mubr.f32.gmra.mxu0 %v8269
    %v8271 = vpop.f32.mrf.mxu0
    %v8272 = vadd.f32 %v8175, %v8271
    %v8273 = vpop.f32.mrf.mxu0
    %8274 = vmatprep.mubr.f32.mxu0 0.0
    %v8275 = vand.u32 %v7782, 4294901760
    %8276 = vmatmul.mubr.f32.gmra.mxu0 %v8275
    %v8277 = vpop.f32.mrf.mxu0
    %v8278 = vadd.f32 %v8183, %v8277
    %v8279 = vpop.f32.mrf.mxu0
    %8280 = vdwg.mxu0
    %8281 = vmatprep.subr.mxu0 0.0
    %8282 = vmatpush1.msra.mxu0 0.0
    %8283 = vmatprep.subr.mxu0 0.0
    %8284 = vmatpush1.msra.mxu0 0.0
    %8285 = vmatprep.subr.mxu0 0.0
    %8286 = vmatpush1.msra.mxu0 0.0
    %8287 = vmatprep.subr.mxu0 0.0
    %8288 = vmatpush1.msra.mxu0 0.0
    %8289 = vmatprep.subr.mxu0 0.0
    %8290 = vmatpush1.msra.mxu0 0.0
    %8291 = vmatprep.subr.mxu0 0.0
    %8292 = vmatpush1.msra.mxu0 0.0
    %8293 = vmatprep.subr.mxu0 0.0
    %8294 = vmatpush1.msra.mxu0 0.0
    %8295 = vmatprep.subr.mxu0 0.0
    %8296 = vmatpush1.msra.mxu0 0.0
    %8297 = vmatprep.subr.mxu0 0.0
    %8298 = vmatpush1.msra.mxu0 0.0
    %8299 = vmatprep.subr.mxu0 0.0
    %8300 = vmatpush1.msra.mxu0 0.0
    %8301 = vmatprep.subr.mxu0 0.0
    %8302 = vmatpush1.msra.mxu0 0.0
    %8303 = vmatprep.subr.mxu0 0.0
    %8304 = vmatpush1.msra.mxu0 0.0
    %8305 = vmatprep.subr.mxu0 0.0
    %8306 = vmatpush1.msra.mxu0 0.0
    %8307 = vmatprep.subr.mxu0 0.0
    %8308 = vmatpush1.msra.mxu0 0.0
    %8309 = vmatprep.subr.mxu0 0.0
    %v8310 = vand.u32 %v4771, 4294901760
    %8311 = vmatpush1.msra.mxu0 %v8310
    %8312 = vmatprep.subr.mxu0 0.0
    %v8313 = vand.u32 %v4770, 4294901760
    %8314 = vmatpush1.msra.mxu0 %v8313
    %8315 = vmatprep.subr.mxu0 0.0
    %8316 = vmatpush2.msra.mxu0 0.0
    %8317 = vmatprep.subr.mxu0 0.0
    %8318 = vmatpush2.msra.mxu0 0.0
    %8319 = vmatprep.subr.mxu0 0.0
    %8320 = vmatpush2.msra.mxu0 0.0
    %8321 = vmatprep.subr.mxu0 0.0
    %8322 = vmatpush2.msra.mxu0 0.0
    %8323 = vmatprep.subr.mxu0 0.0
    %8324 = vmatpush2.msra.mxu0 0.0
    %8325 = vmatprep.subr.mxu0 0.0
    %8326 = vmatpush2.msra.mxu0 0.0
    %8327 = vmatprep.subr.mxu0 0.0
    %8328 = vmatpush2.msra.mxu0 0.0
    %8329 = vmatprep.subr.mxu0 0.0
    %8330 = vmatpush2.msra.mxu0 0.0
    %8331 = vmatprep.subr.mxu0 0.0
    %8332 = vmatpush2.msra.mxu0 0.0
    %8333 = vmatprep.subr.mxu0 0.0
    %8334 = vmatpush2.msra.mxu0 0.0
    %8335 = vmatprep.subr.mxu0 0.0
    %8336 = vmatpush2.msra.mxu0 0.0
    %8337 = vmatprep.subr.mxu0 0.0
    %8338 = vmatpush2.msra.mxu0 0.0
    %8339 = vmatprep.subr.mxu0 0.0
    %8340 = vmatpush2.msra.mxu0 0.0
    %8341 = vmatprep.subr.mxu0 0.0
    %8342 = vmatpush2.msra.mxu0 0.0
    %8343 = vmatprep.subr.mxu0 0.0
    %8344 = vmatpush2.msra.mxu0 0.0
    %8345 = vmatprep.subr.mxu0 0.0
    %8346 = vmatpush2.msra.mxu0 0.0
    %8347 = vmatprep.mubr.f32.mxu0 0.0
    %v8348 = vand.u32 %v7773, 4294901760
    %8349 = vmatmul.mubr.f32.gmra.mxu0 %v8348
    %v8350 = vpop.f32.mrf.mxu0
    %v8351 = vadd.f32 %v8260, %v8350
    %v8352 = vpop.f32.mrf.mxu0
    %8353 = vmatprep.mubr.f32.mxu0 0.0
    %v8354 = vand.u32 %v7776, 4294901760
    %8355 = vmatmul.mubr.f32.gmra.mxu0 %v8354
    %v8356 = vpop.f32.mrf.mxu0
    %v8357 = vadd.f32 %v8266, %v8356
    %v8358 = vpop.f32.mrf.mxu0
    %8359 = vmatprep.mubr.f32.mxu0 0.0
    %v8360 = vand.u32 %v7779, 4294901760
    %8361 = vmatmul.mubr.f32.gmra.mxu0 %v8360
    %v8362 = vpop.f32.mrf.mxu0
    %v8363 = vadd.f32 %v8272, %v8362
    %v8364 = vpop.f32.mrf.mxu0
    %8365 = vmatprep.mubr.f32.mxu0 0.0
    %v8366 = vand.u32 %v7782, 4294901760
    %8367 = vmatmul.mubr.f32.gmra.mxu0 %v8366
    %v8368 = vpop.f32.mrf.mxu0
    %v8369 = vadd.f32 %v8278, %v8368
    %v8370 = vpop.f32.mrf.mxu0
    %8371 = vdwg.mxu0
    %v8373 = vsel %vm53, %v4161, 0
    %v8376 = vsel %vm53, %v4167, 0
    %v8379 = vsel %vm53, %v4173, 0
    %v8382 = vsel %vm53, %v4179, 0
    %8384 = vmatprep.subr.mxu0 0.0
    %8385 = vmatpush1.msra.mxu0 0.0
    %8386 = vmatprep.subr.mxu0 0.0
    %8387 = vmatpush1.msra.mxu0 0.0
    %8388 = vmatprep.subr.mxu0 0.0
    %8389 = vmatpush1.msra.mxu0 0.0
    %8390 = vmatprep.subr.mxu0 0.0
    %8391 = vmatpush1.msra.mxu0 0.0
    %8392 = vmatprep.subr.mxu0 0.0
    %8393 = vmatpush1.msra.mxu0 0.0
    %8394 = vmatprep.subr.mxu0 0.0
    %8395 = vmatpush1.msra.mxu0 0.0
    %8396 = vmatprep.subr.mxu0 0.0
    %8397 = vmatpush1.msra.mxu0 0.0
    %8398 = vmatprep.subr.mxu0 0.0
    %8399 = vmatpush1.msra.mxu0 0.0
    %8400 = vmatprep.subr.mxu0 0.0
    %8401 = vmatpush1.msra.mxu0 0.0
    %8402 = vmatprep.subr.mxu0 0.0
    %8403 = vmatpush1.msra.mxu0 0.0
    %8404 = vmatprep.subr.mxu0 0.0
    %8405 = vmatpush1.msra.mxu0 0.0
    %8406 = vmatprep.subr.mxu0 0.0
    %8407 = vmatpush1.msra.mxu0 0.0
    %8408 = vmatprep.subr.mxu0 0.0
    %8409 = vmatpush1.msra.mxu0 0.0
    %8410 = vmatprep.subr.mxu0 0.0
    %8411 = vmatpush1.msra.mxu0 0.0
    %8412 = vmatprep.subr.mxu0 0.0
    %v8413 = vand.u32 %v4771, 4294901760
    %8414 = vmatpush1.msra.mxu0 %v8413
    %8415 = vmatprep.subr.mxu0 0.0
    %v8416 = vand.u32 %v4770, 4294901760
    %8417 = vmatpush1.msra.mxu0 %v8416
    %8418 = vmatprep.subr.mxu0 0.0
    %8419 = vmatpush2.msra.mxu0 0.0
    %8420 = vmatprep.subr.mxu0 0.0
    %8421 = vmatpush2.msra.mxu0 0.0
    %8422 = vmatprep.subr.mxu0 0.0
    %8423 = vmatpush2.msra.mxu0 0.0
    %8424 = vmatprep.subr.mxu0 0.0
    %8425 = vmatpush2.msra.mxu0 0.0
    %8426 = vmatprep.subr.mxu0 0.0
    %8427 = vmatpush2.msra.mxu0 0.0
    %8428 = vmatprep.subr.mxu0 0.0
    %8429 = vmatpush2.msra.mxu0 0.0
    %8430 = vmatprep.subr.mxu0 0.0
    %8431 = vmatpush2.msra.mxu0 0.0
    %8432 = vmatprep.subr.mxu0 0.0
    %8433 = vmatpush2.msra.mxu0 0.0
    %8434 = vmatprep.subr.mxu0 0.0
    %8435 = vmatpush2.msra.mxu0 0.0
    %8436 = vmatprep.subr.mxu0 0.0
    %8437 = vmatpush2.msra.mxu0 0.0
    %8438 = vmatprep.subr.mxu0 0.0
    %8439 = vmatpush2.msra.mxu0 0.0
    %8440 = vmatprep.subr.mxu0 0.0
    %8441 = vmatpush2.msra.mxu0 0.0
    %8442 = vmatprep.subr.mxu0 0.0
    %8443 = vmatpush2.msra.mxu0 0.0
    %8444 = vmatprep.subr.mxu0 0.0
    %8445 = vmatpush2.msra.mxu0 0.0
    %8446 = vmatprep.subr.mxu0 0.0
    %8447 = vmatpush2.msra.mxu0 0.0
    %8448 = vmatprep.subr.mxu0 0.0
    %8449 = vmatpush2.msra.mxu0 0.0
    %8450 = vmatprep.mubr.f32.mxu0 0.0
    %v8451 = vand.u32 %v8373, 4294901760
    %v8452 = vsub.f32 %v8373, %v8451
    %v8453 = vand.u32 %v8452, 4294901760
    %v8454 = vsub.f32 %v8452, %v8453
    %v8455 = vand.u32 %v8454, 4294901760
    %8456 = vmatmul.mubr.f32.gmra.mxu0 %v8455
    %v8457 = vpop.f32.mrf.mxu0
    %v8458 = vadd.f32 0.0, %v8457
    %v8459 = vpop.f32.mrf.mxu0
    %8460 = vmatprep.mubr.f32.mxu0 0.0
    %v8461 = vand.u32 %v8376, 4294901760
    %v8462 = vsub.f32 %v8376, %v8461
    %v8463 = vand.u32 %v8462, 4294901760
    %v8464 = vsub.f32 %v8462, %v8463
    %v8465 = vand.u32 %v8464, 4294901760
    %8466 = vmatmul.mubr.f32.gmra.mxu0 %v8465
    %v8467 = vpop.f32.mrf.mxu0
    %v8468 = vadd.f32 0.0, %v8467
    %v8469 = vpop.f32.mrf.mxu0
    %8470 = vmatprep.mubr.f32.mxu0 0.0
    %v8471 = vand.u32 %v8379, 4294901760
    %v8472 = vsub.f32 %v8379, %v8471
    %v8473 = vand.u32 %v8472, 4294901760
    %v8474 = vsub.f32 %v8472, %v8473
    %v8475 = vand.u32 %v8474, 4294901760
    %8476 = vmatmul.mubr.f32.gmra.mxu0 %v8475
    %v8477 = vpop.f32.mrf.mxu0
    %v8478 = vadd.f32 0.0, %v8477
    %v8479 = vpop.f32.mrf.mxu0
    %8480 = vmatprep.mubr.f32.mxu0 0.0
    %v8481 = vand.u32 %v8382, 4294901760
    %v8482 = vsub.f32 %v8382, %v8481
    %v8483 = vand.u32 %v8482, 4294901760
    %v8484 = vsub.f32 %v8482, %v8483
    %v8485 = vand.u32 %v8484, 4294901760
    %8486 = vmatmul.mubr.f32.gmra.mxu0 %v8485
    %v8487 = vpop.f32.mrf.mxu0
    %v8488 = vadd.f32 0.0, %v8487
    %v8489 = vpop.f32.mrf.mxu0
    %8490 = vdwg.mxu0
    %8491 = vmatprep.subr.mxu0 0.0
    %8492 = vmatpush1.msra.mxu0 0.0
    %8493 = vmatprep.subr.mxu0 0.0
    %8494 = vmatpush1.msra.mxu0 0.0
    %8495 = vmatprep.subr.mxu0 0.0
    %8496 = vmatpush1.msra.mxu0 0.0
    %8497 = vmatprep.subr.mxu0 0.0
    %8498 = vmatpush1.msra.mxu0 0.0
    %8499 = vmatprep.subr.mxu0 0.0
    %8500 = vmatpush1.msra.mxu0 0.0
    %8501 = vmatprep.subr.mxu0 0.0
    %8502 = vmatpush1.msra.mxu0 0.0
    %8503 = vmatprep.subr.mxu0 0.0
    %8504 = vmatpush1.msra.mxu0 0.0
    %8505 = vmatprep.subr.mxu0 0.0
    %8506 = vmatpush1.msra.mxu0 0.0
    %8507 = vmatprep.subr.mxu0 0.0
    %8508 = vmatpush1.msra.mxu0 0.0
    %8509 = vmatprep.subr.mxu0 0.0
    %8510 = vmatpush1.msra.mxu0 0.0
    %8511 = vmatprep.subr.mxu0 0.0
    %8512 = vmatpush1.msra.mxu0 0.0
    %8513 = vmatprep.subr.mxu0 0.0
    %8514 = vmatpush1.msra.mxu0 0.0
    %8515 = vmatprep.subr.mxu0 0.0
    %8516 = vmatpush1.msra.mxu0 0.0
    %8517 = vmatprep.subr.mxu0 0.0
    %8518 = vmatpush1.msra.mxu0 0.0
    %8519 = vmatprep.subr.mxu0 0.0
    %v8520 = vand.u32 %v4771, 4294901760
    %v8521 = vsub.f32 %v4771, %v8520
    %v8522 = vand.u32 %v8521, 4294901760
    %v8523 = vsub.f32 %v8521, %v8522
    %v8524 = vand.u32 %v8523, 4294901760
    %8525 = vmatpush1.msra.mxu0 %v8524
    %8526 = vmatprep.subr.mxu0 0.0
    %v8527 = vand.u32 %v4770, 4294901760
    %v8528 = vsub.f32 %v4770, %v8527
    %v8529 = vand.u32 %v8528, 4294901760
    %v8530 = vsub.f32 %v8528, %v8529
    %v8531 = vand.u32 %v8530, 4294901760
    %8532 = vmatpush1.msra.mxu0 %v8531
    %8533 = vmatprep.subr.mxu0 0.0
    %8534 = vmatpush2.msra.mxu0 0.0
    %8535 = vmatprep.subr.mxu0 0.0
    %8536 = vmatpush2.msra.mxu0 0.0
    %8537 = vmatprep.subr.mxu0 0.0
    %8538 = vmatpush2.msra.mxu0 0.0
    %8539 = vmatprep.subr.mxu0 0.0
    %8540 = vmatpush2.msra.mxu0 0.0
    %8541 = vmatprep.subr.mxu0 0.0
    %8542 = vmatpush2.msra.mxu0 0.0
    %8543 = vmatprep.subr.mxu0 0.0
    %8544 = vmatpush2.msra.mxu0 0.0
    %8545 = vmatprep.subr.mxu0 0.0
    %8546 = vmatpush2.msra.mxu0 0.0
    %8547 = vmatprep.subr.mxu0 0.0
    %8548 = vmatpush2.msra.mxu0 0.0
    %8549 = vmatprep.subr.mxu0 0.0
    %8550 = vmatpush2.msra.mxu0 0.0
    %8551 = vmatprep.subr.mxu0 0.0
    %8552 = vmatpush2.msra.mxu0 0.0
    %8553 = vmatprep.subr.mxu0 0.0
    %8554 = vmatpush2.msra.mxu0 0.0
    %8555 = vmatprep.subr.mxu0 0.0
    %8556 = vmatpush2.msra.mxu0 0.0
    %8557 = vmatprep.subr.mxu0 0.0
    %8558 = vmatpush2.msra.mxu0 0.0
    %8559 = vmatprep.subr.mxu0 0.0
    %8560 = vmatpush2.msra.mxu0 0.0
    %8561 = vmatprep.subr.mxu0 0.0
    %8562 = vmatpush2.msra.mxu0 0.0
    %8563 = vmatprep.subr.mxu0 0.0
    %8564 = vmatpush2.msra.mxu0 0.0
    %8565 = vmatprep.mubr.f32.mxu0 0.0
    %v8566 = vand.u32 %v8373, 4294901760
    %8567 = vmatmul.mubr.f32.gmra.mxu0 %v8566
    %v8568 = vpop.f32.mrf.mxu0
    %v8569 = vadd.f32 %v8458, %v8568
    %v8570 = vpop.f32.mrf.mxu0
    %8571 = vmatprep.mubr.f32.mxu0 0.0
    %v8572 = vand.u32 %v8376, 4294901760
    %8573 = vmatmul.mubr.f32.gmra.mxu0 %v8572
    %v8574 = vpop.f32.mrf.mxu0
    %v8575 = vadd.f32 %v8468, %v8574
    %v8576 = vpop.f32.mrf.mxu0
    %8577 = vmatprep.mubr.f32.mxu0 0.0
    %v8578 = vand.u32 %v8379, 4294901760
    %8579 = vmatmul.mubr.f32.gmra.mxu0 %v8578
    %v8580 = vpop.f32.mrf.mxu0
    %v8581 = vadd.f32 %v8478, %v8580
    %v8582 = vpop.f32.mrf.mxu0
    %8583 = vmatprep.mubr.f32.mxu0 0.0
    %v8584 = vand.u32 %v8382, 4294901760
    %8585 = vmatmul.mubr.f32.gmra.mxu0 %v8584
    %v8586 = vpop.f32.mrf.mxu0
    %v8587 = vadd.f32 %v8488, %v8586
    %v8588 = vpop.f32.mrf.mxu0
    %8589 = vdwg.mxu0
    %8590 = vmatprep.subr.mxu0 0.0
    %8591 = vmatpush1.msra.mxu0 0.0
    %8592 = vmatprep.subr.mxu0 0.0
    %8593 = vmatpush1.msra.mxu0 0.0
    %8594 = vmatprep.subr.mxu0 0.0
    %8595 = vmatpush1.msra.mxu0 0.0
    %8596 = vmatprep.subr.mxu0 0.0
    %8597 = vmatpush1.msra.mxu0 0.0
    %8598 = vmatprep.subr.mxu0 0.0
    %8599 = vmatpush1.msra.mxu0 0.0
    %8600 = vmatprep.subr.mxu0 0.0
    %8601 = vmatpush1.msra.mxu0 0.0
    %8602 = vmatprep.subr.mxu0 0.0
    %8603 = vmatpush1.msra.mxu0 0.0
    %8604 = vmatprep.subr.mxu0 0.0
    %8605 = vmatpush1.msra.mxu0 0.0
    %8606 = vmatprep.subr.mxu0 0.0
    %8607 = vmatpush1.msra.mxu0 0.0
    %8608 = vmatprep.subr.mxu0 0.0
    %8609 = vmatpush1.msra.mxu0 0.0
    %8610 = vmatprep.subr.mxu0 0.0
    %8611 = vmatpush1.msra.mxu0 0.0
    %8612 = vmatprep.subr.mxu0 0.0
    %8613 = vmatpush1.msra.mxu0 0.0
    %8614 = vmatprep.subr.mxu0 0.0
    %8615 = vmatpush1.msra.mxu0 0.0
    %8616 = vmatprep.subr.mxu0 0.0
    %8617 = vmatpush1.msra.mxu0 0.0
    %8618 = vmatprep.subr.mxu0 0.0
    %v8619 = vand.u32 %v4771, 4294901760
    %v8620 = vsub.f32 %v4771, %v8619
    %8621 = vmatpush1.msra.mxu0 %v8620
    %8622 = vmatprep.subr.mxu0 0.0
    %v8623 = vand.u32 %v4770, 4294901760
    %v8624 = vsub.f32 %v4770, %v8623
    %8625 = vmatpush1.msra.mxu0 %v8624
    %8626 = vmatprep.subr.mxu0 0.0
    %8627 = vmatpush2.msra.mxu0 0.0
    %8628 = vmatprep.subr.mxu0 0.0
    %8629 = vmatpush2.msra.mxu0 0.0
    %8630 = vmatprep.subr.mxu0 0.0
    %8631 = vmatpush2.msra.mxu0 0.0
    %8632 = vmatprep.subr.mxu0 0.0
    %8633 = vmatpush2.msra.mxu0 0.0
    %8634 = vmatprep.subr.mxu0 0.0
    %8635 = vmatpush2.msra.mxu0 0.0
    %8636 = vmatprep.subr.mxu0 0.0
    %8637 = vmatpush2.msra.mxu0 0.0
    %8638 = vmatprep.subr.mxu0 0.0
    %8639 = vmatpush2.msra.mxu0 0.0
    %8640 = vmatprep.subr.mxu0 0.0
    %8641 = vmatpush2.msra.mxu0 0.0
    %8642 = vmatprep.subr.mxu0 0.0
    %8643 = vmatpush2.msra.mxu0 0.0
    %8644 = vmatprep.subr.mxu0 0.0
    %8645 = vmatpush2.msra.mxu0 0.0
    %8646 = vmatprep.subr.mxu0 0.0
    %8647 = vmatpush2.msra.mxu0 0.0
    %8648 = vmatprep.subr.mxu0 0.0
    %8649 = vmatpush2.msra.mxu0 0.0
    %8650 = vmatprep.subr.mxu0 0.0
    %8651 = vmatpush2.msra.mxu0 0.0
    %8652 = vmatprep.subr.mxu0 0.0
    %8653 = vmatpush2.msra.mxu0 0.0
    %8654 = vmatprep.subr.mxu0 0.0
    %8655 = vmatpush2.msra.mxu0 0.0
    %8656 = vmatprep.subr.mxu0 0.0
    %8657 = vmatpush2.msra.mxu0 0.0
    %8658 = vmatprep.mubr.f32.mxu0 0.0
    %v8659 = vand.u32 %v8373, 4294901760
    %v8660 = vsub.f32 %v8373, %v8659
    %8661 = vmatmul.mubr.f32.gmra.mxu0 %v8660
    %v8662 = vpop.f32.mrf.mxu0
    %v8663 = vadd.f32 %v8569, %v8662
    %v8664 = vpop.f32.mrf.mxu0
    %8665 = vmatprep.mubr.f32.mxu0 0.0
    %v8666 = vand.u32 %v8376, 4294901760
    %v8667 = vsub.f32 %v8376, %v8666
    %8668 = vmatmul.mubr.f32.gmra.mxu0 %v8667
    %v8669 = vpop.f32.mrf.mxu0
    %v8670 = vadd.f32 %v8575, %v8669
    %v8671 = vpop.f32.mrf.mxu0
    %8672 = vmatprep.mubr.f32.mxu0 0.0
    %v8673 = vand.u32 %v8379, 4294901760
    %v8674 = vsub.f32 %v8379, %v8673
    %8675 = vmatmul.mubr.f32.gmra.mxu0 %v8674
    %v8676 = vpop.f32.mrf.mxu0
    %v8677 = vadd.f32 %v8581, %v8676
    %v8678 = vpop.f32.mrf.mxu0
    %8679 = vmatprep.mubr.f32.mxu0 0.0
    %v8680 = vand.u32 %v8382, 4294901760
    %v8681 = vsub.f32 %v8382, %v8680
    %8682 = vmatmul.mubr.f32.gmra.mxu0 %v8681
    %v8683 = vpop.f32.mrf.mxu0
    %v8684 = vadd.f32 %v8587, %v8683
    %v8685 = vpop.f32.mrf.mxu0
    %8686 = vdwg.mxu0
    %8687 = vmatprep.subr.mxu0 0.0
    %8688 = vmatpush1.msra.mxu0 0.0
    %8689 = vmatprep.subr.mxu0 0.0
    %8690 = vmatpush1.msra.mxu0 0.0
    %8691 = vmatprep.subr.mxu0 0.0
    %8692 = vmatpush1.msra.mxu0 0.0
    %8693 = vmatprep.subr.mxu0 0.0
    %8694 = vmatpush1.msra.mxu0 0.0
    %8695 = vmatprep.subr.mxu0 0.0
    %8696 = vmatpush1.msra.mxu0 0.0
    %8697 = vmatprep.subr.mxu0 0.0
    %8698 = vmatpush1.msra.mxu0 0.0
    %8699 = vmatprep.subr.mxu0 0.0
    %8700 = vmatpush1.msra.mxu0 0.0
    %8701 = vmatprep.subr.mxu0 0.0
    %8702 = vmatpush1.msra.mxu0 0.0
    %8703 = vmatprep.subr.mxu0 0.0
    %8704 = vmatpush1.msra.mxu0 0.0
    %8705 = vmatprep.subr.mxu0 0.0
    %8706 = vmatpush1.msra.mxu0 0.0
    %8707 = vmatprep.subr.mxu0 0.0
    %8708 = vmatpush1.msra.mxu0 0.0
    %8709 = vmatprep.subr.mxu0 0.0
    %8710 = vmatpush1.msra.mxu0 0.0
    %8711 = vmatprep.subr.mxu0 0.0
    %8712 = vmatpush1.msra.mxu0 0.0
    %8713 = vmatprep.subr.mxu0 0.0
    %8714 = vmatpush1.msra.mxu0 0.0
    %8715 = vmatprep.subr.mxu0 0.0
    %v8716 = vand.u32 %v4771, 4294901760
    %8717 = vmatpush1.msra.mxu0 %v8716
    %8718 = vmatprep.subr.mxu0 0.0
    %v8719 = vand.u32 %v4770, 4294901760
    %8720 = vmatpush1.msra.mxu0 %v8719
    %8721 = vmatprep.subr.mxu0 0.0
    %8722 = vmatpush2.msra.mxu0 0.0
    %8723 = vmatprep.subr.mxu0 0.0
    %8724 = vmatpush2.msra.mxu0 0.0
    %8725 = vmatprep.subr.mxu0 0.0
    %8726 = vmatpush2.msra.mxu0 0.0
    %8727 = vmatprep.subr.mxu0 0.0
    %8728 = vmatpush2.msra.mxu0 0.0
    %8729 = vmatprep.subr.mxu0 0.0
    %8730 = vmatpush2.msra.mxu0 0.0
    %8731 = vmatprep.subr.mxu0 0.0
    %8732 = vmatpush2.msra.mxu0 0.0
    %8733 = vmatprep.subr.mxu0 0.0
    %8734 = vmatpush2.msra.mxu0 0.0
    %8735 = vmatprep.subr.mxu0 0.0
    %8736 = vmatpush2.msra.mxu0 0.0
    %8737 = vmatprep.subr.mxu0 0.0
    %8738 = vmatpush2.msra.mxu0 0.0
    %8739 = vmatprep.subr.mxu0 0.0
    %8740 = vmatpush2.msra.mxu0 0.0
    %8741 = vmatprep.subr.mxu0 0.0
    %8742 = vmatpush2.msra.mxu0 0.0
    %8743 = vmatprep.subr.mxu0 0.0
    %8744 = vmatpush2.msra.mxu0 0.0
    %8745 = vmatprep.subr.mxu0 0.0
    %8746 = vmatpush2.msra.mxu0 0.0
    %8747 = vmatprep.subr.mxu0 0.0
    %8748 = vmatpush2.msra.mxu0 0.0
    %8749 = vmatprep.subr.mxu0 0.0
    %8750 = vmatpush2.msra.mxu0 0.0
    %8751 = vmatprep.subr.mxu0 0.0
    %8752 = vmatpush2.msra.mxu0 0.0
    %8753 = vmatprep.mubr.f32.mxu0 0.0
    %v8754 = vand.u32 %v8373, 4294901760
    %v8755 = vsub.f32 %v8373, %v8754
    %v8756 = vand.u32 %v8755, 4294901760
    %8757 = vmatmul.mubr.f32.gmra.mxu0 %v8756
    %v8758 = vpop.f32.mrf.mxu0
    %v8759 = vadd.f32 %v8663, %v8758
    %v8760 = vpop.f32.mrf.mxu0
    %8761 = vmatprep.mubr.f32.mxu0 0.0
    %v8762 = vand.u32 %v8376, 4294901760
    %v8763 = vsub.f32 %v8376, %v8762
    %v8764 = vand.u32 %v8763, 4294901760
    %8765 = vmatmul.mubr.f32.gmra.mxu0 %v8764
    %v8766 = vpop.f32.mrf.mxu0
    %v8767 = vadd.f32 %v8670, %v8766
    %v8768 = vpop.f32.mrf.mxu0
    %8769 = vmatprep.mubr.f32.mxu0 0.0
    %v8770 = vand.u32 %v8379, 4294901760
    %v8771 = vsub.f32 %v8379, %v8770
    %v8772 = vand.u32 %v8771, 4294901760
    %8773 = vmatmul.mubr.f32.gmra.mxu0 %v8772
    %v8774 = vpop.f32.mrf.mxu0
    %v8775 = vadd.f32 %v8677, %v8774
    %v8776 = vpop.f32.mrf.mxu0
    %8777 = vmatprep.mubr.f32.mxu0 0.0
    %v8778 = vand.u32 %v8382, 4294901760
    %v8779 = vsub.f32 %v8382, %v8778
    %v8780 = vand.u32 %v8779, 4294901760
    %8781 = vmatmul.mubr.f32.gmra.mxu0 %v8780
    %v8782 = vpop.f32.mrf.mxu0
    %v8783 = vadd.f32 %v8684, %v8782
    %v8784 = vpop.f32.mrf.mxu0
    %8785 = vdwg.mxu0
    %8786 = vmatprep.subr.mxu0 0.0
    %8787 = vmatpush1.msra.mxu0 0.0
    %8788 = vmatprep.subr.mxu0 0.0
    %8789 = vmatpush1.msra.mxu0 0.0
    %8790 = vmatprep.subr.mxu0 0.0
    %8791 = vmatpush1.msra.mxu0 0.0
    %8792 = vmatprep.subr.mxu0 0.0
    %8793 = vmatpush1.msra.mxu0 0.0
    %8794 = vmatprep.subr.mxu0 0.0
    %8795 = vmatpush1.msra.mxu0 0.0
    %8796 = vmatprep.subr.mxu0 0.0
    %8797 = vmatpush1.msra.mxu0 0.0
    %8798 = vmatprep.subr.mxu0 0.0
    %8799 = vmatpush1.msra.mxu0 0.0
    %8800 = vmatprep.subr.mxu0 0.0
    %8801 = vmatpush1.msra.mxu0 0.0
    %8802 = vmatprep.subr.mxu0 0.0
    %8803 = vmatpush1.msra.mxu0 0.0
    %8804 = vmatprep.subr.mxu0 0.0
    %8805 = vmatpush1.msra.mxu0 0.0
    %8806 = vmatprep.subr.mxu0 0.0
    %8807 = vmatpush1.msra.mxu0 0.0
    %8808 = vmatprep.subr.mxu0 0.0
    %8809 = vmatpush1.msra.mxu0 0.0
    %8810 = vmatprep.subr.mxu0 0.0
    %8811 = vmatpush1.msra.mxu0 0.0
    %8812 = vmatprep.subr.mxu0 0.0
    %8813 = vmatpush1.msra.mxu0 0.0
    %8814 = vmatprep.subr.mxu0 0.0
    %v8815 = vand.u32 %v4771, 4294901760
    %v8816 = vsub.f32 %v4771, %v8815
    %v8817 = vand.u32 %v8816, 4294901760
    %8818 = vmatpush1.msra.mxu0 %v8817
    %8819 = vmatprep.subr.mxu0 0.0
    %v8820 = vand.u32 %v4770, 4294901760
    %v8821 = vsub.f32 %v4770, %v8820
    %v8822 = vand.u32 %v8821, 4294901760
    %8823 = vmatpush1.msra.mxu0 %v8822
    %8824 = vmatprep.subr.mxu0 0.0
    %8825 = vmatpush2.msra.mxu0 0.0
    %8826 = vmatprep.subr.mxu0 0.0
    %8827 = vmatpush2.msra.mxu0 0.0
    %8828 = vmatprep.subr.mxu0 0.0
    %8829 = vmatpush2.msra.mxu0 0.0
    %8830 = vmatprep.subr.mxu0 0.0
    %8831 = vmatpush2.msra.mxu0 0.0
    %8832 = vmatprep.subr.mxu0 0.0
    %8833 = vmatpush2.msra.mxu0 0.0
    %8834 = vmatprep.subr.mxu0 0.0
    %8835 = vmatpush2.msra.mxu0 0.0
    %8836 = vmatprep.subr.mxu0 0.0
    %8837 = vmatpush2.msra.mxu0 0.0
    %8838 = vmatprep.subr.mxu0 0.0
    %8839 = vmatpush2.msra.mxu0 0.0
    %8840 = vmatprep.subr.mxu0 0.0
    %8841 = vmatpush2.msra.mxu0 0.0
    %8842 = vmatprep.subr.mxu0 0.0
    %8843 = vmatpush2.msra.mxu0 0.0
    %8844 = vmatprep.subr.mxu0 0.0
    %8845 = vmatpush2.msra.mxu0 0.0
    %8846 = vmatprep.subr.mxu0 0.0
    %8847 = vmatpush2.msra.mxu0 0.0
    %8848 = vmatprep.subr.mxu0 0.0
    %8849 = vmatpush2.msra.mxu0 0.0
    %8850 = vmatprep.subr.mxu0 0.0
    %8851 = vmatpush2.msra.mxu0 0.0
    %8852 = vmatprep.subr.mxu0 0.0
    %8853 = vmatpush2.msra.mxu0 0.0
    %8854 = vmatprep.subr.mxu0 0.0
    %8855 = vmatpush2.msra.mxu0 0.0
    %8856 = vmatprep.mubr.f32.mxu0 0.0
    %v8857 = vand.u32 %v8373, 4294901760
    %8858 = vmatmul.mubr.f32.gmra.mxu0 %v8857
    %v8859 = vpop.f32.mrf.mxu0
    %v8860 = vadd.f32 %v8759, %v8859
    %v8861 = vpop.f32.mrf.mxu0
    %8862 = vmatprep.mubr.f32.mxu0 0.0
    %v8863 = vand.u32 %v8376, 4294901760
    %8864 = vmatmul.mubr.f32.gmra.mxu0 %v8863
    %v8865 = vpop.f32.mrf.mxu0
    %v8866 = vadd.f32 %v8767, %v8865
    %v8867 = vpop.f32.mrf.mxu0
    %8868 = vmatprep.mubr.f32.mxu0 0.0
    %v8869 = vand.u32 %v8379, 4294901760
    %8870 = vmatmul.mubr.f32.gmra.mxu0 %v8869
    %v8871 = vpop.f32.mrf.mxu0
    %v8872 = vadd.f32 %v8775, %v8871
    %v8873 = vpop.f32.mrf.mxu0
    %8874 = vmatprep.mubr.f32.mxu0 0.0
    %v8875 = vand.u32 %v8382, 4294901760
    %8876 = vmatmul.mubr.f32.gmra.mxu0 %v8875
    %v8877 = vpop.f32.mrf.mxu0
    %v8878 = vadd.f32 %v8783, %v8877
    %v8879 = vpop.f32.mrf.mxu0
    %8880 = vdwg.mxu0
    %8881 = vmatprep.subr.mxu0 0.0
    %8882 = vmatpush1.msra.mxu0 0.0
    %8883 = vmatprep.subr.mxu0 0.0
    %8884 = vmatpush1.msra.mxu0 0.0
    %8885 = vmatprep.subr.mxu0 0.0
    %8886 = vmatpush1.msra.mxu0 0.0
    %8887 = vmatprep.subr.mxu0 0.0
    %8888 = vmatpush1.msra.mxu0 0.0
    %8889 = vmatprep.subr.mxu0 0.0
    %8890 = vmatpush1.msra.mxu0 0.0
    %8891 = vmatprep.subr.mxu0 0.0
    %8892 = vmatpush1.msra.mxu0 0.0
    %8893 = vmatprep.subr.mxu0 0.0
    %8894 = vmatpush1.msra.mxu0 0.0
    %8895 = vmatprep.subr.mxu0 0.0
    %8896 = vmatpush1.msra.mxu0 0.0
    %8897 = vmatprep.subr.mxu0 0.0
    %8898 = vmatpush1.msra.mxu0 0.0
    %8899 = vmatprep.subr.mxu0 0.0
    %8900 = vmatpush1.msra.mxu0 0.0
    %8901 = vmatprep.subr.mxu0 0.0
    %8902 = vmatpush1.msra.mxu0 0.0
    %8903 = vmatprep.subr.mxu0 0.0
    %8904 = vmatpush1.msra.mxu0 0.0
    %8905 = vmatprep.subr.mxu0 0.0
    %8906 = vmatpush1.msra.mxu0 0.0
    %8907 = vmatprep.subr.mxu0 0.0
    %8908 = vmatpush1.msra.mxu0 0.0
    %8909 = vmatprep.subr.mxu0 0.0
    %v8910 = vand.u32 %v4771, 4294901760
    %8911 = vmatpush1.msra.mxu0 %v8910
    %8912 = vmatprep.subr.mxu0 0.0
    %v8913 = vand.u32 %v4770, 4294901760
    %8914 = vmatpush1.msra.mxu0 %v8913
    %8915 = vmatprep.subr.mxu0 0.0
    %8916 = vmatpush2.msra.mxu0 0.0
    %8917 = vmatprep.subr.mxu0 0.0
    %8918 = vmatpush2.msra.mxu0 0.0
    %8919 = vmatprep.subr.mxu0 0.0
    %8920 = vmatpush2.msra.mxu0 0.0
    %8921 = vmatprep.subr.mxu0 0.0
    %8922 = vmatpush2.msra.mxu0 0.0
    %8923 = vmatprep.subr.mxu0 0.0
    %8924 = vmatpush2.msra.mxu0 0.0
    %8925 = vmatprep.subr.mxu0 0.0
    %8926 = vmatpush2.msra.mxu0 0.0
    %8927 = vmatprep.subr.mxu0 0.0
    %8928 = vmatpush2.msra.mxu0 0.0
    %8929 = vmatprep.subr.mxu0 0.0
    %8930 = vmatpush2.msra.mxu0 0.0
    %8931 = vmatprep.subr.mxu0 0.0
    %8932 = vmatpush2.msra.mxu0 0.0
    %8933 = vmatprep.subr.mxu0 0.0
    %8934 = vmatpush2.msra.mxu0 0.0
    %8935 = vmatprep.subr.mxu0 0.0
    %8936 = vmatpush2.msra.mxu0 0.0
    %8937 = vmatprep.subr.mxu0 0.0
    %8938 = vmatpush2.msra.mxu0 0.0
    %8939 = vmatprep.subr.mxu0 0.0
    %8940 = vmatpush2.msra.mxu0 0.0
    %8941 = vmatprep.subr.mxu0 0.0
    %8942 = vmatpush2.msra.mxu0 0.0
    %8943 = vmatprep.subr.mxu0 0.0
    %8944 = vmatpush2.msra.mxu0 0.0
    %8945 = vmatprep.subr.mxu0 0.0
    %8946 = vmatpush2.msra.mxu0 0.0
    %8947 = vmatprep.mubr.f32.mxu0 0.0
    %v8948 = vand.u32 %v8373, 4294901760
    %8949 = vmatmul.mubr.f32.gmra.mxu0 %v8948
    %v8950 = vpop.f32.mrf.mxu0
    %v8951 = vadd.f32 %v8860, %v8950
    %v8952 = vpop.f32.mrf.mxu0
    %8953 = vmatprep.mubr.f32.mxu0 0.0
    %v8954 = vand.u32 %v8376, 4294901760
    %8955 = vmatmul.mubr.f32.gmra.mxu0 %v8954
    %v8956 = vpop.f32.mrf.mxu0
    %v8957 = vadd.f32 %v8866, %v8956
    %v8958 = vpop.f32.mrf.mxu0
    %8959 = vmatprep.mubr.f32.mxu0 0.0
    %v8960 = vand.u32 %v8379, 4294901760
    %8961 = vmatmul.mubr.f32.gmra.mxu0 %v8960
    %v8962 = vpop.f32.mrf.mxu0
    %v8963 = vadd.f32 %v8872, %v8962
    %v8964 = vpop.f32.mrf.mxu0
    %8965 = vmatprep.mubr.f32.mxu0 0.0
    %v8966 = vand.u32 %v8382, 4294901760
    %8967 = vmatmul.mubr.f32.gmra.mxu0 %v8966
    %v8968 = vpop.f32.mrf.mxu0
    %v8969 = vadd.f32 %v8878, %v8968
    %v8970 = vpop.f32.mrf.mxu0
    %8971 = vdwg.mxu0
    %v8973 = vsel %vm53, %v4749, 0
    %v8976 = vsel %vm53, %v4755, 0
    %v8979 = vsel %vm53, %v4761, 0
    %v8982 = vsel %vm53, %v4767, 0
    %8984 = vmatprep.subr.mxu0 0.0
    %8985 = vmatpush1.msra.mxu0 0.0
    %8986 = vmatprep.subr.mxu0 0.0
    %8987 = vmatpush1.msra.mxu0 0.0
    %8988 = vmatprep.subr.mxu0 0.0
    %8989 = vmatpush1.msra.mxu0 0.0
    %8990 = vmatprep.subr.mxu0 0.0
    %8991 = vmatpush1.msra.mxu0 0.0
    %8992 = vmatprep.subr.mxu0 0.0
    %8993 = vmatpush1.msra.mxu0 0.0
    %8994 = vmatprep.subr.mxu0 0.0
    %8995 = vmatpush1.msra.mxu0 0.0
    %8996 = vmatprep.subr.mxu0 0.0
    %8997 = vmatpush1.msra.mxu0 0.0
    %8998 = vmatprep.subr.mxu0 0.0
    %8999 = vmatpush1.msra.mxu0 0.0
    %9000 = vmatprep.subr.mxu0 0.0
    %9001 = vmatpush1.msra.mxu0 0.0
    %9002 = vmatprep.subr.mxu0 0.0
    %9003 = vmatpush1.msra.mxu0 0.0
    %9004 = vmatprep.subr.mxu0 0.0
    %9005 = vmatpush1.msra.mxu0 0.0
    %9006 = vmatprep.subr.mxu0 0.0
    %9007 = vmatpush1.msra.mxu0 0.0
    %9008 = vmatprep.subr.mxu0 0.0
    %9009 = vmatpush1.msra.mxu0 0.0
    %9010 = vmatprep.subr.mxu0 0.0
    %9011 = vmatpush1.msra.mxu0 0.0
    %9012 = vmatprep.subr.mxu0 0.0
    %v9013 = vand.u32 %v4771, 4294901760
    %9014 = vmatpush1.msra.mxu0 %v9013
    %9015 = vmatprep.subr.mxu0 0.0
    %v9016 = vand.u32 %v4770, 4294901760
    %9017 = vmatpush1.msra.mxu0 %v9016
    %9018 = vmatprep.subr.mxu0 0.0
    %9019 = vmatpush2.msra.mxu0 0.0
    %9020 = vmatprep.subr.mxu0 0.0
    %9021 = vmatpush2.msra.mxu0 0.0
    %9022 = vmatprep.subr.mxu0 0.0
    %9023 = vmatpush2.msra.mxu0 0.0
    %9024 = vmatprep.subr.mxu0 0.0
    %9025 = vmatpush2.msra.mxu0 0.0
    %9026 = vmatprep.subr.mxu0 0.0
    %9027 = vmatpush2.msra.mxu0 0.0
    %9028 = vmatprep.subr.mxu0 0.0
    %9029 = vmatpush2.msra.mxu0 0.0
    %9030 = vmatprep.subr.mxu0 0.0
    %9031 = vmatpush2.msra.mxu0 0.0
    %9032 = vmatprep.subr.mxu0 0.0
    %9033 = vmatpush2.msra.mxu0 0.0
    %9034 = vmatprep.subr.mxu0 0.0
    %9035 = vmatpush2.msra.mxu0 0.0
    %9036 = vmatprep.subr.mxu0 0.0
    %9037 = vmatpush2.msra.mxu0 0.0
    %9038 = vmatprep.subr.mxu0 0.0
    %9039 = vmatpush2.msra.mxu0 0.0
    %9040 = vmatprep.subr.mxu0 0.0
    %9041 = vmatpush2.msra.mxu0 0.0
    %9042 = vmatprep.subr.mxu0 0.0
    %9043 = vmatpush2.msra.mxu0 0.0
    %9044 = vmatprep.subr.mxu0 0.0
    %9045 = vmatpush2.msra.mxu0 0.0
    %9046 = vmatprep.subr.mxu0 0.0
    %9047 = vmatpush2.msra.mxu0 0.0
    %9048 = vmatprep.subr.mxu0 0.0
    %9049 = vmatpush2.msra.mxu0 0.0
    %9050 = vmatprep.mubr.f32.mxu0 0.0
    %v9051 = vand.u32 %v8973, 4294901760
    %v9052 = vsub.f32 %v8973, %v9051
    %v9053 = vand.u32 %v9052, 4294901760
    %v9054 = vsub.f32 %v9052, %v9053
    %v9055 = vand.u32 %v9054, 4294901760
    %9056 = vmatmul.mubr.f32.gmra.mxu0 %v9055
    %v9057 = vpop.f32.mrf.mxu0
    %v9058 = vadd.f32 0.0, %v9057
    %v9059 = vpop.f32.mrf.mxu0
    %9060 = vmatprep.mubr.f32.mxu0 0.0
    %v9061 = vand.u32 %v8976, 4294901760
    %v9062 = vsub.f32 %v8976, %v9061
    %v9063 = vand.u32 %v9062, 4294901760
    %v9064 = vsub.f32 %v9062, %v9063
    %v9065 = vand.u32 %v9064, 4294901760
    %9066 = vmatmul.mubr.f32.gmra.mxu0 %v9065
    %v9067 = vpop.f32.mrf.mxu0
    %v9068 = vadd.f32 0.0, %v9067
    %v9069 = vpop.f32.mrf.mxu0
    %9070 = vmatprep.mubr.f32.mxu0 0.0
    %v9071 = vand.u32 %v8979, 4294901760
    %v9072 = vsub.f32 %v8979, %v9071
    %v9073 = vand.u32 %v9072, 4294901760
    %v9074 = vsub.f32 %v9072, %v9073
    %v9075 = vand.u32 %v9074, 4294901760
    %9076 = vmatmul.mubr.f32.gmra.mxu0 %v9075
    %v9077 = vpop.f32.mrf.mxu0
    %v9078 = vadd.f32 0.0, %v9077
    %v9079 = vpop.f32.mrf.mxu0
    %9080 = vmatprep.mubr.f32.mxu0 0.0
    %v9081 = vand.u32 %v8982, 4294901760
    %v9082 = vsub.f32 %v8982, %v9081
    %v9083 = vand.u32 %v9082, 4294901760
    %v9084 = vsub.f32 %v9082, %v9083
    %v9085 = vand.u32 %v9084, 4294901760
    %9086 = vmatmul.mubr.f32.gmra.mxu0 %v9085
    %v9087 = vpop.f32.mrf.mxu0
    %v9088 = vadd.f32 0.0, %v9087
    %v9089 = vpop.f32.mrf.mxu0
    %9090 = vdwg.mxu0
    %9091 = vmatprep.subr.mxu0 0.0
    %9092 = vmatpush1.msra.mxu0 0.0
    %9093 = vmatprep.subr.mxu0 0.0
    %9094 = vmatpush1.msra.mxu0 0.0
    %9095 = vmatprep.subr.mxu0 0.0
    %9096 = vmatpush1.msra.mxu0 0.0
    %9097 = vmatprep.subr.mxu0 0.0
    %9098 = vmatpush1.msra.mxu0 0.0
    %9099 = vmatprep.subr.mxu0 0.0
    %9100 = vmatpush1.msra.mxu0 0.0
    %9101 = vmatprep.subr.mxu0 0.0
    %9102 = vmatpush1.msra.mxu0 0.0
    %9103 = vmatprep.subr.mxu0 0.0
    %9104 = vmatpush1.msra.mxu0 0.0
    %9105 = vmatprep.subr.mxu0 0.0
    %9106 = vmatpush1.msra.mxu0 0.0
    %9107 = vmatprep.subr.mxu0 0.0
    %9108 = vmatpush1.msra.mxu0 0.0
    %9109 = vmatprep.subr.mxu0 0.0
    %9110 = vmatpush1.msra.mxu0 0.0
    %9111 = vmatprep.subr.mxu0 0.0
    %9112 = vmatpush1.msra.mxu0 0.0
    %9113 = vmatprep.subr.mxu0 0.0
    %9114 = vmatpush1.msra.mxu0 0.0
    %9115 = vmatprep.subr.mxu0 0.0
    %9116 = vmatpush1.msra.mxu0 0.0
    %9117 = vmatprep.subr.mxu0 0.0
    %9118 = vmatpush1.msra.mxu0 0.0
    %9119 = vmatprep.subr.mxu0 0.0
    %v9120 = vand.u32 %v4771, 4294901760
    %v9121 = vsub.f32 %v4771, %v9120
    %v9122 = vand.u32 %v9121, 4294901760
    %v9123 = vsub.f32 %v9121, %v9122
    %v9124 = vand.u32 %v9123, 4294901760
    %9125 = vmatpush1.msra.mxu0 %v9124
    %9126 = vmatprep.subr.mxu0 0.0
    %v9127 = vand.u32 %v4770, 4294901760
    %v9128 = vsub.f32 %v4770, %v9127
    %v9129 = vand.u32 %v9128, 4294901760
    %v9130 = vsub.f32 %v9128, %v9129
    %v9131 = vand.u32 %v9130, 4294901760
    %9132 = vmatpush1.msra.mxu0 %v9131
    %9133 = vmatprep.subr.mxu0 0.0
    %9134 = vmatpush2.msra.mxu0 0.0
    %9135 = vmatprep.subr.mxu0 0.0
    %9136 = vmatpush2.msra.mxu0 0.0
    %9137 = vmatprep.subr.mxu0 0.0
    %9138 = vmatpush2.msra.mxu0 0.0
    %9139 = vmatprep.subr.mxu0 0.0
    %9140 = vmatpush2.msra.mxu0 0.0
    %9141 = vmatprep.subr.mxu0 0.0
    %9142 = vmatpush2.msra.mxu0 0.0
    %9143 = vmatprep.subr.mxu0 0.0
    %9144 = vmatpush2.msra.mxu0 0.0
    %9145 = vmatprep.subr.mxu0 0.0
    %9146 = vmatpush2.msra.mxu0 0.0
    %9147 = vmatprep.subr.mxu0 0.0
    %9148 = vmatpush2.msra.mxu0 0.0
    %9149 = vmatprep.subr.mxu0 0.0
    %9150 = vmatpush2.msra.mxu0 0.0
    %9151 = vmatprep.subr.mxu0 0.0
    %9152 = vmatpush2.msra.mxu0 0.0
    %9153 = vmatprep.subr.mxu0 0.0
    %9154 = vmatpush2.msra.mxu0 0.0
    %9155 = vmatprep.subr.mxu0 0.0
    %9156 = vmatpush2.msra.mxu0 0.0
    %9157 = vmatprep.subr.mxu0 0.0
    %9158 = vmatpush2.msra.mxu0 0.0
    %9159 = vmatprep.subr.mxu0 0.0
    %9160 = vmatpush2.msra.mxu0 0.0
    %9161 = vmatprep.subr.mxu0 0.0
    %9162 = vmatpush2.msra.mxu0 0.0
    %9163 = vmatprep.subr.mxu0 0.0
    %9164 = vmatpush2.msra.mxu0 0.0
    %9165 = vmatprep.mubr.f32.mxu0 0.0
    %v9166 = vand.u32 %v8973, 4294901760
    %9167 = vmatmul.mubr.f32.gmra.mxu0 %v9166
    %v9168 = vpop.f32.mrf.mxu0
    %v9169 = vadd.f32 %v9058, %v9168
    %v9170 = vpop.f32.mrf.mxu0
    %9171 = vmatprep.mubr.f32.mxu0 0.0
    %v9172 = vand.u32 %v8976, 4294901760
    %9173 = vmatmul.mubr.f32.gmra.mxu0 %v9172
    %v9174 = vpop.f32.mrf.mxu0
    %v9175 = vadd.f32 %v9068, %v9174
    %v9176 = vpop.f32.mrf.mxu0
    %9177 = vmatprep.mubr.f32.mxu0 0.0
    %v9178 = vand.u32 %v8979, 4294901760
    %9179 = vmatmul.mubr.f32.gmra.mxu0 %v9178
    %v9180 = vpop.f32.mrf.mxu0
    %v9181 = vadd.f32 %v9078, %v9180
    %v9182 = vpop.f32.mrf.mxu0
    %9183 = vmatprep.mubr.f32.mxu0 0.0
    %v9184 = vand.u32 %v8982, 4294901760
    %9185 = vmatmul.mubr.f32.gmra.mxu0 %v9184
    %v9186 = vpop.f32.mrf.mxu0
    %v9187 = vadd.f32 %v9088, %v9186
    %v9188 = vpop.f32.mrf.mxu0
    %9189 = vdwg.mxu0
    %9190 = vmatprep.subr.mxu0 0.0
    %9191 = vmatpush1.msra.mxu0 0.0
    %9192 = vmatprep.subr.mxu0 0.0
    %9193 = vmatpush1.msra.mxu0 0.0
    %9194 = vmatprep.subr.mxu0 0.0
    %9195 = vmatpush1.msra.mxu0 0.0
    %9196 = vmatprep.subr.mxu0 0.0
    %9197 = vmatpush1.msra.mxu0 0.0
    %9198 = vmatprep.subr.mxu0 0.0
    %9199 = vmatpush1.msra.mxu0 0.0
    %9200 = vmatprep.subr.mxu0 0.0
    %9201 = vmatpush1.msra.mxu0 0.0
    %9202 = vmatprep.subr.mxu0 0.0
    %9203 = vmatpush1.msra.mxu0 0.0
    %9204 = vmatprep.subr.mxu0 0.0
    %9205 = vmatpush1.msra.mxu0 0.0
    %9206 = vmatprep.subr.mxu0 0.0
    %9207 = vmatpush1.msra.mxu0 0.0
    %9208 = vmatprep.subr.mxu0 0.0
    %9209 = vmatpush1.msra.mxu0 0.0
    %9210 = vmatprep.subr.mxu0 0.0
    %9211 = vmatpush1.msra.mxu0 0.0
    %9212 = vmatprep.subr.mxu0 0.0
    %9213 = vmatpush1.msra.mxu0 0.0
    %9214 = vmatprep.subr.mxu0 0.0
    %9215 = vmatpush1.msra.mxu0 0.0
    %9216 = vmatprep.subr.mxu0 0.0
    %9217 = vmatpush1.msra.mxu0 0.0
    %9218 = vmatprep.subr.mxu0 0.0
    %v9219 = vand.u32 %v4771, 4294901760
    %v9220 = vsub.f32 %v4771, %v9219
    %9221 = vmatpush1.msra.mxu0 %v9220
    %9222 = vmatprep.subr.mxu0 0.0
    %v9223 = vand.u32 %v4770, 4294901760
    %v9224 = vsub.f32 %v4770, %v9223
    %9225 = vmatpush1.msra.mxu0 %v9224
    %9226 = vmatprep.subr.mxu0 0.0
    %9227 = vmatpush2.msra.mxu0 0.0
    %9228 = vmatprep.subr.mxu0 0.0
    %9229 = vmatpush2.msra.mxu0 0.0
    %9230 = vmatprep.subr.mxu0 0.0
    %9231 = vmatpush2.msra.mxu0 0.0
    %9232 = vmatprep.subr.mxu0 0.0
    %9233 = vmatpush2.msra.mxu0 0.0
    %9234 = vmatprep.subr.mxu0 0.0
    %9235 = vmatpush2.msra.mxu0 0.0
    %9236 = vmatprep.subr.mxu0 0.0
    %9237 = vmatpush2.msra.mxu0 0.0
    %9238 = vmatprep.subr.mxu0 0.0
    %9239 = vmatpush2.msra.mxu0 0.0
    %9240 = vmatprep.subr.mxu0 0.0
    %9241 = vmatpush2.msra.mxu0 0.0
    %9242 = vmatprep.subr.mxu0 0.0
    %9243 = vmatpush2.msra.mxu0 0.0
    %9244 = vmatprep.subr.mxu0 0.0
    %9245 = vmatpush2.msra.mxu0 0.0
    %9246 = vmatprep.subr.mxu0 0.0
    %9247 = vmatpush2.msra.mxu0 0.0
    %9248 = vmatprep.subr.mxu0 0.0
    %9249 = vmatpush2.msra.mxu0 0.0
    %9250 = vmatprep.subr.mxu0 0.0
    %9251 = vmatpush2.msra.mxu0 0.0
    %9252 = vmatprep.subr.mxu0 0.0
    %9253 = vmatpush2.msra.mxu0 0.0
    %9254 = vmatprep.subr.mxu0 0.0
    %9255 = vmatpush2.msra.mxu0 0.0
    %9256 = vmatprep.subr.mxu0 0.0
    %9257 = vmatpush2.msra.mxu0 0.0
    %9258 = vmatprep.mubr.f32.mxu0 0.0
    %v9259 = vand.u32 %v8973, 4294901760
    %v9260 = vsub.f32 %v8973, %v9259
    %9261 = vmatmul.mubr.f32.gmra.mxu0 %v9260
    %v9262 = vpop.f32.mrf.mxu0
    %v9263 = vadd.f32 %v9169, %v9262
    %v9264 = vpop.f32.mrf.mxu0
    %9265 = vmatprep.mubr.f32.mxu0 0.0
    %v9266 = vand.u32 %v8976, 4294901760
    %v9267 = vsub.f32 %v8976, %v9266
    %9268 = vmatmul.mubr.f32.gmra.mxu0 %v9267
    %v9269 = vpop.f32.mrf.mxu0
    %v9270 = vadd.f32 %v9175, %v9269
    %v9271 = vpop.f32.mrf.mxu0
    %9272 = vmatprep.mubr.f32.mxu0 0.0
    %v9273 = vand.u32 %v8979, 4294901760
    %v9274 = vsub.f32 %v8979, %v9273
    %9275 = vmatmul.mubr.f32.gmra.mxu0 %v9274
    %v9276 = vpop.f32.mrf.mxu0
    %v9277 = vadd.f32 %v9181, %v9276
    %v9278 = vpop.f32.mrf.mxu0
    %9279 = vmatprep.mubr.f32.mxu0 0.0
    %v9280 = vand.u32 %v8982, 4294901760
    %v9281 = vsub.f32 %v8982, %v9280
    %9282 = vmatmul.mubr.f32.gmra.mxu0 %v9281
    %v9283 = vpop.f32.mrf.mxu0
    %v9284 = vadd.f32 %v9187, %v9283
    %v9285 = vpop.f32.mrf.mxu0
    %9286 = vdwg.mxu0
    %9287 = vmatprep.subr.mxu0 0.0
    %9288 = vmatpush1.msra.mxu0 0.0
    %9289 = vmatprep.subr.mxu0 0.0
    %9290 = vmatpush1.msra.mxu0 0.0
    %9291 = vmatprep.subr.mxu0 0.0
    %9292 = vmatpush1.msra.mxu0 0.0
    %9293 = vmatprep.subr.mxu0 0.0
    %9294 = vmatpush1.msra.mxu0 0.0
    %9295 = vmatprep.subr.mxu0 0.0
    %9296 = vmatpush1.msra.mxu0 0.0
    %9297 = vmatprep.subr.mxu0 0.0
    %9298 = vmatpush1.msra.mxu0 0.0
    %9299 = vmatprep.subr.mxu0 0.0
    %9300 = vmatpush1.msra.mxu0 0.0
    %9301 = vmatprep.subr.mxu0 0.0
    %9302 = vmatpush1.msra.mxu0 0.0
    %9303 = vmatprep.subr.mxu0 0.0
    %9304 = vmatpush1.msra.mxu0 0.0
    %9305 = vmatprep.subr.mxu0 0.0
    %9306 = vmatpush1.msra.mxu0 0.0
    %9307 = vmatprep.subr.mxu0 0.0
    %9308 = vmatpush1.msra.mxu0 0.0
    %9309 = vmatprep.subr.mxu0 0.0
    %9310 = vmatpush1.msra.mxu0 0.0
    %9311 = vmatprep.subr.mxu0 0.0
    %9312 = vmatpush1.msra.mxu0 0.0
    %9313 = vmatprep.subr.mxu0 0.0
    %9314 = vmatpush1.msra.mxu0 0.0
    %9315 = vmatprep.subr.mxu0 0.0
    %v9316 = vand.u32 %v4771, 4294901760
    %9317 = vmatpush1.msra.mxu0 %v9316
    %9318 = vmatprep.subr.mxu0 0.0
    %v9319 = vand.u32 %v4770, 4294901760
    %9320 = vmatpush1.msra.mxu0 %v9319
    %9321 = vmatprep.subr.mxu0 0.0
    %9322 = vmatpush2.msra.mxu0 0.0
    %9323 = vmatprep.subr.mxu0 0.0
    %9324 = vmatpush2.msra.mxu0 0.0
    %9325 = vmatprep.subr.mxu0 0.0
    %9326 = vmatpush2.msra.mxu0 0.0
    %9327 = vmatprep.subr.mxu0 0.0
    %9328 = vmatpush2.msra.mxu0 0.0
    %9329 = vmatprep.subr.mxu0 0.0
    %9330 = vmatpush2.msra.mxu0 0.0
    %9331 = vmatprep.subr.mxu0 0.0
    %9332 = vmatpush2.msra.mxu0 0.0
    %9333 = vmatprep.subr.mxu0 0.0
    %9334 = vmatpush2.msra.mxu0 0.0
    %9335 = vmatprep.subr.mxu0 0.0
    %9336 = vmatpush2.msra.mxu0 0.0
    %9337 = vmatprep.subr.mxu0 0.0
    %9338 = vmatpush2.msra.mxu0 0.0
    %9339 = vmatprep.subr.mxu0 0.0
    %9340 = vmatpush2.msra.mxu0 0.0
    %9341 = vmatprep.subr.mxu0 0.0
    %9342 = vmatpush2.msra.mxu0 0.0
    %9343 = vmatprep.subr.mxu0 0.0
    %9344 = vmatpush2.msra.mxu0 0.0
    %9345 = vmatprep.subr.mxu0 0.0
    %9346 = vmatpush2.msra.mxu0 0.0
    %9347 = vmatprep.subr.mxu0 0.0
    %9348 = vmatpush2.msra.mxu0 0.0
    %9349 = vmatprep.subr.mxu0 0.0
    %9350 = vmatpush2.msra.mxu0 0.0
    %9351 = vmatprep.subr.mxu0 0.0
    %9352 = vmatpush2.msra.mxu0 0.0
    %9353 = vmatprep.mubr.f32.mxu0 0.0
    %v9354 = vand.u32 %v8973, 4294901760
    %v9355 = vsub.f32 %v8973, %v9354
    %v9356 = vand.u32 %v9355, 4294901760
    %9357 = vmatmul.mubr.f32.gmra.mxu0 %v9356
    %v9358 = vpop.f32.mrf.mxu0
    %v9359 = vadd.f32 %v9263, %v9358
    %v9360 = vpop.f32.mrf.mxu0
    %9361 = vmatprep.mubr.f32.mxu0 0.0
    %v9362 = vand.u32 %v8976, 4294901760
    %v9363 = vsub.f32 %v8976, %v9362
    %v9364 = vand.u32 %v9363, 4294901760
    %9365 = vmatmul.mubr.f32.gmra.mxu0 %v9364
    %v9366 = vpop.f32.mrf.mxu0
    %v9367 = vadd.f32 %v9270, %v9366
    %v9368 = vpop.f32.mrf.mxu0
    %9369 = vmatprep.mubr.f32.mxu0 0.0
    %v9370 = vand.u32 %v8979, 4294901760
    %v9371 = vsub.f32 %v8979, %v9370
    %v9372 = vand.u32 %v9371, 4294901760
    %9373 = vmatmul.mubr.f32.gmra.mxu0 %v9372
    %v9374 = vpop.f32.mrf.mxu0
    %v9375 = vadd.f32 %v9277, %v9374
    %v9376 = vpop.f32.mrf.mxu0
    %9377 = vmatprep.mubr.f32.mxu0 0.0
    %v9378 = vand.u32 %v8982, 4294901760
    %v9379 = vsub.f32 %v8982, %v9378
    %v9380 = vand.u32 %v9379, 4294901760
    %9381 = vmatmul.mubr.f32.gmra.mxu0 %v9380
    %v9382 = vpop.f32.mrf.mxu0
    %v9383 = vadd.f32 %v9284, %v9382
    %v9384 = vpop.f32.mrf.mxu0
    %9385 = vdwg.mxu0
    %9386 = vmatprep.subr.mxu0 0.0
    %9387 = vmatpush1.msra.mxu0 0.0
    %9388 = vmatprep.subr.mxu0 0.0
    %9389 = vmatpush1.msra.mxu0 0.0
    %9390 = vmatprep.subr.mxu0 0.0
    %9391 = vmatpush1.msra.mxu0 0.0
    %9392 = vmatprep.subr.mxu0 0.0
    %9393 = vmatpush1.msra.mxu0 0.0
    %9394 = vmatprep.subr.mxu0 0.0
    %9395 = vmatpush1.msra.mxu0 0.0
    %9396 = vmatprep.subr.mxu0 0.0
    %9397 = vmatpush1.msra.mxu0 0.0
    %9398 = vmatprep.subr.mxu0 0.0
    %9399 = vmatpush1.msra.mxu0 0.0
    %9400 = vmatprep.subr.mxu0 0.0
    %9401 = vmatpush1.msra.mxu0 0.0
    %9402 = vmatprep.subr.mxu0 0.0
    %9403 = vmatpush1.msra.mxu0 0.0
    %9404 = vmatprep.subr.mxu0 0.0
    %9405 = vmatpush1.msra.mxu0 0.0
    %9406 = vmatprep.subr.mxu0 0.0
    %9407 = vmatpush1.msra.mxu0 0.0
    %9408 = vmatprep.subr.mxu0 0.0
    %9409 = vmatpush1.msra.mxu0 0.0
    %9410 = vmatprep.subr.mxu0 0.0
    %9411 = vmatpush1.msra.mxu0 0.0
    %9412 = vmatprep.subr.mxu0 0.0
    %9413 = vmatpush1.msra.mxu0 0.0
    %9414 = vmatprep.subr.mxu0 0.0
    %v9415 = vand.u32 %v4771, 4294901760
    %v9416 = vsub.f32 %v4771, %v9415
    %v9417 = vand.u32 %v9416, 4294901760
    %9418 = vmatpush1.msra.mxu0 %v9417
    %9419 = vmatprep.subr.mxu0 0.0
    %v9420 = vand.u32 %v4770, 4294901760
    %v9421 = vsub.f32 %v4770, %v9420
    %v9422 = vand.u32 %v9421, 4294901760
    %9423 = vmatpush1.msra.mxu0 %v9422
    %9424 = vmatprep.subr.mxu0 0.0
    %9425 = vmatpush2.msra.mxu0 0.0
    %9426 = vmatprep.subr.mxu0 0.0
    %9427 = vmatpush2.msra.mxu0 0.0
    %9428 = vmatprep.subr.mxu0 0.0
    %9429 = vmatpush2.msra.mxu0 0.0
    %9430 = vmatprep.subr.mxu0 0.0
    %9431 = vmatpush2.msra.mxu0 0.0
    %9432 = vmatprep.subr.mxu0 0.0
    %9433 = vmatpush2.msra.mxu0 0.0
    %9434 = vmatprep.subr.mxu0 0.0
    %9435 = vmatpush2.msra.mxu0 0.0
    %9436 = vmatprep.subr.mxu0 0.0
    %9437 = vmatpush2.msra.mxu0 0.0
    %9438 = vmatprep.subr.mxu0 0.0
    %9439 = vmatpush2.msra.mxu0 0.0
    %9440 = vmatprep.subr.mxu0 0.0
    %9441 = vmatpush2.msra.mxu0 0.0
    %9442 = vmatprep.subr.mxu0 0.0
    %9443 = vmatpush2.msra.mxu0 0.0
    %9444 = vmatprep.subr.mxu0 0.0
    %9445 = vmatpush2.msra.mxu0 0.0
    %9446 = vmatprep.subr.mxu0 0.0
    %9447 = vmatpush2.msra.mxu0 0.0
    %9448 = vmatprep.subr.mxu0 0.0
    %9449 = vmatpush2.msra.mxu0 0.0
    %9450 = vmatprep.subr.mxu0 0.0
    %9451 = vmatpush2.msra.mxu0 0.0
    %9452 = vmatprep.subr.mxu0 0.0
    %9453 = vmatpush2.msra.mxu0 0.0
    %9454 = vmatprep.subr.mxu0 0.0
    %9455 = vmatpush2.msra.mxu0 0.0
    %9456 = vmatprep.mubr.f32.mxu0 0.0
    %v9457 = vand.u32 %v8973, 4294901760
    %9458 = vmatmul.mubr.f32.gmra.mxu0 %v9457
    %v9459 = vpop.f32.mrf.mxu0
    %v9460 = vadd.f32 %v9359, %v9459
    %v9461 = vpop.f32.mrf.mxu0
    %9462 = vmatprep.mubr.f32.mxu0 0.0
    %v9463 = vand.u32 %v8976, 4294901760
    %9464 = vmatmul.mubr.f32.gmra.mxu0 %v9463
    %v9465 = vpop.f32.mrf.mxu0
    %v9466 = vadd.f32 %v9367, %v9465
    %v9467 = vpop.f32.mrf.mxu0
    %9468 = vmatprep.mubr.f32.mxu0 0.0
    %v9469 = vand.u32 %v8979, 4294901760
    %9470 = vmatmul.mubr.f32.gmra.mxu0 %v9469
    %v9471 = vpop.f32.mrf.mxu0
    %v9472 = vadd.f32 %v9375, %v9471
    %v9473 = vpop.f32.mrf.mxu0
    %9474 = vmatprep.mubr.f32.mxu0 0.0
    %v9475 = vand.u32 %v8982, 4294901760
    %9476 = vmatmul.mubr.f32.gmra.mxu0 %v9475
    %v9477 = vpop.f32.mrf.mxu0
    %v9478 = vadd.f32 %v9383, %v9477
    %v9479 = vpop.f32.mrf.mxu0
    %9480 = vdwg.mxu0
    %9481 = vmatprep.subr.mxu0 0.0
    %9482 = vmatpush1.msra.mxu0 0.0
    %9483 = vmatprep.subr.mxu0 0.0
    %9484 = vmatpush1.msra.mxu0 0.0
    %9485 = vmatprep.subr.mxu0 0.0
    %9486 = vmatpush1.msra.mxu0 0.0
    %9487 = vmatprep.subr.mxu0 0.0
    %9488 = vmatpush1.msra.mxu0 0.0
    %9489 = vmatprep.subr.mxu0 0.0
    %9490 = vmatpush1.msra.mxu0 0.0
    %9491 = vmatprep.subr.mxu0 0.0
    %9492 = vmatpush1.msra.mxu0 0.0
    %9493 = vmatprep.subr.mxu0 0.0
    %9494 = vmatpush1.msra.mxu0 0.0
    %9495 = vmatprep.subr.mxu0 0.0
    %9496 = vmatpush1.msra.mxu0 0.0
    %9497 = vmatprep.subr.mxu0 0.0
    %9498 = vmatpush1.msra.mxu0 0.0
    %9499 = vmatprep.subr.mxu0 0.0
    %9500 = vmatpush1.msra.mxu0 0.0
    %9501 = vmatprep.subr.mxu0 0.0
    %9502 = vmatpush1.msra.mxu0 0.0
    %9503 = vmatprep.subr.mxu0 0.0
    %9504 = vmatpush1.msra.mxu0 0.0
    %9505 = vmatprep.subr.mxu0 0.0
    %9506 = vmatpush1.msra.mxu0 0.0
    %9507 = vmatprep.subr.mxu0 0.0
    %9508 = vmatpush1.msra.mxu0 0.0
    %9509 = vmatprep.subr.mxu0 0.0
    %v9510 = vand.u32 %v4771, 4294901760
    %9511 = vmatpush1.msra.mxu0 %v9510
    %9512 = vmatprep.subr.mxu0 0.0
    %v9513 = vand.u32 %v4770, 4294901760
    %9514 = vmatpush1.msra.mxu0 %v9513
    %9515 = vmatprep.subr.mxu0 0.0
    %9516 = vmatpush2.msra.mxu0 0.0
    %9517 = vmatprep.subr.mxu0 0.0
    %9518 = vmatpush2.msra.mxu0 0.0
    %9519 = vmatprep.subr.mxu0 0.0
    %9520 = vmatpush2.msra.mxu0 0.0
    %9521 = vmatprep.subr.mxu0 0.0
    %9522 = vmatpush2.msra.mxu0 0.0
    %9523 = vmatprep.subr.mxu0 0.0
    %9524 = vmatpush2.msra.mxu0 0.0
    %9525 = vmatprep.subr.mxu0 0.0
    %9526 = vmatpush2.msra.mxu0 0.0
    %9527 = vmatprep.subr.mxu0 0.0
    %9528 = vmatpush2.msra.mxu0 0.0
    %9529 = vmatprep.subr.mxu0 0.0
    %9530 = vmatpush2.msra.mxu0 0.0
    %9531 = vmatprep.subr.mxu0 0.0
    %9532 = vmatpush2.msra.mxu0 0.0
    %9533 = vmatprep.subr.mxu0 0.0
    %9534 = vmatpush2.msra.mxu0 0.0
    %9535 = vmatprep.subr.mxu0 0.0
    %9536 = vmatpush2.msra.mxu0 0.0
    %9537 = vmatprep.subr.mxu0 0.0
    %9538 = vmatpush2.msra.mxu0 0.0
    %9539 = vmatprep.subr.mxu0 0.0
    %9540 = vmatpush2.msra.mxu0 0.0
    %9541 = vmatprep.subr.mxu0 0.0
    %9542 = vmatpush2.msra.mxu0 0.0
    %9543 = vmatprep.subr.mxu0 0.0
    %9544 = vmatpush2.msra.mxu0 0.0
    %9545 = vmatprep.subr.mxu0 0.0
    %9546 = vmatpush2.msra.mxu0 0.0
    %9547 = vmatprep.mubr.f32.mxu0 0.0
    %v9548 = vand.u32 %v8973, 4294901760
    %9549 = vmatmul.mubr.f32.gmra.mxu0 %v9548
    %v9550 = vpop.f32.mrf.mxu0
    %v9551 = vadd.f32 %v9460, %v9550
    %v9552 = vpop.f32.mrf.mxu0
    %9553 = vmatprep.mubr.f32.mxu0 0.0
    %v9554 = vand.u32 %v8976, 4294901760
    %9555 = vmatmul.mubr.f32.gmra.mxu0 %v9554
    %v9556 = vpop.f32.mrf.mxu0
    %v9557 = vadd.f32 %v9466, %v9556
    %v9558 = vpop.f32.mrf.mxu0
    %9559 = vmatprep.mubr.f32.mxu0 0.0
    %v9560 = vand.u32 %v8979, 4294901760
    %9561 = vmatmul.mubr.f32.gmra.mxu0 %v9560
    %v9562 = vpop.f32.mrf.mxu0
    %v9563 = vadd.f32 %v9472, %v9562
    %v9564 = vpop.f32.mrf.mxu0
    %9565 = vmatprep.mubr.f32.mxu0 0.0
    %v9566 = vand.u32 %v8982, 4294901760
    %9567 = vmatmul.mubr.f32.gmra.mxu0 %v9566
    %v9568 = vpop.f32.mrf.mxu0
    %v9569 = vadd.f32 %v9478, %v9568
    %v9570 = vpop.f32.mrf.mxu0
    %9571 = vdwg.mxu0
    %vm9572 = vcmask 261120
    %9573 = vst.msk [vmem:[#allocation7] sm:$0xff] %vm9572, %v5351
    %9574 = vst.msk [vmem:[#allocation7 + $0x8] sm:$0xff] %vm9572, %v5357
    %9575 = vst.msk [vmem:[#allocation7 + $0x10] sm:$0xff] %vm9572, %v5363
    %9576 = vst.msk [vmem:[#allocation7 + $0x18] sm:$0xff] %vm9572, %v5369
    %9577 = vst.msk [vmem:[#allocation7 + $0x20] sm:$0xff] %vm9572, %v5951
    %9578 = vst.msk [vmem:[#allocation7 + $0x28] sm:$0xff] %vm9572, %v5957
    %9579 = vst.msk [vmem:[#allocation7 + $0x30] sm:$0xff] %vm9572, %v5963
    %9580 = vst.msk [vmem:[#allocation7 + $0x38] sm:$0xff] %vm9572, %v5969
    %9581 = vst.msk [vmem:[#allocation7 + $0x40] sm:$0xff] %vm9572, %v6551
    %9582 = vst.msk [vmem:[#allocation7 + $0x48] sm:$0xff] %vm9572, %v6557
    %9583 = vst.msk [vmem:[#allocation7 + $0x50] sm:$0xff] %vm9572, %v6563
    %9584 = vst.msk [vmem:[#allocation7 + $0x58] sm:$0xff] %vm9572, %v6569
    %9585 = vst.msk [vmem:[#allocation7 + $0x60] sm:$0xff] %vm9572, %v7151
    %9586 = vst.msk [vmem:[#allocation7 + $0x68] sm:$0xff] %vm9572, %v7157
    %9587 = vst.msk [vmem:[#allocation7 + $0x70] sm:$0xff] %vm9572, %v7163
    %9588 = vst.msk [vmem:[#allocation7 + $0x78] sm:$0xff] %vm9572, %v7169
    %9589 = vst.msk [vmem:[#allocation7 + $0x80] sm:$0xff] %vm9572, %v7751
    %9590 = vst.msk [vmem:[#allocation7 + $0x88] sm:$0xff] %vm9572, %v7757
    %9591 = vst.msk [vmem:[#allocation7 + $0x90] sm:$0xff] %vm9572, %v7763
    %9592 = vst.msk [vmem:[#allocation7 + $0x98] sm:$0xff] %vm9572, %v7769
    %9593 = vst.msk [vmem:[#allocation7 + $0xa0] sm:$0xff] %vm9572, %v8351
    %9594 = vst.msk [vmem:[#allocation7 + $0xa8] sm:$0xff] %vm9572, %v8357
    %9595 = vst.msk [vmem:[#allocation7 + $0xb0] sm:$0xff] %vm9572, %v8363
    %9596 = vst.msk [vmem:[#allocation7 + $0xb8] sm:$0xff] %vm9572, %v8369
    %9597 = vst.msk [vmem:[#allocation7 + $0xc0] sm:$0xff] %vm9572, %v8951
    %9598 = vst.msk [vmem:[#allocation7 + $0xc8] sm:$0xff] %vm9572, %v8957
    %9599 = vst.msk [vmem:[#allocation7 + $0xd0] sm:$0xff] %vm9572, %v8963
    %9600 = vst.msk [vmem:[#allocation7 + $0xd8] sm:$0xff] %vm9572, %v8969
    %9601 = vst.msk [vmem:[#allocation7 + $0xe0] sm:$0xff] %vm9572, %v9551
    %9602 = vst.msk [vmem:[#allocation7 + $0xe8] sm:$0xff] %vm9572, %v9557
    %9603 = vst.msk [vmem:[#allocation7 + $0xf0] sm:$0xff] %vm9572, %v9563
    %9604 = vst.msk [vmem:[#allocation7 + $0xf8] sm:$0xff] %vm9572, %v9569
    // Predicated region
    $region18: #{tpu_custom_call.1} parent=1 // pred_check
      _
    $region19: #{tpu_custom_call.1} parent=1 // pred_check_branch
      %9606 = sbr.rel (0) target = $region21
    $region20: #{tpu_custom_call.1} parent=1 // pred_region
      %s9608 = ssub.s32 4096, 4096
      %9609 = vsyncadd [#allocation6], %s9608
      %s9610 = sshll.u32 [#allocation7], 4
      %s9611 = int_to_ptr.vmem [resolvable:$true] %s9610
      %9616 = dma.vmem_to_hbm [thread:$0]  %s9611, 4096, %s4, [#allocation6], 128, 128, 8
    $region21: #{tpu_custom_call.1} parent=1 // pred_fallthru
      _
    // Predicated region
    $region22: #{tpu_custom_call.1} parent=1 // pred_check
      _
    $region23: #{tpu_custom_call.1} parent=1 // pred_check_branch
      %9618 = sbr.rel (0) target = $region25
    $region24: #{tpu_custom_call.1} parent=1 // pred_region
      %9619 = dma.done [#allocation6], 4096
    $region25: #{tpu_custom_call.1} parent=1 // pred_fallthru
      _
    %9620 = vsyncpa [#allocation5], 1
    %9621 = vsyncpa [#allocation6], 1

</llo_original>
